<compile_context>
chip_gen: v5e
topology: v5e:2x2
jax: 0.10.0
libtpu: 0.0.40
codegen_flags: <defaults>
</compile_context>

<pallas_src>
import math
from functools import partial

import jax
import jax.numpy as jnp
from jax.experimental import pallas as pl
from jax.experimental.pallas import tpu as pltpu

NTU_PAIRS = ((10, 8), (8, 6), (9, 7), (7, 5), (15, 13), (13, 11), (16, 14),
             (14, 12), (11, 5), (12, 6), (11, 12), (5, 6), (5, 0), (6, 0),
             (1, 0), (2, 0), (3, 1), (4, 2))

BN_EPS = 1e-5
ROW_TILE_TARGET = 512          # rows per VMEM tile


def _round_up(a, b):
    return -(-a // b) * b


# --------------------------------------------------------------------------- #
# Pallas kernels
# --------------------------------------------------------------------------- #
def _block_kernel(x_ref, k_ref, b_ref, o_ref):
    # x: (tile_r, V*Cin) bf16, k: (V*Cin, V*Cout) bf16 (graph mix + projection +
    # residual pre-folded), b: (1, V*Cout) f32.
    x = x_ref[0]
    k = k_ref[0]
    y = jnp.dot(x, k, preferred_element_type=jnp.float32)   # one lane-dense MXU matmul
    y = y + b_ref[0]
    y = jnp.where(y > 0, y, 0.1 * y)                        # LeakyReLU(0.1), f32 on VPU
    o_ref[0] = y.astype(o_ref.dtype)


def block_call(x, kmats, bias):
    """One fused GCN block for all 3 streams.

    x:     (S_in, R, V*Cin) bf16  (S_in == 1 -> the same input is shared by all
                                   3 streams and only read once per row tile)
    kmats: (3, V*Cin, V*Cout) bf16 folded (A (x) W [+ residual]) weights
    bias:  (3, 1, V*Cout)   f32
    ->     (3, R, V*Cout)   bf16
    """
    s_in, R, vcin = x.shape
    S, _, vcout = kmats.shape

    tile_r = min(ROW_TILE_TARGET, _round_up(R, 8))
    r_pad = _round_up(R, tile_r)
    if r_pad != R:                                           # pad rows, keep grid > 1
        x = jnp.concatenate(
            [x, jnp.zeros((s_in, r_pad - R, vcin), x.dtype)], axis=1)

    x_map = (lambda s, i: (s, i, 0)) if s_in == S else (lambda s, i: (0, i, 0))

    out = pl.pallas_call(
        _block_kernel,
        out_shape=jax.ShapeDtypeStruct((S, r_pad, vcout), jnp.bfloat16),
        grid=(S, r_pad // tile_r),
        in_specs=[
            pl.BlockSpec((1, tile_r, vcin), x_map),
            pl.BlockSpec((1, vcin, vcout), lambda s, i: (s, 0, 0)),
            pl.BlockSpec((1, 1, vcout), lambda s, i: (s, 0, 0)),
        ],
        out_specs=pl.BlockSpec((1, tile_r, vcout), lambda s, i: (s, i, 0)),
        compiler_params=pltpu.CompilerParams(
            dimension_semantics=("parallel", "parallel")),
    )(x, kmats, bias)
    return out[:, :R] if r_pad != R else out


def _pool_fc_kernel(x_ref, w_ref, b_ref, o_ref):
    n = pl.program_id(1)
    x = x_ref[0].astype(jnp.float32)                 # (M*Tf, V*C)
    pooled = jnp.mean(x, axis=0, keepdims=True)      # (1, V*C); 1/V folded into w
    y = jnp.dot(pooled, w_ref[0], preferred_element_type=jnp.float32) + b_ref[0]
    o_ref[0, pl.ds(n, 1), :] = y                     # fill row n of the resident block


def pool_fc_call(h, w_eff, bias, *, n_batch, group_rows):
    """x.view(N, M, C, -1).mean(3).mean(1) + Linear, for all 3 streams at once.

    h:     (3, N*M*Tf, V*C) bf16   (rows grouped per sample n)
    w_eff: (3, V*C, num_class) f32 (Linear weight tiled over V, pre-divided by V)
    bias:  (3, 1, num_class)  f32
    ->     (3, N, num_class)  f32
    """
    S, _, vc = h.shape
    num_class = w_eff.shape[-1]
    return pl.pallas_call(
        _pool_fc_kernel,
        out_shape=jax.ShapeDtypeStruct((S, n_batch, num_class), jnp.float32),
        grid=(S, n_batch),
        in_specs=[
            pl.BlockSpec((1, group_rows, vc), lambda s, n: (s, n, 0)),
            pl.BlockSpec((1, vc, num_class), lambda s, n: (s, 0, 0)),
            pl.BlockSpec((1, 1, num_class), lambda s, n: (s, 0, 0)),
        ],
        out_specs=pl.BlockSpec((1, n_batch, num_class), lambda s, n: (s, 0, 0)),
        compiler_params=pltpu.CompilerParams(
            dimension_semantics=("parallel", "arbitrary")),
    )(h, w_eff, bias)


# --------------------------------------------------------------------------- #
# Host glue: weight folding, layout conversion, parameters
# --------------------------------------------------------------------------- #
def fold_block_weights(per_stream, a_norm, V, cin, cout, stride, residual,
                       pre_scale=1.0):
    """Fold graph mixing, 1x1 projection and residual of one block into a single
    (V*cin, V*cout) matrix per stream:  out = x2d @ (A (x) W [+ I or I_V (x) Wres]) + b."""
    identity_res = residual and cin == cout and stride == 1
    kmats, biases = [], []
    for p in per_stream:
        k = jnp.kron(a_norm, p['w'])                         # graph mix (x) projection
        if residual:
            if identity_res:
                k = k + jnp.eye(V * cin, dtype=jnp.float32)
            else:
                k = k + jnp.kron(jnp.eye(V, dtype=jnp.float32), p['wres'])
        if pre_scale != 1.0:
            k = k * pre_scale                                # fold the BN input scale
        kmats.append(k)
        biases.append(jnp.tile(p['b'], V))                   # per-Cout bias tiled over V
    kstack = jnp.stack(kmats).astype(jnp.bfloat16)
    bstack = jnp.stack(biases)[:, None, :].astype(jnp.float32)
    return kstack, bstack


def to_rows(x5):
    """(N, C, T, V, M) -> (N*M*T, V*C): rows = (n, m, t), lanes = (v, c)."""
    N, C, T, V, M = x5.shape
    return jnp.transpose(x5, (0, 4, 2, 3, 1)).reshape(N * M * T, V * C)


def stride_rows(h, nm, t_cur, stride):
    """Temporal stride: keep every `stride`-th frame (rows are (n*M+m, t))."""
    S, _, vc = h.shape
    h = h.reshape(S, nm, t_cur, vc)[:, :, ::stride]
    return h.reshape(S, nm * (t_cur // stride), vc)


def init_block_params(key, cin, cout, residual, stride):
    kw, kr = jax.random.split(key)
    p = {'w': jax.random.normal(kw, (cin, cout), jnp.float32) / math.sqrt(cin),
         'b': jnp.zeros((cout,), jnp.float32)}
    if residual and not (cin == cout and stride == 1):
        p['wres'] = jax.random.normal(kr, (cin, cout), jnp.float32) / math.sqrt(cin)
    return p


def build_params(key, in_channels, base_channel, num_class):
    blockargs1 = [[in_channels, base_channel, 1, False],
                  [base_channel, base_channel, 1, True],
                  [base_channel, base_channel, 1, True]]
    blockargs2 = [[base_channel, base_channel, 1, True],
                  [base_channel, base_channel * 2, 2, True],
                  [base_channel * 2, base_channel * 2, 1, True],
                  [base_channel * 2, base_channel * 2, 1, True],
                  [base_channel * 2, base_channel * 4, 2, True],
                  [base_channel * 4, base_channel * 4, 1, True],
                  [base_channel * 4, base_channel * 4, 1, True]]
    params = {'streams1': [], 'streams2': [], 'fc': []}
    for s in range(3):                                       # num_modal streams
        ks = jax.random.fold_in(key, 100 + s)
        params['streams1'].append(
            [init_block_params(jax.random.fold_in(ks, i), ci, co, res, st)
             for i, (ci, co, st, res) in enumerate(blockargs1)])
    for s in range(3):                                       # num_stream streams
        ks = jax.random.fold_in(key, 200 + s)
        params['streams2'].append(
            [init_block_params(jax.random.fold_in(ks, i), ci, co, res, st)
             for i, (ci, co, st, res) in enumerate(blockargs2)])
    c4 = base_channel * 4
    for s in range(3):
        kf = jax.random.fold_in(key, 300 + s)
        kw, kb = jax.random.split(kf)
        wfc = jax.random.normal(kw, (c4, num_class), jnp.float32) \
            * math.sqrt(2.0 / num_class)                     # nn.init.normal_ on fc.weight
        bound = 1.0 / math.sqrt(c4)
        bfc = jax.random.uniform(kb, (num_class,), jnp.float32, -bound, bound)
        params['fc'].append({'w': wfc, 'b': bfc})
    return params, blockargs1, blockargs2


def build_adjacency(V):
    # TODO(synk): Graph class not provided; deterministic normalized chain adjacency.
    a = jnp.eye(V, dtype=jnp.float32)
    idx = jnp.arange(V - 1)
    a = a.at[idx, idx + 1].set(1.0).at[idx + 1, idx].set(1.0)
    dinv = 1.0 / jnp.sqrt(jnp.sum(a, axis=1))
    return a * dinv[:, None] * dinv[None, :]


# --------------------------------------------------------------------------- #
# Model forward (mirrors Model.forward for a 5-D (N, C, T, V, M) input)
# --------------------------------------------------------------------------- #
def model_forward(x, params, a_norm, blockargs1, blockargs2):
    N, C, T, V, M = x.shape
    nm = N * M
    scale = 1.0 / math.sqrt(1.0 + BN_EPS)          # eval-mode default-init BatchNorm

    # x2: bone differences from the ORIGINAL x (loop order preserved; v2=0 ->
    # index -1 wraps to the last joint, as in PyTorch).
    x2 = jnp.zeros_like(x)
    for v1, v2 in NTU_PAIRS:
        x2 = x2.at[:, :, :, v1 - 1].set(x[:, :, :, v1 - 1] - x[:, :, :, v2 - 1])

    # x1 and x3 alias x in the original; x is modified in place along channels.
    x3 = jnp.concatenate([x[:, 1:] - x[:, :-1], jnp.zeros_like(x[:, :1])], axis=1)
    x1 = x3

    # cat -> data_bn -> chunk(num_modal): with default eval BN this is a uniform
    # 1/sqrt(1+eps) scale (folded into the first block's weights below); the
    # modalities go straight to the (rows, V*C) lane-dense layout.
    h = jnp.stack([to_rows(x1), to_rows(x2), to_rows(x3)]).astype(jnp.bfloat16)

    t_cur = T
    for i, (cin, cout, st, res) in enumerate(blockargs1):
        if st > 1:      # TODO(synk): host-side stride; blockargs1 strides are all 1.
            h = stride_rows(h, nm, t_cur, st)
            t_cur //= st
        kst, bst = fold_block_weights(
            [params['streams1'][s][i] for s in range(3)], a_norm, V,
            cin, cout, st, res, pre_scale=scale if i == 0 else 1.0)
        h = block_call(h, kst, bst)

    # bn_mid(sum of the three modality streams): the 1/sqrt(1+eps) scale is folded
    # into the first streams2 block; the shared x_mid is fed once (S_in == 1) so
    # each row tile is only read once per stream without materializing 3 copies.
    x_mid = jnp.sum(h.astype(jnp.float32), axis=0, keepdims=True).astype(jnp.bfloat16)

    h = x_mid
    for i, (cin, cout, st, res) in enumerate(blockargs2):
        if st > 1:
            h = stride_rows(h, nm, t_cur, st)
            t_cur //= st
        kst, bst = fold_block_weights(
            [params['streams2'][s][i] for s in range(3)], a_norm, V,
            cin, cout, st, res, pre_scale=scale if i == 0 else 1.0)
        h = block_call(h, kst, bst)

    # Pooling mean(3).mean(1) + Linear heads (drop_out == identity); the 1/V of
    # the joint mean is folded into the (V*C, num_class) weight.
    w_eff = jnp.stack([jnp.tile(params['fc'][s]['w'], (V, 1)) / V for s in range(3)])
    b_fc = jnp.stack([params['fc'][s]['b'] for s in range(3)])[:, None, :]
    out = pool_fc_call(h, w_eff, b_fc, n_batch=N, group_rows=M * t_cur)
    return [out[0], out[1], out[2]]


# --------------------------------------------------------------------------- #
if __name__ == "__main__":
    # Small shapes: N=2 batch, C=3 coords, T=16 frames, V=16 joints (>=16 needed
    # by ntu_pairs), M=2 persons; base_channel=16, num_class=10.
    N, C, T, V, M = 2, 3, 16, 16, 2
    base_channel, num_class = 16, 10

    key = jax.random.PRNGKey(0)
    kx, kp = jax.random.split(key)
    x = jax.random.normal(kx, (N, C, T, V, M), jnp.float32)

    params, blockargs1, blockargs2 = build_params(kp, C, base_channel, num_class)
    a_norm = build_adjacency(V)

    fwd = jax.jit(partial(model_forward, blockargs1=blockargs1,
                          blockargs2=blockargs2))
    outs = fwd(x, params, a_norm)
    outs = [jax.block_until_ready(o) for o in outs]

    assert len(outs) == 3
    for o in outs:
        assert o.shape == (N, num_class)
        assert bool(jnp.all(jnp.isfinite(o)))
    print("KERNEL_OK")
</pallas_src>

<mosaic_0001>
module attributes {stable_mosaic.version = 11 : i64} {
  func.func @_block_kernel(%arg0: i32, %arg1: i32, %arg2: memref<1x64x48xbf16, #tpu.memory_space<vmem>>, %arg3: memref<1x48x256xbf16, #tpu.memory_space<vmem>>, %arg4: memref<1x1x256xf32, #tpu.memory_space<vmem>>, %arg5: memref<1x64x256xbf16, #tpu.memory_space<vmem>>) attributes {dimension_semantics = [#tpu.dimension_semantics<parallel>, #tpu.dimension_semantics<parallel>], iteration_bounds = array<i64: 3, 1>, scalar_prefetch = 0 : i64, scratch_operands = 0 : i64, tpu.core_type = #tpu.core_type<tc>, window_params = [{transform_indices = @transform_0, window_bounds = array<i64: 1, 64, 48>}, {transform_indices = @transform_1, window_bounds = array<i64: 1, 48, 256>}, {transform_indices = @transform_2, window_bounds = array<i64: 1, 1, 256>}, {transform_indices = @transform_3, window_bounds = array<i64: 1, 64, 256>}]} {
    %c0 = arith.constant 0 : index
    %c0_0 = arith.constant 0 : index
    %c0_1 = arith.constant 0 : index
    %0 = vector.load %arg2[%c0, %c0_0, %c0_1] : memref<1x64x48xbf16, #tpu.memory_space<vmem>>, vector<1x64x48xbf16>
    %1 = vector.shape_cast %0 : vector<1x64x48xbf16> to vector<64x48xbf16>
    %c0_2 = arith.constant 0 : index
    %c0_3 = arith.constant 0 : index
    %c0_4 = arith.constant 0 : index
    %2 = vector.load %arg3[%c0_2, %c0_3, %c0_4] : memref<1x48x256xbf16, #tpu.memory_space<vmem>>, vector<1x48x256xbf16>
    %3 = vector.shape_cast %2 : vector<1x48x256xbf16> to vector<48x256xbf16>
    %cst = arith.constant dense<0.000000e+00> : vector<64x256xf32>
    %4 = tpu.matmul %1, %3, %cst {dimension_numbers = #tpu.dot_dimension_numbers<[1], [0], [0], [1], [0, 0, 1, 1], [], []>} : vector<64x48xbf16>, vector<48x256xbf16>, vector<64x256xf32> -> vector<64x256xf32>
    %c0_5 = arith.constant 0 : index
    %c0_6 = arith.constant 0 : index
    %c0_7 = arith.constant 0 : index
    %5 = vector.load %arg4[%c0_5, %c0_6, %c0_7] : memref<1x1x256xf32, #tpu.memory_space<vmem>>, vector<1x1x256xf32>
    %6 = vector.shape_cast %5 : vector<1x1x256xf32> to vector<1x256xf32>
    %7 = vector.broadcast %6 : vector<1x256xf32> to vector<64x256xf32>
    %8 = arith.addf %4, %7 : vector<64x256xf32>
    %cst_8 = arith.constant 0.000000e+00 : f32
    %9 = vector.broadcast %cst_8 : f32 to vector<64x256xf32>
    %10 = arith.cmpf ogt, %8, %9 : vector<64x256xf32>
    %cst_9 = arith.constant 1.000000e-01 : f32
    %11 = vector.broadcast %cst_9 : f32 to vector<64x256xf32>
    %12 = arith.mulf %11, %8 : vector<64x256xf32>
    %13 = arith.select %10, %8, %12 : vector<64x256xi1>, vector<64x256xf32>
    %14 = arith.truncf %13 : vector<64x256xf32> to vector<64x256xbf16>
    %c0_10 = arith.constant 0 : index
    %c0_11 = arith.constant 0 : index
    %c0_12 = arith.constant 0 : index
    %15 = vector.load %arg5[%c0_10, %c0_11, %c0_12] : memref<1x64x256xbf16, #tpu.memory_space<vmem>>, vector<1x64x256xbf16>
    %16 = vector.shape_cast %15 : vector<1x64x256xbf16> to vector<64x256xbf16>
    %17 = vector.shape_cast %14 : vector<64x256xbf16> to vector<1x64x256xbf16>
    tpu.vector_store %arg5[%c0_10, %c0_11, %c0_12], %17 {strides = array<i32>} : memref<1x64x256xbf16, #tpu.memory_space<vmem>>, vector<1x64x256xbf16>,
    return
  }
  func.func @transform_0(%arg0: i32, %arg1: i32) -> (i32, i32, i32) {
    %c0_i32 = arith.constant 0 : i32
    %c0_i32_0 = arith.constant 0 : i32
    return %arg0, %arg1, %c0_i32 : i32, i32, i32
  }
  func.func @transform_1(%arg0: i32, %arg1: i32) -> (i32, i32, i32) {
    %c0_i32 = arith.constant 0 : i32
    %c0_i32_0 = arith.constant 0 : i32
    %c0_i32_1 = arith.constant 0 : i32
    return %arg0, %c0_i32, %c0_i32_0 : i32, i32, i32
  }
  func.func @transform_2(%arg0: i32, %arg1: i32) -> (i32, i32, i32) {
    %c0_i32 = arith.constant 0 : i32
    %c0_i32_0 = arith.constant 0 : i32
    %c0_i32_1 = arith.constant 0 : i32
    return %arg0, %c0_i32, %c0_i32_0 : i32, i32, i32
  }
  func.func @transform_3(%arg0: i32, %arg1: i32) -> (i32, i32, i32) {
    %c0_i32 = arith.constant 0 : i32
    %c0_i32_0 = arith.constant 0 : i32
    return %arg0, %arg1, %c0_i32 : i32, i32, i32
  }
}

module attributes {stable_mosaic.version = 11 : i64} {
  func.func @_block_kernel(%arg0: i32, %arg1: i32, %arg2: memref<1x64x256xbf16, #tpu.memory_space<vmem>>, %arg3: memref<1x256x256xbf16, #tpu.memory_space<vmem>>, %arg4: memref<1x1x256xf32, #tpu.memory_space<vmem>>, %arg5: memref<1x64x256xbf16, #tpu.memory_space<vmem>>) attributes {dimension_semantics = [#tpu.dimension_semantics<parallel>, #tpu.dimension_semantics<parallel>], iteration_bounds = array<i64: 3, 1>, scalar_prefetch = 0 : i64, scratch_operands = 0 : i64, tpu.core_type = #tpu.core_type<tc>, window_params = [{transform_indices = @transform_0, window_bounds = array<i64: 1, 64, 256>}, {transform_indices = @transform_1, window_bounds = array<i64: 1, 256, 256>}, {transform_indices = @transform_2, window_bounds = array<i64: 1, 1, 256>}, {transform_indices = @transform_3, window_bounds = array<i64: 1, 64, 256>}]} {
    %c0 = arith.constant 0 : index
    %c0_0 = arith.constant 0 : index
    %c0_1 = arith.constant 0 : index
    %0 = vector.load %arg2[%c0, %c0_0, %c0_1] : memref<1x64x256xbf16, #tpu.memory_space<vmem>>, vector<1x64x256xbf16>
    %1 = vector.shape_cast %0 : vector<1x64x256xbf16> to vector<64x256xbf16>
    %c0_2 = arith.constant 0 : index
    %c0_3 = arith.constant 0 : index
    %c0_4 = arith.constant 0 : index
    %2 = vector.load %arg3[%c0_2, %c0_3, %c0_4] : memref<1x256x256xbf16, #tpu.memory_space<vmem>>, vector<1x256x256xbf16>
    %3 = vector.shape_cast %2 : vector<1x256x256xbf16> to vector<256x256xbf16>
    %cst = arith.constant dense<0.000000e+00> : vector<64x256xf32>
    %4 = tpu.matmul %1, %3, %cst {dimension_numbers = #tpu.dot_dimension_numbers<[1], [0], [0], [1], [0, 0, 1, 1], [], []>} : vector<64x256xbf16>, vector<256x256xbf16>, vector<64x256xf32> -> vector<64x256xf32>
    %c0_5 = arith.constant 0 : index
    %c0_6 = arith.constant 0 : index
    %c0_7 = arith.constant 0 : index
    %5 = vector.load %arg4[%c0_5, %c0_6, %c0_7] : memref<1x1x256xf32, #tpu.memory_space<vmem>>, vector<1x1x256xf32>
    %6 = vector.shape_cast %5 : vector<1x1x256xf32> to vector<1x256xf32>
    %7 = vector.broadcast %6 : vector<1x256xf32> to vector<64x256xf32>
    %8 = arith.addf %4, %7 : vector<64x256xf32>
    %cst_8 = arith.constant 0.000000e+00 : f32
    %9 = vector.broadcast %cst_8 : f32 to vector<64x256xf32>
    %10 = arith.cmpf ogt, %8, %9 : vector<64x256xf32>
    %cst_9 = arith.constant 1.000000e-01 : f32
    %11 = vector.broadcast %cst_9 : f32 to vector<64x256xf32>
    %12 = arith.mulf %11, %8 : vector<64x256xf32>
    %13 = arith.select %10, %8, %12 : vector<64x256xi1>, vector<64x256xf32>
    %14 = arith.truncf %13 : vector<64x256xf32> to vector<64x256xbf16>
    %c0_10 = arith.constant 0 : index
    %c0_11 = arith.constant 0 : index
    %c0_12 = arith.constant 0 : index
    %15 = vector.load %arg5[%c0_10, %c0_11, %c0_12] : memref<1x64x256xbf16, #tpu.memory_space<vmem>>, vector<1x64x256xbf16>
    %16 = vector.shape_cast %15 : vector<1x64x256xbf16> to vector<64x256xbf16>
    %17 = vector.shape_cast %14 : vector<64x256xbf16> to vector<1x64x256xbf16>
    tpu.vector_store %arg5[%c0_10, %c0_11, %c0_12], %17 {strides = array<i32>} : memref<1x64x256xbf16, #tpu.memory_space<vmem>>, vector<1x64x256xbf16>,
    return
  }
  func.func @transform_0(%arg0: i32, %arg1: i32) -> (i32, i32, i32) {
    %c0_i32 = arith.constant 0 : i32
    %c0_i32_0 = arith.constant 0 : i32
    return %arg0, %arg1, %c0_i32 : i32, i32, i32
  }
  func.func @transform_1(%arg0: i32, %arg1: i32) -> (i32, i32, i32) {
    %c0_i32 = arith.constant 0 : i32
    %c0_i32_0 = arith.constant 0 : i32
    %c0_i32_1 = arith.constant 0 : i32
    return %arg0, %c0_i32, %c0_i32_0 : i32, i32, i32
  }
  func.func @transform_2(%arg0: i32, %arg1: i32) -> (i32, i32, i32) {
    %c0_i32 = arith.constant 0 : i32
    %c0_i32_0 = arith.constant 0 : i32
    %c0_i32_1 = arith.constant 0 : i32
    return %arg0, %c0_i32, %c0_i32_0 : i32, i32, i32
  }
  func.func @transform_3(%arg0: i32, %arg1: i32) -> (i32, i32, i32) {
    %c0_i32 = arith.constant 0 : i32
    %c0_i32_0 = arith.constant 0 : i32
    return %arg0, %arg1, %c0_i32 : i32, i32, i32
  }
}

module attributes {stable_mosaic.version = 11 : i64} {
  func.func @_block_kernel(%arg0: i32, %arg1: i32, %arg2: memref<1x64x256xbf16, #tpu.memory_space<vmem>>, %arg3: memref<1x256x256xbf16, #tpu.memory_space<vmem>>, %arg4: memref<1x1x256xf32, #tpu.memory_space<vmem>>, %arg5: memref<1x64x256xbf16, #tpu.memory_space<vmem>>) attributes {dimension_semantics = [#tpu.dimension_semantics<parallel>, #tpu.dimension_semantics<parallel>], iteration_bounds = array<i64: 3, 1>, scalar_prefetch = 0 : i64, scratch_operands = 0 : i64, tpu.core_type = #tpu.core_type<tc>, window_params = [{transform_indices = @transform_0, window_bounds = array<i64: 1, 64, 256>}, {transform_indices = @transform_1, window_bounds = array<i64: 1, 256, 256>}, {transform_indices = @transform_2, window_bounds = array<i64: 1, 1, 256>}, {transform_indices = @transform_3, window_bounds = array<i64: 1, 64, 256>}]} {
    %c0 = arith.constant 0 : index
    %c0_0 = arith.constant 0 : index
    %c0_1 = arith.constant 0 : index
    %0 = vector.load %arg2[%c0, %c0_0, %c0_1] : memref<1x64x256xbf16, #tpu.memory_space<vmem>>, vector<1x64x256xbf16>
    %1 = vector.shape_cast %0 : vector<1x64x256xbf16> to vector<64x256xbf16>
    %c0_2 = arith.constant 0 : index
    %c0_3 = arith.constant 0 : index
    %c0_4 = arith.constant 0 : index
    %2 = vector.load %arg3[%c0_2, %c0_3, %c0_4] : memref<1x256x256xbf16, #tpu.memory_space<vmem>>, vector<1x256x256xbf16>
    %3 = vector.shape_cast %2 : vector<1x256x256xbf16> to vector<256x256xbf16>
    %cst = arith.constant dense<0.000000e+00> : vector<64x256xf32>
    %4 = tpu.matmul %1, %3, %cst {dimension_numbers = #tpu.dot_dimension_numbers<[1], [0], [0], [1], [0, 0, 1, 1], [], []>} : vector<64x256xbf16>, vector<256x256xbf16>, vector<64x256xf32> -> vector<64x256xf32>
    %c0_5 = arith.constant 0 : index
    %c0_6 = arith.constant 0 : index
    %c0_7 = arith.constant 0 : index
    %5 = vector.load %arg4[%c0_5, %c0_6, %c0_7] : memref<1x1x256xf32, #tpu.memory_space<vmem>>, vector<1x1x256xf32>
    %6 = vector.shape_cast %5 : vector<1x1x256xf32> to vector<1x256xf32>
    %7 = vector.broadcast %6 : vector<1x256xf32> to vector<64x256xf32>
    %8 = arith.addf %4, %7 : vector<64x256xf32>
    %cst_8 = arith.constant 0.000000e+00 : f32
    %9 = vector.broadcast %cst_8 : f32 to vector<64x256xf32>
    %10 = arith.cmpf ogt, %8, %9 : vector<64x256xf32>
    %cst_9 = arith.constant 1.000000e-01 : f32
    %11 = vector.broadcast %cst_9 : f32 to vector<64x256xf32>
    %12 = arith.mulf %11, %8 : vector<64x256xf32>
    %13 = arith.select %10, %8, %12 : vector<64x256xi1>, vector<64x256xf32>
    %14 = arith.truncf %13 : vector<64x256xf32> to vector<64x256xbf16>
    %c0_10 = arith.constant 0 : index
    %c0_11 = arith.constant 0 : index
    %c0_12 = arith.constant 0 : index
    %15 = vector.load %arg5[%c0_10, %c0_11, %c0_12] : memref<1x64x256xbf16, #tpu.memory_space<vmem>>, vector<1x64x256xbf16>
    %16 = vector.shape_cast %15 : vector<1x64x256xbf16> to vector<64x256xbf16>
    %17 = vector.shape_cast %14 : vector<64x256xbf16> to vector<1x64x256xbf16>
    tpu.vector_store %arg5[%c0_10, %c0_11, %c0_12], %17 {strides = array<i32>} : memref<1x64x256xbf16, #tpu.memory_space<vmem>>, vector<1x64x256xbf16>,
    return
  }
  func.func @transform_0(%arg0: i32, %arg1: i32) -> (i32, i32, i32) {
    %c0_i32 = arith.constant 0 : i32
    %c0_i32_0 = arith.constant 0 : i32
    %c0_i32_1 = arith.constant 0 : i32
    return %c0_i32, %arg1, %c0_i32_0 : i32, i32, i32
  }
  func.func @transform_1(%arg0: i32, %arg1: i32) -> (i32, i32, i32) {
    %c0_i32 = arith.constant 0 : i32
    %c0_i32_0 = arith.constant 0 : i32
    %c0_i32_1 = arith.constant 0 : i32
    return %arg0, %c0_i32, %c0_i32_0 : i32, i32, i32
  }
  func.func @transform_2(%arg0: i32, %arg1: i32) -> (i32, i32, i32) {
    %c0_i32 = arith.constant 0 : i32
    %c0_i32_0 = arith.constant 0 : i32
    %c0_i32_1 = arith.constant 0 : i32
    return %arg0, %c0_i32, %c0_i32_0 : i32, i32, i32
  }
  func.func @transform_3(%arg0: i32, %arg1: i32) -> (i32, i32, i32) {
    %c0_i32 = arith.constant 0 : i32
    %c0_i32_0 = arith.constant 0 : i32
    return %arg0, %arg1, %c0_i32 : i32, i32, i32
  }
}

module attributes {stable_mosaic.version = 11 : i64} {
  func.func @_block_kernel(%arg0: i32, %arg1: i32, %arg2: memref<1x32x256xbf16, #tpu.memory_space<vmem>>, %arg3: memref<1x256x512xbf16, #tpu.memory_space<vmem>>, %arg4: memref<1x1x512xf32, #tpu.memory_space<vmem>>, %arg5: memref<1x32x512xbf16, #tpu.memory_space<vmem>>) attributes {dimension_semantics = [#tpu.dimension_semantics<parallel>, #tpu.dimension_semantics<parallel>], iteration_bounds = array<i64: 3, 1>, scalar_prefetch = 0 : i64, scratch_operands = 0 : i64, tpu.core_type = #tpu.core_type<tc>, window_params = [{transform_indices = @transform_0, window_bounds = array<i64: 1, 32, 256>}, {transform_indices = @transform_1, window_bounds = array<i64: 1, 256, 512>}, {transform_indices = @transform_2, window_bounds = array<i64: 1, 1, 512>}, {transform_indices = @transform_3, window_bounds = array<i64: 1, 32, 512>}]} {
    %c0 = arith.constant 0 : index
    %c0_0 = arith.constant 0 : index
    %c0_1 = arith.constant 0 : index
    %0 = vector.load %arg2[%c0, %c0_0, %c0_1] : memref<1x32x256xbf16, #tpu.memory_space<vmem>>, vector<1x32x256xbf16>
    %1 = vector.shape_cast %0 : vector<1x32x256xbf16> to vector<32x256xbf16>
    %c0_2 = arith.constant 0 : index
    %c0_3 = arith.constant 0 : index
    %c0_4 = arith.constant 0 : index
    %2 = vector.load %arg3[%c0_2, %c0_3, %c0_4] : memref<1x256x512xbf16, #tpu.memory_space<vmem>>, vector<1x256x512xbf16>
    %3 = vector.shape_cast %2 : vector<1x256x512xbf16> to vector<256x512xbf16>
    %cst = arith.constant dense<0.000000e+00> : vector<32x512xf32>
    %4 = tpu.matmul %1, %3, %cst {dimension_numbers = #tpu.dot_dimension_numbers<[1], [0], [0], [1], [0, 0, 1, 1], [], []>} : vector<32x256xbf16>, vector<256x512xbf16>, vector<32x512xf32> -> vector<32x512xf32>
    %c0_5 = arith.constant 0 : index
    %c0_6 = arith.constant 0 : index
    %c0_7 = arith.constant 0 : index
    %5 = vector.load %arg4[%c0_5, %c0_6, %c0_7] : memref<1x1x512xf32, #tpu.memory_space<vmem>>, vector<1x1x512xf32>
    %6 = vector.shape_cast %5 : vector<1x1x512xf32> to vector<1x512xf32>
    %7 = vector.broadcast %6 : vector<1x512xf32> to vector<32x512xf32>
    %8 = arith.addf %4, %7 : vector<32x512xf32>
    %cst_8 = arith.constant 0.000000e+00 : f32
    %9 = vector.broadcast %cst_8 : f32 to vector<32x512xf32>
    %10 = arith.cmpf ogt, %8, %9 : vector<32x512xf32>
    %cst_9 = arith.constant 1.000000e-01 : f32
    %11 = vector.broadcast %cst_9 : f32 to vector<32x512xf32>
    %12 = arith.mulf %11, %8 : vector<32x512xf32>
    %13 = arith.select %10, %8, %12 : vector<32x512xi1>, vector<32x512xf32>
    %14 = arith.truncf %13 : vector<32x512xf32> to vector<32x512xbf16>
    %c0_10 = arith.constant 0 : index
    %c0_11 = arith.constant 0 : index
    %c0_12 = arith.constant 0 : index
    %15 = vector.load %arg5[%c0_10, %c0_11, %c0_12] : memref<1x32x512xbf16, #tpu.memory_space<vmem>>, vector<1x32x512xbf16>
    %16 = vector.shape_cast %15 : vector<1x32x512xbf16> to vector<32x512xbf16>
    %17 = vector.shape_cast %14 : vector<32x512xbf16> to vector<1x32x512xbf16>
    tpu.vector_store %arg5[%c0_10, %c0_11, %c0_12], %17 {strides = array<i32>} : memref<1x32x512xbf16, #tpu.memory_space<vmem>>, vector<1x32x512xbf16>,
    return
  }
  func.func @transform_0(%arg0: i32, %arg1: i32) -> (i32, i32, i32) {
    %c0_i32 = arith.constant 0 : i32
    %c0_i32_0 = arith.constant 0 : i32
    return %arg0, %arg1, %c0_i32 : i32, i32, i32
  }
  func.func @transform_1(%arg0: i32, %arg1: i32) -> (i32, i32, i32) {
    %c0_i32 = arith.constant 0 : i32
    %c0_i32_0 = arith.constant 0 : i32
    %c0_i32_1 = arith.constant 0 : i32
    return %arg0, %c0_i32, %c0_i32_0 : i32, i32, i32
  }
  func.func @transform_2(%arg0: i32, %arg1: i32) -> (i32, i32, i32) {
    %c0_i32 = arith.constant 0 : i32
    %c0_i32_0 = arith.constant 0 : i32
    %c0_i32_1 = arith.constant 0 : i32
    return %arg0, %c0_i32, %c0_i32_0 : i32, i32, i32
  }
  func.func @transform_3(%arg0: i32, %arg1: i32) -> (i32, i32, i32) {
    %c0_i32 = arith.constant 0 : i32
    %c0_i32_0 = arith.constant 0 : i32
    return %arg0, %arg1, %c0_i32 : i32, i32, i32
  }
}

module attributes {stable_mosaic.version = 11 : i64} {
  func.func @_block_kernel(%arg0: i32, %arg1: i32, %arg2: memref<1x32x512xbf16, #tpu.memory_space<vmem>>, %arg3: memref<1x512x512xbf16, #tpu.memory_space<vmem>>, %arg4: memref<1x1x512xf32, #tpu.memory_space<vmem>>, %arg5: memref<1x32x512xbf16, #tpu.memory_space<vmem>>) attributes {dimension_semantics = [#tpu.dimension_semantics<parallel>, #tpu.dimension_semantics<parallel>], iteration_bounds = array<i64: 3, 1>, scalar_prefetch = 0 : i64, scratch_operands = 0 : i64, tpu.core_type = #tpu.core_type<tc>, window_params = [{transform_indices = @transform_0, window_bounds = array<i64: 1, 32, 512>}, {transform_indices = @transform_1, window_bounds = array<i64: 1, 512, 512>}, {transform_indices = @transform_2, window_bounds = array<i64: 1, 1, 512>}, {transform_indices = @transform_3, window_bounds = array<i64: 1, 32, 512>}]} {
    %c0 = arith.constant 0 : index
    %c0_0 = arith.constant 0 : index
    %c0_1 = arith.constant 0 : index
    %0 = vector.load %arg2[%c0, %c0_0, %c0_1] : memref<1x32x512xbf16, #tpu.memory_space<vmem>>, vector<1x32x512xbf16>
    %1 = vector.shape_cast %0 : vector<1x32x512xbf16> to vector<32x512xbf16>
    %c0_2 = arith.constant 0 : index
    %c0_3 = arith.constant 0 : index
    %c0_4 = arith.constant 0 : index
    %2 = vector.load %arg3[%c0_2, %c0_3, %c0_4] : memref<1x512x512xbf16, #tpu.memory_space<vmem>>, vector<1x512x512xbf16>
    %3 = vector.shape_cast %2 : vector<1x512x512xbf16> to vector<512x512xbf16>
    %cst = arith.constant dense<0.000000e+00> : vector<32x512xf32>
    %4 = tpu.matmul %1, %3, %cst {dimension_numbers = #tpu.dot_dimension_numbers<[1], [0], [0], [1], [0, 0, 1, 1], [], []>} : vector<32x512xbf16>, vector<512x512xbf16>, vector<32x512xf32> -> vector<32x512xf32>
    %c0_5 = arith.constant 0 : index
    %c0_6 = arith.constant 0 : index
    %c0_7 = arith.constant 0 : index
    %5 = vector.load %arg4[%c0_5, %c0_6, %c0_7] : memref<1x1x512xf32, #tpu.memory_space<vmem>>, vector<1x1x512xf32>
    %6 = vector.shape_cast %5 : vector<1x1x512xf32> to vector<1x512xf32>
    %7 = vector.broadcast %6 : vector<1x512xf32> to vector<32x512xf32>
    %8 = arith.addf %4, %7 : vector<32x512xf32>
    %cst_8 = arith.constant 0.000000e+00 : f32
    %9 = vector.broadcast %cst_8 : f32 to vector<32x512xf32>
    %10 = arith.cmpf ogt, %8, %9 : vector<32x512xf32>
    %cst_9 = arith.constant 1.000000e-01 : f32
    %11 = vector.broadcast %cst_9 : f32 to vector<32x512xf32>
    %12 = arith.mulf %11, %8 : vector<32x512xf32>
    %13 = arith.select %10, %8, %12 : vector<32x512xi1>, vector<32x512xf32>
    %14 = arith.truncf %13 : vector<32x512xf32> to vector<32x512xbf16>
    %c0_10 = arith.constant 0 : index
    %c0_11 = arith.constant 0 : index
    %c0_12 = arith.constant 0 : index
    %15 = vector.load %arg5[%c0_10, %c0_11, %c0_12] : memref<1x32x512xbf16, #tpu.memory_space<vmem>>, vector<1x32x512xbf16>
    %16 = vector.shape_cast %15 : vector<1x32x512xbf16> to vector<32x512xbf16>
    %17 = vector.shape_cast %14 : vector<32x512xbf16> to vector<1x32x512xbf16>
    tpu.vector_store %arg5[%c0_10, %c0_11, %c0_12], %17 {strides = array<i32>} : memref<1x32x512xbf16, #tpu.memory_space<vmem>>, vector<1x32x512xbf16>,
    return
  }
  func.func @transform_0(%arg0: i32, %arg1: i32) -> (i32, i32, i32) {
    %c0_i32 = arith.constant 0 : i32
    %c0_i32_0 = arith.constant 0 : i32
    return %arg0, %arg1, %c0_i32 : i32, i32, i32
  }
  func.func @transform_1(%arg0: i32, %arg1: i32) -> (i32, i32, i32) {
    %c0_i32 = arith.constant 0 : i32
    %c0_i32_0 = arith.constant 0 : i32
    %c0_i32_1 = arith.constant 0 : i32
    return %arg0, %c0_i32, %c0_i32_0 : i32, i32, i32
  }
  func.func @transform_2(%arg0: i32, %arg1: i32) -> (i32, i32, i32) {
    %c0_i32 = arith.constant 0 : i32
    %c0_i32_0 = arith.constant 0 : i32
    %c0_i32_1 = arith.constant 0 : i32
    return %arg0, %c0_i32, %c0_i32_0 : i32, i32, i32
  }
  func.func @transform_3(%arg0: i32, %arg1: i32) -> (i32, i32, i32) {
    %c0_i32 = arith.constant 0 : i32
    %c0_i32_0 = arith.constant 0 : i32
    return %arg0, %arg1, %c0_i32 : i32, i32, i32
  }
}

module attributes {stable_mosaic.version = 11 : i64} {
  func.func @_block_kernel(%arg0: i32, %arg1: i32, %arg2: memref<1x16x512xbf16, #tpu.memory_space<vmem>>, %arg3: memref<1x512x1024xbf16, #tpu.memory_space<vmem>>, %arg4: memref<1x1x1024xf32, #tpu.memory_space<vmem>>, %arg5: memref<1x16x1024xbf16, #tpu.memory_space<vmem>>) attributes {dimension_semantics = [#tpu.dimension_semantics<parallel>, #tpu.dimension_semantics<parallel>], iteration_bounds = array<i64: 3, 1>, scalar_prefetch = 0 : i64, scratch_operands = 0 : i64, tpu.core_type = #tpu.core_type<tc>, window_params = [{transform_indices = @transform_0, window_bounds = array<i64: 1, 16, 512>}, {transform_indices = @transform_1, window_bounds = array<i64: 1, 512, 1024>}, {transform_indices = @transform_2, window_bounds = array<i64: 1, 1, 1024>}, {transform_indices = @transform_3, window_bounds = array<i64: 1, 16, 1024>}]} {
    %c0 = arith.constant 0 : index
    %c0_0 = arith.constant 0 : index
    %c0_1 = arith.constant 0 : index
    %0 = vector.load %arg2[%c0, %c0_0, %c0_1] : memref<1x16x512xbf16, #tpu.memory_space<vmem>>, vector<1x16x512xbf16>
    %1 = vector.shape_cast %0 : vector<1x16x512xbf16> to vector<16x512xbf16>
    %c0_2 = arith.constant 0 : index
    %c0_3 = arith.constant 0 : index
    %c0_4 = arith.constant 0 : index
    %2 = vector.load %arg3[%c0_2, %c0_3, %c0_4] : memref<1x512x1024xbf16, #tpu.memory_space<vmem>>, vector<1x512x1024xbf16>
    %3 = vector.shape_cast %2 : vector<1x512x1024xbf16> to vector<512x1024xbf16>
    %cst = arith.constant dense<0.000000e+00> : vector<16x1024xf32>
    %4 = tpu.matmul %1, %3, %cst {dimension_numbers = #tpu.dot_dimension_numbers<[1], [0], [0], [1], [0, 0, 1, 1], [], []>} : vector<16x512xbf16>, vector<512x1024xbf16>, vector<16x1024xf32> -> vector<16x1024xf32>
    %c0_5 = arith.constant 0 : index
    %c0_6 = arith.constant 0 : index
    %c0_7 = arith.constant 0 : index
    %5 = vector.load %arg4[%c0_5, %c0_6, %c0_7] : memref<1x1x1024xf32, #tpu.memory_space<vmem>>, vector<1x1x1024xf32>
    %6 = vector.shape_cast %5 : vector<1x1x1024xf32> to vector<1x1024xf32>
    %7 = vector.broadcast %6 : vector<1x1024xf32> to vector<16x1024xf32>
    %8 = arith.addf %4, %7 : vector<16x1024xf32>
    %cst_8 = arith.constant 0.000000e+00 : f32
    %9 = vector.broadcast %cst_8 : f32 to vector<16x1024xf32>
    %10 = arith.cmpf ogt, %8, %9 : vector<16x1024xf32>
    %cst_9 = arith.constant 1.000000e-01 : f32
    %11 = vector.broadcast %cst_9 : f32 to vector<16x1024xf32>
    %12 = arith.mulf %11, %8 : vector<16x1024xf32>
    %13 = arith.select %10, %8, %12 : vector<16x1024xi1>, vector<16x1024xf32>
    %14 = arith.truncf %13 : vector<16x1024xf32> to vector<16x1024xbf16>
    %c0_10 = arith.constant 0 : index
    %c0_11 = arith.constant 0 : index
    %c0_12 = arith.constant 0 : index
    %15 = vector.load %arg5[%c0_10, %c0_11, %c0_12] : memref<1x16x1024xbf16, #tpu.memory_space<vmem>>, vector<1x16x1024xbf16>
    %16 = vector.shape_cast %15 : vector<1x16x1024xbf16> to vector<16x1024xbf16>
    %17 = vector.shape_cast %14 : vector<16x1024xbf16> to vector<1x16x1024xbf16>
    tpu.vector_store %arg5[%c0_10, %c0_11, %c0_12], %17 {strides = array<i32>} : memref<1x16x1024xbf16, #tpu.memory_space<vmem>>, vector<1x16x1024xbf16>,
    return
  }
  func.func @transform_0(%arg0: i32, %arg1: i32) -> (i32, i32, i32) {
    %c0_i32 = arith.constant 0 : i32
    %c0_i32_0 = arith.constant 0 : i32
    return %arg0, %arg1, %c0_i32 : i32, i32, i32
  }
  func.func @transform_1(%arg0: i32, %arg1: i32) -> (i32, i32, i32) {
    %c0_i32 = arith.constant 0 : i32
    %c0_i32_0 = arith.constant 0 : i32
    %c0_i32_1 = arith.constant 0 : i32
    return %arg0, %c0_i32, %c0_i32_0 : i32, i32, i32
  }
  func.func @transform_2(%arg0: i32, %arg1: i32) -> (i32, i32, i32) {
    %c0_i32 = arith.constant 0 : i32
    %c0_i32_0 = arith.constant 0 : i32
    %c0_i32_1 = arith.constant 0 : i32
    return %arg0, %c0_i32, %c0_i32_0 : i32, i32, i32
  }
  func.func @transform_3(%arg0: i32, %arg1: i32) -> (i32, i32, i32) {
    %c0_i32 = arith.constant 0 : i32
    %c0_i32_0 = arith.constant 0 : i32
    return %arg0, %arg1, %c0_i32 : i32, i32, i32
  }
}

module attributes {stable_mosaic.version = 11 : i64} {
  func.func @_block_kernel(%arg0: i32, %arg1: i32, %arg2: memref<1x16x1024xbf16, #tpu.memory_space<vmem>>, %arg3: memref<1x1024x1024xbf16, #tpu.memory_space<vmem>>, %arg4: memref<1x1x1024xf32, #tpu.memory_space<vmem>>, %arg5: memref<1x16x1024xbf16, #tpu.memory_space<vmem>>) attributes {dimension_semantics = [#tpu.dimension_semantics<parallel>, #tpu.dimension_semantics<parallel>], iteration_bounds = array<i64: 3, 1>, scalar_prefetch = 0 : i64, scratch_operands = 0 : i64, tpu.core_type = #tpu.core_type<tc>, window_params = [{transform_indices = @transform_0, window_bounds = array<i64: 1, 16, 1024>}, {transform_indices = @transform_1, window_bounds = array<i64: 1, 1024, 1024>}, {transform_indices = @transform_2, window_bounds = array<i64: 1, 1, 1024>}, {transform_indices = @transform_3, window_bounds = array<i64: 1, 16, 1024>}]} {
    %c0 = arith.constant 0 : index
    %c0_0 = arith.constant 0 : index
    %c0_1 = arith.constant 0 : index
    %0 = vector.load %arg2[%c0, %c0_0, %c0_1] : memref<1x16x1024xbf16, #tpu.memory_space<vmem>>, vector<1x16x1024xbf16>
    %1 = vector.shape_cast %0 : vector<1x16x1024xbf16> to vector<16x1024xbf16>
    %c0_2 = arith.constant 0 : index
    %c0_3 = arith.constant 0 : index
    %c0_4 = arith.constant 0 : index
    %2 = vector.load %arg3[%c0_2, %c0_3, %c0_4] : memref<1x1024x1024xbf16, #tpu.memory_space<vmem>>, vector<1x1024x1024xbf16>
    %3 = vector.shape_cast %2 : vector<1x1024x1024xbf16> to vector<1024x1024xbf16>
    %cst = arith.constant dense<0.000000e+00> : vector<16x1024xf32>
    %4 = tpu.matmul %1, %3, %cst {dimension_numbers = #tpu.dot_dimension_numbers<[1], [0], [0], [1], [0, 0, 1, 1], [], []>} : vector<16x1024xbf16>, vector<1024x1024xbf16>, vector<16x1024xf32> -> vector<16x1024xf32>
    %c0_5 = arith.constant 0 : index
    %c0_6 = arith.constant 0 : index
    %c0_7 = arith.constant 0 : index
    %5 = vector.load %arg4[%c0_5, %c0_6, %c0_7] : memref<1x1x1024xf32, #tpu.memory_space<vmem>>, vector<1x1x1024xf32>
    %6 = vector.shape_cast %5 : vector<1x1x1024xf32> to vector<1x1024xf32>
    %7 = vector.broadcast %6 : vector<1x1024xf32> to vector<16x1024xf32>
    %8 = arith.addf %4, %7 : vector<16x1024xf32>
    %cst_8 = arith.constant 0.000000e+00 : f32
    %9 = vector.broadcast %cst_8 : f32 to vector<16x1024xf32>
    %10 = arith.cmpf ogt, %8, %9 : vector<16x1024xf32>
    %cst_9 = arith.constant 1.000000e-01 : f32
    %11 = vector.broadcast %cst_9 : f32 to vector<16x1024xf32>
    %12 = arith.mulf %11, %8 : vector<16x1024xf32>
    %13 = arith.select %10, %8, %12 : vector<16x1024xi1>, vector<16x1024xf32>
    %14 = arith.truncf %13 : vector<16x1024xf32> to vector<16x1024xbf16>
    %c0_10 = arith.constant 0 : index
    %c0_11 = arith.constant 0 : index
    %c0_12 = arith.constant 0 : index
    %15 = vector.load %arg5[%c0_10, %c0_11, %c0_12] : memref<1x16x1024xbf16, #tpu.memory_space<vmem>>, vector<1x16x1024xbf16>
    %16 = vector.shape_cast %15 : vector<1x16x1024xbf16> to vector<16x1024xbf16>
    %17 = vector.shape_cast %14 : vector<16x1024xbf16> to vector<1x16x1024xbf16>
    tpu.vector_store %arg5[%c0_10, %c0_11, %c0_12], %17 {strides = array<i32>} : memref<1x16x1024xbf16, #tpu.memory_space<vmem>>, vector<1x16x1024xbf16>,
    return
  }
  func.func @transform_0(%arg0: i32, %arg1: i32) -> (i32, i32, i32) {
    %c0_i32 = arith.constant 0 : i32
    %c0_i32_0 = arith.constant 0 : i32
    return %arg0, %arg1, %c0_i32 : i32, i32, i32
  }
  func.func @transform_1(%arg0: i32, %arg1: i32) -> (i32, i32, i32) {
    %c0_i32 = arith.constant 0 : i32
    %c0_i32_0 = arith.constant 0 : i32
    %c0_i32_1 = arith.constant 0 : i32
    return %arg0, %c0_i32, %c0_i32_0 : i32, i32, i32
  }
  func.func @transform_2(%arg0: i32, %arg1: i32) -> (i32, i32, i32) {
    %c0_i32 = arith.constant 0 : i32
    %c0_i32_0 = arith.constant 0 : i32
    %c0_i32_1 = arith.constant 0 : i32
    return %arg0, %c0_i32, %c0_i32_0 : i32, i32, i32
  }
  func.func @transform_3(%arg0: i32, %arg1: i32) -> (i32, i32, i32) {
    %c0_i32 = arith.constant 0 : i32
    %c0_i32_0 = arith.constant 0 : i32
    return %arg0, %arg1, %c0_i32 : i32, i32, i32
  }
}

module attributes {stable_mosaic.version = 11 : i64} {
  func.func @_pool_fc_kernel(%arg0: i32, %arg1: i32, %arg2: memref<1x8x1024xbf16, #tpu.memory_space<vmem>>, %arg3: memref<1x1024x10xf32, #tpu.memory_space<vmem>>, %arg4: memref<1x1x10xf32, #tpu.memory_space<vmem>>, %arg5: memref<1x2x10xf32, #tpu.memory_space<vmem>>) attributes {dimension_semantics = [#tpu.dimension_semantics<parallel>, #tpu.dimension_semantics<arbitrary>], iteration_bounds = array<i64: 3, 2>, scalar_prefetch = 0 : i64, scratch_operands = 0 : i64, tpu.core_type = #tpu.core_type<tc>, window_params = [{transform_indices = @transform_0, window_bounds = array<i64: 1, 8, 1024>}, {transform_indices = @transform_1, window_bounds = array<i64: 1, 1024, 10>}, {transform_indices = @transform_2, window_bounds = array<i64: 1, 1, 10>}, {transform_indices = @transform_3, window_bounds = array<i64: 1, 2, 10>}]} {
    %c0 = arith.constant 0 : index
    %c0_0 = arith.constant 0 : index
    %c0_1 = arith.constant 0 : index
    %0 = vector.load %arg2[%c0, %c0_0, %c0_1] : memref<1x8x1024xbf16, #tpu.memory_space<vmem>>, vector<1x8x1024xbf16>
    %1 = vector.shape_cast %0 : vector<1x8x1024xbf16> to vector<8x1024xbf16>
    %2 = arith.extf %1 : vector<8x1024xbf16> to vector<8x1024xf32>
    %cst = arith.constant dense<0.000000e+00> : vector<1024xf32>
    %3 = vector.multi_reduction <add>, %2, %cst [0] : vector<8x1024xf32> to vector<1024xf32>
    %4 = vector.shape_cast %3 : vector<1024xf32> to vector<1x1024xf32>
    %cst_2 = arith.constant 8.000000e+00 : f32
    %5 = vector.broadcast %cst_2 : f32 to vector<1x1024xf32>
    %6 = arith.divf %4, %5 : vector<1x1024xf32>
    %c0_3 = arith.constant 0 : index
    %c0_4 = arith.constant 0 : index
    %c0_5 = arith.constant 0 : index
    %7 = vector.load %arg3[%c0_3, %c0_4, %c0_5] : memref<1x1024x10xf32, #tpu.memory_space<vmem>>, vector<1x1024x10xf32>
    %8 = vector.shape_cast %7 : vector<1x1024x10xf32> to vector<1024x10xf32>
    %cst_6 = arith.constant dense<0.000000e+00> : vector<1x10xf32>
    %9 = tpu.matmul %6, %8, %cst_6 {dimension_numbers = #tpu.dot_dimension_numbers<[1], [0], [0], [1], [0, 0, 1, 1], [], []>} : vector<1x1024xf32>, vector<1024x10xf32>, vector<1x10xf32> -> vector<1x10xf32>
    %c0_7 = arith.constant 0 : index
    %c0_8 = arith.constant 0 : index
    %c0_9 = arith.constant 0 : index
    %10 = vector.load %arg4[%c0_7, %c0_8, %c0_9] : memref<1x1x10xf32, #tpu.memory_space<vmem>>, vector<1x1x10xf32>
    %11 = vector.shape_cast %10 : vector<1x1x10xf32> to vector<1x10xf32>
    %12 = arith.addf %9, %11 : vector<1x10xf32>
    %c0_10 = arith.constant 0 : index
    %13 = arith.index_cast %arg1 : i32 to index
    %c0_11 = arith.constant 0 : index
    %14 = vector.load %arg5[%c0_10, %13, %c0_11] : memref<1x2x10xf32, #tpu.memory_space<vmem>>, vector<1x1x10xf32>
    %15 = vector.shape_cast %14 : vector<1x1x10xf32> to vector<1x10xf32>
    %16 = vector.shape_cast %12 : vector<1x10xf32> to vector<1x1x10xf32>
    tpu.vector_store %arg5[%c0_10, %13, %c0_11], %16 {strides = array<i32>} : memref<1x2x10xf32, #tpu.memory_space<vmem>>, vector<1x1x10xf32>,
    return
  }
  func.func @transform_0(%arg0: i32, %arg1: i32) -> (i32, i32, i32) {
    %c0_i32 = arith.constant 0 : i32
    %c0_i32_0 = arith.constant 0 : i32
    return %arg0, %arg1, %c0_i32 : i32, i32, i32
  }
  func.func @transform_1(%arg0: i32, %arg1: i32) -> (i32, i32, i32) {
    %c0_i32 = arith.constant 0 : i32
    %c0_i32_0 = arith.constant 0 : i32
    %c0_i32_1 = arith.constant 0 : i32
    return %arg0, %c0_i32, %c0_i32_0 : i32, i32, i32
  }
  func.func @transform_2(%arg0: i32, %arg1: i32) -> (i32, i32, i32) {
    %c0_i32 = arith.constant 0 : i32
    %c0_i32_0 = arith.constant 0 : i32
    %c0_i32_1 = arith.constant 0 : i32
    return %arg0, %c0_i32, %c0_i32_0 : i32, i32, i32
  }
  func.func @transform_3(%arg0: i32, %arg1: i32) -> (i32, i32, i32) {
    %c0_i32 = arith.constant 0 : i32
    %c0_i32_0 = arith.constant 0 : i32
    %c0_i32_1 = arith.constant 0 : i32
    return %arg0, %c0_i32, %c0_i32_0 : i32, i32, i32
  }
}

</mosaic_0001>

<llo_original>
// kernel: tile.168
$region0: #{tile.168}
  #allocation0 [shape = 's32[1]{0}', space=sflag, size = 0x4, scoped, tag = 'scoped memory for tile.168']
  %s0 = inlined_call_operand.vmem [shape: f32[16], index: 0, kind: input, shape index: {}]
  %s1 = inlined_call_operand.vmem [shape: f32[16,16], index: 1, kind: output, shape index: {}]
  // Predicated region
  $region2: #{tile.168} parent=0 // pred_check
    _
  $region3: #{tile.168} parent=0 // pred_check_branch
    %3 = sbr.rel (0) target = $region5
  $region4: #{tile.168} parent=0 // pred_region
    _
  $region5: #{tile.168} parent=0 // pred_fallthru
    _
  %v4 = vld [vmem:[%s0] ss:$0 sm:$0xff]
  %5 = vst [vmem:[%s1] sm:$0xff] %v4
  %s6 = scalar_lea.vmem %s1, 8
  %7 = vst [vmem:[%s6] sm:$0xff] %v4

// kernel: tile.177
$region0: #{tile.177}
  %s0 = inlined_call_operand.vmem [shape: f32[16,16], index: 0, kind: input, shape index: {}]
  %s1 = inlined_call_operand.vmem [shape: f32[1,256], index: 1, kind: output, shape index: {}]
  $region1: #{tile.177} parent=0
    #allocation0 [shape = 'u8[8192]{0}', space=vmem, size = 0x2000, scoped, tag = 'scoped mem for output reshape']
    %s2 = smov 3
    %v3 = vld [vmem:[%s0] ss:$8 sm:%s2]
    %vm4 = vcmask 130048
    %5 = vst.msk [vmem:[#allocation0] ss:$8 sm:$0x3] %vm4, %v3
    %s6 = scalar_lea.vmem %s0, 7
    %s7 = smov 3
    %v8 = vld [vmem:[%s6] ss:$8 sm:%s7]
    %9 = vrot.lane.b32.xlu0 %v8, 112
    %v10 = vpop.permute.xlu0 %9
    %vm11 = vcmask 1048448
    %12 = vst.msk [vmem:[#allocation0] ss:$8 sm:$0x3] %vm11, %v10
    %s13 = scalar_lea.vmem %s0, 6
    %s14 = smov 3
    %v15 = vld [vmem:[%s13] ss:$8 sm:%s14]
    %16 = vrot.lane.b32.xlu0 %v15, 96
    %v17 = vpop.permute.xlu0 %16
    %vm18 = vcmask 917248
    %19 = vst.msk [vmem:[#allocation0] ss:$8 sm:$0x3] %vm18, %v17
    %s20 = scalar_lea.vmem %s0, 5
    %s21 = smov 3
    %v22 = vld [vmem:[%s20] ss:$8 sm:%s21]
    %23 = vrot.lane.b32.xlu0 %v22, 80
    %v24 = vpop.permute.xlu0 %23
    %vm25 = vcmask 786048
    %26 = vst.msk [vmem:[#allocation0] ss:$8 sm:$0x3] %vm25, %v24
    %s27 = scalar_lea.vmem %s0, 4
    %s28 = smov 3
    %v29 = vld [vmem:[%s27] ss:$8 sm:%s28]
    %30 = vrot.lane.b32.xlu0 %v29, 64
    %v31 = vpop.permute.xlu0 %30
    %vm32 = vcmask 654848
    %33 = vst.msk [vmem:[#allocation0] ss:$8 sm:$0x3] %vm32, %v31
    %s34 = scalar_lea.vmem %s0, 3
    %s35 = smov 3
    %v36 = vld [vmem:[%s34] ss:$8 sm:%s35]
    %37 = vrot.lane.b32.xlu0 %v36, 48
    %v38 = vpop.permute.xlu0 %37
    %vm39 = vcmask 523648
    %40 = vst.msk [vmem:[#allocation0] ss:$8 sm:$0x3] %vm39, %v38
    %s41 = scalar_lea.vmem %s0, 2
    %s42 = smov 3
    %v43 = vld [vmem:[%s41] ss:$8 sm:%s42]
    %44 = vrot.lane.b32.xlu0 %v43, 32
    %v45 = vpop.permute.xlu0 %44
    %vm46 = vcmask 392448
    %47 = vst.msk [vmem:[#allocation0] ss:$8 sm:$0x3] %vm46, %v45
    %s48 = scalar_lea.vmem %s0, 1
    %s49 = smov 3
    %v50 = vld [vmem:[%s48] ss:$8 sm:%s49]
    %51 = vrot.lane.b32.xlu0 %v50, 16
    %v52 = vpop.permute.xlu0 %51
    %vm53 = vcmask 261248
    %54 = vst.msk [vmem:[#allocation0] ss:$8 sm:$0x3] %vm53, %v52
    %s56 = ssub.s32 2, 1
    %v57 = vld [vmem:[#allocation0] sm:%s56]
    %s59 = ssub.s32 2, 1
    %60 = vst [vmem:[%s1] sm:%s59] %v57
    %s61 = scalar_lea.vmem [#allocation0], 8
    %v62 = vld [vmem:[%s61] sm:%s56]
    %s64 = ssub.s32 2, 1
    %s65 = scalar_lea.vmem %s1, 1
    %66 = vst [vmem:[%s65] sm:%s64] %v62

// kernel: model_forward.11
$region0: #{model_forward.11}
  #allocation0 [shape = 'u32[]', space=smem, size = 0x4, offset = 0x4, fixed_abs, tag = 'smem constant byte address 0x4 - core index']
  #allocation1 [shape = 'u32[72,128]{1,0:T(1,128)}', space=vmem, size = 0x9000, scoped, tag = 'internal scratch']
  %s0 = inlined_call_operand.vmem [shape: bf16[3,64,48], index: 0, kind: input, shape index: {}]
  %s1 = inlined_call_operand.vmem [shape: bf16[3,48,256], index: 1, kind: input, shape index: {}]
  %s2 = inlined_call_operand.vmem [shape: f32[3,1,256], index: 2, kind: input, shape index: {}]
  %s3 = inlined_call_operand.vmem [shape: bf16[3,64,256], index: 3, kind: output, shape index: {}]
  %s4 = sld [smem:[#allocation0]]
  $region45: #{model_forward.11} parent=0
    _
  %s6 = ssub.s32 1, %s4
  %s7 = scalar_select 0, %s6, %s4
  loop: start=0, step=1, limit=5
  $region2: #{model_forward.11} parent=0 // loop_pre_header
    _
  $region3: #{model_forward.11} parent=0 // loop_header
    %s9 = sphi 0, %s13
    %p10 = scmp.ge.s32.totalorder %s9, 5
    %s16 = sphi 0, %s28
    %s17 = sphi 0, %s24
    %s18 = sphi 0, %s16
    %s19 = sphi 0, %s17
    %s20 = sphi 0, %s18
    %s21 = sphi 0, %s19
    %s33 = sphi 0, %s35
    %s36 = sphi 0, %s33
    %s37 = sphi 0, %s36
    %s53 = sphi 0, %s37
    %s59 = sphi 0, %s61
    %s62 = sphi 0, %s59
    %s63 = sphi 0, %s62
    %s79 = sphi 0, %s63
    %s85 = sphi 0, %s87
    %s88 = sphi 0, %s85
    %s89 = sphi 0, %s88
    %s105 = sphi 0, %s89
    %s113 = sphi 0, %s115
    %s116 = sphi 0, %s113
    %s117 = sphi 0, %s116
    %s133 = sphi 0, %s117
  $region4: #{model_forward.11} parent=0 // loop_header_branch
    %12 = sbr.rel (%p10) target = $region8
  $region5: #{model_forward.11} parent=0 // loop_body
    %s14 = ssub.s32 %s9, 1
    %s15 = ssub.s32 %s9, 2
    %s22 = sadd.s32 1, %s17
    %p23 = scmp.ge.s32.totalorder %s22, 1
    %s24 = scalar_select %p23, 0, %s22
    %s25 = sadd.s32 1, %s16
    %s26 = scalar_select %p23, %s25, %s16
    %p27 = scmp.ge.s32.totalorder %s26, 3
    %s28 = scalar_select %p27, 0, %s26
    %s29 = ssub.s32 %s16, %s28
    %s30 = ssub.s32 %s17, %s24
    %s31 = sor.u32 %s29, %s30
    %p32 = scmp.eq.s32.totalorder %s31, 0
    %s34 = sadd.s32 %s33, 1
    %s35 = scalar_select %p32, %s33, %s34
    %p38 = pneg %p32
    %p39 = scmp.eq.s32.totalorder %s9, 2
    %p40 = por %p38, %p39
    %p41 = scmp.ne.s32.totalorder %s33, %s36
    %p42 = scmp.eq.s32.totalorder %s9, 0
    %p43 = por %p41, %p42
    %p44 = scmp.ne.s32.totalorder %s33, %s36
    %p45 = scmp.eq.s32.totalorder %s14, 2
    %p46 = por %p44, %p45
    %p47 = scmp.ne.s32.totalorder %s36, %s37
    %p48 = scmp.eq.s32.totalorder %s14, 0
    %p49 = por %p47, %p48
    %p50 = scmp.ne.s32.totalorder %s36, %s37
    %p51 = scmp.eq.s32.totalorder %s15, 2
    %p52 = por %p50, %p51
    %p54 = scmp.ne.s32.totalorder %s37, %s53
    %p55 = scmp.eq.s32.totalorder %s15, 0
    %p56 = por %p54, %p55
    %s57 = ssub.s32 %s16, %s28
    %p58 = scmp.eq.s32.totalorder %s57, 0
    %s60 = sadd.s32 %s59, 1
    %s61 = scalar_select %p58, %s59, %s60
    %p64 = pneg %p58
    %p65 = scmp.eq.s32.totalorder %s9, 2
    %p66 = por %p64, %p65
    %p67 = scmp.ne.s32.totalorder %s59, %s62
    %p68 = scmp.eq.s32.totalorder %s9, 0
    %p69 = por %p67, %p68
    %p70 = scmp.ne.s32.totalorder %s59, %s62
    %p71 = scmp.eq.s32.totalorder %s14, 2
    %p72 = por %p70, %p71
    %p73 = scmp.ne.s32.totalorder %s62, %s63
    %p74 = scmp.eq.s32.totalorder %s14, 0
    %p75 = por %p73, %p74
    %p76 = scmp.ne.s32.totalorder %s62, %s63
    %p77 = scmp.eq.s32.totalorder %s15, 2
    %p78 = por %p76, %p77
    %p80 = scmp.ne.s32.totalorder %s63, %s79
    %p81 = scmp.eq.s32.totalorder %s15, 0
    %p82 = por %p80, %p81
    %s83 = ssub.s32 %s16, %s28
    %p84 = scmp.eq.s32.totalorder %s83, 0
    %s86 = sadd.s32 %s85, 1
    %s87 = scalar_select %p84, %s85, %s86
    %p90 = pneg %p84
    %p91 = scmp.eq.s32.totalorder %s9, 2
    %p92 = por %p90, %p91
    %p93 = scmp.ne.s32.totalorder %s85, %s88
    %p94 = scmp.eq.s32.totalorder %s9, 0
    %p95 = por %p93, %p94
    %p96 = scmp.ne.s32.totalorder %s85, %s88
    %p97 = scmp.eq.s32.totalorder %s14, 2
    %p98 = por %p96, %p97
    %p99 = scmp.ne.s32.totalorder %s88, %s89
    %p100 = scmp.eq.s32.totalorder %s14, 0
    %p101 = por %p99, %p100
    %p102 = scmp.ne.s32.totalorder %s88, %s89
    %p103 = scmp.eq.s32.totalorder %s15, 2
    %p104 = por %p102, %p103
    %p106 = scmp.ne.s32.totalorder %s89, %s105
    %p107 = scmp.eq.s32.totalorder %s15, 0
    %p108 = por %p106, %p107
    %s109 = ssub.s32 %s16, %s28
    %s110 = ssub.s32 %s17, %s24
    %s111 = sor.u32 %s109, %s110
    %p112 = scmp.eq.s32.totalorder %s111, 0
    %s114 = sadd.s32 %s113, 1
    %s115 = scalar_select %p112, %s113, %s114
    %p118 = pneg %p112
    %p119 = scmp.eq.s32.totalorder %s9, 2
    %p120 = por %p118, %p119
    %p121 = scmp.ne.s32.totalorder %s113, %s116
    %p122 = scmp.eq.s32.totalorder %s9, 0
    %p123 = por %p121, %p122
    %p124 = scmp.ne.s32.totalorder %s113, %s116
    %p125 = scmp.eq.s32.totalorder %s14, 2
    %p126 = por %p124, %p125
    %p127 = scmp.ne.s32.totalorder %s116, %s117
    %p128 = scmp.eq.s32.totalorder %s14, 0
    %p129 = por %p127, %p128
    %p130 = scmp.ne.s32.totalorder %s116, %s117
    %p131 = scmp.eq.s32.totalorder %s15, 2
    %p132 = por %p130, %p131
    %p134 = scmp.ne.s32.totalorder %s117, %s133
    %p135 = scmp.eq.s32.totalorder %s15, 0
    %p136 = por %p134, %p135
    %p137 = scmp.le.s32.totalorder 1, %s9
    %p138 = scmp.lt.s32.totalorder %s9, 4
    %p139 = pnand %p137, %p138
    %p140 = pneg %p139
    // Predicated region
    $region9: #{model_forward.11} parent=5 // pred_check
      _
    $region10: #{model_forward.11} parent=5 // pred_check_branch
      %142 = sbr.rel (%p139) target = $region12
    $region11: #{model_forward.11} parent=5 // pred_region
      %s143 = ssub.s32 %s9, 1
    $region12: #{model_forward.11} parent=5 // pred_fallthru
      _
    %p144 = scmp.lt.s32.totalorder %s9, 3
    // Predicated region
    $region13: #{model_forward.11} parent=5 // pred_check
      %p145 = pneg %p144
    $region14: #{model_forward.11} parent=5 // pred_check_branch
      %147 = sbr.rel (%p145) target = $region16
    $region15: #{model_forward.11} parent=5 // pred_region
      // Predicated region
      $region17: #{model_forward.11} parent=15 // pred_check
        %p148 = pneg %p43
      $region18: #{model_forward.11} parent=15 // pred_check_branch
        %150 = sbr.rel (%p148) target = $region20
      $region19: #{model_forward.11} parent=15 // pred_region
        %s151 = smul.u32 8, %s17
        %p152 = scmp.lt.s32.totalorder %s16, 2
        %s153 = scalar_select %p152, %s16, 2
        %p154 = scmp.lt.s32.totalorder %s151, 7
        %s155 = scalar_select %p154, %s151, 7
        %s156 = smul.addr %s153, 8
        %s157 = sadd.s32 %s155, %s156
        %s158 = smul.addr %s157, 4
        %s159 = scalar_lea.vmem %s0, %s158
        %s160 = smul.u32 8, %s17
      $region20: #{model_forward.11} parent=15 // pred_fallthru
        _
      // Predicated region
      $region21: #{model_forward.11} parent=15 // pred_check
        %p161 = pneg %p69
      $region22: #{model_forward.11} parent=15 // pred_check_branch
        %163 = sbr.rel (%p161) target = $region24
      $region23: #{model_forward.11} parent=15 // pred_region
        %p164 = scmp.lt.s32.totalorder %s16, 2
        %s165 = scalar_select %p164, %s16, 2
        %s166 = smul.addr %s165, 12
        %s167 = smul.addr %s166, 4
        %s168 = scalar_lea.vmem %s1, %s167
      $region24: #{model_forward.11} parent=15 // pred_fallthru
        _
      // Predicated region
      $region25: #{model_forward.11} parent=15 // pred_check
        %p169 = pneg %p95
      $region26: #{model_forward.11} parent=15 // pred_check_branch
        %171 = sbr.rel (%p169) target = $region28
      $region27: #{model_forward.11} parent=15 // pred_region
        %p172 = scmp.lt.s32.totalorder %s16, 2
        %s173 = scalar_select %p172, %s16, 2
        %s174 = smul.addr %s173, 2
        %s175 = scalar_lea.vmem %s2, %s174
      $region28: #{model_forward.11} parent=15 // pred_fallthru
        _
    $region16: #{model_forward.11} parent=5 // pred_fallthru
      _
    %p176 = scmp.le.s32.totalorder 1, %s9
    %p177 = scmp.lt.s32.totalorder %s9, 4
    %p178 = pnand %p176, %p177
    %p179 = pneg %p178
    // Predicated region
    $region29: #{model_forward.11} parent=5 // pred_check
      _
    $region30: #{model_forward.11} parent=5 // pred_check_branch
      %181 = sbr.rel (%p178) target = $region32
    $region31: #{model_forward.11} parent=5 // pred_region
      %s182 = ssub.s32 %s9, 1
      %s183 = smul.u32 8, %s19
      %p184 = scmp.lt.s32.totalorder %s18, 2
      %s185 = scalar_select %p184, %s18, 2
      %p186 = scmp.lt.s32.totalorder %s183, 7
      %s187 = scalar_select %p186, %s183, 7
      %s188 = smul.addr %s185, 8
      %s189 = sadd.s32 %s187, %s188
      %s190 = smul.addr %s189, 4
      %s191 = scalar_lea.vmem %s0, %s190
      %p192 = pneg %p49
      %p193 = pneg %p46
      %p194 = scmp.lt.s32.totalorder %s18, 2
      %s195 = scalar_select %p194, %s18, 2
      %s196 = smul.addr %s195, 12
      %s197 = smul.addr %s196, 4
      %s198 = scalar_lea.vmem %s1, %s197
      %p199 = pneg %p75
      %p200 = pneg %p72
      %p201 = scmp.lt.s32.totalorder %s18, 2
      %s202 = scalar_select %p201, %s18, 2
      %s203 = smul.addr %s202, 2
      %s204 = scalar_lea.vmem %s2, %s203
      %p205 = pneg %p101
      %p206 = pneg %p98
      %p207 = pneg %p129
      %p208 = pneg %p126
      %s209 = smul.u32 8, %s19
      %p210 = scmp.lt.s32.totalorder %s18, 2
      %s211 = scalar_select %p210, %s18, 2
      %p212 = scmp.lt.s32.totalorder %s209, 7
      %s213 = scalar_select %p212, %s209, 7
      %s214 = smul.addr %s213, 2
      %s215 = smul.addr %s211, 16
      %s216 = sadd.s32 %s214, %s215
      %s217 = smul.addr %s216, 4
      %s218 = scalar_lea.vmem %s3, %s217
      %s219 = smul.u32 8, %s19
      %p220 = scmp.lt.s32.totalorder %s18, 2
      %s221 = scalar_select %p220, %s18, 2
      %p222 = scmp.lt.s32.totalorder %s219, 7
      %s223 = scalar_select %p222, %s219, 7
      %s224 = smul.addr %s221, 8
      %s225 = sadd.s32 %s223, %s224
      %s226 = smul.addr %s225, 4
      %s227 = scalar_lea.vmem %s0, %s226
      %s228 = smul.u32 8, %s19
      %p229 = scmp.lt.s32.totalorder %s18, 2
      %s230 = scalar_select %p229, %s18, 2
      %s231 = smul.addr %s230, 12
      %s232 = smul.addr %s231, 4
      %s233 = scalar_lea.vmem %s1, %s232
      %p234 = scmp.lt.s32.totalorder %s18, 2
      %s235 = scalar_select %p234, %s18, 2
      %s236 = smul.addr %s235, 2
      %s237 = scalar_lea.vmem %s2, %s236
      %s238 = smul.u32 8, %s19
      %p239 = scmp.lt.s32.totalorder %s18, 2
      %s240 = scalar_select %p239, %s18, 2
      %p241 = scmp.lt.s32.totalorder %s238, 7
      %s242 = scalar_select %p241, %s238, 7
      %s243 = smul.addr %s242, 2
      %s244 = smul.addr %s240, 16
      %s245 = sadd.s32 %s243, %s244
      %s246 = smul.addr %s245, 4
      %s247 = scalar_lea.vmem %s3, %s246
      %s248 = smul.u32 8, %s19
      %v250 = vld [vmem:[%s227] sm:$0xf]
      %v251 = vld [vmem:[%s227 + $0x4] sm:$0xf]
      %v252 = vld [vmem:[%s227 + $0x8] sm:$0xf]
      %v253 = vld [vmem:[%s227 + $0xc] sm:$0xf]
      %v254 = vld [vmem:[%s227 + $0x10] sm:$0xf]
      %v255 = vld [vmem:[%s227 + $0x14] sm:$0xf]
      %v256 = vld [vmem:[%s227 + $0x18] sm:$0xf]
      %v257 = vld [vmem:[%s227 + $0x1c] sm:$0xf]
      %v258 = vld [vmem:[%s233] sm:$0xff]
      %v259 = vld [vmem:[%s233 + $0x8] sm:$0xff]
      %v260 = vld [vmem:[%s233 + $0x10] sm:$0xff]
      %v261 = vld [vmem:[%s233 + $0x18] sm:$0xff]
      %v262 = vld [vmem:[%s233 + $0x20] sm:$0xff]
      %v263 = vld [vmem:[%s233 + $0x28] sm:$0xff]
      %v264 = vld [vmem:[%s237] sm:$0x3]
      %v266 = vperm.slane %v264, 0
      %v267 = vperm.slane %v264, 1
      %v278 = vunpack.c.l.b16 %v250
      %v279 = vunpack.c.l.b16 %v251
      %v280 = vunpack.c.l.b16 %v252
      %v281 = vunpack.c.l.b16 %v253
      %v282 = vunpack.c.l.b16 %v254
      %v283 = vunpack.c.l.b16 %v255
      %v284 = vunpack.c.l.b16 %v256
      %v285 = vunpack.c.l.b16 %v257
      %v286 = vpack.c.b16 %v279, %v278
      %v287 = vpack.c.b16 %v281, %v280
      %v288 = vpack.c.b16 %v283, %v282
      %v289 = vpack.c.b16 %v285, %v284
      %v296 = vunpack.c.l.b16 %v258
      %v297 = vunpack.c.h.b16 %v258
      %v298 = vunpack.c.l.b16 %v259
      %v299 = vunpack.c.h.b16 %v259
      %v300 = vunpack.c.l.b16 %v260
      %v301 = vunpack.c.h.b16 %v260
      %v302 = vunpack.c.l.b16 %v261
      %v303 = vunpack.c.h.b16 %v261
      %v304 = vunpack.c.l.b16 %v262
      %v305 = vunpack.c.h.b16 %v262
      %v306 = vunpack.c.l.b16 %v263
      %v307 = vunpack.c.h.b16 %v263
      %v308 = vpack.c.b16 %v298, %v296
      %v309 = vpack.c.b16 %v299, %v297
      %v310 = vpack.c.b16 %v302, %v300
      %v311 = vpack.c.b16 %v303, %v301
      %v312 = vpack.c.b16 %v306, %v304
      %v313 = vpack.c.b16 %v307, %v305
      %vm320 = vcmask 392192
      %v322 = vsel %vm320, %v286, 0
      %v325 = vsel %vm320, %v287, 0
      %v328 = vsel %vm320, %v288, 0
      %v331 = vsel %vm320, %v289, 0
      %333 = vmatpush.bf16.msra.mxu0 0
      %334 = vmatpush.bf16.msra.mxu0 0
      %335 = vmatpush.bf16.msra.mxu0 0
      %336 = vmatpush.bf16.msra.mxu0 0
      %337 = vmatpush.bf16.msra.mxu0 0
      %338 = vmatpush.bf16.msra.mxu0 %v312
      %339 = vmatpush.bf16.msra.mxu0 %v310
      %340 = vmatpush.bf16.msra.mxu0 %v308
      %341 = vmatmul.bf16.gmra.mxu0 %v322
      %v342 = vpop.f32.mrf.mxu0
      %v343 = vadd.f32 %v266, %v342
      %v344 = vpop.f32.mrf.mxu0
      %v345 = vadd.f32 %v266, %v344
      %346 = vmatmul.bf16.gmra.mxu0 %v325
      %v347 = vpop.f32.mrf.mxu0
      %v348 = vadd.f32 %v266, %v347
      %v349 = vpop.f32.mrf.mxu0
      %v350 = vadd.f32 %v266, %v349
      %351 = vmatmul.bf16.gmra.mxu0 %v328
      %v352 = vpop.f32.mrf.mxu0
      %v353 = vadd.f32 %v266, %v352
      %v354 = vpop.f32.mrf.mxu0
      %v355 = vadd.f32 %v266, %v354
      %356 = vmatmul.bf16.gmra.mxu0 %v331
      %v357 = vpop.f32.mrf.mxu0
      %v358 = vadd.f32 %v266, %v357
      %v359 = vpop.f32.mrf.mxu0
      %v360 = vadd.f32 %v266, %v359
      %361 = vdwg.mxu0
      %362 = vmatpush.bf16.msra.mxu0 0
      %363 = vmatpush.bf16.msra.mxu0 0
      %364 = vmatpush.bf16.msra.mxu0 0
      %365 = vmatpush.bf16.msra.mxu0 0
      %366 = vmatpush.bf16.msra.mxu0 0
      %367 = vmatpush.bf16.msra.mxu0 %v313
      %368 = vmatpush.bf16.msra.mxu0 %v311
      %369 = vmatpush.bf16.msra.mxu0 %v309
      %370 = vmatmul.bf16.gmra.mxu0 %v322
      %v371 = vpop.f32.mrf.mxu0
      %v372 = vadd.f32 %v267, %v371
      %v373 = vpop.f32.mrf.mxu0
      %v374 = vadd.f32 %v267, %v373
      %375 = vmatmul.bf16.gmra.mxu0 %v325
      %v376 = vpop.f32.mrf.mxu0
      %v377 = vadd.f32 %v267, %v376
      %v378 = vpop.f32.mrf.mxu0
      %v379 = vadd.f32 %v267, %v378
      %380 = vmatmul.bf16.gmra.mxu0 %v328
      %v381 = vpop.f32.mrf.mxu0
      %v382 = vadd.f32 %v267, %v381
      %v383 = vpop.f32.mrf.mxu0
      %v384 = vadd.f32 %v267, %v383
      %385 = vmatmul.bf16.gmra.mxu0 %v331
      %v386 = vpop.f32.mrf.mxu0
      %v387 = vadd.f32 %v267, %v386
      %v388 = vpop.f32.mrf.mxu0
      %v389 = vadd.f32 %v267, %v388
      %390 = vdwg.mxu0
      %vm391 = vcmp.gt.f32.partialorder %v343, 0.0
      %vm392 = vcmp.gt.f32.partialorder %v372, 0.0
      %vm393 = vcmp.gt.f32.partialorder %v345, 0.0
      %vm394 = vcmp.gt.f32.partialorder %v374, 0.0
      %vm395 = vcmp.gt.f32.partialorder %v348, 0.0
      %vm396 = vcmp.gt.f32.partialorder %v377, 0.0
      %vm397 = vcmp.gt.f32.partialorder %v350, 0.0
      %vm398 = vcmp.gt.f32.partialorder %v379, 0.0
      %vm399 = vcmp.gt.f32.partialorder %v353, 0.0
      %vm400 = vcmp.gt.f32.partialorder %v382, 0.0
      %vm401 = vcmp.gt.f32.partialorder %v355, 0.0
      %vm402 = vcmp.gt.f32.partialorder %v384, 0.0
      %vm403 = vcmp.gt.f32.partialorder %v358, 0.0
      %vm404 = vcmp.gt.f32.partialorder %v387, 0.0
      %vm405 = vcmp.gt.f32.partialorder %v360, 0.0
      %vm406 = vcmp.gt.f32.partialorder %v389, 0.0
      %v407 = vmul.f32 %v343, 0.1
      %v408 = vmul.f32 %v372, 0.1
      %v409 = vmul.f32 %v345, 0.1
      %v410 = vmul.f32 %v374, 0.1
      %v411 = vmul.f32 %v348, 0.1
      %v412 = vmul.f32 %v377, 0.1
      %v413 = vmul.f32 %v350, 0.1
      %v414 = vmul.f32 %v379, 0.1
      %v415 = vmul.f32 %v353, 0.1
      %v416 = vmul.f32 %v382, 0.1
      %v417 = vmul.f32 %v355, 0.1
      %v418 = vmul.f32 %v384, 0.1
      %v419 = vmul.f32 %v358, 0.1
      %v420 = vmul.f32 %v387, 0.1
      %v421 = vmul.f32 %v360, 0.1
      %v422 = vmul.f32 %v389, 0.1
      %v423 = vsel %vm391, %v343, %v407
      %v424 = vsel %vm392, %v372, %v408
      %v425 = vsel %vm393, %v345, %v409
      %v426 = vsel %vm394, %v374, %v410
      %v427 = vsel %vm395, %v348, %v411
      %v428 = vsel %vm396, %v377, %v412
      %v429 = vsel %vm397, %v350, %v413
      %v430 = vsel %vm398, %v379, %v414
      %v431 = vsel %vm399, %v353, %v415
      %v432 = vsel %vm400, %v382, %v416
      %v433 = vsel %vm401, %v355, %v417
      %v434 = vsel %vm402, %v384, %v418
      %v435 = vsel %vm403, %v358, %v419
      %v436 = vsel %vm404, %v387, %v420
      %v437 = vsel %vm405, %v360, %v421
      %v438 = vsel %vm406, %v389, %v422
      %v439 = vpack.c.bf16 %v424, %v423
      %v440 = vpack.c.bf16 %v426, %v425
      %v441 = vpack.c.bf16 %v428, %v427
      %v442 = vpack.c.bf16 %v430, %v429
      %v443 = vpack.c.bf16 %v432, %v431
      %v444 = vpack.c.bf16 %v434, %v433
      %v445 = vpack.c.bf16 %v436, %v435
      %v446 = vpack.c.bf16 %v438, %v437
      %447 = vst [vmem:[%s247] sm:$0xff] %v439
      %448 = vst [vmem:[%s247 + $0x8] sm:$0xff] %v440
      %449 = vst [vmem:[%s247 + $0x10] sm:$0xff] %v441
      %450 = vst [vmem:[%s247 + $0x18] sm:$0xff] %v442
      %451 = vst [vmem:[%s247 + $0x20] sm:$0xff] %v443
      %452 = vst [vmem:[%s247 + $0x28] sm:$0xff] %v444
      %453 = vst [vmem:[%s247 + $0x30] sm:$0xff] %v445
      %454 = vst [vmem:[%s247 + $0x38] sm:$0xff] %v446
      %s455 = smul.u32 8, %s19
      %p456 = scmp.lt.s32.totalorder %s18, 2
      %s457 = scalar_select %p456, %s18, 2
      %p458 = scmp.lt.s32.totalorder %s455, 7
      %s459 = scalar_select %p458, %s455, 7
      %s460 = smul.addr %s459, 2
      %s461 = smul.addr %s457, 16
      %s462 = sadd.s32 %s460, %s461
      %s463 = smul.addr %s462, 4
      %s464 = scalar_lea.vmem %s3, %s463
      // Predicated region
      $region33: #{model_forward.11} parent=31 // pred_check
        %p465 = pneg %p126
      $region34: #{model_forward.11} parent=31 // pred_check_branch
        %467 = sbr.rel (%p465) target = $region36
      $region35: #{model_forward.11} parent=31 // pred_region
        %s468 = smul.u32 8, %s19
      $region36: #{model_forward.11} parent=31 // pred_fallthru
        _
    $region32: #{model_forward.11} parent=5 // pred_fallthru
      _
    %p469 = scmp.le.s32.totalorder 2, %s9
    // Predicated region
    $region37: #{model_forward.11} parent=5 // pred_check
      %p470 = pneg %p469
    $region38: #{model_forward.11} parent=5 // pred_check_branch
      %472 = sbr.rel (%p470) target = $region40
    $region39: #{model_forward.11} parent=5 // pred_region
      %s473 = ssub.s32 %s9, 2
      // Predicated region
      $region41: #{model_forward.11} parent=39 // pred_check
        %p474 = pneg %p132
      $region42: #{model_forward.11} parent=39 // pred_check_branch
        %476 = sbr.rel (%p474) target = $region44
      $region43: #{model_forward.11} parent=39 // pred_region
        %s477 = smul.u32 8, %s21
        %p478 = scmp.lt.s32.totalorder %s20, 2
        %s479 = scalar_select %p478, %s20, 2
        %p480 = scmp.lt.s32.totalorder %s477, 7
        %s481 = scalar_select %p480, %s477, 7
        %s482 = smul.addr %s481, 2
        %s483 = smul.addr %s479, 16
        %s484 = sadd.s32 %s482, %s483
        %s485 = smul.addr %s484, 4
        %s486 = scalar_lea.vmem %s3, %s485
      $region44: #{model_forward.11} parent=39 // pred_fallthru
        _
    $region40: #{model_forward.11} parent=5 // pred_fallthru
      _
  $region6: #{model_forward.11} parent=0 // loop_footer
    %s13 = sadd.s32 1, %s9
  $region7: #{model_forward.11} parent=0 // loop_footer_branch
    %8 = sbr.rel target = $region3
  $region8: #{model_forward.11} parent=0 // loop_exit
    _

// kernel: model_forward.12
$region0: #{model_forward.12}
  #allocation0 [shape = 'u32[]', space=smem, size = 0x4, offset = 0x4, fixed_abs, tag = 'smem constant byte address 0x4 - core index']
  #allocation1 [shape = 'u32[72,128]{1,0:T(1,128)}', space=vmem, size = 0x9000, scoped, tag = 'internal scratch']
  %s0 = inlined_call_operand.vmem [shape: bf16[3,64,256], index: 0, kind: input, shape index: {}]
  %s1 = inlined_call_operand.vmem [shape: bf16[3,256,256], index: 1, kind: input, shape index: {}]
  %s2 = inlined_call_operand.vmem [shape: f32[3,1,256], index: 2, kind: input, shape index: {}]
  %s3 = inlined_call_operand.vmem [shape: bf16[3,64,256], index: 3, kind: output, shape index: {}]
  %s4 = sld [smem:[#allocation0]]
  $region45: #{model_forward.12} parent=0
    _
  %s6 = ssub.s32 1, %s4
  %s7 = scalar_select 0, %s6, %s4
  loop: start=0, step=1, limit=5
  $region2: #{model_forward.12} parent=0 // loop_pre_header
    _
  $region3: #{model_forward.12} parent=0 // loop_header
    %s9 = sphi 0, %s13
    %p10 = scmp.ge.s32.totalorder %s9, 5
    %s16 = sphi 0, %s28
    %s17 = sphi 0, %s24
    %s18 = sphi 0, %s16
    %s19 = sphi 0, %s17
    %s20 = sphi 0, %s18
    %s21 = sphi 0, %s19
    %s33 = sphi 0, %s35
    %s36 = sphi 0, %s33
    %s37 = sphi 0, %s36
    %s53 = sphi 0, %s37
    %s59 = sphi 0, %s61
    %s62 = sphi 0, %s59
    %s63 = sphi 0, %s62
    %s79 = sphi 0, %s63
    %s85 = sphi 0, %s87
    %s88 = sphi 0, %s85
    %s89 = sphi 0, %s88
    %s105 = sphi 0, %s89
    %s113 = sphi 0, %s115
    %s116 = sphi 0, %s113
    %s117 = sphi 0, %s116
    %s133 = sphi 0, %s117
  $region4: #{model_forward.12} parent=0 // loop_header_branch
    %12 = sbr.rel (%p10) target = $region8
  $region5: #{model_forward.12} parent=0 // loop_body
    %s14 = ssub.s32 %s9, 1
    %s15 = ssub.s32 %s9, 2
    %s22 = sadd.s32 1, %s17
    %p23 = scmp.ge.s32.totalorder %s22, 1
    %s24 = scalar_select %p23, 0, %s22
    %s25 = sadd.s32 1, %s16
    %s26 = scalar_select %p23, %s25, %s16
    %p27 = scmp.ge.s32.totalorder %s26, 3
    %s28 = scalar_select %p27, 0, %s26
    %s29 = ssub.s32 %s16, %s28
    %s30 = ssub.s32 %s17, %s24
    %s31 = sor.u32 %s29, %s30
    %p32 = scmp.eq.s32.totalorder %s31, 0
    %s34 = sadd.s32 %s33, 1
    %s35 = scalar_select %p32, %s33, %s34
    %p38 = pneg %p32
    %p39 = scmp.eq.s32.totalorder %s9, 2
    %p40 = por %p38, %p39
    %p41 = scmp.ne.s32.totalorder %s33, %s36
    %p42 = scmp.eq.s32.totalorder %s9, 0
    %p43 = por %p41, %p42
    %p44 = scmp.ne.s32.totalorder %s33, %s36
    %p45 = scmp.eq.s32.totalorder %s14, 2
    %p46 = por %p44, %p45
    %p47 = scmp.ne.s32.totalorder %s36, %s37
    %p48 = scmp.eq.s32.totalorder %s14, 0
    %p49 = por %p47, %p48
    %p50 = scmp.ne.s32.totalorder %s36, %s37
    %p51 = scmp.eq.s32.totalorder %s15, 2
    %p52 = por %p50, %p51
    %p54 = scmp.ne.s32.totalorder %s37, %s53
    %p55 = scmp.eq.s32.totalorder %s15, 0
    %p56 = por %p54, %p55
    %s57 = ssub.s32 %s16, %s28
    %p58 = scmp.eq.s32.totalorder %s57, 0
    %s60 = sadd.s32 %s59, 1
    %s61 = scalar_select %p58, %s59, %s60
    %p64 = pneg %p58
    %p65 = scmp.eq.s32.totalorder %s9, 2
    %p66 = por %p64, %p65
    %p67 = scmp.ne.s32.totalorder %s59, %s62
    %p68 = scmp.eq.s32.totalorder %s9, 0
    %p69 = por %p67, %p68
    %p70 = scmp.ne.s32.totalorder %s59, %s62
    %p71 = scmp.eq.s32.totalorder %s14, 2
    %p72 = por %p70, %p71
    %p73 = scmp.ne.s32.totalorder %s62, %s63
    %p74 = scmp.eq.s32.totalorder %s14, 0
    %p75 = por %p73, %p74
    %p76 = scmp.ne.s32.totalorder %s62, %s63
    %p77 = scmp.eq.s32.totalorder %s15, 2
    %p78 = por %p76, %p77
    %p80 = scmp.ne.s32.totalorder %s63, %s79
    %p81 = scmp.eq.s32.totalorder %s15, 0
    %p82 = por %p80, %p81
    %s83 = ssub.s32 %s16, %s28
    %p84 = scmp.eq.s32.totalorder %s83, 0
    %s86 = sadd.s32 %s85, 1
    %s87 = scalar_select %p84, %s85, %s86
    %p90 = pneg %p84
    %p91 = scmp.eq.s32.totalorder %s9, 2
    %p92 = por %p90, %p91
    %p93 = scmp.ne.s32.totalorder %s85, %s88
    %p94 = scmp.eq.s32.totalorder %s9, 0
    %p95 = por %p93, %p94
    %p96 = scmp.ne.s32.totalorder %s85, %s88
    %p97 = scmp.eq.s32.totalorder %s14, 2
    %p98 = por %p96, %p97
    %p99 = scmp.ne.s32.totalorder %s88, %s89
    %p100 = scmp.eq.s32.totalorder %s14, 0
    %p101 = por %p99, %p100
    %p102 = scmp.ne.s32.totalorder %s88, %s89
    %p103 = scmp.eq.s32.totalorder %s15, 2
    %p104 = por %p102, %p103
    %p106 = scmp.ne.s32.totalorder %s89, %s105
    %p107 = scmp.eq.s32.totalorder %s15, 0
    %p108 = por %p106, %p107
    %s109 = ssub.s32 %s16, %s28
    %s110 = ssub.s32 %s17, %s24
    %s111 = sor.u32 %s109, %s110
    %p112 = scmp.eq.s32.totalorder %s111, 0
    %s114 = sadd.s32 %s113, 1
    %s115 = scalar_select %p112, %s113, %s114
    %p118 = pneg %p112
    %p119 = scmp.eq.s32.totalorder %s9, 2
    %p120 = por %p118, %p119
    %p121 = scmp.ne.s32.totalorder %s113, %s116
    %p122 = scmp.eq.s32.totalorder %s9, 0
    %p123 = por %p121, %p122
    %p124 = scmp.ne.s32.totalorder %s113, %s116
    %p125 = scmp.eq.s32.totalorder %s14, 2
    %p126 = por %p124, %p125
    %p127 = scmp.ne.s32.totalorder %s116, %s117
    %p128 = scmp.eq.s32.totalorder %s14, 0
    %p129 = por %p127, %p128
    %p130 = scmp.ne.s32.totalorder %s116, %s117
    %p131 = scmp.eq.s32.totalorder %s15, 2
    %p132 = por %p130, %p131
    %p134 = scmp.ne.s32.totalorder %s117, %s133
    %p135 = scmp.eq.s32.totalorder %s15, 0
    %p136 = por %p134, %p135
    %p137 = scmp.le.s32.totalorder 1, %s9
    %p138 = scmp.lt.s32.totalorder %s9, 4
    %p139 = pnand %p137, %p138
    %p140 = pneg %p139
    // Predicated region
    $region9: #{model_forward.12} parent=5 // pred_check
      _
    $region10: #{model_forward.12} parent=5 // pred_check_branch
      %142 = sbr.rel (%p139) target = $region12
    $region11: #{model_forward.12} parent=5 // pred_region
      %s143 = ssub.s32 %s9, 1
    $region12: #{model_forward.12} parent=5 // pred_fallthru
      _
    %p144 = scmp.lt.s32.totalorder %s9, 3
    // Predicated region
    $region13: #{model_forward.12} parent=5 // pred_check
      %p145 = pneg %p144
    $region14: #{model_forward.12} parent=5 // pred_check_branch
      %147 = sbr.rel (%p145) target = $region16
    $region15: #{model_forward.12} parent=5 // pred_region
      // Predicated region
      $region17: #{model_forward.12} parent=15 // pred_check
        %p148 = pneg %p43
      $region18: #{model_forward.12} parent=15 // pred_check_branch
        %150 = sbr.rel (%p148) target = $region20
      $region19: #{model_forward.12} parent=15 // pred_region
        %s151 = smul.u32 8, %s17
        %p152 = scmp.lt.s32.totalorder %s16, 2
        %s153 = scalar_select %p152, %s16, 2
        %p154 = scmp.lt.s32.totalorder %s151, 7
        %s155 = scalar_select %p154, %s151, 7
        %s156 = smul.addr %s155, 2
        %s157 = smul.addr %s153, 16
        %s158 = sadd.s32 %s156, %s157
        %s159 = smul.addr %s158, 4
        %s160 = scalar_lea.vmem %s0, %s159
        %s161 = smul.u32 8, %s17
      $region20: #{model_forward.12} parent=15 // pred_fallthru
        _
      // Predicated region
      $region21: #{model_forward.12} parent=15 // pred_check
        %p162 = pneg %p69
      $region22: #{model_forward.12} parent=15 // pred_check_branch
        %164 = sbr.rel (%p162) target = $region24
      $region23: #{model_forward.12} parent=15 // pred_region
        %p165 = scmp.lt.s32.totalorder %s16, 2
        %s166 = scalar_select %p165, %s16, 2
        %s167 = smul.addr %s166, 64
        %s168 = smul.addr %s167, 4
        %s169 = scalar_lea.vmem %s1, %s168
      $region24: #{model_forward.12} parent=15 // pred_fallthru
        _
      // Predicated region
      $region25: #{model_forward.12} parent=15 // pred_check
        %p170 = pneg %p95
      $region26: #{model_forward.12} parent=15 // pred_check_branch
        %172 = sbr.rel (%p170) target = $region28
      $region27: #{model_forward.12} parent=15 // pred_region
        %p173 = scmp.lt.s32.totalorder %s16, 2
        %s174 = scalar_select %p173, %s16, 2
        %s175 = smul.addr %s174, 2
        %s176 = scalar_lea.vmem %s2, %s175
      $region28: #{model_forward.12} parent=15 // pred_fallthru
        _
    $region16: #{model_forward.12} parent=5 // pred_fallthru
      _
    %p177 = scmp.le.s32.totalorder 1, %s9
    %p178 = scmp.lt.s32.totalorder %s9, 4
    %p179 = pnand %p177, %p178
    %p180 = pneg %p179
    // Predicated region
    $region29: #{model_forward.12} parent=5 // pred_check
      _
    $region30: #{model_forward.12} parent=5 // pred_check_branch
      %182 = sbr.rel (%p179) target = $region32
    $region31: #{model_forward.12} parent=5 // pred_region
      %s183 = ssub.s32 %s9, 1
      %s184 = smul.u32 8, %s19
      %p185 = scmp.lt.s32.totalorder %s18, 2
      %s186 = scalar_select %p185, %s18, 2
      %p187 = scmp.lt.s32.totalorder %s184, 7
      %s188 = scalar_select %p187, %s184, 7
      %s189 = smul.addr %s188, 2
      %s190 = smul.addr %s186, 16
      %s191 = sadd.s32 %s189, %s190
      %s192 = smul.addr %s191, 4
      %s193 = scalar_lea.vmem %s0, %s192
      %p194 = pneg %p49
      %p195 = pneg %p46
      %p196 = scmp.lt.s32.totalorder %s18, 2
      %s197 = scalar_select %p196, %s18, 2
      %s198 = smul.addr %s197, 64
      %s199 = smul.addr %s198, 4
      %s200 = scalar_lea.vmem %s1, %s199
      %p201 = pneg %p75
      %p202 = pneg %p72
      %p203 = scmp.lt.s32.totalorder %s18, 2
      %s204 = scalar_select %p203, %s18, 2
      %s205 = smul.addr %s204, 2
      %s206 = scalar_lea.vmem %s2, %s205
      %p207 = pneg %p101
      %p208 = pneg %p98
      %p209 = pneg %p129
      %p210 = pneg %p126
      %s211 = smul.u32 8, %s19
      %p212 = scmp.lt.s32.totalorder %s18, 2
      %s213 = scalar_select %p212, %s18, 2
      %p214 = scmp.lt.s32.totalorder %s211, 7
      %s215 = scalar_select %p214, %s211, 7
      %s216 = smul.addr %s215, 2
      %s217 = smul.addr %s213, 16
      %s218 = sadd.s32 %s216, %s217
      %s219 = smul.addr %s218, 4
      %s220 = scalar_lea.vmem %s3, %s219
      %s221 = smul.u32 8, %s19
      %p222 = scmp.lt.s32.totalorder %s18, 2
      %s223 = scalar_select %p222, %s18, 2
      %p224 = scmp.lt.s32.totalorder %s221, 7
      %s225 = scalar_select %p224, %s221, 7
      %s226 = smul.addr %s225, 2
      %s227 = smul.addr %s223, 16
      %s228 = sadd.s32 %s226, %s227
      %s229 = smul.addr %s228, 4
      %s230 = scalar_lea.vmem %s0, %s229
      %s231 = smul.u32 8, %s19
      %p232 = scmp.lt.s32.totalorder %s18, 2
      %s233 = scalar_select %p232, %s18, 2
      %s234 = smul.addr %s233, 64
      %s235 = smul.addr %s234, 4
      %s236 = scalar_lea.vmem %s1, %s235
      %p237 = scmp.lt.s32.totalorder %s18, 2
      %s238 = scalar_select %p237, %s18, 2
      %s239 = smul.addr %s238, 2
      %s240 = scalar_lea.vmem %s2, %s239
      %s241 = smul.u32 8, %s19
      %p242 = scmp.lt.s32.totalorder %s18, 2
      %s243 = scalar_select %p242, %s18, 2
      %p244 = scmp.lt.s32.totalorder %s241, 7
      %s245 = scalar_select %p244, %s241, 7
      %s246 = smul.addr %s245, 2
      %s247 = smul.addr %s243, 16
      %s248 = sadd.s32 %s246, %s247
      %s249 = smul.addr %s248, 4
      %s250 = scalar_lea.vmem %s3, %s249
      %s251 = smul.u32 8, %s19
      %v252 = vld [vmem:[%s230] sm:$0xff]
      %v253 = vld [vmem:[%s230 + $0x8] sm:$0xff]
      %v254 = vld [vmem:[%s230 + $0x10] sm:$0xff]
      %v255 = vld [vmem:[%s230 + $0x18] sm:$0xff]
      %v256 = vld [vmem:[%s230 + $0x20] sm:$0xff]
      %v257 = vld [vmem:[%s230 + $0x28] sm:$0xff]
      %v258 = vld [vmem:[%s230 + $0x30] sm:$0xff]
      %v259 = vld [vmem:[%s230 + $0x38] sm:$0xff]
      %v260 = vld [vmem:[%s236] sm:$0xff]
      %v261 = vld [vmem:[%s236 + $0x8] sm:$0xff]
      %v262 = vld [vmem:[%s236 + $0x10] sm:$0xff]
      %v263 = vld [vmem:[%s236 + $0x18] sm:$0xff]
      %v264 = vld [vmem:[%s236 + $0x20] sm:$0xff]
      %v265 = vld [vmem:[%s236 + $0x28] sm:$0xff]
      %v266 = vld [vmem:[%s236 + $0x30] sm:$0xff]
      %v267 = vld [vmem:[%s236 + $0x38] sm:$0xff]
      %v268 = vld [vmem:[%s236 + $0x40] sm:$0xff]
      %v269 = vld [vmem:[%s236 + $0x48] sm:$0xff]
      %v270 = vld [vmem:[%s236 + $0x50] sm:$0xff]
      %v271 = vld [vmem:[%s236 + $0x58] sm:$0xff]
      %v272 = vld [vmem:[%s236 + $0x60] sm:$0xff]
      %v273 = vld [vmem:[%s236 + $0x68] sm:$0xff]
      %v274 = vld [vmem:[%s236 + $0x70] sm:$0xff]
      %v275 = vld [vmem:[%s236 + $0x78] sm:$0xff]
      %v276 = vld [vmem:[%s236 + $0x80] sm:$0xff]
      %v277 = vld [vmem:[%s236 + $0x88] sm:$0xff]
      %v278 = vld [vmem:[%s236 + $0x90] sm:$0xff]
      %v279 = vld [vmem:[%s236 + $0x98] sm:$0xff]
      %v280 = vld [vmem:[%s236 + $0xa0] sm:$0xff]
      %v281 = vld [vmem:[%s236 + $0xa8] sm:$0xff]
      %v282 = vld [vmem:[%s236 + $0xb0] sm:$0xff]
      %v283 = vld [vmem:[%s236 + $0xb8] sm:$0xff]
      %v284 = vld [vmem:[%s236 + $0xc0] sm:$0xff]
      %v285 = vld [vmem:[%s236 + $0xc8] sm:$0xff]
      %v286 = vld [vmem:[%s236 + $0xd0] sm:$0xff]
      %v287 = vld [vmem:[%s236 + $0xd8] sm:$0xff]
      %v288 = vld [vmem:[%s236 + $0xe0] sm:$0xff]
      %v289 = vld [vmem:[%s236 + $0xe8] sm:$0xff]
      %v290 = vld [vmem:[%s236 + $0xf0] sm:$0xff]
      %v291 = vld [vmem:[%s236 + $0xf8] sm:$0xff]
      %v292 = vld [vmem:[%s240] sm:$0x3]
      %v294 = vperm.slane %v292, 0
      %v295 = vperm.slane %v292, 1
      %v306 = vunpack.c.l.b16 %v252
      %v307 = vunpack.c.h.b16 %v252
      %v308 = vunpack.c.l.b16 %v253
      %v309 = vunpack.c.h.b16 %v253
      %v310 = vunpack.c.l.b16 %v254
      %v311 = vunpack.c.h.b16 %v254
      %v312 = vunpack.c.l.b16 %v255
      %v313 = vunpack.c.h.b16 %v255
      %v314 = vunpack.c.l.b16 %v256
      %v315 = vunpack.c.h.b16 %v256
      %v316 = vunpack.c.l.b16 %v257
      %v317 = vunpack.c.h.b16 %v257
      %v318 = vunpack.c.l.b16 %v258
      %v319 = vunpack.c.h.b16 %v258
      %v320 = vunpack.c.l.b16 %v259
      %v321 = vunpack.c.h.b16 %v259
      %v322 = vpack.c.b16 %v308, %v306
      %v323 = vpack.c.b16 %v309, %v307
      %v324 = vpack.c.b16 %v312, %v310
      %v325 = vpack.c.b16 %v313, %v311
      %v326 = vpack.c.b16 %v316, %v314
      %v327 = vpack.c.b16 %v317, %v315
      %v328 = vpack.c.b16 %v320, %v318
      %v329 = vpack.c.b16 %v321, %v319
      %v370 = vunpack.c.l.b16 %v260
      %v371 = vunpack.c.h.b16 %v260
      %v372 = vunpack.c.l.b16 %v261
      %v373 = vunpack.c.h.b16 %v261
      %v374 = vunpack.c.l.b16 %v262
      %v375 = vunpack.c.h.b16 %v262
      %v376 = vunpack.c.l.b16 %v263
      %v377 = vunpack.c.h.b16 %v263
      %v378 = vunpack.c.l.b16 %v264
      %v379 = vunpack.c.h.b16 %v264
      %v380 = vunpack.c.l.b16 %v265
      %v381 = vunpack.c.h.b16 %v265
      %v382 = vunpack.c.l.b16 %v266
      %v383 = vunpack.c.h.b16 %v266
      %v384 = vunpack.c.l.b16 %v267
      %v385 = vunpack.c.h.b16 %v267
      %v386 = vunpack.c.l.b16 %v268
      %v387 = vunpack.c.h.b16 %v268
      %v388 = vunpack.c.l.b16 %v269
      %v389 = vunpack.c.h.b16 %v269
      %v390 = vunpack.c.l.b16 %v270
      %v391 = vunpack.c.h.b16 %v270
      %v392 = vunpack.c.l.b16 %v271
      %v393 = vunpack.c.h.b16 %v271
      %v394 = vunpack.c.l.b16 %v272
      %v395 = vunpack.c.h.b16 %v272
      %v396 = vunpack.c.l.b16 %v273
      %v397 = vunpack.c.h.b16 %v273
      %v398 = vunpack.c.l.b16 %v274
      %v399 = vunpack.c.h.b16 %v274
      %v400 = vunpack.c.l.b16 %v275
      %v401 = vunpack.c.h.b16 %v275
      %v402 = vunpack.c.l.b16 %v276
      %v403 = vunpack.c.h.b16 %v276
      %v404 = vunpack.c.l.b16 %v277
      %v405 = vunpack.c.h.b16 %v277
      %v406 = vunpack.c.l.b16 %v278
      %v407 = vunpack.c.h.b16 %v278
      %v408 = vunpack.c.l.b16 %v279
      %v409 = vunpack.c.h.b16 %v279
      %v410 = vunpack.c.l.b16 %v280
      %v411 = vunpack.c.h.b16 %v280
      %v412 = vunpack.c.l.b16 %v281
      %v413 = vunpack.c.h.b16 %v281
      %v414 = vunpack.c.l.b16 %v282
      %v415 = vunpack.c.h.b16 %v282
      %v416 = vunpack.c.l.b16 %v283
      %v417 = vunpack.c.h.b16 %v283
      %v418 = vunpack.c.l.b16 %v284
      %v419 = vunpack.c.h.b16 %v284
      %v420 = vunpack.c.l.b16 %v285
      %v421 = vunpack.c.h.b16 %v285
      %v422 = vunpack.c.l.b16 %v286
      %v423 = vunpack.c.h.b16 %v286
      %v424 = vunpack.c.l.b16 %v287
      %v425 = vunpack.c.h.b16 %v287
      %v426 = vunpack.c.l.b16 %v288
      %v427 = vunpack.c.h.b16 %v288
      %v428 = vunpack.c.l.b16 %v289
      %v429 = vunpack.c.h.b16 %v289
      %v430 = vunpack.c.l.b16 %v290
      %v431 = vunpack.c.h.b16 %v290
      %v432 = vunpack.c.l.b16 %v291
      %v433 = vunpack.c.h.b16 %v291
      %v434 = vpack.c.b16 %v372, %v370
      %v435 = vpack.c.b16 %v373, %v371
      %v436 = vpack.c.b16 %v376, %v374
      %v437 = vpack.c.b16 %v377, %v375
      %v438 = vpack.c.b16 %v380, %v378
      %v439 = vpack.c.b16 %v381, %v379
      %v440 = vpack.c.b16 %v384, %v382
      %v441 = vpack.c.b16 %v385, %v383
      %v442 = vpack.c.b16 %v388, %v386
      %v443 = vpack.c.b16 %v389, %v387
      %v444 = vpack.c.b16 %v392, %v390
      %v445 = vpack.c.b16 %v393, %v391
      %v446 = vpack.c.b16 %v396, %v394
      %v447 = vpack.c.b16 %v397, %v395
      %v448 = vpack.c.b16 %v400, %v398
      %v449 = vpack.c.b16 %v401, %v399
      %v450 = vpack.c.b16 %v404, %v402
      %v451 = vpack.c.b16 %v405, %v403
      %v452 = vpack.c.b16 %v408, %v406
      %v453 = vpack.c.b16 %v409, %v407
      %v454 = vpack.c.b16 %v412, %v410
      %v455 = vpack.c.b16 %v413, %v411
      %v456 = vpack.c.b16 %v416, %v414
      %v457 = vpack.c.b16 %v417, %v415
      %v458 = vpack.c.b16 %v420, %v418
      %v459 = vpack.c.b16 %v421, %v419
      %v460 = vpack.c.b16 %v424, %v422
      %v461 = vpack.c.b16 %v425, %v423
      %v462 = vpack.c.b16 %v428, %v426
      %v463 = vpack.c.b16 %v429, %v427
      %v464 = vpack.c.b16 %v432, %v430
      %v465 = vpack.c.b16 %v433, %v431
      %498 = vmatpush.bf16.msra.mxu0 %v448
      %499 = vmatpush.bf16.msra.mxu0 %v446
      %500 = vmatpush.bf16.msra.mxu0 %v444
      %501 = vmatpush.bf16.msra.mxu0 %v442
      %502 = vmatpush.bf16.msra.mxu0 %v440
      %503 = vmatpush.bf16.msra.mxu0 %v438
      %504 = vmatpush.bf16.msra.mxu0 %v436
      %505 = vmatpush.bf16.msra.mxu0 %v434
      %506 = vmatmul.bf16.gmra.mxu0 %v322
      %v507 = vpop.f32.mrf.mxu0
      %v508 = vadd.f32 %v294, %v507
      %v509 = vpop.f32.mrf.mxu0
      %v510 = vadd.f32 %v294, %v509
      %511 = vmatmul.bf16.gmra.mxu0 %v324
      %v512 = vpop.f32.mrf.mxu0
      %v513 = vadd.f32 %v294, %v512
      %v514 = vpop.f32.mrf.mxu0
      %v515 = vadd.f32 %v294, %v514
      %516 = vmatmul.bf16.gmra.mxu0 %v326
      %v517 = vpop.f32.mrf.mxu0
      %v518 = vadd.f32 %v294, %v517
      %v519 = vpop.f32.mrf.mxu0
      %v520 = vadd.f32 %v294, %v519
      %521 = vmatmul.bf16.gmra.mxu0 %v328
      %v522 = vpop.f32.mrf.mxu0
      %v523 = vadd.f32 %v294, %v522
      %v524 = vpop.f32.mrf.mxu0
      %v525 = vadd.f32 %v294, %v524
      %526 = vdwg.mxu0
      %527 = vmatpush.bf16.msra.mxu0 %v464
      %528 = vmatpush.bf16.msra.mxu0 %v462
      %529 = vmatpush.bf16.msra.mxu0 %v460
      %530 = vmatpush.bf16.msra.mxu0 %v458
      %531 = vmatpush.bf16.msra.mxu0 %v456
      %532 = vmatpush.bf16.msra.mxu0 %v454
      %533 = vmatpush.bf16.msra.mxu0 %v452
      %534 = vmatpush.bf16.msra.mxu0 %v450
      %535 = vmatmul.bf16.gmra.mxu0 %v323
      %v536 = vpop.f32.mrf.mxu0
      %v537 = vadd.f32 %v508, %v536
      %v538 = vpop.f32.mrf.mxu0
      %v539 = vadd.f32 %v510, %v538
      %540 = vmatmul.bf16.gmra.mxu0 %v325
      %v541 = vpop.f32.mrf.mxu0
      %v542 = vadd.f32 %v513, %v541
      %v543 = vpop.f32.mrf.mxu0
      %v544 = vadd.f32 %v515, %v543
      %545 = vmatmul.bf16.gmra.mxu0 %v327
      %v546 = vpop.f32.mrf.mxu0
      %v547 = vadd.f32 %v518, %v546
      %v548 = vpop.f32.mrf.mxu0
      %v549 = vadd.f32 %v520, %v548
      %550 = vmatmul.bf16.gmra.mxu0 %v329
      %v551 = vpop.f32.mrf.mxu0
      %v552 = vadd.f32 %v523, %v551
      %v553 = vpop.f32.mrf.mxu0
      %v554 = vadd.f32 %v525, %v553
      %555 = vdwg.mxu0
      %556 = vmatpush.bf16.msra.mxu0 %v449
      %557 = vmatpush.bf16.msra.mxu0 %v447
      %558 = vmatpush.bf16.msra.mxu0 %v445
      %559 = vmatpush.bf16.msra.mxu0 %v443
      %560 = vmatpush.bf16.msra.mxu0 %v441
      %561 = vmatpush.bf16.msra.mxu0 %v439
      %562 = vmatpush.bf16.msra.mxu0 %v437
      %563 = vmatpush.bf16.msra.mxu0 %v435
      %564 = vmatmul.bf16.gmra.mxu0 %v322
      %v565 = vpop.f32.mrf.mxu0
      %v566 = vadd.f32 %v295, %v565
      %v567 = vpop.f32.mrf.mxu0
      %v568 = vadd.f32 %v295, %v567
      %569 = vmatmul.bf16.gmra.mxu0 %v324
      %v570 = vpop.f32.mrf.mxu0
      %v571 = vadd.f32 %v295, %v570
      %v572 = vpop.f32.mrf.mxu0
      %v573 = vadd.f32 %v295, %v572
      %574 = vmatmul.bf16.gmra.mxu0 %v326
      %v575 = vpop.f32.mrf.mxu0
      %v576 = vadd.f32 %v295, %v575
      %v577 = vpop.f32.mrf.mxu0
      %v578 = vadd.f32 %v295, %v577
      %579 = vmatmul.bf16.gmra.mxu0 %v328
      %v580 = vpop.f32.mrf.mxu0
      %v581 = vadd.f32 %v295, %v580
      %v582 = vpop.f32.mrf.mxu0
      %v583 = vadd.f32 %v295, %v582
      %584 = vdwg.mxu0
      %585 = vmatpush.bf16.msra.mxu0 %v465
      %586 = vmatpush.bf16.msra.mxu0 %v463
      %587 = vmatpush.bf16.msra.mxu0 %v461
      %588 = vmatpush.bf16.msra.mxu0 %v459
      %589 = vmatpush.bf16.msra.mxu0 %v457
      %590 = vmatpush.bf16.msra.mxu0 %v455
      %591 = vmatpush.bf16.msra.mxu0 %v453
      %592 = vmatpush.bf16.msra.mxu0 %v451
      %593 = vmatmul.bf16.gmra.mxu0 %v323
      %v594 = vpop.f32.mrf.mxu0
      %v595 = vadd.f32 %v566, %v594
      %v596 = vpop.f32.mrf.mxu0
      %v597 = vadd.f32 %v568, %v596
      %598 = vmatmul.bf16.gmra.mxu0 %v325
      %v599 = vpop.f32.mrf.mxu0
      %v600 = vadd.f32 %v571, %v599
      %v601 = vpop.f32.mrf.mxu0
      %v602 = vadd.f32 %v573, %v601
      %603 = vmatmul.bf16.gmra.mxu0 %v327
      %v604 = vpop.f32.mrf.mxu0
      %v605 = vadd.f32 %v576, %v604
      %v606 = vpop.f32.mrf.mxu0
      %v607 = vadd.f32 %v578, %v606
      %608 = vmatmul.bf16.gmra.mxu0 %v329
      %v609 = vpop.f32.mrf.mxu0
      %v610 = vadd.f32 %v581, %v609
      %v611 = vpop.f32.mrf.mxu0
      %v612 = vadd.f32 %v583, %v611
      %613 = vdwg.mxu0
      %vm614 = vcmp.gt.f32.partialorder %v537, 0.0
      %vm615 = vcmp.gt.f32.partialorder %v595, 0.0
      %vm616 = vcmp.gt.f32.partialorder %v539, 0.0
      %vm617 = vcmp.gt.f32.partialorder %v597, 0.0
      %vm618 = vcmp.gt.f32.partialorder %v542, 0.0
      %vm619 = vcmp.gt.f32.partialorder %v600, 0.0
      %vm620 = vcmp.gt.f32.partialorder %v544, 0.0
      %vm621 = vcmp.gt.f32.partialorder %v602, 0.0
      %vm622 = vcmp.gt.f32.partialorder %v547, 0.0
      %vm623 = vcmp.gt.f32.partialorder %v605, 0.0
      %vm624 = vcmp.gt.f32.partialorder %v549, 0.0
      %vm625 = vcmp.gt.f32.partialorder %v607, 0.0
      %vm626 = vcmp.gt.f32.partialorder %v552, 0.0
      %vm627 = vcmp.gt.f32.partialorder %v610, 0.0
      %vm628 = vcmp.gt.f32.partialorder %v554, 0.0
      %vm629 = vcmp.gt.f32.partialorder %v612, 0.0
      %v630 = vmul.f32 %v537, 0.1
      %v631 = vmul.f32 %v595, 0.1
      %v632 = vmul.f32 %v539, 0.1
      %v633 = vmul.f32 %v597, 0.1
      %v634 = vmul.f32 %v542, 0.1
      %v635 = vmul.f32 %v600, 0.1
      %v636 = vmul.f32 %v544, 0.1
      %v637 = vmul.f32 %v602, 0.1
      %v638 = vmul.f32 %v547, 0.1
      %v639 = vmul.f32 %v605, 0.1
      %v640 = vmul.f32 %v549, 0.1
      %v641 = vmul.f32 %v607, 0.1
      %v642 = vmul.f32 %v552, 0.1
      %v643 = vmul.f32 %v610, 0.1
      %v644 = vmul.f32 %v554, 0.1
      %v645 = vmul.f32 %v612, 0.1
      %v646 = vsel %vm614, %v537, %v630
      %v647 = vsel %vm615, %v595, %v631
      %v648 = vsel %vm616, %v539, %v632
      %v649 = vsel %vm617, %v597, %v633
      %v650 = vsel %vm618, %v542, %v634
      %v651 = vsel %vm619, %v600, %v635
      %v652 = vsel %vm620, %v544, %v636
      %v653 = vsel %vm621, %v602, %v637
      %v654 = vsel %vm622, %v547, %v638
      %v655 = vsel %vm623, %v605, %v639
      %v656 = vsel %vm624, %v549, %v640
      %v657 = vsel %vm625, %v607, %v641
      %v658 = vsel %vm626, %v552, %v642
      %v659 = vsel %vm627, %v610, %v643
      %v660 = vsel %vm628, %v554, %v644
      %v661 = vsel %vm629, %v612, %v645
      %v662 = vpack.c.bf16 %v647, %v646
      %v663 = vpack.c.bf16 %v649, %v648
      %v664 = vpack.c.bf16 %v651, %v650
      %v665 = vpack.c.bf16 %v653, %v652
      %v666 = vpack.c.bf16 %v655, %v654
      %v667 = vpack.c.bf16 %v657, %v656
      %v668 = vpack.c.bf16 %v659, %v658
      %v669 = vpack.c.bf16 %v661, %v660
      %670 = vst [vmem:[%s250] sm:$0xff] %v662
      %671 = vst [vmem:[%s250 + $0x8] sm:$0xff] %v663
      %672 = vst [vmem:[%s250 + $0x10] sm:$0xff] %v664
      %673 = vst [vmem:[%s250 + $0x18] sm:$0xff] %v665
      %674 = vst [vmem:[%s250 + $0x20] sm:$0xff] %v666
      %675 = vst [vmem:[%s250 + $0x28] sm:$0xff] %v667
      %676 = vst [vmem:[%s250 + $0x30] sm:$0xff] %v668
      %677 = vst [vmem:[%s250 + $0x38] sm:$0xff] %v669
      %s678 = smul.u32 8, %s19
      %p679 = scmp.lt.s32.totalorder %s18, 2
      %s680 = scalar_select %p679, %s18, 2
      %p681 = scmp.lt.s32.totalorder %s678, 7
      %s682 = scalar_select %p681, %s678, 7
      %s683 = smul.addr %s682, 2
      %s684 = smul.addr %s680, 16
      %s685 = sadd.s32 %s683, %s684
      %s686 = smul.addr %s685, 4
      %s687 = scalar_lea.vmem %s3, %s686
      // Predicated region
      $region33: #{model_forward.12} parent=31 // pred_check
        %p688 = pneg %p126
      $region34: #{model_forward.12} parent=31 // pred_check_branch
        %690 = sbr.rel (%p688) target = $region36
      $region35: #{model_forward.12} parent=31 // pred_region
        %s691 = smul.u32 8, %s19
      $region36: #{model_forward.12} parent=31 // pred_fallthru
        _
    $region32: #{model_forward.12} parent=5 // pred_fallthru
      _
    %p692 = scmp.le.s32.totalorder 2, %s9
    // Predicated region
    $region37: #{model_forward.12} parent=5 // pred_check
      %p693 = pneg %p692
    $region38: #{model_forward.12} parent=5 // pred_check_branch
      %695 = sbr.rel (%p693) target = $region40
    $region39: #{model_forward.12} parent=5 // pred_region
      %s696 = ssub.s32 %s9, 2
      // Predicated region
      $region41: #{model_forward.12} parent=39 // pred_check
        %p697 = pneg %p132
      $region42: #{model_forward.12} parent=39 // pred_check_branch
        %699 = sbr.rel (%p697) target = $region44
      $region43: #{model_forward.12} parent=39 // pred_region
        %s700 = smul.u32 8, %s21
        %p701 = scmp.lt.s32.totalorder %s20, 2
        %s702 = scalar_select %p701, %s20, 2
        %p703 = scmp.lt.s32.totalorder %s700, 7
        %s704 = scalar_select %p703, %s700, 7
        %s705 = smul.addr %s704, 2
        %s706 = smul.addr %s702, 16
        %s707 = sadd.s32 %s705, %s706
        %s708 = smul.addr %s707, 4
        %s709 = scalar_lea.vmem %s3, %s708
      $region44: #{model_forward.12} parent=39 // pred_fallthru
        _
    $region40: #{model_forward.12} parent=5 // pred_fallthru
      _
  $region6: #{model_forward.12} parent=0 // loop_footer
    %s13 = sadd.s32 1, %s9
  $region7: #{model_forward.12} parent=0 // loop_footer_branch
    %8 = sbr.rel target = $region3
  $region8: #{model_forward.12} parent=0 // loop_exit
    _

// kernel: model_forward.14
$region0: #{model_forward.14}
  #allocation0 [shape = 'u32[]', space=smem, size = 0x4, offset = 0x4, fixed_abs, tag = 'smem constant byte address 0x4 - core index']
  #allocation1 [shape = 'u32[72,128]{1,0:T(1,128)}', space=vmem, size = 0x9000, scoped, tag = 'internal scratch']
  %s0 = inlined_call_operand.vmem [shape: bf16[1,64,256], index: 0, kind: input, shape index: {}]
  %s1 = inlined_call_operand.vmem [shape: bf16[3,256,256], index: 1, kind: input, shape index: {}]
  %s2 = inlined_call_operand.vmem [shape: f32[3,1,256], index: 2, kind: input, shape index: {}]
  %s3 = inlined_call_operand.vmem [shape: bf16[3,64,256], index: 3, kind: output, shape index: {}]
  %s4 = sld [smem:[#allocation0]]
  $region45: #{model_forward.14} parent=0
    _
  %s6 = ssub.s32 1, %s4
  %s7 = scalar_select 0, %s6, %s4
  loop: start=0, step=1, limit=5
  $region2: #{model_forward.14} parent=0 // loop_pre_header
    _
  $region3: #{model_forward.14} parent=0 // loop_header
    %s9 = sphi 0, %s13
    %p10 = scmp.ge.s32.totalorder %s9, 5
    %s16 = sphi 0, %s28
    %s17 = sphi 0, %s24
    %s18 = sphi 0, %s16
    %s19 = sphi 0, %s17
    %s20 = sphi 0, %s18
    %s21 = sphi 0, %s19
    %s31 = sphi 0, %s33
    %s34 = sphi 0, %s31
    %s35 = sphi 0, %s34
    %s51 = sphi 0, %s35
    %s57 = sphi 0, %s59
    %s60 = sphi 0, %s57
    %s61 = sphi 0, %s60
    %s77 = sphi 0, %s61
    %s83 = sphi 0, %s85
    %s86 = sphi 0, %s83
    %s87 = sphi 0, %s86
    %s103 = sphi 0, %s87
    %s111 = sphi 0, %s113
    %s114 = sphi 0, %s111
    %s115 = sphi 0, %s114
    %s131 = sphi 0, %s115
  $region4: #{model_forward.14} parent=0 // loop_header_branch
    %12 = sbr.rel (%p10) target = $region8
  $region5: #{model_forward.14} parent=0 // loop_body
    %s14 = ssub.s32 %s9, 1
    %s15 = ssub.s32 %s9, 2
    %s22 = sadd.s32 1, %s17
    %p23 = scmp.ge.s32.totalorder %s22, 1
    %s24 = scalar_select %p23, 0, %s22
    %s25 = sadd.s32 1, %s16
    %s26 = scalar_select %p23, %s25, %s16
    %p27 = scmp.ge.s32.totalorder %s26, 3
    %s28 = scalar_select %p27, 0, %s26
    %s29 = ssub.s32 %s17, %s24
    %p30 = scmp.eq.s32.totalorder %s29, 0
    %s32 = sadd.s32 %s31, 1
    %s33 = scalar_select %p30, %s31, %s32
    %p36 = pneg %p30
    %p37 = scmp.eq.s32.totalorder %s9, 2
    %p38 = por %p36, %p37
    %p39 = scmp.ne.s32.totalorder %s31, %s34
    %p40 = scmp.eq.s32.totalorder %s9, 0
    %p41 = por %p39, %p40
    %p42 = scmp.ne.s32.totalorder %s31, %s34
    %p43 = scmp.eq.s32.totalorder %s14, 2
    %p44 = por %p42, %p43
    %p45 = scmp.ne.s32.totalorder %s34, %s35
    %p46 = scmp.eq.s32.totalorder %s14, 0
    %p47 = por %p45, %p46
    %p48 = scmp.ne.s32.totalorder %s34, %s35
    %p49 = scmp.eq.s32.totalorder %s15, 2
    %p50 = por %p48, %p49
    %p52 = scmp.ne.s32.totalorder %s35, %s51
    %p53 = scmp.eq.s32.totalorder %s15, 0
    %p54 = por %p52, %p53
    %s55 = ssub.s32 %s16, %s28
    %p56 = scmp.eq.s32.totalorder %s55, 0
    %s58 = sadd.s32 %s57, 1
    %s59 = scalar_select %p56, %s57, %s58
    %p62 = pneg %p56
    %p63 = scmp.eq.s32.totalorder %s9, 2
    %p64 = por %p62, %p63
    %p65 = scmp.ne.s32.totalorder %s57, %s60
    %p66 = scmp.eq.s32.totalorder %s9, 0
    %p67 = por %p65, %p66
    %p68 = scmp.ne.s32.totalorder %s57, %s60
    %p69 = scmp.eq.s32.totalorder %s14, 2
    %p70 = por %p68, %p69
    %p71 = scmp.ne.s32.totalorder %s60, %s61
    %p72 = scmp.eq.s32.totalorder %s14, 0
    %p73 = por %p71, %p72
    %p74 = scmp.ne.s32.totalorder %s60, %s61
    %p75 = scmp.eq.s32.totalorder %s15, 2
    %p76 = por %p74, %p75
    %p78 = scmp.ne.s32.totalorder %s61, %s77
    %p79 = scmp.eq.s32.totalorder %s15, 0
    %p80 = por %p78, %p79
    %s81 = ssub.s32 %s16, %s28
    %p82 = scmp.eq.s32.totalorder %s81, 0
    %s84 = sadd.s32 %s83, 1
    %s85 = scalar_select %p82, %s83, %s84
    %p88 = pneg %p82
    %p89 = scmp.eq.s32.totalorder %s9, 2
    %p90 = por %p88, %p89
    %p91 = scmp.ne.s32.totalorder %s83, %s86
    %p92 = scmp.eq.s32.totalorder %s9, 0
    %p93 = por %p91, %p92
    %p94 = scmp.ne.s32.totalorder %s83, %s86
    %p95 = scmp.eq.s32.totalorder %s14, 2
    %p96 = por %p94, %p95
    %p97 = scmp.ne.s32.totalorder %s86, %s87
    %p98 = scmp.eq.s32.totalorder %s14, 0
    %p99 = por %p97, %p98
    %p100 = scmp.ne.s32.totalorder %s86, %s87
    %p101 = scmp.eq.s32.totalorder %s15, 2
    %p102 = por %p100, %p101
    %p104 = scmp.ne.s32.totalorder %s87, %s103
    %p105 = scmp.eq.s32.totalorder %s15, 0
    %p106 = por %p104, %p105
    %s107 = ssub.s32 %s16, %s28
    %s108 = ssub.s32 %s17, %s24
    %s109 = sor.u32 %s107, %s108
    %p110 = scmp.eq.s32.totalorder %s109, 0
    %s112 = sadd.s32 %s111, 1
    %s113 = scalar_select %p110, %s111, %s112
    %p116 = pneg %p110
    %p117 = scmp.eq.s32.totalorder %s9, 2
    %p118 = por %p116, %p117
    %p119 = scmp.ne.s32.totalorder %s111, %s114
    %p120 = scmp.eq.s32.totalorder %s9, 0
    %p121 = por %p119, %p120
    %p122 = scmp.ne.s32.totalorder %s111, %s114
    %p123 = scmp.eq.s32.totalorder %s14, 2
    %p124 = por %p122, %p123
    %p125 = scmp.ne.s32.totalorder %s114, %s115
    %p126 = scmp.eq.s32.totalorder %s14, 0
    %p127 = por %p125, %p126
    %p128 = scmp.ne.s32.totalorder %s114, %s115
    %p129 = scmp.eq.s32.totalorder %s15, 2
    %p130 = por %p128, %p129
    %p132 = scmp.ne.s32.totalorder %s115, %s131
    %p133 = scmp.eq.s32.totalorder %s15, 0
    %p134 = por %p132, %p133
    %p135 = scmp.le.s32.totalorder 1, %s9
    %p136 = scmp.lt.s32.totalorder %s9, 4
    %p137 = pnand %p135, %p136
    %p138 = pneg %p137
    // Predicated region
    $region9: #{model_forward.14} parent=5 // pred_check
      _
    $region10: #{model_forward.14} parent=5 // pred_check_branch
      %140 = sbr.rel (%p137) target = $region12
    $region11: #{model_forward.14} parent=5 // pred_region
      %s141 = ssub.s32 %s9, 1
      // Predicated region
      $region13: #{model_forward.14} parent=11 // pred_check
        %p142 = pneg %p47
      $region14: #{model_forward.14} parent=11 // pred_check_branch
        %144 = sbr.rel (%p142) target = $region16
      $region15: #{model_forward.14} parent=11 // pred_region
        %s145 = smul.u32 8, %s19
        %p146 = scmp.lt.s32.totalorder %s145, 7
        %s147 = scalar_select %p146, %s145, 7
        %s148 = smul.addr %s147, 2
        %s149 = smul.addr %s148, 4
        %s150 = scalar_lea.vmem %s0, %s149
        %s151 = smul.u32 8, %s19
      $region16: #{model_forward.14} parent=11 // pred_fallthru
        _
    $region12: #{model_forward.14} parent=5 // pred_fallthru
      _
    %p152 = scmp.lt.s32.totalorder %s9, 3
    // Predicated region
    $region17: #{model_forward.14} parent=5 // pred_check
      %p153 = pneg %p152
    $region18: #{model_forward.14} parent=5 // pred_check_branch
      %155 = sbr.rel (%p153) target = $region20
    $region19: #{model_forward.14} parent=5 // pred_region
      // Predicated region
      $region21: #{model_forward.14} parent=19 // pred_check
        %p156 = pneg %p67
      $region22: #{model_forward.14} parent=19 // pred_check_branch
        %158 = sbr.rel (%p156) target = $region24
      $region23: #{model_forward.14} parent=19 // pred_region
        %p159 = scmp.lt.s32.totalorder %s16, 2
        %s160 = scalar_select %p159, %s16, 2
        %s161 = smul.addr %s160, 64
        %s162 = smul.addr %s161, 4
        %s163 = scalar_lea.vmem %s1, %s162
      $region24: #{model_forward.14} parent=19 // pred_fallthru
        _
      // Predicated region
      $region25: #{model_forward.14} parent=19 // pred_check
        %p164 = pneg %p93
      $region26: #{model_forward.14} parent=19 // pred_check_branch
        %166 = sbr.rel (%p164) target = $region28
      $region27: #{model_forward.14} parent=19 // pred_region
        %p167 = scmp.lt.s32.totalorder %s16, 2
        %s168 = scalar_select %p167, %s16, 2
        %s169 = smul.addr %s168, 2
        %s170 = scalar_lea.vmem %s2, %s169
      $region28: #{model_forward.14} parent=19 // pred_fallthru
        _
    $region20: #{model_forward.14} parent=5 // pred_fallthru
      _
    %p171 = scmp.le.s32.totalorder 1, %s9
    %p172 = scmp.lt.s32.totalorder %s9, 4
    %p173 = pnand %p171, %p172
    %p174 = pneg %p173
    // Predicated region
    $region29: #{model_forward.14} parent=5 // pred_check
      _
    $region30: #{model_forward.14} parent=5 // pred_check_branch
      %176 = sbr.rel (%p173) target = $region32
    $region31: #{model_forward.14} parent=5 // pred_region
      %s177 = ssub.s32 %s9, 1
      %s178 = smul.u32 8, %s19
      %p179 = scmp.lt.s32.totalorder %s178, 7
      %s180 = scalar_select %p179, %s178, 7
      %s181 = smul.addr %s180, 2
      %s182 = smul.addr %s181, 4
      %s183 = scalar_lea.vmem %s0, %s182
      %p184 = pneg %p47
      %p185 = pneg %p44
      %p186 = scmp.lt.s32.totalorder %s18, 2
      %s187 = scalar_select %p186, %s18, 2
      %s188 = smul.addr %s187, 64
      %s189 = smul.addr %s188, 4
      %s190 = scalar_lea.vmem %s1, %s189
      %p191 = pneg %p73
      %p192 = pneg %p70
      %p193 = scmp.lt.s32.totalorder %s18, 2
      %s194 = scalar_select %p193, %s18, 2
      %s195 = smul.addr %s194, 2
      %s196 = scalar_lea.vmem %s2, %s195
      %p197 = pneg %p99
      %p198 = pneg %p96
      %p199 = pneg %p127
      %p200 = pneg %p124
      %s201 = smul.u32 8, %s19
      %p202 = scmp.lt.s32.totalorder %s18, 2
      %s203 = scalar_select %p202, %s18, 2
      %p204 = scmp.lt.s32.totalorder %s201, 7
      %s205 = scalar_select %p204, %s201, 7
      %s206 = smul.addr %s205, 2
      %s207 = smul.addr %s203, 16
      %s208 = sadd.s32 %s206, %s207
      %s209 = smul.addr %s208, 4
      %s210 = scalar_lea.vmem %s3, %s209
      %s211 = smul.u32 8, %s19
      %p212 = scmp.lt.s32.totalorder %s211, 7
      %s213 = scalar_select %p212, %s211, 7
      %s214 = smul.addr %s213, 2
      %s215 = smul.addr %s214, 4
      %s216 = scalar_lea.vmem %s0, %s215
      %s217 = smul.u32 8, %s19
      %p218 = scmp.lt.s32.totalorder %s18, 2
      %s219 = scalar_select %p218, %s18, 2
      %s220 = smul.addr %s219, 64
      %s221 = smul.addr %s220, 4
      %s222 = scalar_lea.vmem %s1, %s221
      %p223 = scmp.lt.s32.totalorder %s18, 2
      %s224 = scalar_select %p223, %s18, 2
      %s225 = smul.addr %s224, 2
      %s226 = scalar_lea.vmem %s2, %s225
      %s227 = smul.u32 8, %s19
      %p228 = scmp.lt.s32.totalorder %s18, 2
      %s229 = scalar_select %p228, %s18, 2
      %p230 = scmp.lt.s32.totalorder %s227, 7
      %s231 = scalar_select %p230, %s227, 7
      %s232 = smul.addr %s231, 2
      %s233 = smul.addr %s229, 16
      %s234 = sadd.s32 %s232, %s233
      %s235 = smul.addr %s234, 4
      %s236 = scalar_lea.vmem %s3, %s235
      %s237 = smul.u32 8, %s19
      %v238 = vld [vmem:[%s216] sm:$0xff]
      %v239 = vld [vmem:[%s216 + $0x8] sm:$0xff]
      %v240 = vld [vmem:[%s216 + $0x10] sm:$0xff]
      %v241 = vld [vmem:[%s216 + $0x18] sm:$0xff]
      %v242 = vld [vmem:[%s216 + $0x20] sm:$0xff]
      %v243 = vld [vmem:[%s216 + $0x28] sm:$0xff]
      %v244 = vld [vmem:[%s216 + $0x30] sm:$0xff]
      %v245 = vld [vmem:[%s216 + $0x38] sm:$0xff]
      %v246 = vld [vmem:[%s222] sm:$0xff]
      %v247 = vld [vmem:[%s222 + $0x8] sm:$0xff]
      %v248 = vld [vmem:[%s222 + $0x10] sm:$0xff]
      %v249 = vld [vmem:[%s222 + $0x18] sm:$0xff]
      %v250 = vld [vmem:[%s222 + $0x20] sm:$0xff]
      %v251 = vld [vmem:[%s222 + $0x28] sm:$0xff]
      %v252 = vld [vmem:[%s222 + $0x30] sm:$0xff]
      %v253 = vld [vmem:[%s222 + $0x38] sm:$0xff]
      %v254 = vld [vmem:[%s222 + $0x40] sm:$0xff]
      %v255 = vld [vmem:[%s222 + $0x48] sm:$0xff]
      %v256 = vld [vmem:[%s222 + $0x50] sm:$0xff]
      %v257 = vld [vmem:[%s222 + $0x58] sm:$0xff]
      %v258 = vld [vmem:[%s222 + $0x60] sm:$0xff]
      %v259 = vld [vmem:[%s222 + $0x68] sm:$0xff]
      %v260 = vld [vmem:[%s222 + $0x70] sm:$0xff]
      %v261 = vld [vmem:[%s222 + $0x78] sm:$0xff]
      %v262 = vld [vmem:[%s222 + $0x80] sm:$0xff]
      %v263 = vld [vmem:[%s222 + $0x88] sm:$0xff]
      %v264 = vld [vmem:[%s222 + $0x90] sm:$0xff]
      %v265 = vld [vmem:[%s222 + $0x98] sm:$0xff]
      %v266 = vld [vmem:[%s222 + $0xa0] sm:$0xff]
      %v267 = vld [vmem:[%s222 + $0xa8] sm:$0xff]
      %v268 = vld [vmem:[%s222 + $0xb0] sm:$0xff]
      %v269 = vld [vmem:[%s222 + $0xb8] sm:$0xff]
      %v270 = vld [vmem:[%s222 + $0xc0] sm:$0xff]
      %v271 = vld [vmem:[%s222 + $0xc8] sm:$0xff]
      %v272 = vld [vmem:[%s222 + $0xd0] sm:$0xff]
      %v273 = vld [vmem:[%s222 + $0xd8] sm:$0xff]
      %v274 = vld [vmem:[%s222 + $0xe0] sm:$0xff]
      %v275 = vld [vmem:[%s222 + $0xe8] sm:$0xff]
      %v276 = vld [vmem:[%s222 + $0xf0] sm:$0xff]
      %v277 = vld [vmem:[%s222 + $0xf8] sm:$0xff]
      %v278 = vld [vmem:[%s226] sm:$0x3]
      %v280 = vperm.slane %v278, 0
      %v281 = vperm.slane %v278, 1
      %v292 = vunpack.c.l.b16 %v238
      %v293 = vunpack.c.h.b16 %v238
      %v294 = vunpack.c.l.b16 %v239
      %v295 = vunpack.c.h.b16 %v239
      %v296 = vunpack.c.l.b16 %v240
      %v297 = vunpack.c.h.b16 %v240
      %v298 = vunpack.c.l.b16 %v241
      %v299 = vunpack.c.h.b16 %v241
      %v300 = vunpack.c.l.b16 %v242
      %v301 = vunpack.c.h.b16 %v242
      %v302 = vunpack.c.l.b16 %v243
      %v303 = vunpack.c.h.b16 %v243
      %v304 = vunpack.c.l.b16 %v244
      %v305 = vunpack.c.h.b16 %v244
      %v306 = vunpack.c.l.b16 %v245
      %v307 = vunpack.c.h.b16 %v245
      %v308 = vpack.c.b16 %v294, %v292
      %v309 = vpack.c.b16 %v295, %v293
      %v310 = vpack.c.b16 %v298, %v296
      %v311 = vpack.c.b16 %v299, %v297
      %v312 = vpack.c.b16 %v302, %v300
      %v313 = vpack.c.b16 %v303, %v301
      %v314 = vpack.c.b16 %v306, %v304
      %v315 = vpack.c.b16 %v307, %v305
      %v356 = vunpack.c.l.b16 %v246
      %v357 = vunpack.c.h.b16 %v246
      %v358 = vunpack.c.l.b16 %v247
      %v359 = vunpack.c.h.b16 %v247
      %v360 = vunpack.c.l.b16 %v248
      %v361 = vunpack.c.h.b16 %v248
      %v362 = vunpack.c.l.b16 %v249
      %v363 = vunpack.c.h.b16 %v249
      %v364 = vunpack.c.l.b16 %v250
      %v365 = vunpack.c.h.b16 %v250
      %v366 = vunpack.c.l.b16 %v251
      %v367 = vunpack.c.h.b16 %v251
      %v368 = vunpack.c.l.b16 %v252
      %v369 = vunpack.c.h.b16 %v252
      %v370 = vunpack.c.l.b16 %v253
      %v371 = vunpack.c.h.b16 %v253
      %v372 = vunpack.c.l.b16 %v254
      %v373 = vunpack.c.h.b16 %v254
      %v374 = vunpack.c.l.b16 %v255
      %v375 = vunpack.c.h.b16 %v255
      %v376 = vunpack.c.l.b16 %v256
      %v377 = vunpack.c.h.b16 %v256
      %v378 = vunpack.c.l.b16 %v257
      %v379 = vunpack.c.h.b16 %v257
      %v380 = vunpack.c.l.b16 %v258
      %v381 = vunpack.c.h.b16 %v258
      %v382 = vunpack.c.l.b16 %v259
      %v383 = vunpack.c.h.b16 %v259
      %v384 = vunpack.c.l.b16 %v260
      %v385 = vunpack.c.h.b16 %v260
      %v386 = vunpack.c.l.b16 %v261
      %v387 = vunpack.c.h.b16 %v261
      %v388 = vunpack.c.l.b16 %v262
      %v389 = vunpack.c.h.b16 %v262
      %v390 = vunpack.c.l.b16 %v263
      %v391 = vunpack.c.h.b16 %v263
      %v392 = vunpack.c.l.b16 %v264
      %v393 = vunpack.c.h.b16 %v264
      %v394 = vunpack.c.l.b16 %v265
      %v395 = vunpack.c.h.b16 %v265
      %v396 = vunpack.c.l.b16 %v266
      %v397 = vunpack.c.h.b16 %v266
      %v398 = vunpack.c.l.b16 %v267
      %v399 = vunpack.c.h.b16 %v267
      %v400 = vunpack.c.l.b16 %v268
      %v401 = vunpack.c.h.b16 %v268
      %v402 = vunpack.c.l.b16 %v269
      %v403 = vunpack.c.h.b16 %v269
      %v404 = vunpack.c.l.b16 %v270
      %v405 = vunpack.c.h.b16 %v270
      %v406 = vunpack.c.l.b16 %v271
      %v407 = vunpack.c.h.b16 %v271
      %v408 = vunpack.c.l.b16 %v272
      %v409 = vunpack.c.h.b16 %v272
      %v410 = vunpack.c.l.b16 %v273
      %v411 = vunpack.c.h.b16 %v273
      %v412 = vunpack.c.l.b16 %v274
      %v413 = vunpack.c.h.b16 %v274
      %v414 = vunpack.c.l.b16 %v275
      %v415 = vunpack.c.h.b16 %v275
      %v416 = vunpack.c.l.b16 %v276
      %v417 = vunpack.c.h.b16 %v276
      %v418 = vunpack.c.l.b16 %v277
      %v419 = vunpack.c.h.b16 %v277
      %v420 = vpack.c.b16 %v358, %v356
      %v421 = vpack.c.b16 %v359, %v357
      %v422 = vpack.c.b16 %v362, %v360
      %v423 = vpack.c.b16 %v363, %v361
      %v424 = vpack.c.b16 %v366, %v364
      %v425 = vpack.c.b16 %v367, %v365
      %v426 = vpack.c.b16 %v370, %v368
      %v427 = vpack.c.b16 %v371, %v369
      %v428 = vpack.c.b16 %v374, %v372
      %v429 = vpack.c.b16 %v375, %v373
      %v430 = vpack.c.b16 %v378, %v376
      %v431 = vpack.c.b16 %v379, %v377
      %v432 = vpack.c.b16 %v382, %v380
      %v433 = vpack.c.b16 %v383, %v381
      %v434 = vpack.c.b16 %v386, %v384
      %v435 = vpack.c.b16 %v387, %v385
      %v436 = vpack.c.b16 %v390, %v388
      %v437 = vpack.c.b16 %v391, %v389
      %v438 = vpack.c.b16 %v394, %v392
      %v439 = vpack.c.b16 %v395, %v393
      %v440 = vpack.c.b16 %v398, %v396
      %v441 = vpack.c.b16 %v399, %v397
      %v442 = vpack.c.b16 %v402, %v400
      %v443 = vpack.c.b16 %v403, %v401
      %v444 = vpack.c.b16 %v406, %v404
      %v445 = vpack.c.b16 %v407, %v405
      %v446 = vpack.c.b16 %v410, %v408
      %v447 = vpack.c.b16 %v411, %v409
      %v448 = vpack.c.b16 %v414, %v412
      %v449 = vpack.c.b16 %v415, %v413
      %v450 = vpack.c.b16 %v418, %v416
      %v451 = vpack.c.b16 %v419, %v417
      %484 = vmatpush.bf16.msra.mxu0 %v434
      %485 = vmatpush.bf16.msra.mxu0 %v432
      %486 = vmatpush.bf16.msra.mxu0 %v430
      %487 = vmatpush.bf16.msra.mxu0 %v428
      %488 = vmatpush.bf16.msra.mxu0 %v426
      %489 = vmatpush.bf16.msra.mxu0 %v424
      %490 = vmatpush.bf16.msra.mxu0 %v422
      %491 = vmatpush.bf16.msra.mxu0 %v420
      %492 = vmatmul.bf16.gmra.mxu0 %v308
      %v493 = vpop.f32.mrf.mxu0
      %v494 = vadd.f32 %v280, %v493
      %v495 = vpop.f32.mrf.mxu0
      %v496 = vadd.f32 %v280, %v495
      %497 = vmatmul.bf16.gmra.mxu0 %v310
      %v498 = vpop.f32.mrf.mxu0
      %v499 = vadd.f32 %v280, %v498
      %v500 = vpop.f32.mrf.mxu0
      %v501 = vadd.f32 %v280, %v500
      %502 = vmatmul.bf16.gmra.mxu0 %v312
      %v503 = vpop.f32.mrf.mxu0
      %v504 = vadd.f32 %v280, %v503
      %v505 = vpop.f32.mrf.mxu0
      %v506 = vadd.f32 %v280, %v505
      %507 = vmatmul.bf16.gmra.mxu0 %v314
      %v508 = vpop.f32.mrf.mxu0
      %v509 = vadd.f32 %v280, %v508
      %v510 = vpop.f32.mrf.mxu0
      %v511 = vadd.f32 %v280, %v510
      %512 = vdwg.mxu0
      %513 = vmatpush.bf16.msra.mxu0 %v450
      %514 = vmatpush.bf16.msra.mxu0 %v448
      %515 = vmatpush.bf16.msra.mxu0 %v446
      %516 = vmatpush.bf16.msra.mxu0 %v444
      %517 = vmatpush.bf16.msra.mxu0 %v442
      %518 = vmatpush.bf16.msra.mxu0 %v440
      %519 = vmatpush.bf16.msra.mxu0 %v438
      %520 = vmatpush.bf16.msra.mxu0 %v436
      %521 = vmatmul.bf16.gmra.mxu0 %v309
      %v522 = vpop.f32.mrf.mxu0
      %v523 = vadd.f32 %v494, %v522
      %v524 = vpop.f32.mrf.mxu0
      %v525 = vadd.f32 %v496, %v524
      %526 = vmatmul.bf16.gmra.mxu0 %v311
      %v527 = vpop.f32.mrf.mxu0
      %v528 = vadd.f32 %v499, %v527
      %v529 = vpop.f32.mrf.mxu0
      %v530 = vadd.f32 %v501, %v529
      %531 = vmatmul.bf16.gmra.mxu0 %v313
      %v532 = vpop.f32.mrf.mxu0
      %v533 = vadd.f32 %v504, %v532
      %v534 = vpop.f32.mrf.mxu0
      %v535 = vadd.f32 %v506, %v534
      %536 = vmatmul.bf16.gmra.mxu0 %v315
      %v537 = vpop.f32.mrf.mxu0
      %v538 = vadd.f32 %v509, %v537
      %v539 = vpop.f32.mrf.mxu0
      %v540 = vadd.f32 %v511, %v539
      %541 = vdwg.mxu0
      %542 = vmatpush.bf16.msra.mxu0 %v435
      %543 = vmatpush.bf16.msra.mxu0 %v433
      %544 = vmatpush.bf16.msra.mxu0 %v431
      %545 = vmatpush.bf16.msra.mxu0 %v429
      %546 = vmatpush.bf16.msra.mxu0 %v427
      %547 = vmatpush.bf16.msra.mxu0 %v425
      %548 = vmatpush.bf16.msra.mxu0 %v423
      %549 = vmatpush.bf16.msra.mxu0 %v421
      %550 = vmatmul.bf16.gmra.mxu0 %v308
      %v551 = vpop.f32.mrf.mxu0
      %v552 = vadd.f32 %v281, %v551
      %v553 = vpop.f32.mrf.mxu0
      %v554 = vadd.f32 %v281, %v553
      %555 = vmatmul.bf16.gmra.mxu0 %v310
      %v556 = vpop.f32.mrf.mxu0
      %v557 = vadd.f32 %v281, %v556
      %v558 = vpop.f32.mrf.mxu0
      %v559 = vadd.f32 %v281, %v558
      %560 = vmatmul.bf16.gmra.mxu0 %v312
      %v561 = vpop.f32.mrf.mxu0
      %v562 = vadd.f32 %v281, %v561
      %v563 = vpop.f32.mrf.mxu0
      %v564 = vadd.f32 %v281, %v563
      %565 = vmatmul.bf16.gmra.mxu0 %v314
      %v566 = vpop.f32.mrf.mxu0
      %v567 = vadd.f32 %v281, %v566
      %v568 = vpop.f32.mrf.mxu0
      %v569 = vadd.f32 %v281, %v568
      %570 = vdwg.mxu0
      %571 = vmatpush.bf16.msra.mxu0 %v451
      %572 = vmatpush.bf16.msra.mxu0 %v449
      %573 = vmatpush.bf16.msra.mxu0 %v447
      %574 = vmatpush.bf16.msra.mxu0 %v445
      %575 = vmatpush.bf16.msra.mxu0 %v443
      %576 = vmatpush.bf16.msra.mxu0 %v441
      %577 = vmatpush.bf16.msra.mxu0 %v439
      %578 = vmatpush.bf16.msra.mxu0 %v437
      %579 = vmatmul.bf16.gmra.mxu0 %v309
      %v580 = vpop.f32.mrf.mxu0
      %v581 = vadd.f32 %v552, %v580
      %v582 = vpop.f32.mrf.mxu0
      %v583 = vadd.f32 %v554, %v582
      %584 = vmatmul.bf16.gmra.mxu0 %v311
      %v585 = vpop.f32.mrf.mxu0
      %v586 = vadd.f32 %v557, %v585
      %v587 = vpop.f32.mrf.mxu0
      %v588 = vadd.f32 %v559, %v587
      %589 = vmatmul.bf16.gmra.mxu0 %v313
      %v590 = vpop.f32.mrf.mxu0
      %v591 = vadd.f32 %v562, %v590
      %v592 = vpop.f32.mrf.mxu0
      %v593 = vadd.f32 %v564, %v592
      %594 = vmatmul.bf16.gmra.mxu0 %v315
      %v595 = vpop.f32.mrf.mxu0
      %v596 = vadd.f32 %v567, %v595
      %v597 = vpop.f32.mrf.mxu0
      %v598 = vadd.f32 %v569, %v597
      %599 = vdwg.mxu0
      %vm600 = vcmp.gt.f32.partialorder %v523, 0.0
      %vm601 = vcmp.gt.f32.partialorder %v581, 0.0
      %vm602 = vcmp.gt.f32.partialorder %v525, 0.0
      %vm603 = vcmp.gt.f32.partialorder %v583, 0.0
      %vm604 = vcmp.gt.f32.partialorder %v528, 0.0
      %vm605 = vcmp.gt.f32.partialorder %v586, 0.0
      %vm606 = vcmp.gt.f32.partialorder %v530, 0.0
      %vm607 = vcmp.gt.f32.partialorder %v588, 0.0
      %vm608 = vcmp.gt.f32.partialorder %v533, 0.0
      %vm609 = vcmp.gt.f32.partialorder %v591, 0.0
      %vm610 = vcmp.gt.f32.partialorder %v535, 0.0
      %vm611 = vcmp.gt.f32.partialorder %v593, 0.0
      %vm612 = vcmp.gt.f32.partialorder %v538, 0.0
      %vm613 = vcmp.gt.f32.partialorder %v596, 0.0
      %vm614 = vcmp.gt.f32.partialorder %v540, 0.0
      %vm615 = vcmp.gt.f32.partialorder %v598, 0.0
      %v616 = vmul.f32 %v523, 0.1
      %v617 = vmul.f32 %v581, 0.1
      %v618 = vmul.f32 %v525, 0.1
      %v619 = vmul.f32 %v583, 0.1
      %v620 = vmul.f32 %v528, 0.1
      %v621 = vmul.f32 %v586, 0.1
      %v622 = vmul.f32 %v530, 0.1
      %v623 = vmul.f32 %v588, 0.1
      %v624 = vmul.f32 %v533, 0.1
      %v625 = vmul.f32 %v591, 0.1
      %v626 = vmul.f32 %v535, 0.1
      %v627 = vmul.f32 %v593, 0.1
      %v628 = vmul.f32 %v538, 0.1
      %v629 = vmul.f32 %v596, 0.1
      %v630 = vmul.f32 %v540, 0.1
      %v631 = vmul.f32 %v598, 0.1
      %v632 = vsel %vm600, %v523, %v616
      %v633 = vsel %vm601, %v581, %v617
      %v634 = vsel %vm602, %v525, %v618
      %v635 = vsel %vm603, %v583, %v619
      %v636 = vsel %vm604, %v528, %v620
      %v637 = vsel %vm605, %v586, %v621
      %v638 = vsel %vm606, %v530, %v622
      %v639 = vsel %vm607, %v588, %v623
      %v640 = vsel %vm608, %v533, %v624
      %v641 = vsel %vm609, %v591, %v625
      %v642 = vsel %vm610, %v535, %v626
      %v643 = vsel %vm611, %v593, %v627
      %v644 = vsel %vm612, %v538, %v628
      %v645 = vsel %vm613, %v596, %v629
      %v646 = vsel %vm614, %v540, %v630
      %v647 = vsel %vm615, %v598, %v631
      %v648 = vpack.c.bf16 %v633, %v632
      %v649 = vpack.c.bf16 %v635, %v634
      %v650 = vpack.c.bf16 %v637, %v636
      %v651 = vpack.c.bf16 %v639, %v638
      %v652 = vpack.c.bf16 %v641, %v640
      %v653 = vpack.c.bf16 %v643, %v642
      %v654 = vpack.c.bf16 %v645, %v644
      %v655 = vpack.c.bf16 %v647, %v646
      %656 = vst [vmem:[%s236] sm:$0xff] %v648
      %657 = vst [vmem:[%s236 + $0x8] sm:$0xff] %v649
      %658 = vst [vmem:[%s236 + $0x10] sm:$0xff] %v650
      %659 = vst [vmem:[%s236 + $0x18] sm:$0xff] %v651
      %660 = vst [vmem:[%s236 + $0x20] sm:$0xff] %v652
      %661 = vst [vmem:[%s236 + $0x28] sm:$0xff] %v653
      %662 = vst [vmem:[%s236 + $0x30] sm:$0xff] %v654
      %663 = vst [vmem:[%s236 + $0x38] sm:$0xff] %v655
      %s664 = smul.u32 8, %s19
      %p665 = scmp.lt.s32.totalorder %s18, 2
      %s666 = scalar_select %p665, %s18, 2
      %p667 = scmp.lt.s32.totalorder %s664, 7
      %s668 = scalar_select %p667, %s664, 7
      %s669 = smul.addr %s668, 2
      %s670 = smul.addr %s666, 16
      %s671 = sadd.s32 %s669, %s670
      %s672 = smul.addr %s671, 4
      %s673 = scalar_lea.vmem %s3, %s672
      // Predicated region
      $region33: #{model_forward.14} parent=31 // pred_check
        %p674 = pneg %p124
      $region34: #{model_forward.14} parent=31 // pred_check_branch
        %676 = sbr.rel (%p674) target = $region36
      $region35: #{model_forward.14} parent=31 // pred_region
        %s677 = smul.u32 8, %s19
      $region36: #{model_forward.14} parent=31 // pred_fallthru
        _
    $region32: #{model_forward.14} parent=5 // pred_fallthru
      _
    %p678 = scmp.le.s32.totalorder 2, %s9
    // Predicated region
    $region37: #{model_forward.14} parent=5 // pred_check
      %p679 = pneg %p678
    $region38: #{model_forward.14} parent=5 // pred_check_branch
      %681 = sbr.rel (%p679) target = $region40
    $region39: #{model_forward.14} parent=5 // pred_region
      %s682 = ssub.s32 %s9, 2
      // Predicated region
      $region41: #{model_forward.14} parent=39 // pred_check
        %p683 = pneg %p130
      $region42: #{model_forward.14} parent=39 // pred_check_branch
        %685 = sbr.rel (%p683) target = $region44
      $region43: #{model_forward.14} parent=39 // pred_region
        %s686 = smul.u32 8, %s21
        %p687 = scmp.lt.s32.totalorder %s20, 2
        %s688 = scalar_select %p687, %s20, 2
        %p689 = scmp.lt.s32.totalorder %s686, 7
        %s690 = scalar_select %p689, %s686, 7
        %s691 = smul.addr %s690, 2
        %s692 = smul.addr %s688, 16
        %s693 = sadd.s32 %s691, %s692
        %s694 = smul.addr %s693, 4
        %s695 = scalar_lea.vmem %s3, %s694
      $region44: #{model_forward.14} parent=39 // pred_fallthru
        _
    $region40: #{model_forward.14} parent=5 // pred_fallthru
      _
  $region6: #{model_forward.14} parent=0 // loop_footer
    %s13 = sadd.s32 1, %s9
  $region7: #{model_forward.14} parent=0 // loop_footer_branch
    %8 = sbr.rel target = $region3
  $region8: #{model_forward.14} parent=0 // loop_exit
    _

// kernel: tile.228
$region0: #{tile.228}
  #allocation0 [shape = 's32[1]{0}', space=sflag, size = 0x4, scoped, tag = 'scoped memory for tile.228']
  %s0 = inlined_call_operand.vmem [shape: f32[32], index: 0, kind: input, shape index: {}]
  %s1 = inlined_call_operand.vmem [shape: f32[16,32], index: 1, kind: output, shape index: {}]
  // Predicated region
  $region2: #{tile.228} parent=0 // pred_check
    _
  $region3: #{tile.228} parent=0 // pred_check_branch
    %3 = sbr.rel (0) target = $region5
  $region4: #{tile.228} parent=0 // pred_region
    _
  $region5: #{tile.228} parent=0 // pred_fallthru
    _
  %v4 = vld [vmem:[%s0] ss:$0 sm:$0xff]
  %5 = vst [vmem:[%s1] sm:$0xff] %v4
  %s6 = scalar_lea.vmem %s1, 8
  %7 = vst [vmem:[%s6] sm:$0xff] %v4

// kernel: tile.237
$region0: #{tile.237}
  %s0 = inlined_call_operand.vmem [shape: f32[16,32], index: 0, kind: input, shape index: {}]
  %s1 = inlined_call_operand.vmem [shape: f32[1,512], index: 1, kind: output, shape index: {}]
  $region1: #{tile.237} parent=0
    #allocation0 [shape = 'u8[16384]{0}', space=vmem, size = 0x4000, scoped, tag = 'scoped mem for output reshape']
    %v2 = vld [vmem:[%s0] ss:$4 sm:$0xf]
    %vm3 = vcmask 261120
    %4 = vst.msk [vmem:[#allocation0] ss:$8 sm:$0xf] %vm3, %v2
    %s5 = scalar_lea.vmem %s0, 3
    %v6 = vld [vmem:[%s5] ss:$4 sm:$0xf]
    %7 = vrot.lane.b32.xlu0 %v6, 96
    %v8 = vpop.permute.xlu0 %7
    %vm9 = vcmask 1048320
    %10 = vst.msk [vmem:[#allocation0] ss:$8 sm:$0xf] %vm9, %v8
    %s11 = scalar_lea.vmem %s0, 2
    %v12 = vld [vmem:[%s11] ss:$4 sm:$0xf]
    %13 = vrot.lane.b32.xlu0 %v12, 64
    %v14 = vpop.permute.xlu0 %13
    %vm15 = vcmask 785920
    %16 = vst.msk [vmem:[#allocation0] ss:$8 sm:$0xf] %vm15, %v14
    %s17 = scalar_lea.vmem %s0, 1
    %v18 = vld [vmem:[%s17] ss:$4 sm:$0xf]
    %19 = vrot.lane.b32.xlu0 %v18, 32
    %v20 = vpop.permute.xlu0 %19
    %vm21 = vcmask 523520
    %22 = vst.msk [vmem:[#allocation0] ss:$8 sm:$0xf] %vm21, %v20
    %s24 = ssub.s32 2, 1
    %v25 = vld [vmem:[#allocation0] sm:%s24]
    %s27 = ssub.s32 2, 1
    %28 = vst [vmem:[%s1] sm:%s27] %v25
    %s29 = scalar_lea.vmem [#allocation0], 8
    %v30 = vld [vmem:[%s29] sm:%s24]
    %s32 = ssub.s32 2, 1
    %s33 = scalar_lea.vmem %s1, 1
    %34 = vst [vmem:[%s33] sm:%s32] %v30
    %s35 = scalar_lea.vmem [#allocation0], 16
    %v36 = vld [vmem:[%s35] sm:%s24]
    %s38 = ssub.s32 2, 1
    %s39 = scalar_lea.vmem %s1, 2
    %40 = vst [vmem:[%s39] sm:%s38] %v36
    %s41 = scalar_lea.vmem [#allocation0], 24
    %v42 = vld [vmem:[%s41] sm:%s24]
    %s44 = ssub.s32 2, 1
    %s45 = scalar_lea.vmem %s1, 3
    %46 = vst [vmem:[%s45] sm:%s44] %v42

// kernel: model_forward.15
$region0: #{model_forward.15}
  #allocation0 [shape = 'u32[]', space=smem, size = 0x4, offset = 0x4, fixed_abs, tag = 'smem constant byte address 0x4 - core index']
  #allocation1 [shape = 'u32[72,128]{1,0:T(1,128)}', space=vmem, size = 0x9000, scoped, tag = 'internal scratch']
  %s0 = inlined_call_operand.vmem [shape: bf16[3,32,256], index: 0, kind: input, shape index: {}]
  %s1 = inlined_call_operand.vmem [shape: bf16[3,256,512], index: 1, kind: input, shape index: {}]
  %s2 = inlined_call_operand.vmem [shape: f32[3,1,512], index: 2, kind: input, shape index: {}]
  %s3 = inlined_call_operand.vmem [shape: bf16[3,32,512], index: 3, kind: output, shape index: {}]
  %s4 = sld [smem:[#allocation0]]
  $region45: #{model_forward.15} parent=0
    _
  %s6 = ssub.s32 1, %s4
  %s7 = scalar_select 0, %s6, %s4
  loop: start=0, step=1, limit=5
  $region2: #{model_forward.15} parent=0 // loop_pre_header
    _
  $region3: #{model_forward.15} parent=0 // loop_header
    %s9 = sphi 0, %s13
    %p10 = scmp.ge.s32.totalorder %s9, 5
    %s16 = sphi 0, %s28
    %s17 = sphi 0, %s24
    %s18 = sphi 0, %s16
    %s19 = sphi 0, %s17
    %s20 = sphi 0, %s18
    %s21 = sphi 0, %s19
    %s33 = sphi 0, %s35
    %s36 = sphi 0, %s33
    %s37 = sphi 0, %s36
    %s53 = sphi 0, %s37
    %s59 = sphi 0, %s61
    %s62 = sphi 0, %s59
    %s63 = sphi 0, %s62
    %s79 = sphi 0, %s63
    %s85 = sphi 0, %s87
    %s88 = sphi 0, %s85
    %s89 = sphi 0, %s88
    %s105 = sphi 0, %s89
    %s113 = sphi 0, %s115
    %s116 = sphi 0, %s113
    %s117 = sphi 0, %s116
    %s133 = sphi 0, %s117
  $region4: #{model_forward.15} parent=0 // loop_header_branch
    %12 = sbr.rel (%p10) target = $region8
  $region5: #{model_forward.15} parent=0 // loop_body
    %s14 = ssub.s32 %s9, 1
    %s15 = ssub.s32 %s9, 2
    %s22 = sadd.s32 1, %s17
    %p23 = scmp.ge.s32.totalorder %s22, 1
    %s24 = scalar_select %p23, 0, %s22
    %s25 = sadd.s32 1, %s16
    %s26 = scalar_select %p23, %s25, %s16
    %p27 = scmp.ge.s32.totalorder %s26, 3
    %s28 = scalar_select %p27, 0, %s26
    %s29 = ssub.s32 %s16, %s28
    %s30 = ssub.s32 %s17, %s24
    %s31 = sor.u32 %s29, %s30
    %p32 = scmp.eq.s32.totalorder %s31, 0
    %s34 = sadd.s32 %s33, 1
    %s35 = scalar_select %p32, %s33, %s34
    %p38 = pneg %p32
    %p39 = scmp.eq.s32.totalorder %s9, 2
    %p40 = por %p38, %p39
    %p41 = scmp.ne.s32.totalorder %s33, %s36
    %p42 = scmp.eq.s32.totalorder %s9, 0
    %p43 = por %p41, %p42
    %p44 = scmp.ne.s32.totalorder %s33, %s36
    %p45 = scmp.eq.s32.totalorder %s14, 2
    %p46 = por %p44, %p45
    %p47 = scmp.ne.s32.totalorder %s36, %s37
    %p48 = scmp.eq.s32.totalorder %s14, 0
    %p49 = por %p47, %p48
    %p50 = scmp.ne.s32.totalorder %s36, %s37
    %p51 = scmp.eq.s32.totalorder %s15, 2
    %p52 = por %p50, %p51
    %p54 = scmp.ne.s32.totalorder %s37, %s53
    %p55 = scmp.eq.s32.totalorder %s15, 0
    %p56 = por %p54, %p55
    %s57 = ssub.s32 %s16, %s28
    %p58 = scmp.eq.s32.totalorder %s57, 0
    %s60 = sadd.s32 %s59, 1
    %s61 = scalar_select %p58, %s59, %s60
    %p64 = pneg %p58
    %p65 = scmp.eq.s32.totalorder %s9, 2
    %p66 = por %p64, %p65
    %p67 = scmp.ne.s32.totalorder %s59, %s62
    %p68 = scmp.eq.s32.totalorder %s9, 0
    %p69 = por %p67, %p68
    %p70 = scmp.ne.s32.totalorder %s59, %s62
    %p71 = scmp.eq.s32.totalorder %s14, 2
    %p72 = por %p70, %p71
    %p73 = scmp.ne.s32.totalorder %s62, %s63
    %p74 = scmp.eq.s32.totalorder %s14, 0
    %p75 = por %p73, %p74
    %p76 = scmp.ne.s32.totalorder %s62, %s63
    %p77 = scmp.eq.s32.totalorder %s15, 2
    %p78 = por %p76, %p77
    %p80 = scmp.ne.s32.totalorder %s63, %s79
    %p81 = scmp.eq.s32.totalorder %s15, 0
    %p82 = por %p80, %p81
    %s83 = ssub.s32 %s16, %s28
    %p84 = scmp.eq.s32.totalorder %s83, 0
    %s86 = sadd.s32 %s85, 1
    %s87 = scalar_select %p84, %s85, %s86
    %p90 = pneg %p84
    %p91 = scmp.eq.s32.totalorder %s9, 2
    %p92 = por %p90, %p91
    %p93 = scmp.ne.s32.totalorder %s85, %s88
    %p94 = scmp.eq.s32.totalorder %s9, 0
    %p95 = por %p93, %p94
    %p96 = scmp.ne.s32.totalorder %s85, %s88
    %p97 = scmp.eq.s32.totalorder %s14, 2
    %p98 = por %p96, %p97
    %p99 = scmp.ne.s32.totalorder %s88, %s89
    %p100 = scmp.eq.s32.totalorder %s14, 0
    %p101 = por %p99, %p100
    %p102 = scmp.ne.s32.totalorder %s88, %s89
    %p103 = scmp.eq.s32.totalorder %s15, 2
    %p104 = por %p102, %p103
    %p106 = scmp.ne.s32.totalorder %s89, %s105
    %p107 = scmp.eq.s32.totalorder %s15, 0
    %p108 = por %p106, %p107
    %s109 = ssub.s32 %s16, %s28
    %s110 = ssub.s32 %s17, %s24
    %s111 = sor.u32 %s109, %s110
    %p112 = scmp.eq.s32.totalorder %s111, 0
    %s114 = sadd.s32 %s113, 1
    %s115 = scalar_select %p112, %s113, %s114
    %p118 = pneg %p112
    %p119 = scmp.eq.s32.totalorder %s9, 2
    %p120 = por %p118, %p119
    %p121 = scmp.ne.s32.totalorder %s113, %s116
    %p122 = scmp.eq.s32.totalorder %s9, 0
    %p123 = por %p121, %p122
    %p124 = scmp.ne.s32.totalorder %s113, %s116
    %p125 = scmp.eq.s32.totalorder %s14, 2
    %p126 = por %p124, %p125
    %p127 = scmp.ne.s32.totalorder %s116, %s117
    %p128 = scmp.eq.s32.totalorder %s14, 0
    %p129 = por %p127, %p128
    %p130 = scmp.ne.s32.totalorder %s116, %s117
    %p131 = scmp.eq.s32.totalorder %s15, 2
    %p132 = por %p130, %p131
    %p134 = scmp.ne.s32.totalorder %s117, %s133
    %p135 = scmp.eq.s32.totalorder %s15, 0
    %p136 = por %p134, %p135
    %p137 = scmp.le.s32.totalorder 1, %s9
    %p138 = scmp.lt.s32.totalorder %s9, 4
    %p139 = pnand %p137, %p138
    %p140 = pneg %p139
    // Predicated region
    $region9: #{model_forward.15} parent=5 // pred_check
      _
    $region10: #{model_forward.15} parent=5 // pred_check_branch
      %142 = sbr.rel (%p139) target = $region12
    $region11: #{model_forward.15} parent=5 // pred_region
      %s143 = ssub.s32 %s9, 1
    $region12: #{model_forward.15} parent=5 // pred_fallthru
      _
    %p144 = scmp.lt.s32.totalorder %s9, 3
    // Predicated region
    $region13: #{model_forward.15} parent=5 // pred_check
      %p145 = pneg %p144
    $region14: #{model_forward.15} parent=5 // pred_check_branch
      %147 = sbr.rel (%p145) target = $region16
    $region15: #{model_forward.15} parent=5 // pred_region
      // Predicated region
      $region17: #{model_forward.15} parent=15 // pred_check
        %p148 = pneg %p43
      $region18: #{model_forward.15} parent=15 // pred_check_branch
        %150 = sbr.rel (%p148) target = $region20
      $region19: #{model_forward.15} parent=15 // pred_region
        %s151 = smul.u32 4, %s17
        %p152 = scmp.lt.s32.totalorder %s16, 2
        %s153 = scalar_select %p152, %s16, 2
        %p154 = scmp.lt.s32.totalorder %s151, 3
        %s155 = scalar_select %p154, %s151, 3
        %s156 = smul.addr %s155, 2
        %s157 = smul.addr %s153, 8
        %s158 = sadd.s32 %s156, %s157
        %s159 = smul.addr %s158, 4
        %s160 = scalar_lea.vmem %s0, %s159
        %s161 = smul.u32 4, %s17
      $region20: #{model_forward.15} parent=15 // pred_fallthru
        _
      // Predicated region
      $region21: #{model_forward.15} parent=15 // pred_check
        %p162 = pneg %p69
      $region22: #{model_forward.15} parent=15 // pred_check_branch
        %164 = sbr.rel (%p162) target = $region24
      $region23: #{model_forward.15} parent=15 // pred_region
        %p165 = scmp.lt.s32.totalorder %s16, 2
        %s166 = scalar_select %p165, %s16, 2
        %s167 = smul.addr %s166, 128
        %s168 = smul.addr %s167, 4
        %s169 = scalar_lea.vmem %s1, %s168
      $region24: #{model_forward.15} parent=15 // pred_fallthru
        _
      // Predicated region
      $region25: #{model_forward.15} parent=15 // pred_check
        %p170 = pneg %p95
      $region26: #{model_forward.15} parent=15 // pred_check_branch
        %172 = sbr.rel (%p170) target = $region28
      $region27: #{model_forward.15} parent=15 // pred_region
        %p173 = scmp.lt.s32.totalorder %s16, 2
        %s174 = scalar_select %p173, %s16, 2
        %s175 = smul.addr %s174, 4
        %s176 = scalar_lea.vmem %s2, %s175
      $region28: #{model_forward.15} parent=15 // pred_fallthru
        _
    $region16: #{model_forward.15} parent=5 // pred_fallthru
      _
    %p177 = scmp.le.s32.totalorder 1, %s9
    %p178 = scmp.lt.s32.totalorder %s9, 4
    %p179 = pnand %p177, %p178
    %p180 = pneg %p179
    // Predicated region
    $region29: #{model_forward.15} parent=5 // pred_check
      _
    $region30: #{model_forward.15} parent=5 // pred_check_branch
      %182 = sbr.rel (%p179) target = $region32
    $region31: #{model_forward.15} parent=5 // pred_region
      %s183 = ssub.s32 %s9, 1
      %s184 = smul.u32 4, %s19
      %p185 = scmp.lt.s32.totalorder %s18, 2
      %s186 = scalar_select %p185, %s18, 2
      %p187 = scmp.lt.s32.totalorder %s184, 3
      %s188 = scalar_select %p187, %s184, 3
      %s189 = smul.addr %s188, 2
      %s190 = smul.addr %s186, 8
      %s191 = sadd.s32 %s189, %s190
      %s192 = smul.addr %s191, 4
      %s193 = scalar_lea.vmem %s0, %s192
      %p194 = pneg %p49
      %p195 = pneg %p46
      %p196 = scmp.lt.s32.totalorder %s18, 2
      %s197 = scalar_select %p196, %s18, 2
      %s198 = smul.addr %s197, 128
      %s199 = smul.addr %s198, 4
      %s200 = scalar_lea.vmem %s1, %s199
      %p201 = pneg %p75
      %p202 = pneg %p72
      %p203 = scmp.lt.s32.totalorder %s18, 2
      %s204 = scalar_select %p203, %s18, 2
      %s205 = smul.addr %s204, 4
      %s206 = scalar_lea.vmem %s2, %s205
      %p207 = pneg %p101
      %p208 = pneg %p98
      %p209 = pneg %p129
      %p210 = pneg %p126
      %s211 = smul.u32 4, %s19
      %p212 = scmp.lt.s32.totalorder %s18, 2
      %s213 = scalar_select %p212, %s18, 2
      %p214 = scmp.lt.s32.totalorder %s211, 3
      %s215 = scalar_select %p214, %s211, 3
      %s216 = smul.addr %s215, 4
      %s217 = smul.addr %s213, 16
      %s218 = sadd.s32 %s216, %s217
      %s219 = smul.addr %s218, 4
      %s220 = scalar_lea.vmem %s3, %s219
      %s221 = smul.u32 4, %s19
      %p222 = scmp.lt.s32.totalorder %s18, 2
      %s223 = scalar_select %p222, %s18, 2
      %p224 = scmp.lt.s32.totalorder %s221, 3
      %s225 = scalar_select %p224, %s221, 3
      %s226 = smul.addr %s225, 2
      %s227 = smul.addr %s223, 8
      %s228 = sadd.s32 %s226, %s227
      %s229 = smul.addr %s228, 4
      %s230 = scalar_lea.vmem %s0, %s229
      %s231 = smul.u32 4, %s19
      %p232 = scmp.lt.s32.totalorder %s18, 2
      %s233 = scalar_select %p232, %s18, 2
      %s234 = smul.addr %s233, 128
      %s235 = smul.addr %s234, 4
      %s236 = scalar_lea.vmem %s1, %s235
      %p237 = scmp.lt.s32.totalorder %s18, 2
      %s238 = scalar_select %p237, %s18, 2
      %s239 = smul.addr %s238, 4
      %s240 = scalar_lea.vmem %s2, %s239
      %s241 = smul.u32 4, %s19
      %p242 = scmp.lt.s32.totalorder %s18, 2
      %s243 = scalar_select %p242, %s18, 2
      %p244 = scmp.lt.s32.totalorder %s241, 3
      %s245 = scalar_select %p244, %s241, 3
      %s246 = smul.addr %s245, 4
      %s247 = smul.addr %s243, 16
      %s248 = sadd.s32 %s246, %s247
      %s249 = smul.addr %s248, 4
      %s250 = scalar_lea.vmem %s3, %s249
      %s251 = smul.u32 4, %s19
      %v252 = vld [vmem:[%s230] sm:$0xff]
      %v253 = vld [vmem:[%s230 + $0x8] sm:$0xff]
      %v254 = vld [vmem:[%s230 + $0x10] sm:$0xff]
      %v255 = vld [vmem:[%s230 + $0x18] sm:$0xff]
      %v256 = vld [vmem:[%s236] sm:$0xff]
      %v257 = vld [vmem:[%s236 + $0x8] sm:$0xff]
      %v258 = vld [vmem:[%s236 + $0x10] sm:$0xff]
      %v259 = vld [vmem:[%s236 + $0x18] sm:$0xff]
      %v260 = vld [vmem:[%s236 + $0x20] sm:$0xff]
      %v261 = vld [vmem:[%s236 + $0x28] sm:$0xff]
      %v262 = vld [vmem:[%s236 + $0x30] sm:$0xff]
      %v263 = vld [vmem:[%s236 + $0x38] sm:$0xff]
      %v264 = vld [vmem:[%s236 + $0x40] sm:$0xff]
      %v265 = vld [vmem:[%s236 + $0x48] sm:$0xff]
      %v266 = vld [vmem:[%s236 + $0x50] sm:$0xff]
      %v267 = vld [vmem:[%s236 + $0x58] sm:$0xff]
      %v268 = vld [vmem:[%s236 + $0x60] sm:$0xff]
      %v269 = vld [vmem:[%s236 + $0x68] sm:$0xff]
      %v270 = vld [vmem:[%s236 + $0x70] sm:$0xff]
      %v271 = vld [vmem:[%s236 + $0x78] sm:$0xff]
      %v272 = vld [vmem:[%s236 + $0x80] sm:$0xff]
      %v273 = vld [vmem:[%s236 + $0x88] sm:$0xff]
      %v274 = vld [vmem:[%s236 + $0x90] sm:$0xff]
      %v275 = vld [vmem:[%s236 + $0x98] sm:$0xff]
      %v276 = vld [vmem:[%s236 + $0xa0] sm:$0xff]
      %v277 = vld [vmem:[%s236 + $0xa8] sm:$0xff]
      %v278 = vld [vmem:[%s236 + $0xb0] sm:$0xff]
      %v279 = vld [vmem:[%s236 + $0xb8] sm:$0xff]
      %v280 = vld [vmem:[%s236 + $0xc0] sm:$0xff]
      %v281 = vld [vmem:[%s236 + $0xc8] sm:$0xff]
      %v282 = vld [vmem:[%s236 + $0xd0] sm:$0xff]
      %v283 = vld [vmem:[%s236 + $0xd8] sm:$0xff]
      %v284 = vld [vmem:[%s236 + $0xe0] sm:$0xff]
      %v285 = vld [vmem:[%s236 + $0xe8] sm:$0xff]
      %v286 = vld [vmem:[%s236 + $0xf0] sm:$0xff]
      %v287 = vld [vmem:[%s236 + $0xf8] sm:$0xff]
      %v288 = vld [vmem:[%s236 + $0x100] sm:$0xff]
      %v289 = vld [vmem:[%s236 + $0x108] sm:$0xff]
      %v290 = vld [vmem:[%s236 + $0x110] sm:$0xff]
      %v291 = vld [vmem:[%s236 + $0x118] sm:$0xff]
      %v292 = vld [vmem:[%s236 + $0x120] sm:$0xff]
      %v293 = vld [vmem:[%s236 + $0x128] sm:$0xff]
      %v294 = vld [vmem:[%s236 + $0x130] sm:$0xff]
      %v295 = vld [vmem:[%s236 + $0x138] sm:$0xff]
      %v296 = vld [vmem:[%s236 + $0x140] sm:$0xff]
      %v297 = vld [vmem:[%s236 + $0x148] sm:$0xff]
      %v298 = vld [vmem:[%s236 + $0x150] sm:$0xff]
      %v299 = vld [vmem:[%s236 + $0x158] sm:$0xff]
      %v300 = vld [vmem:[%s236 + $0x160] sm:$0xff]
      %v301 = vld [vmem:[%s236 + $0x168] sm:$0xff]
      %v302 = vld [vmem:[%s236 + $0x170] sm:$0xff]
      %v303 = vld [vmem:[%s236 + $0x178] sm:$0xff]
      %v304 = vld [vmem:[%s236 + $0x180] sm:$0xff]
      %v305 = vld [vmem:[%s236 + $0x188] sm:$0xff]
      %v306 = vld [vmem:[%s236 + $0x190] sm:$0xff]
      %v307 = vld [vmem:[%s236 + $0x198] sm:$0xff]
      %v308 = vld [vmem:[%s236 + $0x1a0] sm:$0xff]
      %v309 = vld [vmem:[%s236 + $0x1a8] sm:$0xff]
      %v310 = vld [vmem:[%s236 + $0x1b0] sm:$0xff]
      %v311 = vld [vmem:[%s236 + $0x1b8] sm:$0xff]
      %v312 = vld [vmem:[%s236 + $0x1c0] sm:$0xff]
      %v313 = vld [vmem:[%s236 + $0x1c8] sm:$0xff]
      %v314 = vld [vmem:[%s236 + $0x1d0] sm:$0xff]
      %v315 = vld [vmem:[%s236 + $0x1d8] sm:$0xff]
      %v316 = vld [vmem:[%s236 + $0x1e0] sm:$0xff]
      %v317 = vld [vmem:[%s236 + $0x1e8] sm:$0xff]
      %v318 = vld [vmem:[%s236 + $0x1f0] sm:$0xff]
      %v319 = vld [vmem:[%s236 + $0x1f8] sm:$0xff]
      %v320 = vld [vmem:[%s240] sm:$0xf]
      %v322 = vperm.slane %v320, 0
      %v323 = vperm.slane %v320, 1
      %v324 = vperm.slane %v320, 2
      %v325 = vperm.slane %v320, 3
      %v334 = vunpack.c.l.b16 %v252
      %v335 = vunpack.c.h.b16 %v252
      %v336 = vunpack.c.l.b16 %v253
      %v337 = vunpack.c.h.b16 %v253
      %v338 = vunpack.c.l.b16 %v254
      %v339 = vunpack.c.h.b16 %v254
      %v340 = vunpack.c.l.b16 %v255
      %v341 = vunpack.c.h.b16 %v255
      %v342 = vpack.c.b16 %v336, %v334
      %v343 = vpack.c.b16 %v337, %v335
      %v344 = vpack.c.b16 %v340, %v338
      %v345 = vpack.c.b16 %v341, %v339
      %v414 = vunpack.c.l.b16 %v256
      %v415 = vunpack.c.h.b16 %v256
      %v416 = vunpack.c.l.b16 %v257
      %v417 = vunpack.c.h.b16 %v257
      %v418 = vunpack.c.l.b16 %v258
      %v419 = vunpack.c.h.b16 %v258
      %v420 = vunpack.c.l.b16 %v259
      %v421 = vunpack.c.h.b16 %v259
      %v422 = vunpack.c.l.b16 %v260
      %v423 = vunpack.c.h.b16 %v260
      %v424 = vunpack.c.l.b16 %v261
      %v425 = vunpack.c.h.b16 %v261
      %v426 = vunpack.c.l.b16 %v262
      %v427 = vunpack.c.h.b16 %v262
      %v428 = vunpack.c.l.b16 %v263
      %v429 = vunpack.c.h.b16 %v263
      %v430 = vunpack.c.l.b16 %v264
      %v431 = vunpack.c.h.b16 %v264
      %v432 = vunpack.c.l.b16 %v265
      %v433 = vunpack.c.h.b16 %v265
      %v434 = vunpack.c.l.b16 %v266
      %v435 = vunpack.c.h.b16 %v266
      %v436 = vunpack.c.l.b16 %v267
      %v437 = vunpack.c.h.b16 %v267
      %v438 = vunpack.c.l.b16 %v268
      %v439 = vunpack.c.h.b16 %v268
      %v440 = vunpack.c.l.b16 %v269
      %v441 = vunpack.c.h.b16 %v269
      %v442 = vunpack.c.l.b16 %v270
      %v443 = vunpack.c.h.b16 %v270
      %v444 = vunpack.c.l.b16 %v271
      %v445 = vunpack.c.h.b16 %v271
      %v446 = vunpack.c.l.b16 %v272
      %v447 = vunpack.c.h.b16 %v272
      %v448 = vunpack.c.l.b16 %v273
      %v449 = vunpack.c.h.b16 %v273
      %v450 = vunpack.c.l.b16 %v274
      %v451 = vunpack.c.h.b16 %v274
      %v452 = vunpack.c.l.b16 %v275
      %v453 = vunpack.c.h.b16 %v275
      %v454 = vunpack.c.l.b16 %v276
      %v455 = vunpack.c.h.b16 %v276
      %v456 = vunpack.c.l.b16 %v277
      %v457 = vunpack.c.h.b16 %v277
      %v458 = vunpack.c.l.b16 %v278
      %v459 = vunpack.c.h.b16 %v278
      %v460 = vunpack.c.l.b16 %v279
      %v461 = vunpack.c.h.b16 %v279
      %v462 = vunpack.c.l.b16 %v280
      %v463 = vunpack.c.h.b16 %v280
      %v464 = vunpack.c.l.b16 %v281
      %v465 = vunpack.c.h.b16 %v281
      %v466 = vunpack.c.l.b16 %v282
      %v467 = vunpack.c.h.b16 %v282
      %v468 = vunpack.c.l.b16 %v283
      %v469 = vunpack.c.h.b16 %v283
      %v470 = vunpack.c.l.b16 %v284
      %v471 = vunpack.c.h.b16 %v284
      %v472 = vunpack.c.l.b16 %v285
      %v473 = vunpack.c.h.b16 %v285
      %v474 = vunpack.c.l.b16 %v286
      %v475 = vunpack.c.h.b16 %v286
      %v476 = vunpack.c.l.b16 %v287
      %v477 = vunpack.c.h.b16 %v287
      %v478 = vunpack.c.l.b16 %v288
      %v479 = vunpack.c.h.b16 %v288
      %v480 = vunpack.c.l.b16 %v289
      %v481 = vunpack.c.h.b16 %v289
      %v482 = vunpack.c.l.b16 %v290
      %v483 = vunpack.c.h.b16 %v290
      %v484 = vunpack.c.l.b16 %v291
      %v485 = vunpack.c.h.b16 %v291
      %v486 = vunpack.c.l.b16 %v292
      %v487 = vunpack.c.h.b16 %v292
      %v488 = vunpack.c.l.b16 %v293
      %v489 = vunpack.c.h.b16 %v293
      %v490 = vunpack.c.l.b16 %v294
      %v491 = vunpack.c.h.b16 %v294
      %v492 = vunpack.c.l.b16 %v295
      %v493 = vunpack.c.h.b16 %v295
      %v494 = vunpack.c.l.b16 %v296
      %v495 = vunpack.c.h.b16 %v296
      %v496 = vunpack.c.l.b16 %v297
      %v497 = vunpack.c.h.b16 %v297
      %v498 = vunpack.c.l.b16 %v298
      %v499 = vunpack.c.h.b16 %v298
      %v500 = vunpack.c.l.b16 %v299
      %v501 = vunpack.c.h.b16 %v299
      %v502 = vunpack.c.l.b16 %v300
      %v503 = vunpack.c.h.b16 %v300
      %v504 = vunpack.c.l.b16 %v301
      %v505 = vunpack.c.h.b16 %v301
      %v506 = vunpack.c.l.b16 %v302
      %v507 = vunpack.c.h.b16 %v302
      %v508 = vunpack.c.l.b16 %v303
      %v509 = vunpack.c.h.b16 %v303
      %v510 = vunpack.c.l.b16 %v304
      %v511 = vunpack.c.h.b16 %v304
      %v512 = vunpack.c.l.b16 %v305
      %v513 = vunpack.c.h.b16 %v305
      %v514 = vunpack.c.l.b16 %v306
      %v515 = vunpack.c.h.b16 %v306
      %v516 = vunpack.c.l.b16 %v307
      %v517 = vunpack.c.h.b16 %v307
      %v518 = vunpack.c.l.b16 %v308
      %v519 = vunpack.c.h.b16 %v308
      %v520 = vunpack.c.l.b16 %v309
      %v521 = vunpack.c.h.b16 %v309
      %v522 = vunpack.c.l.b16 %v310
      %v523 = vunpack.c.h.b16 %v310
      %v524 = vunpack.c.l.b16 %v311
      %v525 = vunpack.c.h.b16 %v311
      %v526 = vunpack.c.l.b16 %v312
      %v527 = vunpack.c.h.b16 %v312
      %v528 = vunpack.c.l.b16 %v313
      %v529 = vunpack.c.h.b16 %v313
      %v530 = vunpack.c.l.b16 %v314
      %v531 = vunpack.c.h.b16 %v314
      %v532 = vunpack.c.l.b16 %v315
      %v533 = vunpack.c.h.b16 %v315
      %v534 = vunpack.c.l.b16 %v316
      %v535 = vunpack.c.h.b16 %v316
      %v536 = vunpack.c.l.b16 %v317
      %v537 = vunpack.c.h.b16 %v317
      %v538 = vunpack.c.l.b16 %v318
      %v539 = vunpack.c.h.b16 %v318
      %v540 = vunpack.c.l.b16 %v319
      %v541 = vunpack.c.h.b16 %v319
      %v542 = vpack.c.b16 %v418, %v414
      %v543 = vpack.c.b16 %v419, %v415
      %v544 = vpack.c.b16 %v420, %v416
      %v545 = vpack.c.b16 %v421, %v417
      %v546 = vpack.c.b16 %v426, %v422
      %v547 = vpack.c.b16 %v427, %v423
      %v548 = vpack.c.b16 %v428, %v424
      %v549 = vpack.c.b16 %v429, %v425
      %v550 = vpack.c.b16 %v434, %v430
      %v551 = vpack.c.b16 %v435, %v431
      %v552 = vpack.c.b16 %v436, %v432
      %v553 = vpack.c.b16 %v437, %v433
      %v554 = vpack.c.b16 %v442, %v438
      %v555 = vpack.c.b16 %v443, %v439
      %v556 = vpack.c.b16 %v444, %v440
      %v557 = vpack.c.b16 %v445, %v441
      %v558 = vpack.c.b16 %v450, %v446
      %v559 = vpack.c.b16 %v451, %v447
      %v560 = vpack.c.b16 %v452, %v448
      %v561 = vpack.c.b16 %v453, %v449
      %v562 = vpack.c.b16 %v458, %v454
      %v563 = vpack.c.b16 %v459, %v455
      %v564 = vpack.c.b16 %v460, %v456
      %v565 = vpack.c.b16 %v461, %v457
      %v566 = vpack.c.b16 %v466, %v462
      %v567 = vpack.c.b16 %v467, %v463
      %v568 = vpack.c.b16 %v468, %v464
      %v569 = vpack.c.b16 %v469, %v465
      %v570 = vpack.c.b16 %v474, %v470
      %v571 = vpack.c.b16 %v475, %v471
      %v572 = vpack.c.b16 %v476, %v472
      %v573 = vpack.c.b16 %v477, %v473
      %v574 = vpack.c.b16 %v482, %v478
      %v575 = vpack.c.b16 %v483, %v479
      %v576 = vpack.c.b16 %v484, %v480
      %v577 = vpack.c.b16 %v485, %v481
      %v578 = vpack.c.b16 %v490, %v486
      %v579 = vpack.c.b16 %v491, %v487
      %v580 = vpack.c.b16 %v492, %v488
      %v581 = vpack.c.b16 %v493, %v489
      %v582 = vpack.c.b16 %v498, %v494
      %v583 = vpack.c.b16 %v499, %v495
      %v584 = vpack.c.b16 %v500, %v496
      %v585 = vpack.c.b16 %v501, %v497
      %v586 = vpack.c.b16 %v506, %v502
      %v587 = vpack.c.b16 %v507, %v503
      %v588 = vpack.c.b16 %v508, %v504
      %v589 = vpack.c.b16 %v509, %v505
      %v590 = vpack.c.b16 %v514, %v510
      %v591 = vpack.c.b16 %v515, %v511
      %v592 = vpack.c.b16 %v516, %v512
      %v593 = vpack.c.b16 %v517, %v513
      %v594 = vpack.c.b16 %v522, %v518
      %v595 = vpack.c.b16 %v523, %v519
      %v596 = vpack.c.b16 %v524, %v520
      %v597 = vpack.c.b16 %v525, %v521
      %v598 = vpack.c.b16 %v530, %v526
      %v599 = vpack.c.b16 %v531, %v527
      %v600 = vpack.c.b16 %v532, %v528
      %v601 = vpack.c.b16 %v533, %v529
      %v602 = vpack.c.b16 %v538, %v534
      %v603 = vpack.c.b16 %v539, %v535
      %v604 = vpack.c.b16 %v540, %v536
      %v605 = vpack.c.b16 %v541, %v537
      %670 = vmatpush.bf16.msra.mxu0 %v570
      %671 = vmatpush.bf16.msra.mxu0 %v566
      %672 = vmatpush.bf16.msra.mxu0 %v562
      %673 = vmatpush.bf16.msra.mxu0 %v558
      %674 = vmatpush.bf16.msra.mxu0 %v554
      %675 = vmatpush.bf16.msra.mxu0 %v550
      %676 = vmatpush.bf16.msra.mxu0 %v546
      %677 = vmatpush.bf16.msra.mxu0 %v542
      %678 = vmatmul.bf16.gmra.mxu0 %v342
      %v679 = vpop.f32.mrf.mxu0
      %v680 = vadd.f32 %v322, %v679
      %v681 = vpop.f32.mrf.mxu0
      %v682 = vadd.f32 %v322, %v681
      %683 = vmatmul.bf16.gmra.mxu0 %v344
      %v684 = vpop.f32.mrf.mxu0
      %v685 = vadd.f32 %v322, %v684
      %v686 = vpop.f32.mrf.mxu0
      %v687 = vadd.f32 %v322, %v686
      %688 = vdwg.mxu0
      %689 = vmatpush.bf16.msra.mxu0 %v602
      %690 = vmatpush.bf16.msra.mxu0 %v598
      %691 = vmatpush.bf16.msra.mxu0 %v594
      %692 = vmatpush.bf16.msra.mxu0 %v590
      %693 = vmatpush.bf16.msra.mxu0 %v586
      %694 = vmatpush.bf16.msra.mxu0 %v582
      %695 = vmatpush.bf16.msra.mxu0 %v578
      %696 = vmatpush.bf16.msra.mxu0 %v574
      %697 = vmatmul.bf16.gmra.mxu0 %v343
      %v698 = vpop.f32.mrf.mxu0
      %v699 = vadd.f32 %v680, %v698
      %v700 = vpop.f32.mrf.mxu0
      %v701 = vadd.f32 %v682, %v700
      %702 = vmatmul.bf16.gmra.mxu0 %v345
      %v703 = vpop.f32.mrf.mxu0
      %v704 = vadd.f32 %v685, %v703
      %v705 = vpop.f32.mrf.mxu0
      %v706 = vadd.f32 %v687, %v705
      %707 = vdwg.mxu0
      %708 = vmatpush.bf16.msra.mxu0 %v571
      %709 = vmatpush.bf16.msra.mxu0 %v567
      %710 = vmatpush.bf16.msra.mxu0 %v563
      %711 = vmatpush.bf16.msra.mxu0 %v559
      %712 = vmatpush.bf16.msra.mxu0 %v555
      %713 = vmatpush.bf16.msra.mxu0 %v551
      %714 = vmatpush.bf16.msra.mxu0 %v547
      %715 = vmatpush.bf16.msra.mxu0 %v543
      %716 = vmatmul.bf16.gmra.mxu0 %v342
      %v717 = vpop.f32.mrf.mxu0
      %v718 = vadd.f32 %v323, %v717
      %v719 = vpop.f32.mrf.mxu0
      %v720 = vadd.f32 %v323, %v719
      %721 = vmatmul.bf16.gmra.mxu0 %v344
      %v722 = vpop.f32.mrf.mxu0
      %v723 = vadd.f32 %v323, %v722
      %v724 = vpop.f32.mrf.mxu0
      %v725 = vadd.f32 %v323, %v724
      %726 = vdwg.mxu0
      %727 = vmatpush.bf16.msra.mxu0 %v603
      %728 = vmatpush.bf16.msra.mxu0 %v599
      %729 = vmatpush.bf16.msra.mxu0 %v595
      %730 = vmatpush.bf16.msra.mxu0 %v591
      %731 = vmatpush.bf16.msra.mxu0 %v587
      %732 = vmatpush.bf16.msra.mxu0 %v583
      %733 = vmatpush.bf16.msra.mxu0 %v579
      %734 = vmatpush.bf16.msra.mxu0 %v575
      %735 = vmatmul.bf16.gmra.mxu0 %v343
      %v736 = vpop.f32.mrf.mxu0
      %v737 = vadd.f32 %v718, %v736
      %v738 = vpop.f32.mrf.mxu0
      %v739 = vadd.f32 %v720, %v738
      %740 = vmatmul.bf16.gmra.mxu0 %v345
      %v741 = vpop.f32.mrf.mxu0
      %v742 = vadd.f32 %v723, %v741
      %v743 = vpop.f32.mrf.mxu0
      %v744 = vadd.f32 %v725, %v743
      %745 = vdwg.mxu0
      %746 = vmatpush.bf16.msra.mxu0 %v572
      %747 = vmatpush.bf16.msra.mxu0 %v568
      %748 = vmatpush.bf16.msra.mxu0 %v564
      %749 = vmatpush.bf16.msra.mxu0 %v560
      %750 = vmatpush.bf16.msra.mxu0 %v556
      %751 = vmatpush.bf16.msra.mxu0 %v552
      %752 = vmatpush.bf16.msra.mxu0 %v548
      %753 = vmatpush.bf16.msra.mxu0 %v544
      %754 = vmatmul.bf16.gmra.mxu0 %v342
      %v755 = vpop.f32.mrf.mxu0
      %v756 = vadd.f32 %v324, %v755
      %v757 = vpop.f32.mrf.mxu0
      %v758 = vadd.f32 %v324, %v757
      %759 = vmatmul.bf16.gmra.mxu0 %v344
      %v760 = vpop.f32.mrf.mxu0
      %v761 = vadd.f32 %v324, %v760
      %v762 = vpop.f32.mrf.mxu0
      %v763 = vadd.f32 %v324, %v762
      %764 = vdwg.mxu0
      %765 = vmatpush.bf16.msra.mxu0 %v604
      %766 = vmatpush.bf16.msra.mxu0 %v600
      %767 = vmatpush.bf16.msra.mxu0 %v596
      %768 = vmatpush.bf16.msra.mxu0 %v592
      %769 = vmatpush.bf16.msra.mxu0 %v588
      %770 = vmatpush.bf16.msra.mxu0 %v584
      %771 = vmatpush.bf16.msra.mxu0 %v580
      %772 = vmatpush.bf16.msra.mxu0 %v576
      %773 = vmatmul.bf16.gmra.mxu0 %v343
      %v774 = vpop.f32.mrf.mxu0
      %v775 = vadd.f32 %v756, %v774
      %v776 = vpop.f32.mrf.mxu0
      %v777 = vadd.f32 %v758, %v776
      %778 = vmatmul.bf16.gmra.mxu0 %v345
      %v779 = vpop.f32.mrf.mxu0
      %v780 = vadd.f32 %v761, %v779
      %v781 = vpop.f32.mrf.mxu0
      %v782 = vadd.f32 %v763, %v781
      %783 = vdwg.mxu0
      %784 = vmatpush.bf16.msra.mxu0 %v573
      %785 = vmatpush.bf16.msra.mxu0 %v569
      %786 = vmatpush.bf16.msra.mxu0 %v565
      %787 = vmatpush.bf16.msra.mxu0 %v561
      %788 = vmatpush.bf16.msra.mxu0 %v557
      %789 = vmatpush.bf16.msra.mxu0 %v553
      %790 = vmatpush.bf16.msra.mxu0 %v549
      %791 = vmatpush.bf16.msra.mxu0 %v545
      %792 = vmatmul.bf16.gmra.mxu0 %v342
      %v793 = vpop.f32.mrf.mxu0
      %v794 = vadd.f32 %v325, %v793
      %v795 = vpop.f32.mrf.mxu0
      %v796 = vadd.f32 %v325, %v795
      %797 = vmatmul.bf16.gmra.mxu0 %v344
      %v798 = vpop.f32.mrf.mxu0
      %v799 = vadd.f32 %v325, %v798
      %v800 = vpop.f32.mrf.mxu0
      %v801 = vadd.f32 %v325, %v800
      %802 = vdwg.mxu0
      %803 = vmatpush.bf16.msra.mxu0 %v605
      %804 = vmatpush.bf16.msra.mxu0 %v601
      %805 = vmatpush.bf16.msra.mxu0 %v597
      %806 = vmatpush.bf16.msra.mxu0 %v593
      %807 = vmatpush.bf16.msra.mxu0 %v589
      %808 = vmatpush.bf16.msra.mxu0 %v585
      %809 = vmatpush.bf16.msra.mxu0 %v581
      %810 = vmatpush.bf16.msra.mxu0 %v577
      %811 = vmatmul.bf16.gmra.mxu0 %v343
      %v812 = vpop.f32.mrf.mxu0
      %v813 = vadd.f32 %v794, %v812
      %v814 = vpop.f32.mrf.mxu0
      %v815 = vadd.f32 %v796, %v814
      %816 = vmatmul.bf16.gmra.mxu0 %v345
      %v817 = vpop.f32.mrf.mxu0
      %v818 = vadd.f32 %v799, %v817
      %v819 = vpop.f32.mrf.mxu0
      %v820 = vadd.f32 %v801, %v819
      %821 = vdwg.mxu0
      %vm822 = vcmp.gt.f32.partialorder %v699, 0.0
      %vm823 = vcmp.gt.f32.partialorder %v737, 0.0
      %vm824 = vcmp.gt.f32.partialorder %v775, 0.0
      %vm825 = vcmp.gt.f32.partialorder %v813, 0.0
      %vm826 = vcmp.gt.f32.partialorder %v701, 0.0
      %vm827 = vcmp.gt.f32.partialorder %v739, 0.0
      %vm828 = vcmp.gt.f32.partialorder %v777, 0.0
      %vm829 = vcmp.gt.f32.partialorder %v815, 0.0
      %vm830 = vcmp.gt.f32.partialorder %v704, 0.0
      %vm831 = vcmp.gt.f32.partialorder %v742, 0.0
      %vm832 = vcmp.gt.f32.partialorder %v780, 0.0
      %vm833 = vcmp.gt.f32.partialorder %v818, 0.0
      %vm834 = vcmp.gt.f32.partialorder %v706, 0.0
      %vm835 = vcmp.gt.f32.partialorder %v744, 0.0
      %vm836 = vcmp.gt.f32.partialorder %v782, 0.0
      %vm837 = vcmp.gt.f32.partialorder %v820, 0.0
      %v838 = vmul.f32 %v699, 0.1
      %v839 = vmul.f32 %v737, 0.1
      %v840 = vmul.f32 %v775, 0.1
      %v841 = vmul.f32 %v813, 0.1
      %v842 = vmul.f32 %v701, 0.1
      %v843 = vmul.f32 %v739, 0.1
      %v844 = vmul.f32 %v777, 0.1
      %v845 = vmul.f32 %v815, 0.1
      %v846 = vmul.f32 %v704, 0.1
      %v847 = vmul.f32 %v742, 0.1
      %v848 = vmul.f32 %v780, 0.1
      %v849 = vmul.f32 %v818, 0.1
      %v850 = vmul.f32 %v706, 0.1
      %v851 = vmul.f32 %v744, 0.1
      %v852 = vmul.f32 %v782, 0.1
      %v853 = vmul.f32 %v820, 0.1
      %v854 = vsel %vm822, %v699, %v838
      %v855 = vsel %vm823, %v737, %v839
      %v856 = vsel %vm824, %v775, %v840
      %v857 = vsel %vm825, %v813, %v841
      %v858 = vsel %vm826, %v701, %v842
      %v859 = vsel %vm827, %v739, %v843
      %v860 = vsel %vm828, %v777, %v844
      %v861 = vsel %vm829, %v815, %v845
      %v862 = vsel %vm830, %v704, %v846
      %v863 = vsel %vm831, %v742, %v847
      %v864 = vsel %vm832, %v780, %v848
      %v865 = vsel %vm833, %v818, %v849
      %v866 = vsel %vm834, %v706, %v850
      %v867 = vsel %vm835, %v744, %v851
      %v868 = vsel %vm836, %v782, %v852
      %v869 = vsel %vm837, %v820, %v853
      %v870 = vpack.c.bf16 %v855, %v854
      %v871 = vpack.c.bf16 %v857, %v856
      %v872 = vpack.c.bf16 %v859, %v858
      %v873 = vpack.c.bf16 %v861, %v860
      %v874 = vpack.c.bf16 %v863, %v862
      %v875 = vpack.c.bf16 %v865, %v864
      %v876 = vpack.c.bf16 %v867, %v866
      %v877 = vpack.c.bf16 %v869, %v868
      %878 = vst [vmem:[%s250] sm:$0xff] %v870
      %879 = vst [vmem:[%s250 + $0x8] sm:$0xff] %v871
      %880 = vst [vmem:[%s250 + $0x10] sm:$0xff] %v872
      %881 = vst [vmem:[%s250 + $0x18] sm:$0xff] %v873
      %882 = vst [vmem:[%s250 + $0x20] sm:$0xff] %v874
      %883 = vst [vmem:[%s250 + $0x28] sm:$0xff] %v875
      %884 = vst [vmem:[%s250 + $0x30] sm:$0xff] %v876
      %885 = vst [vmem:[%s250 + $0x38] sm:$0xff] %v877
      %s886 = smul.u32 4, %s19
      %p887 = scmp.lt.s32.totalorder %s18, 2
      %s888 = scalar_select %p887, %s18, 2
      %p889 = scmp.lt.s32.totalorder %s886, 3
      %s890 = scalar_select %p889, %s886, 3
      %s891 = smul.addr %s890, 4
      %s892 = smul.addr %s888, 16
      %s893 = sadd.s32 %s891, %s892
      %s894 = smul.addr %s893, 4
      %s895 = scalar_lea.vmem %s3, %s894
      // Predicated region
      $region33: #{model_forward.15} parent=31 // pred_check
        %p896 = pneg %p126
      $region34: #{model_forward.15} parent=31 // pred_check_branch
        %898 = sbr.rel (%p896) target = $region36
      $region35: #{model_forward.15} parent=31 // pred_region
        %s899 = smul.u32 4, %s19
      $region36: #{model_forward.15} parent=31 // pred_fallthru
        _
    $region32: #{model_forward.15} parent=5 // pred_fallthru
      _
    %p900 = scmp.le.s32.totalorder 2, %s9
    // Predicated region
    $region37: #{model_forward.15} parent=5 // pred_check
      %p901 = pneg %p900
    $region38: #{model_forward.15} parent=5 // pred_check_branch
      %903 = sbr.rel (%p901) target = $region40
    $region39: #{model_forward.15} parent=5 // pred_region
      %s904 = ssub.s32 %s9, 2
      // Predicated region
      $region41: #{model_forward.15} parent=39 // pred_check
        %p905 = pneg %p132
      $region42: #{model_forward.15} parent=39 // pred_check_branch
        %907 = sbr.rel (%p905) target = $region44
      $region43: #{model_forward.15} parent=39 // pred_region
        %s908 = smul.u32 4, %s21
        %p909 = scmp.lt.s32.totalorder %s20, 2
        %s910 = scalar_select %p909, %s20, 2
        %p911 = scmp.lt.s32.totalorder %s908, 3
        %s912 = scalar_select %p911, %s908, 3
        %s913 = smul.addr %s912, 4
        %s914 = smul.addr %s910, 16
        %s915 = sadd.s32 %s913, %s914
        %s916 = smul.addr %s915, 4
        %s917 = scalar_lea.vmem %s3, %s916
      $region44: #{model_forward.15} parent=39 // pred_fallthru
        _
    $region40: #{model_forward.15} parent=5 // pred_fallthru
      _
  $region6: #{model_forward.15} parent=0 // loop_footer
    %s13 = sadd.s32 1, %s9
  $region7: #{model_forward.15} parent=0 // loop_footer_branch
    %8 = sbr.rel target = $region3
  $region8: #{model_forward.15} parent=0 // loop_exit
    _

// kernel: model_forward.16
$region0: #{model_forward.16}
  #allocation0 [shape = 'u32[]', space=smem, size = 0x4, offset = 0x4, fixed_abs, tag = 'smem constant byte address 0x4 - core index']
  #allocation1 [shape = 'u32[72,128]{1,0:T(1,128)}', space=vmem, size = 0x9000, scoped, tag = 'internal scratch']
  %s0 = inlined_call_operand.vmem [shape: bf16[3,32,512], index: 0, kind: input, shape index: {}]
  %s1 = inlined_call_operand.vmem [shape: bf16[3,512,512], index: 1, kind: input, shape index: {}]
  %s2 = inlined_call_operand.vmem [shape: f32[3,1,512], index: 2, kind: input, shape index: {}]
  %s3 = inlined_call_operand.vmem [shape: bf16[3,32,512], index: 3, kind: output, shape index: {}]
  %s4 = sld [smem:[#allocation0]]
  $region45: #{model_forward.16} parent=0
    _
  %s6 = ssub.s32 1, %s4
  %s7 = scalar_select 0, %s6, %s4
  loop: start=0, step=1, limit=5
  $region2: #{model_forward.16} parent=0 // loop_pre_header
    _
  $region3: #{model_forward.16} parent=0 // loop_header
    %s9 = sphi 0, %s13
    %p10 = scmp.ge.s32.totalorder %s9, 5
    %s16 = sphi 0, %s28
    %s17 = sphi 0, %s24
    %s18 = sphi 0, %s16
    %s19 = sphi 0, %s17
    %s20 = sphi 0, %s18
    %s21 = sphi 0, %s19
    %s33 = sphi 0, %s35
    %s36 = sphi 0, %s33
    %s37 = sphi 0, %s36
    %s53 = sphi 0, %s37
    %s59 = sphi 0, %s61
    %s62 = sphi 0, %s59
    %s63 = sphi 0, %s62
    %s79 = sphi 0, %s63
    %s85 = sphi 0, %s87
    %s88 = sphi 0, %s85
    %s89 = sphi 0, %s88
    %s105 = sphi 0, %s89
    %s113 = sphi 0, %s115
    %s116 = sphi 0, %s113
    %s117 = sphi 0, %s116
    %s133 = sphi 0, %s117
  $region4: #{model_forward.16} parent=0 // loop_header_branch
    %12 = sbr.rel (%p10) target = $region8
  $region5: #{model_forward.16} parent=0 // loop_body
    %s14 = ssub.s32 %s9, 1
    %s15 = ssub.s32 %s9, 2
    %s22 = sadd.s32 1, %s17
    %p23 = scmp.ge.s32.totalorder %s22, 1
    %s24 = scalar_select %p23, 0, %s22
    %s25 = sadd.s32 1, %s16
    %s26 = scalar_select %p23, %s25, %s16
    %p27 = scmp.ge.s32.totalorder %s26, 3
    %s28 = scalar_select %p27, 0, %s26
    %s29 = ssub.s32 %s16, %s28
    %s30 = ssub.s32 %s17, %s24
    %s31 = sor.u32 %s29, %s30
    %p32 = scmp.eq.s32.totalorder %s31, 0
    %s34 = sadd.s32 %s33, 1
    %s35 = scalar_select %p32, %s33, %s34
    %p38 = pneg %p32
    %p39 = scmp.eq.s32.totalorder %s9, 2
    %p40 = por %p38, %p39
    %p41 = scmp.ne.s32.totalorder %s33, %s36
    %p42 = scmp.eq.s32.totalorder %s9, 0
    %p43 = por %p41, %p42
    %p44 = scmp.ne.s32.totalorder %s33, %s36
    %p45 = scmp.eq.s32.totalorder %s14, 2
    %p46 = por %p44, %p45
    %p47 = scmp.ne.s32.totalorder %s36, %s37
    %p48 = scmp.eq.s32.totalorder %s14, 0
    %p49 = por %p47, %p48
    %p50 = scmp.ne.s32.totalorder %s36, %s37
    %p51 = scmp.eq.s32.totalorder %s15, 2
    %p52 = por %p50, %p51
    %p54 = scmp.ne.s32.totalorder %s37, %s53
    %p55 = scmp.eq.s32.totalorder %s15, 0
    %p56 = por %p54, %p55
    %s57 = ssub.s32 %s16, %s28
    %p58 = scmp.eq.s32.totalorder %s57, 0
    %s60 = sadd.s32 %s59, 1
    %s61 = scalar_select %p58, %s59, %s60
    %p64 = pneg %p58
    %p65 = scmp.eq.s32.totalorder %s9, 2
    %p66 = por %p64, %p65
    %p67 = scmp.ne.s32.totalorder %s59, %s62
    %p68 = scmp.eq.s32.totalorder %s9, 0
    %p69 = por %p67, %p68
    %p70 = scmp.ne.s32.totalorder %s59, %s62
    %p71 = scmp.eq.s32.totalorder %s14, 2
    %p72 = por %p70, %p71
    %p73 = scmp.ne.s32.totalorder %s62, %s63
    %p74 = scmp.eq.s32.totalorder %s14, 0
    %p75 = por %p73, %p74
    %p76 = scmp.ne.s32.totalorder %s62, %s63
    %p77 = scmp.eq.s32.totalorder %s15, 2
    %p78 = por %p76, %p77
    %p80 = scmp.ne.s32.totalorder %s63, %s79
    %p81 = scmp.eq.s32.totalorder %s15, 0
    %p82 = por %p80, %p81
    %s83 = ssub.s32 %s16, %s28
    %p84 = scmp.eq.s32.totalorder %s83, 0
    %s86 = sadd.s32 %s85, 1
    %s87 = scalar_select %p84, %s85, %s86
    %p90 = pneg %p84
    %p91 = scmp.eq.s32.totalorder %s9, 2
    %p92 = por %p90, %p91
    %p93 = scmp.ne.s32.totalorder %s85, %s88
    %p94 = scmp.eq.s32.totalorder %s9, 0
    %p95 = por %p93, %p94
    %p96 = scmp.ne.s32.totalorder %s85, %s88
    %p97 = scmp.eq.s32.totalorder %s14, 2
    %p98 = por %p96, %p97
    %p99 = scmp.ne.s32.totalorder %s88, %s89
    %p100 = scmp.eq.s32.totalorder %s14, 0
    %p101 = por %p99, %p100
    %p102 = scmp.ne.s32.totalorder %s88, %s89
    %p103 = scmp.eq.s32.totalorder %s15, 2
    %p104 = por %p102, %p103
    %p106 = scmp.ne.s32.totalorder %s89, %s105
    %p107 = scmp.eq.s32.totalorder %s15, 0
    %p108 = por %p106, %p107
    %s109 = ssub.s32 %s16, %s28
    %s110 = ssub.s32 %s17, %s24
    %s111 = sor.u32 %s109, %s110
    %p112 = scmp.eq.s32.totalorder %s111, 0
    %s114 = sadd.s32 %s113, 1
    %s115 = scalar_select %p112, %s113, %s114
    %p118 = pneg %p112
    %p119 = scmp.eq.s32.totalorder %s9, 2
    %p120 = por %p118, %p119
    %p121 = scmp.ne.s32.totalorder %s113, %s116
    %p122 = scmp.eq.s32.totalorder %s9, 0
    %p123 = por %p121, %p122
    %p124 = scmp.ne.s32.totalorder %s113, %s116
    %p125 = scmp.eq.s32.totalorder %s14, 2
    %p126 = por %p124, %p125
    %p127 = scmp.ne.s32.totalorder %s116, %s117
    %p128 = scmp.eq.s32.totalorder %s14, 0
    %p129 = por %p127, %p128
    %p130 = scmp.ne.s32.totalorder %s116, %s117
    %p131 = scmp.eq.s32.totalorder %s15, 2
    %p132 = por %p130, %p131
    %p134 = scmp.ne.s32.totalorder %s117, %s133
    %p135 = scmp.eq.s32.totalorder %s15, 0
    %p136 = por %p134, %p135
    %p137 = scmp.le.s32.totalorder 1, %s9
    %p138 = scmp.lt.s32.totalorder %s9, 4
    %p139 = pnand %p137, %p138
    %p140 = pneg %p139
    // Predicated region
    $region9: #{model_forward.16} parent=5 // pred_check
      _
    $region10: #{model_forward.16} parent=5 // pred_check_branch
      %142 = sbr.rel (%p139) target = $region12
    $region11: #{model_forward.16} parent=5 // pred_region
      %s143 = ssub.s32 %s9, 1
    $region12: #{model_forward.16} parent=5 // pred_fallthru
      _
    %p144 = scmp.lt.s32.totalorder %s9, 3
    // Predicated region
    $region13: #{model_forward.16} parent=5 // pred_check
      %p145 = pneg %p144
    $region14: #{model_forward.16} parent=5 // pred_check_branch
      %147 = sbr.rel (%p145) target = $region16
    $region15: #{model_forward.16} parent=5 // pred_region
      // Predicated region
      $region17: #{model_forward.16} parent=15 // pred_check
        %p148 = pneg %p43
      $region18: #{model_forward.16} parent=15 // pred_check_branch
        %150 = sbr.rel (%p148) target = $region20
      $region19: #{model_forward.16} parent=15 // pred_region
        %s151 = smul.u32 4, %s17
        %p152 = scmp.lt.s32.totalorder %s16, 2
        %s153 = scalar_select %p152, %s16, 2
        %p154 = scmp.lt.s32.totalorder %s151, 3
        %s155 = scalar_select %p154, %s151, 3
        %s156 = smul.addr %s155, 4
        %s157 = smul.addr %s153, 16
        %s158 = sadd.s32 %s156, %s157
        %s159 = smul.addr %s158, 4
        %s160 = scalar_lea.vmem %s0, %s159
        %s161 = smul.u32 4, %s17
      $region20: #{model_forward.16} parent=15 // pred_fallthru
        _
      // Predicated region
      $region21: #{model_forward.16} parent=15 // pred_check
        %p162 = pneg %p69
      $region22: #{model_forward.16} parent=15 // pred_check_branch
        %164 = sbr.rel (%p162) target = $region24
      $region23: #{model_forward.16} parent=15 // pred_region
        %p165 = scmp.lt.s32.totalorder %s16, 2
        %s166 = scalar_select %p165, %s16, 2
        %s167 = smul.addr %s166, 256
        %s168 = smul.addr %s167, 4
        %s169 = scalar_lea.vmem %s1, %s168
      $region24: #{model_forward.16} parent=15 // pred_fallthru
        _
      // Predicated region
      $region25: #{model_forward.16} parent=15 // pred_check
        %p170 = pneg %p95
      $region26: #{model_forward.16} parent=15 // pred_check_branch
        %172 = sbr.rel (%p170) target = $region28
      $region27: #{model_forward.16} parent=15 // pred_region
        %p173 = scmp.lt.s32.totalorder %s16, 2
        %s174 = scalar_select %p173, %s16, 2
        %s175 = smul.addr %s174, 4
        %s176 = scalar_lea.vmem %s2, %s175
      $region28: #{model_forward.16} parent=15 // pred_fallthru
        _
    $region16: #{model_forward.16} parent=5 // pred_fallthru
      _
    %p177 = scmp.le.s32.totalorder 1, %s9
    %p178 = scmp.lt.s32.totalorder %s9, 4
    %p179 = pnand %p177, %p178
    %p180 = pneg %p179
    // Predicated region
    $region29: #{model_forward.16} parent=5 // pred_check
      _
    $region30: #{model_forward.16} parent=5 // pred_check_branch
      %182 = sbr.rel (%p179) target = $region32
    $region31: #{model_forward.16} parent=5 // pred_region
      %s183 = ssub.s32 %s9, 1
      %s184 = smul.u32 4, %s19
      %p185 = scmp.lt.s32.totalorder %s18, 2
      %s186 = scalar_select %p185, %s18, 2
      %p187 = scmp.lt.s32.totalorder %s184, 3
      %s188 = scalar_select %p187, %s184, 3
      %s189 = smul.addr %s188, 4
      %s190 = smul.addr %s186, 16
      %s191 = sadd.s32 %s189, %s190
      %s192 = smul.addr %s191, 4
      %s193 = scalar_lea.vmem %s0, %s192
      %p194 = pneg %p49
      %p195 = pneg %p46
      %p196 = scmp.lt.s32.totalorder %s18, 2
      %s197 = scalar_select %p196, %s18, 2
      %s198 = smul.addr %s197, 256
      %s199 = smul.addr %s198, 4
      %s200 = scalar_lea.vmem %s1, %s199
      %p201 = pneg %p75
      %p202 = pneg %p72
      %p203 = scmp.lt.s32.totalorder %s18, 2
      %s204 = scalar_select %p203, %s18, 2
      %s205 = smul.addr %s204, 4
      %s206 = scalar_lea.vmem %s2, %s205
      %p207 = pneg %p101
      %p208 = pneg %p98
      %p209 = pneg %p129
      %p210 = pneg %p126
      %s211 = smul.u32 4, %s19
      %p212 = scmp.lt.s32.totalorder %s18, 2
      %s213 = scalar_select %p212, %s18, 2
      %p214 = scmp.lt.s32.totalorder %s211, 3
      %s215 = scalar_select %p214, %s211, 3
      %s216 = smul.addr %s215, 4
      %s217 = smul.addr %s213, 16
      %s218 = sadd.s32 %s216, %s217
      %s219 = smul.addr %s218, 4
      %s220 = scalar_lea.vmem %s3, %s219
      %s221 = smul.u32 4, %s19
      %p222 = scmp.lt.s32.totalorder %s18, 2
      %s223 = scalar_select %p222, %s18, 2
      %p224 = scmp.lt.s32.totalorder %s221, 3
      %s225 = scalar_select %p224, %s221, 3
      %s226 = smul.addr %s225, 4
      %s227 = smul.addr %s223, 16
      %s228 = sadd.s32 %s226, %s227
      %s229 = smul.addr %s228, 4
      %s230 = scalar_lea.vmem %s0, %s229
      %s231 = smul.u32 4, %s19
      %p232 = scmp.lt.s32.totalorder %s18, 2
      %s233 = scalar_select %p232, %s18, 2
      %s234 = smul.addr %s233, 256
      %s235 = smul.addr %s234, 4
      %s236 = scalar_lea.vmem %s1, %s235
      %p237 = scmp.lt.s32.totalorder %s18, 2
      %s238 = scalar_select %p237, %s18, 2
      %s239 = smul.addr %s238, 4
      %s240 = scalar_lea.vmem %s2, %s239
      %s241 = smul.u32 4, %s19
      %p242 = scmp.lt.s32.totalorder %s18, 2
      %s243 = scalar_select %p242, %s18, 2
      %p244 = scmp.lt.s32.totalorder %s241, 3
      %s245 = scalar_select %p244, %s241, 3
      %s246 = smul.addr %s245, 4
      %s247 = smul.addr %s243, 16
      %s248 = sadd.s32 %s246, %s247
      %s249 = smul.addr %s248, 4
      %s250 = scalar_lea.vmem %s3, %s249
      %s251 = smul.u32 4, %s19
      %v252 = vld [vmem:[%s230] sm:$0xff]
      %v253 = vld [vmem:[%s230 + $0x8] sm:$0xff]
      %v254 = vld [vmem:[%s230 + $0x10] sm:$0xff]
      %v255 = vld [vmem:[%s230 + $0x18] sm:$0xff]
      %v256 = vld [vmem:[%s230 + $0x20] sm:$0xff]
      %v257 = vld [vmem:[%s230 + $0x28] sm:$0xff]
      %v258 = vld [vmem:[%s230 + $0x30] sm:$0xff]
      %v259 = vld [vmem:[%s230 + $0x38] sm:$0xff]
      %v260 = vld [vmem:[%s236] sm:$0xff]
      %v261 = vld [vmem:[%s236 + $0x8] sm:$0xff]
      %v262 = vld [vmem:[%s236 + $0x10] sm:$0xff]
      %v263 = vld [vmem:[%s236 + $0x18] sm:$0xff]
      %v264 = vld [vmem:[%s236 + $0x20] sm:$0xff]
      %v265 = vld [vmem:[%s236 + $0x28] sm:$0xff]
      %v266 = vld [vmem:[%s236 + $0x30] sm:$0xff]
      %v267 = vld [vmem:[%s236 + $0x38] sm:$0xff]
      %v268 = vld [vmem:[%s236 + $0x40] sm:$0xff]
      %v269 = vld [vmem:[%s236 + $0x48] sm:$0xff]
      %v270 = vld [vmem:[%s236 + $0x50] sm:$0xff]
      %v271 = vld [vmem:[%s236 + $0x58] sm:$0xff]
      %v272 = vld [vmem:[%s236 + $0x60] sm:$0xff]
      %v273 = vld [vmem:[%s236 + $0x68] sm:$0xff]
      %v274 = vld [vmem:[%s236 + $0x70] sm:$0xff]
      %v275 = vld [vmem:[%s236 + $0x78] sm:$0xff]
      %v276 = vld [vmem:[%s236 + $0x80] sm:$0xff]
      %v277 = vld [vmem:[%s236 + $0x88] sm:$0xff]
      %v278 = vld [vmem:[%s236 + $0x90] sm:$0xff]
      %v279 = vld [vmem:[%s236 + $0x98] sm:$0xff]
      %v280 = vld [vmem:[%s236 + $0xa0] sm:$0xff]
      %v281 = vld [vmem:[%s236 + $0xa8] sm:$0xff]
      %v282 = vld [vmem:[%s236 + $0xb0] sm:$0xff]
      %v283 = vld [vmem:[%s236 + $0xb8] sm:$0xff]
      %v284 = vld [vmem:[%s236 + $0xc0] sm:$0xff]
      %v285 = vld [vmem:[%s236 + $0xc8] sm:$0xff]
      %v286 = vld [vmem:[%s236 + $0xd0] sm:$0xff]
      %v287 = vld [vmem:[%s236 + $0xd8] sm:$0xff]
      %v288 = vld [vmem:[%s236 + $0xe0] sm:$0xff]
      %v289 = vld [vmem:[%s236 + $0xe8] sm:$0xff]
      %v290 = vld [vmem:[%s236 + $0xf0] sm:$0xff]
      %v291 = vld [vmem:[%s236 + $0xf8] sm:$0xff]
      %v292 = vld [vmem:[%s236 + $0x100] sm:$0xff]
      %v293 = vld [vmem:[%s236 + $0x108] sm:$0xff]
      %v294 = vld [vmem:[%s236 + $0x110] sm:$0xff]
      %v295 = vld [vmem:[%s236 + $0x118] sm:$0xff]
      %v296 = vld [vmem:[%s236 + $0x120] sm:$0xff]
      %v297 = vld [vmem:[%s236 + $0x128] sm:$0xff]
      %v298 = vld [vmem:[%s236 + $0x130] sm:$0xff]
      %v299 = vld [vmem:[%s236 + $0x138] sm:$0xff]
      %v300 = vld [vmem:[%s236 + $0x140] sm:$0xff]
      %v301 = vld [vmem:[%s236 + $0x148] sm:$0xff]
      %v302 = vld [vmem:[%s236 + $0x150] sm:$0xff]
      %v303 = vld [vmem:[%s236 + $0x158] sm:$0xff]
      %v304 = vld [vmem:[%s236 + $0x160] sm:$0xff]
      %v305 = vld [vmem:[%s236 + $0x168] sm:$0xff]
      %v306 = vld [vmem:[%s236 + $0x170] sm:$0xff]
      %v307 = vld [vmem:[%s236 + $0x178] sm:$0xff]
      %v308 = vld [vmem:[%s236 + $0x180] sm:$0xff]
      %v309 = vld [vmem:[%s236 + $0x188] sm:$0xff]
      %v310 = vld [vmem:[%s236 + $0x190] sm:$0xff]
      %v311 = vld [vmem:[%s236 + $0x198] sm:$0xff]
      %v312 = vld [vmem:[%s236 + $0x1a0] sm:$0xff]
      %v313 = vld [vmem:[%s236 + $0x1a8] sm:$0xff]
      %v314 = vld [vmem:[%s236 + $0x1b0] sm:$0xff]
      %v315 = vld [vmem:[%s236 + $0x1b8] sm:$0xff]
      %v316 = vld [vmem:[%s236 + $0x1c0] sm:$0xff]
      %v317 = vld [vmem:[%s236 + $0x1c8] sm:$0xff]
      %v318 = vld [vmem:[%s236 + $0x1d0] sm:$0xff]
      %v319 = vld [vmem:[%s236 + $0x1d8] sm:$0xff]
      %v320 = vld [vmem:[%s236 + $0x1e0] sm:$0xff]
      %v321 = vld [vmem:[%s236 + $0x1e8] sm:$0xff]
      %v322 = vld [vmem:[%s236 + $0x1f0] sm:$0xff]
      %v323 = vld [vmem:[%s236 + $0x1f8] sm:$0xff]
      %v324 = vld [vmem:[%s236 + $0x200] sm:$0xff]
      %v325 = vld [vmem:[%s236 + $0x208] sm:$0xff]
      %v326 = vld [vmem:[%s236 + $0x210] sm:$0xff]
      %v327 = vld [vmem:[%s236 + $0x218] sm:$0xff]
      %v328 = vld [vmem:[%s236 + $0x220] sm:$0xff]
      %v329 = vld [vmem:[%s236 + $0x228] sm:$0xff]
      %v330 = vld [vmem:[%s236 + $0x230] sm:$0xff]
      %v331 = vld [vmem:[%s236 + $0x238] sm:$0xff]
      %v332 = vld [vmem:[%s236 + $0x240] sm:$0xff]
      %v333 = vld [vmem:[%s236 + $0x248] sm:$0xff]
      %v334 = vld [vmem:[%s236 + $0x250] sm:$0xff]
      %v335 = vld [vmem:[%s236 + $0x258] sm:$0xff]
      %v336 = vld [vmem:[%s236 + $0x260] sm:$0xff]
      %v337 = vld [vmem:[%s236 + $0x268] sm:$0xff]
      %v338 = vld [vmem:[%s236 + $0x270] sm:$0xff]
      %v339 = vld [vmem:[%s236 + $0x278] sm:$0xff]
      %v340 = vld [vmem:[%s236 + $0x280] sm:$0xff]
      %v341 = vld [vmem:[%s236 + $0x288] sm:$0xff]
      %v342 = vld [vmem:[%s236 + $0x290] sm:$0xff]
      %v343 = vld [vmem:[%s236 + $0x298] sm:$0xff]
      %v344 = vld [vmem:[%s236 + $0x2a0] sm:$0xff]
      %v345 = vld [vmem:[%s236 + $0x2a8] sm:$0xff]
      %v346 = vld [vmem:[%s236 + $0x2b0] sm:$0xff]
      %v347 = vld [vmem:[%s236 + $0x2b8] sm:$0xff]
      %v348 = vld [vmem:[%s236 + $0x2c0] sm:$0xff]
      %v349 = vld [vmem:[%s236 + $0x2c8] sm:$0xff]
      %v350 = vld [vmem:[%s236 + $0x2d0] sm:$0xff]
      %v351 = vld [vmem:[%s236 + $0x2d8] sm:$0xff]
      %v352 = vld [vmem:[%s236 + $0x2e0] sm:$0xff]
      %v353 = vld [vmem:[%s236 + $0x2e8] sm:$0xff]
      %v354 = vld [vmem:[%s236 + $0x2f0] sm:$0xff]
      %v355 = vld [vmem:[%s236 + $0x2f8] sm:$0xff]
      %v356 = vld [vmem:[%s236 + $0x300] sm:$0xff]
      %v357 = vld [vmem:[%s236 + $0x308] sm:$0xff]
      %v358 = vld [vmem:[%s236 + $0x310] sm:$0xff]
      %v359 = vld [vmem:[%s236 + $0x318] sm:$0xff]
      %v360 = vld [vmem:[%s236 + $0x320] sm:$0xff]
      %v361 = vld [vmem:[%s236 + $0x328] sm:$0xff]
      %v362 = vld [vmem:[%s236 + $0x330] sm:$0xff]
      %v363 = vld [vmem:[%s236 + $0x338] sm:$0xff]
      %v364 = vld [vmem:[%s236 + $0x340] sm:$0xff]
      %v365 = vld [vmem:[%s236 + $0x348] sm:$0xff]
      %v366 = vld [vmem:[%s236 + $0x350] sm:$0xff]
      %v367 = vld [vmem:[%s236 + $0x358] sm:$0xff]
      %v368 = vld [vmem:[%s236 + $0x360] sm:$0xff]
      %v369 = vld [vmem:[%s236 + $0x368] sm:$0xff]
      %v370 = vld [vmem:[%s236 + $0x370] sm:$0xff]
      %v371 = vld [vmem:[%s236 + $0x378] sm:$0xff]
      %v372 = vld [vmem:[%s236 + $0x380] sm:$0xff]
      %v373 = vld [vmem:[%s236 + $0x388] sm:$0xff]
      %v374 = vld [vmem:[%s236 + $0x390] sm:$0xff]
      %v375 = vld [vmem:[%s236 + $0x398] sm:$0xff]
      %v376 = vld [vmem:[%s236 + $0x3a0] sm:$0xff]
      %v377 = vld [vmem:[%s236 + $0x3a8] sm:$0xff]
      %v378 = vld [vmem:[%s236 + $0x3b0] sm:$0xff]
      %v379 = vld [vmem:[%s236 + $0x3b8] sm:$0xff]
      %v380 = vld [vmem:[%s236 + $0x3c0] sm:$0xff]
      %v381 = vld [vmem:[%s236 + $0x3c8] sm:$0xff]
      %v382 = vld [vmem:[%s236 + $0x3d0] sm:$0xff]
      %v383 = vld [vmem:[%s236 + $0x3d8] sm:$0xff]
      %v384 = vld [vmem:[%s236 + $0x3e0] sm:$0xff]
      %v385 = vld [vmem:[%s236 + $0x3e8] sm:$0xff]
      %v386 = vld [vmem:[%s236 + $0x3f0] sm:$0xff]
      %v387 = vld [vmem:[%s236 + $0x3f8] sm:$0xff]
      %v388 = vld [vmem:[%s240] sm:$0xf]
      %v390 = vperm.slane %v388, 0
      %v391 = vperm.slane %v388, 1
      %v392 = vperm.slane %v388, 2
      %v393 = vperm.slane %v388, 3
      %v406 = vunpack.c.l.b16 %v252
      %v407 = vunpack.c.h.b16 %v252
      %v408 = vunpack.c.l.b16 %v253
      %v409 = vunpack.c.h.b16 %v253
      %v410 = vunpack.c.l.b16 %v254
      %v411 = vunpack.c.h.b16 %v254
      %v412 = vunpack.c.l.b16 %v255
      %v413 = vunpack.c.h.b16 %v255
      %v414 = vunpack.c.l.b16 %v256
      %v415 = vunpack.c.h.b16 %v256
      %v416 = vunpack.c.l.b16 %v257
      %v417 = vunpack.c.h.b16 %v257
      %v418 = vunpack.c.l.b16 %v258
      %v419 = vunpack.c.h.b16 %v258
      %v420 = vunpack.c.l.b16 %v259
      %v421 = vunpack.c.h.b16 %v259
      %v422 = vpack.c.b16 %v410, %v406
      %v423 = vpack.c.b16 %v411, %v407
      %v424 = vpack.c.b16 %v412, %v408
      %v425 = vpack.c.b16 %v413, %v409
      %v426 = vpack.c.b16 %v418, %v414
      %v427 = vpack.c.b16 %v419, %v415
      %v428 = vpack.c.b16 %v420, %v416
      %v429 = vpack.c.b16 %v421, %v417
      %v566 = vunpack.c.l.b16 %v260
      %v567 = vunpack.c.h.b16 %v260
      %v568 = vunpack.c.l.b16 %v261
      %v569 = vunpack.c.h.b16 %v261
      %v570 = vunpack.c.l.b16 %v262
      %v571 = vunpack.c.h.b16 %v262
      %v572 = vunpack.c.l.b16 %v263
      %v573 = vunpack.c.h.b16 %v263
      %v574 = vunpack.c.l.b16 %v264
      %v575 = vunpack.c.h.b16 %v264
      %v576 = vunpack.c.l.b16 %v265
      %v577 = vunpack.c.h.b16 %v265
      %v578 = vunpack.c.l.b16 %v266
      %v579 = vunpack.c.h.b16 %v266
      %v580 = vunpack.c.l.b16 %v267
      %v581 = vunpack.c.h.b16 %v267
      %v582 = vunpack.c.l.b16 %v268
      %v583 = vunpack.c.h.b16 %v268
      %v584 = vunpack.c.l.b16 %v269
      %v585 = vunpack.c.h.b16 %v269
      %v586 = vunpack.c.l.b16 %v270
      %v587 = vunpack.c.h.b16 %v270
      %v588 = vunpack.c.l.b16 %v271
      %v589 = vunpack.c.h.b16 %v271
      %v590 = vunpack.c.l.b16 %v272
      %v591 = vunpack.c.h.b16 %v272
      %v592 = vunpack.c.l.b16 %v273
      %v593 = vunpack.c.h.b16 %v273
      %v594 = vunpack.c.l.b16 %v274
      %v595 = vunpack.c.h.b16 %v274
      %v596 = vunpack.c.l.b16 %v275
      %v597 = vunpack.c.h.b16 %v275
      %v598 = vunpack.c.l.b16 %v276
      %v599 = vunpack.c.h.b16 %v276
      %v600 = vunpack.c.l.b16 %v277
      %v601 = vunpack.c.h.b16 %v277
      %v602 = vunpack.c.l.b16 %v278
      %v603 = vunpack.c.h.b16 %v278
      %v604 = vunpack.c.l.b16 %v279
      %v605 = vunpack.c.h.b16 %v279
      %v606 = vunpack.c.l.b16 %v280
      %v607 = vunpack.c.h.b16 %v280
      %v608 = vunpack.c.l.b16 %v281
      %v609 = vunpack.c.h.b16 %v281
      %v610 = vunpack.c.l.b16 %v282
      %v611 = vunpack.c.h.b16 %v282
      %v612 = vunpack.c.l.b16 %v283
      %v613 = vunpack.c.h.b16 %v283
      %v614 = vunpack.c.l.b16 %v284
      %v615 = vunpack.c.h.b16 %v284
      %v616 = vunpack.c.l.b16 %v285
      %v617 = vunpack.c.h.b16 %v285
      %v618 = vunpack.c.l.b16 %v286
      %v619 = vunpack.c.h.b16 %v286
      %v620 = vunpack.c.l.b16 %v287
      %v621 = vunpack.c.h.b16 %v287
      %v622 = vunpack.c.l.b16 %v288
      %v623 = vunpack.c.h.b16 %v288
      %v624 = vunpack.c.l.b16 %v289
      %v625 = vunpack.c.h.b16 %v289
      %v626 = vunpack.c.l.b16 %v290
      %v627 = vunpack.c.h.b16 %v290
      %v628 = vunpack.c.l.b16 %v291
      %v629 = vunpack.c.h.b16 %v291
      %v630 = vunpack.c.l.b16 %v292
      %v631 = vunpack.c.h.b16 %v292
      %v632 = vunpack.c.l.b16 %v293
      %v633 = vunpack.c.h.b16 %v293
      %v634 = vunpack.c.l.b16 %v294
      %v635 = vunpack.c.h.b16 %v294
      %v636 = vunpack.c.l.b16 %v295
      %v637 = vunpack.c.h.b16 %v295
      %v638 = vunpack.c.l.b16 %v296
      %v639 = vunpack.c.h.b16 %v296
      %v640 = vunpack.c.l.b16 %v297
      %v641 = vunpack.c.h.b16 %v297
      %v642 = vunpack.c.l.b16 %v298
      %v643 = vunpack.c.h.b16 %v298
      %v644 = vunpack.c.l.b16 %v299
      %v645 = vunpack.c.h.b16 %v299
      %v646 = vunpack.c.l.b16 %v300
      %v647 = vunpack.c.h.b16 %v300
      %v648 = vunpack.c.l.b16 %v301
      %v649 = vunpack.c.h.b16 %v301
      %v650 = vunpack.c.l.b16 %v302
      %v651 = vunpack.c.h.b16 %v302
      %v652 = vunpack.c.l.b16 %v303
      %v653 = vunpack.c.h.b16 %v303
      %v654 = vunpack.c.l.b16 %v304
      %v655 = vunpack.c.h.b16 %v304
      %v656 = vunpack.c.l.b16 %v305
      %v657 = vunpack.c.h.b16 %v305
      %v658 = vunpack.c.l.b16 %v306
      %v659 = vunpack.c.h.b16 %v306
      %v660 = vunpack.c.l.b16 %v307
      %v661 = vunpack.c.h.b16 %v307
      %v662 = vunpack.c.l.b16 %v308
      %v663 = vunpack.c.h.b16 %v308
      %v664 = vunpack.c.l.b16 %v309
      %v665 = vunpack.c.h.b16 %v309
      %v666 = vunpack.c.l.b16 %v310
      %v667 = vunpack.c.h.b16 %v310
      %v668 = vunpack.c.l.b16 %v311
      %v669 = vunpack.c.h.b16 %v311
      %v670 = vunpack.c.l.b16 %v312
      %v671 = vunpack.c.h.b16 %v312
      %v672 = vunpack.c.l.b16 %v313
      %v673 = vunpack.c.h.b16 %v313
      %v674 = vunpack.c.l.b16 %v314
      %v675 = vunpack.c.h.b16 %v314
      %v676 = vunpack.c.l.b16 %v315
      %v677 = vunpack.c.h.b16 %v315
      %v678 = vunpack.c.l.b16 %v316
      %v679 = vunpack.c.h.b16 %v316
      %v680 = vunpack.c.l.b16 %v317
      %v681 = vunpack.c.h.b16 %v317
      %v682 = vunpack.c.l.b16 %v318
      %v683 = vunpack.c.h.b16 %v318
      %v684 = vunpack.c.l.b16 %v319
      %v685 = vunpack.c.h.b16 %v319
      %v686 = vunpack.c.l.b16 %v320
      %v687 = vunpack.c.h.b16 %v320
      %v688 = vunpack.c.l.b16 %v321
      %v689 = vunpack.c.h.b16 %v321
      %v690 = vunpack.c.l.b16 %v322
      %v691 = vunpack.c.h.b16 %v322
      %v692 = vunpack.c.l.b16 %v323
      %v693 = vunpack.c.h.b16 %v323
      %v694 = vunpack.c.l.b16 %v324
      %v695 = vunpack.c.h.b16 %v324
      %v696 = vunpack.c.l.b16 %v325
      %v697 = vunpack.c.h.b16 %v325
      %v698 = vunpack.c.l.b16 %v326
      %v699 = vunpack.c.h.b16 %v326
      %v700 = vunpack.c.l.b16 %v327
      %v701 = vunpack.c.h.b16 %v327
      %v702 = vunpack.c.l.b16 %v328
      %v703 = vunpack.c.h.b16 %v328
      %v704 = vunpack.c.l.b16 %v329
      %v705 = vunpack.c.h.b16 %v329
      %v706 = vunpack.c.l.b16 %v330
      %v707 = vunpack.c.h.b16 %v330
      %v708 = vunpack.c.l.b16 %v331
      %v709 = vunpack.c.h.b16 %v331
      %v710 = vunpack.c.l.b16 %v332
      %v711 = vunpack.c.h.b16 %v332
      %v712 = vunpack.c.l.b16 %v333
      %v713 = vunpack.c.h.b16 %v333
      %v714 = vunpack.c.l.b16 %v334
      %v715 = vunpack.c.h.b16 %v334
      %v716 = vunpack.c.l.b16 %v335
      %v717 = vunpack.c.h.b16 %v335
      %v718 = vunpack.c.l.b16 %v336
      %v719 = vunpack.c.h.b16 %v336
      %v720 = vunpack.c.l.b16 %v337
      %v721 = vunpack.c.h.b16 %v337
      %v722 = vunpack.c.l.b16 %v338
      %v723 = vunpack.c.h.b16 %v338
      %v724 = vunpack.c.l.b16 %v339
      %v725 = vunpack.c.h.b16 %v339
      %v726 = vunpack.c.l.b16 %v340
      %v727 = vunpack.c.h.b16 %v340
      %v728 = vunpack.c.l.b16 %v341
      %v729 = vunpack.c.h.b16 %v341
      %v730 = vunpack.c.l.b16 %v342
      %v731 = vunpack.c.h.b16 %v342
      %v732 = vunpack.c.l.b16 %v343
      %v733 = vunpack.c.h.b16 %v343
      %v734 = vunpack.c.l.b16 %v344
      %v735 = vunpack.c.h.b16 %v344
      %v736 = vunpack.c.l.b16 %v345
      %v737 = vunpack.c.h.b16 %v345
      %v738 = vunpack.c.l.b16 %v346
      %v739 = vunpack.c.h.b16 %v346
      %v740 = vunpack.c.l.b16 %v347
      %v741 = vunpack.c.h.b16 %v347
      %v742 = vunpack.c.l.b16 %v348
      %v743 = vunpack.c.h.b16 %v348
      %v744 = vunpack.c.l.b16 %v349
      %v745 = vunpack.c.h.b16 %v349
      %v746 = vunpack.c.l.b16 %v350
      %v747 = vunpack.c.h.b16 %v350
      %v748 = vunpack.c.l.b16 %v351
      %v749 = vunpack.c.h.b16 %v351
      %v750 = vunpack.c.l.b16 %v352
      %v751 = vunpack.c.h.b16 %v352
      %v752 = vunpack.c.l.b16 %v353
      %v753 = vunpack.c.h.b16 %v353
      %v754 = vunpack.c.l.b16 %v354
      %v755 = vunpack.c.h.b16 %v354
      %v756 = vunpack.c.l.b16 %v355
      %v757 = vunpack.c.h.b16 %v355
      %v758 = vunpack.c.l.b16 %v356
      %v759 = vunpack.c.h.b16 %v356
      %v760 = vunpack.c.l.b16 %v357
      %v761 = vunpack.c.h.b16 %v357
      %v762 = vunpack.c.l.b16 %v358
      %v763 = vunpack.c.h.b16 %v358
      %v764 = vunpack.c.l.b16 %v359
      %v765 = vunpack.c.h.b16 %v359
      %v766 = vunpack.c.l.b16 %v360
      %v767 = vunpack.c.h.b16 %v360
      %v768 = vunpack.c.l.b16 %v361
      %v769 = vunpack.c.h.b16 %v361
      %v770 = vunpack.c.l.b16 %v362
      %v771 = vunpack.c.h.b16 %v362
      %v772 = vunpack.c.l.b16 %v363
      %v773 = vunpack.c.h.b16 %v363
      %v774 = vunpack.c.l.b16 %v364
      %v775 = vunpack.c.h.b16 %v364
      %v776 = vunpack.c.l.b16 %v365
      %v777 = vunpack.c.h.b16 %v365
      %v778 = vunpack.c.l.b16 %v366
      %v779 = vunpack.c.h.b16 %v366
      %v780 = vunpack.c.l.b16 %v367
      %v781 = vunpack.c.h.b16 %v367
      %v782 = vunpack.c.l.b16 %v368
      %v783 = vunpack.c.h.b16 %v368
      %v784 = vunpack.c.l.b16 %v369
      %v785 = vunpack.c.h.b16 %v369
      %v786 = vunpack.c.l.b16 %v370
      %v787 = vunpack.c.h.b16 %v370
      %v788 = vunpack.c.l.b16 %v371
      %v789 = vunpack.c.h.b16 %v371
      %v790 = vunpack.c.l.b16 %v372
      %v791 = vunpack.c.h.b16 %v372
      %v792 = vunpack.c.l.b16 %v373
      %v793 = vunpack.c.h.b16 %v373
      %v794 = vunpack.c.l.b16 %v374
      %v795 = vunpack.c.h.b16 %v374
      %v796 = vunpack.c.l.b16 %v375
      %v797 = vunpack.c.h.b16 %v375
      %v798 = vunpack.c.l.b16 %v376
      %v799 = vunpack.c.h.b16 %v376
      %v800 = vunpack.c.l.b16 %v377
      %v801 = vunpack.c.h.b16 %v377
      %v802 = vunpack.c.l.b16 %v378
      %v803 = vunpack.c.h.b16 %v378
      %v804 = vunpack.c.l.b16 %v379
      %v805 = vunpack.c.h.b16 %v379
      %v806 = vunpack.c.l.b16 %v380
      %v807 = vunpack.c.h.b16 %v380
      %v808 = vunpack.c.l.b16 %v381
      %v809 = vunpack.c.h.b16 %v381
      %v810 = vunpack.c.l.b16 %v382
      %v811 = vunpack.c.h.b16 %v382
      %v812 = vunpack.c.l.b16 %v383
      %v813 = vunpack.c.h.b16 %v383
      %v814 = vunpack.c.l.b16 %v384
      %v815 = vunpack.c.h.b16 %v384
      %v816 = vunpack.c.l.b16 %v385
      %v817 = vunpack.c.h.b16 %v385
      %v818 = vunpack.c.l.b16 %v386
      %v819 = vunpack.c.h.b16 %v386
      %v820 = vunpack.c.l.b16 %v387
      %v821 = vunpack.c.h.b16 %v387
      %v822 = vpack.c.b16 %v570, %v566
      %v823 = vpack.c.b16 %v571, %v567
      %v824 = vpack.c.b16 %v572, %v568
      %v825 = vpack.c.b16 %v573, %v569
      %v826 = vpack.c.b16 %v578, %v574
      %v827 = vpack.c.b16 %v579, %v575
      %v828 = vpack.c.b16 %v580, %v576
      %v829 = vpack.c.b16 %v581, %v577
      %v830 = vpack.c.b16 %v586, %v582
      %v831 = vpack.c.b16 %v587, %v583
      %v832 = vpack.c.b16 %v588, %v584
      %v833 = vpack.c.b16 %v589, %v585
      %v834 = vpack.c.b16 %v594, %v590
      %v835 = vpack.c.b16 %v595, %v591
      %v836 = vpack.c.b16 %v596, %v592
      %v837 = vpack.c.b16 %v597, %v593
      %v838 = vpack.c.b16 %v602, %v598
      %v839 = vpack.c.b16 %v603, %v599
      %v840 = vpack.c.b16 %v604, %v600
      %v841 = vpack.c.b16 %v605, %v601
      %v842 = vpack.c.b16 %v610, %v606
      %v843 = vpack.c.b16 %v611, %v607
      %v844 = vpack.c.b16 %v612, %v608
      %v845 = vpack.c.b16 %v613, %v609
      %v846 = vpack.c.b16 %v618, %v614
      %v847 = vpack.c.b16 %v619, %v615
      %v848 = vpack.c.b16 %v620, %v616
      %v849 = vpack.c.b16 %v621, %v617
      %v850 = vpack.c.b16 %v626, %v622
      %v851 = vpack.c.b16 %v627, %v623
      %v852 = vpack.c.b16 %v628, %v624
      %v853 = vpack.c.b16 %v629, %v625
      %v854 = vpack.c.b16 %v634, %v630
      %v855 = vpack.c.b16 %v635, %v631
      %v856 = vpack.c.b16 %v636, %v632
      %v857 = vpack.c.b16 %v637, %v633
      %v858 = vpack.c.b16 %v642, %v638
      %v859 = vpack.c.b16 %v643, %v639
      %v860 = vpack.c.b16 %v644, %v640
      %v861 = vpack.c.b16 %v645, %v641
      %v862 = vpack.c.b16 %v650, %v646
      %v863 = vpack.c.b16 %v651, %v647
      %v864 = vpack.c.b16 %v652, %v648
      %v865 = vpack.c.b16 %v653, %v649
      %v866 = vpack.c.b16 %v658, %v654
      %v867 = vpack.c.b16 %v659, %v655
      %v868 = vpack.c.b16 %v660, %v656
      %v869 = vpack.c.b16 %v661, %v657
      %v870 = vpack.c.b16 %v666, %v662
      %v871 = vpack.c.b16 %v667, %v663
      %v872 = vpack.c.b16 %v668, %v664
      %v873 = vpack.c.b16 %v669, %v665
      %v874 = vpack.c.b16 %v674, %v670
      %v875 = vpack.c.b16 %v675, %v671
      %v876 = vpack.c.b16 %v676, %v672
      %v877 = vpack.c.b16 %v677, %v673
      %v878 = vpack.c.b16 %v682, %v678
      %v879 = vpack.c.b16 %v683, %v679
      %v880 = vpack.c.b16 %v684, %v680
      %v881 = vpack.c.b16 %v685, %v681
      %v882 = vpack.c.b16 %v690, %v686
      %v883 = vpack.c.b16 %v691, %v687
      %v884 = vpack.c.b16 %v692, %v688
      %v885 = vpack.c.b16 %v693, %v689
      %v886 = vpack.c.b16 %v698, %v694
      %v887 = vpack.c.b16 %v699, %v695
      %v888 = vpack.c.b16 %v700, %v696
      %v889 = vpack.c.b16 %v701, %v697
      %v890 = vpack.c.b16 %v706, %v702
      %v891 = vpack.c.b16 %v707, %v703
      %v892 = vpack.c.b16 %v708, %v704
      %v893 = vpack.c.b16 %v709, %v705
      %v894 = vpack.c.b16 %v714, %v710
      %v895 = vpack.c.b16 %v715, %v711
      %v896 = vpack.c.b16 %v716, %v712
      %v897 = vpack.c.b16 %v717, %v713
      %v898 = vpack.c.b16 %v722, %v718
      %v899 = vpack.c.b16 %v723, %v719
      %v900 = vpack.c.b16 %v724, %v720
      %v901 = vpack.c.b16 %v725, %v721
      %v902 = vpack.c.b16 %v730, %v726
      %v903 = vpack.c.b16 %v731, %v727
      %v904 = vpack.c.b16 %v732, %v728
      %v905 = vpack.c.b16 %v733, %v729
      %v906 = vpack.c.b16 %v738, %v734
      %v907 = vpack.c.b16 %v739, %v735
      %v908 = vpack.c.b16 %v740, %v736
      %v909 = vpack.c.b16 %v741, %v737
      %v910 = vpack.c.b16 %v746, %v742
      %v911 = vpack.c.b16 %v747, %v743
      %v912 = vpack.c.b16 %v748, %v744
      %v913 = vpack.c.b16 %v749, %v745
      %v914 = vpack.c.b16 %v754, %v750
      %v915 = vpack.c.b16 %v755, %v751
      %v916 = vpack.c.b16 %v756, %v752
      %v917 = vpack.c.b16 %v757, %v753
      %v918 = vpack.c.b16 %v762, %v758
      %v919 = vpack.c.b16 %v763, %v759
      %v920 = vpack.c.b16 %v764, %v760
      %v921 = vpack.c.b16 %v765, %v761
      %v922 = vpack.c.b16 %v770, %v766
      %v923 = vpack.c.b16 %v771, %v767
      %v924 = vpack.c.b16 %v772, %v768
      %v925 = vpack.c.b16 %v773, %v769
      %v926 = vpack.c.b16 %v778, %v774
      %v927 = vpack.c.b16 %v779, %v775
      %v928 = vpack.c.b16 %v780, %v776
      %v929 = vpack.c.b16 %v781, %v777
      %v930 = vpack.c.b16 %v786, %v782
      %v931 = vpack.c.b16 %v787, %v783
      %v932 = vpack.c.b16 %v788, %v784
      %v933 = vpack.c.b16 %v789, %v785
      %v934 = vpack.c.b16 %v794, %v790
      %v935 = vpack.c.b16 %v795, %v791
      %v936 = vpack.c.b16 %v796, %v792
      %v937 = vpack.c.b16 %v797, %v793
      %v938 = vpack.c.b16 %v802, %v798
      %v939 = vpack.c.b16 %v803, %v799
      %v940 = vpack.c.b16 %v804, %v800
      %v941 = vpack.c.b16 %v805, %v801
      %v942 = vpack.c.b16 %v810, %v806
      %v943 = vpack.c.b16 %v811, %v807
      %v944 = vpack.c.b16 %v812, %v808
      %v945 = vpack.c.b16 %v813, %v809
      %v946 = vpack.c.b16 %v818, %v814
      %v947 = vpack.c.b16 %v819, %v815
      %v948 = vpack.c.b16 %v820, %v816
      %v949 = vpack.c.b16 %v821, %v817
      %1078 = vmatpush.bf16.msra.mxu0 %v850
      %1079 = vmatpush.bf16.msra.mxu0 %v846
      %1080 = vmatpush.bf16.msra.mxu0 %v842
      %1081 = vmatpush.bf16.msra.mxu0 %v838
      %1082 = vmatpush.bf16.msra.mxu0 %v834
      %1083 = vmatpush.bf16.msra.mxu0 %v830
      %1084 = vmatpush.bf16.msra.mxu0 %v826
      %1085 = vmatpush.bf16.msra.mxu0 %v822
      %1086 = vmatmul.bf16.gmra.mxu0 %v422
      %v1087 = vpop.f32.mrf.mxu0
      %v1088 = vadd.f32 %v390, %v1087
      %v1089 = vpop.f32.mrf.mxu0
      %v1090 = vadd.f32 %v390, %v1089
      %1091 = vmatmul.bf16.gmra.mxu0 %v426
      %v1092 = vpop.f32.mrf.mxu0
      %v1093 = vadd.f32 %v390, %v1092
      %v1094 = vpop.f32.mrf.mxu0
      %v1095 = vadd.f32 %v390, %v1094
      %1096 = vdwg.mxu0
      %1097 = vmatpush.bf16.msra.mxu0 %v882
      %1098 = vmatpush.bf16.msra.mxu0 %v878
      %1099 = vmatpush.bf16.msra.mxu0 %v874
      %1100 = vmatpush.bf16.msra.mxu0 %v870
      %1101 = vmatpush.bf16.msra.mxu0 %v866
      %1102 = vmatpush.bf16.msra.mxu0 %v862
      %1103 = vmatpush.bf16.msra.mxu0 %v858
      %1104 = vmatpush.bf16.msra.mxu0 %v854
      %1105 = vmatmul.bf16.gmra.mxu0 %v423
      %v1106 = vpop.f32.mrf.mxu0
      %v1107 = vadd.f32 %v1088, %v1106
      %v1108 = vpop.f32.mrf.mxu0
      %v1109 = vadd.f32 %v1090, %v1108
      %1110 = vmatmul.bf16.gmra.mxu0 %v427
      %v1111 = vpop.f32.mrf.mxu0
      %v1112 = vadd.f32 %v1093, %v1111
      %v1113 = vpop.f32.mrf.mxu0
      %v1114 = vadd.f32 %v1095, %v1113
      %1115 = vdwg.mxu0
      %1116 = vmatpush.bf16.msra.mxu0 %v914
      %1117 = vmatpush.bf16.msra.mxu0 %v910
      %1118 = vmatpush.bf16.msra.mxu0 %v906
      %1119 = vmatpush.bf16.msra.mxu0 %v902
      %1120 = vmatpush.bf16.msra.mxu0 %v898
      %1121 = vmatpush.bf16.msra.mxu0 %v894
      %1122 = vmatpush.bf16.msra.mxu0 %v890
      %1123 = vmatpush.bf16.msra.mxu0 %v886
      %1124 = vmatmul.bf16.gmra.mxu0 %v424
      %v1125 = vpop.f32.mrf.mxu0
      %v1126 = vadd.f32 %v1107, %v1125
      %v1127 = vpop.f32.mrf.mxu0
      %v1128 = vadd.f32 %v1109, %v1127
      %1129 = vmatmul.bf16.gmra.mxu0 %v428
      %v1130 = vpop.f32.mrf.mxu0
      %v1131 = vadd.f32 %v1112, %v1130
      %v1132 = vpop.f32.mrf.mxu0
      %v1133 = vadd.f32 %v1114, %v1132
      %1134 = vdwg.mxu0
      %1135 = vmatpush.bf16.msra.mxu0 %v946
      %1136 = vmatpush.bf16.msra.mxu0 %v942
      %1137 = vmatpush.bf16.msra.mxu0 %v938
      %1138 = vmatpush.bf16.msra.mxu0 %v934
      %1139 = vmatpush.bf16.msra.mxu0 %v930
      %1140 = vmatpush.bf16.msra.mxu0 %v926
      %1141 = vmatpush.bf16.msra.mxu0 %v922
      %1142 = vmatpush.bf16.msra.mxu0 %v918
      %1143 = vmatmul.bf16.gmra.mxu0 %v425
      %v1144 = vpop.f32.mrf.mxu0
      %v1145 = vadd.f32 %v1126, %v1144
      %v1146 = vpop.f32.mrf.mxu0
      %v1147 = vadd.f32 %v1128, %v1146
      %1148 = vmatmul.bf16.gmra.mxu0 %v429
      %v1149 = vpop.f32.mrf.mxu0
      %v1150 = vadd.f32 %v1131, %v1149
      %v1151 = vpop.f32.mrf.mxu0
      %v1152 = vadd.f32 %v1133, %v1151
      %1153 = vdwg.mxu0
      %1154 = vmatpush.bf16.msra.mxu0 %v851
      %1155 = vmatpush.bf16.msra.mxu0 %v847
      %1156 = vmatpush.bf16.msra.mxu0 %v843
      %1157 = vmatpush.bf16.msra.mxu0 %v839
      %1158 = vmatpush.bf16.msra.mxu0 %v835
      %1159 = vmatpush.bf16.msra.mxu0 %v831
      %1160 = vmatpush.bf16.msra.mxu0 %v827
      %1161 = vmatpush.bf16.msra.mxu0 %v823
      %1162 = vmatmul.bf16.gmra.mxu0 %v422
      %v1163 = vpop.f32.mrf.mxu0
      %v1164 = vadd.f32 %v391, %v1163
      %v1165 = vpop.f32.mrf.mxu0
      %v1166 = vadd.f32 %v391, %v1165
      %1167 = vmatmul.bf16.gmra.mxu0 %v426
      %v1168 = vpop.f32.mrf.mxu0
      %v1169 = vadd.f32 %v391, %v1168
      %v1170 = vpop.f32.mrf.mxu0
      %v1171 = vadd.f32 %v391, %v1170
      %1172 = vdwg.mxu0
      %1173 = vmatpush.bf16.msra.mxu0 %v883
      %1174 = vmatpush.bf16.msra.mxu0 %v879
      %1175 = vmatpush.bf16.msra.mxu0 %v875
      %1176 = vmatpush.bf16.msra.mxu0 %v871
      %1177 = vmatpush.bf16.msra.mxu0 %v867
      %1178 = vmatpush.bf16.msra.mxu0 %v863
      %1179 = vmatpush.bf16.msra.mxu0 %v859
      %1180 = vmatpush.bf16.msra.mxu0 %v855
      %1181 = vmatmul.bf16.gmra.mxu0 %v423
      %v1182 = vpop.f32.mrf.mxu0
      %v1183 = vadd.f32 %v1164, %v1182
      %v1184 = vpop.f32.mrf.mxu0
      %v1185 = vadd.f32 %v1166, %v1184
      %1186 = vmatmul.bf16.gmra.mxu0 %v427
      %v1187 = vpop.f32.mrf.mxu0
      %v1188 = vadd.f32 %v1169, %v1187
      %v1189 = vpop.f32.mrf.mxu0
      %v1190 = vadd.f32 %v1171, %v1189
      %1191 = vdwg.mxu0
      %1192 = vmatpush.bf16.msra.mxu0 %v915
      %1193 = vmatpush.bf16.msra.mxu0 %v911
      %1194 = vmatpush.bf16.msra.mxu0 %v907
      %1195 = vmatpush.bf16.msra.mxu0 %v903
      %1196 = vmatpush.bf16.msra.mxu0 %v899
      %1197 = vmatpush.bf16.msra.mxu0 %v895
      %1198 = vmatpush.bf16.msra.mxu0 %v891
      %1199 = vmatpush.bf16.msra.mxu0 %v887
      %1200 = vmatmul.bf16.gmra.mxu0 %v424
      %v1201 = vpop.f32.mrf.mxu0
      %v1202 = vadd.f32 %v1183, %v1201
      %v1203 = vpop.f32.mrf.mxu0
      %v1204 = vadd.f32 %v1185, %v1203
      %1205 = vmatmul.bf16.gmra.mxu0 %v428
      %v1206 = vpop.f32.mrf.mxu0
      %v1207 = vadd.f32 %v1188, %v1206
      %v1208 = vpop.f32.mrf.mxu0
      %v1209 = vadd.f32 %v1190, %v1208
      %1210 = vdwg.mxu0
      %1211 = vmatpush.bf16.msra.mxu0 %v947
      %1212 = vmatpush.bf16.msra.mxu0 %v943
      %1213 = vmatpush.bf16.msra.mxu0 %v939
      %1214 = vmatpush.bf16.msra.mxu0 %v935
      %1215 = vmatpush.bf16.msra.mxu0 %v931
      %1216 = vmatpush.bf16.msra.mxu0 %v927
      %1217 = vmatpush.bf16.msra.mxu0 %v923
      %1218 = vmatpush.bf16.msra.mxu0 %v919
      %1219 = vmatmul.bf16.gmra.mxu0 %v425
      %v1220 = vpop.f32.mrf.mxu0
      %v1221 = vadd.f32 %v1202, %v1220
      %v1222 = vpop.f32.mrf.mxu0
      %v1223 = vadd.f32 %v1204, %v1222
      %1224 = vmatmul.bf16.gmra.mxu0 %v429
      %v1225 = vpop.f32.mrf.mxu0
      %v1226 = vadd.f32 %v1207, %v1225
      %v1227 = vpop.f32.mrf.mxu0
      %v1228 = vadd.f32 %v1209, %v1227
      %1229 = vdwg.mxu0
      %1230 = vmatpush.bf16.msra.mxu0 %v852
      %1231 = vmatpush.bf16.msra.mxu0 %v848
      %1232 = vmatpush.bf16.msra.mxu0 %v844
      %1233 = vmatpush.bf16.msra.mxu0 %v840
      %1234 = vmatpush.bf16.msra.mxu0 %v836
      %1235 = vmatpush.bf16.msra.mxu0 %v832
      %1236 = vmatpush.bf16.msra.mxu0 %v828
      %1237 = vmatpush.bf16.msra.mxu0 %v824
      %1238 = vmatmul.bf16.gmra.mxu0 %v422
      %v1239 = vpop.f32.mrf.mxu0
      %v1240 = vadd.f32 %v392, %v1239
      %v1241 = vpop.f32.mrf.mxu0
      %v1242 = vadd.f32 %v392, %v1241
      %1243 = vmatmul.bf16.gmra.mxu0 %v426
      %v1244 = vpop.f32.mrf.mxu0
      %v1245 = vadd.f32 %v392, %v1244
      %v1246 = vpop.f32.mrf.mxu0
      %v1247 = vadd.f32 %v392, %v1246
      %1248 = vdwg.mxu0
      %1249 = vmatpush.bf16.msra.mxu0 %v884
      %1250 = vmatpush.bf16.msra.mxu0 %v880
      %1251 = vmatpush.bf16.msra.mxu0 %v876
      %1252 = vmatpush.bf16.msra.mxu0 %v872
      %1253 = vmatpush.bf16.msra.mxu0 %v868
      %1254 = vmatpush.bf16.msra.mxu0 %v864
      %1255 = vmatpush.bf16.msra.mxu0 %v860
      %1256 = vmatpush.bf16.msra.mxu0 %v856
      %1257 = vmatmul.bf16.gmra.mxu0 %v423
      %v1258 = vpop.f32.mrf.mxu0
      %v1259 = vadd.f32 %v1240, %v1258
      %v1260 = vpop.f32.mrf.mxu0
      %v1261 = vadd.f32 %v1242, %v1260
      %1262 = vmatmul.bf16.gmra.mxu0 %v427
      %v1263 = vpop.f32.mrf.mxu0
      %v1264 = vadd.f32 %v1245, %v1263
      %v1265 = vpop.f32.mrf.mxu0
      %v1266 = vadd.f32 %v1247, %v1265
      %1267 = vdwg.mxu0
      %1268 = vmatpush.bf16.msra.mxu0 %v916
      %1269 = vmatpush.bf16.msra.mxu0 %v912
      %1270 = vmatpush.bf16.msra.mxu0 %v908
      %1271 = vmatpush.bf16.msra.mxu0 %v904
      %1272 = vmatpush.bf16.msra.mxu0 %v900
      %1273 = vmatpush.bf16.msra.mxu0 %v896
      %1274 = vmatpush.bf16.msra.mxu0 %v892
      %1275 = vmatpush.bf16.msra.mxu0 %v888
      %1276 = vmatmul.bf16.gmra.mxu0 %v424
      %v1277 = vpop.f32.mrf.mxu0
      %v1278 = vadd.f32 %v1259, %v1277
      %v1279 = vpop.f32.mrf.mxu0
      %v1280 = vadd.f32 %v1261, %v1279
      %1281 = vmatmul.bf16.gmra.mxu0 %v428
      %v1282 = vpop.f32.mrf.mxu0
      %v1283 = vadd.f32 %v1264, %v1282
      %v1284 = vpop.f32.mrf.mxu0
      %v1285 = vadd.f32 %v1266, %v1284
      %1286 = vdwg.mxu0
      %1287 = vmatpush.bf16.msra.mxu0 %v948
      %1288 = vmatpush.bf16.msra.mxu0 %v944
      %1289 = vmatpush.bf16.msra.mxu0 %v940
      %1290 = vmatpush.bf16.msra.mxu0 %v936
      %1291 = vmatpush.bf16.msra.mxu0 %v932
      %1292 = vmatpush.bf16.msra.mxu0 %v928
      %1293 = vmatpush.bf16.msra.mxu0 %v924
      %1294 = vmatpush.bf16.msra.mxu0 %v920
      %1295 = vmatmul.bf16.gmra.mxu0 %v425
      %v1296 = vpop.f32.mrf.mxu0
      %v1297 = vadd.f32 %v1278, %v1296
      %v1298 = vpop.f32.mrf.mxu0
      %v1299 = vadd.f32 %v1280, %v1298
      %1300 = vmatmul.bf16.gmra.mxu0 %v429
      %v1301 = vpop.f32.mrf.mxu0
      %v1302 = vadd.f32 %v1283, %v1301
      %v1303 = vpop.f32.mrf.mxu0
      %v1304 = vadd.f32 %v1285, %v1303
      %1305 = vdwg.mxu0
      %1306 = vmatpush.bf16.msra.mxu0 %v853
      %1307 = vmatpush.bf16.msra.mxu0 %v849
      %1308 = vmatpush.bf16.msra.mxu0 %v845
      %1309 = vmatpush.bf16.msra.mxu0 %v841
      %1310 = vmatpush.bf16.msra.mxu0 %v837
      %1311 = vmatpush.bf16.msra.mxu0 %v833
      %1312 = vmatpush.bf16.msra.mxu0 %v829
      %1313 = vmatpush.bf16.msra.mxu0 %v825
      %1314 = vmatmul.bf16.gmra.mxu0 %v422
      %v1315 = vpop.f32.mrf.mxu0
      %v1316 = vadd.f32 %v393, %v1315
      %v1317 = vpop.f32.mrf.mxu0
      %v1318 = vadd.f32 %v393, %v1317
      %1319 = vmatmul.bf16.gmra.mxu0 %v426
      %v1320 = vpop.f32.mrf.mxu0
      %v1321 = vadd.f32 %v393, %v1320
      %v1322 = vpop.f32.mrf.mxu0
      %v1323 = vadd.f32 %v393, %v1322
      %1324 = vdwg.mxu0
      %1325 = vmatpush.bf16.msra.mxu0 %v885
      %1326 = vmatpush.bf16.msra.mxu0 %v881
      %1327 = vmatpush.bf16.msra.mxu0 %v877
      %1328 = vmatpush.bf16.msra.mxu0 %v873
      %1329 = vmatpush.bf16.msra.mxu0 %v869
      %1330 = vmatpush.bf16.msra.mxu0 %v865
      %1331 = vmatpush.bf16.msra.mxu0 %v861
      %1332 = vmatpush.bf16.msra.mxu0 %v857
      %1333 = vmatmul.bf16.gmra.mxu0 %v423
      %v1334 = vpop.f32.mrf.mxu0
      %v1335 = vadd.f32 %v1316, %v1334
      %v1336 = vpop.f32.mrf.mxu0
      %v1337 = vadd.f32 %v1318, %v1336
      %1338 = vmatmul.bf16.gmra.mxu0 %v427
      %v1339 = vpop.f32.mrf.mxu0
      %v1340 = vadd.f32 %v1321, %v1339
      %v1341 = vpop.f32.mrf.mxu0
      %v1342 = vadd.f32 %v1323, %v1341
      %1343 = vdwg.mxu0
      %1344 = vmatpush.bf16.msra.mxu0 %v917
      %1345 = vmatpush.bf16.msra.mxu0 %v913
      %1346 = vmatpush.bf16.msra.mxu0 %v909
      %1347 = vmatpush.bf16.msra.mxu0 %v905
      %1348 = vmatpush.bf16.msra.mxu0 %v901
      %1349 = vmatpush.bf16.msra.mxu0 %v897
      %1350 = vmatpush.bf16.msra.mxu0 %v893
      %1351 = vmatpush.bf16.msra.mxu0 %v889
      %1352 = vmatmul.bf16.gmra.mxu0 %v424
      %v1353 = vpop.f32.mrf.mxu0
      %v1354 = vadd.f32 %v1335, %v1353
      %v1355 = vpop.f32.mrf.mxu0
      %v1356 = vadd.f32 %v1337, %v1355
      %1357 = vmatmul.bf16.gmra.mxu0 %v428
      %v1358 = vpop.f32.mrf.mxu0
      %v1359 = vadd.f32 %v1340, %v1358
      %v1360 = vpop.f32.mrf.mxu0
      %v1361 = vadd.f32 %v1342, %v1360
      %1362 = vdwg.mxu0
      %1363 = vmatpush.bf16.msra.mxu0 %v949
      %1364 = vmatpush.bf16.msra.mxu0 %v945
      %1365 = vmatpush.bf16.msra.mxu0 %v941
      %1366 = vmatpush.bf16.msra.mxu0 %v937
      %1367 = vmatpush.bf16.msra.mxu0 %v933
      %1368 = vmatpush.bf16.msra.mxu0 %v929
      %1369 = vmatpush.bf16.msra.mxu0 %v925
      %1370 = vmatpush.bf16.msra.mxu0 %v921
      %1371 = vmatmul.bf16.gmra.mxu0 %v425
      %v1372 = vpop.f32.mrf.mxu0
      %v1373 = vadd.f32 %v1354, %v1372
      %v1374 = vpop.f32.mrf.mxu0
      %v1375 = vadd.f32 %v1356, %v1374
      %1376 = vmatmul.bf16.gmra.mxu0 %v429
      %v1377 = vpop.f32.mrf.mxu0
      %v1378 = vadd.f32 %v1359, %v1377
      %v1379 = vpop.f32.mrf.mxu0
      %v1380 = vadd.f32 %v1361, %v1379
      %1381 = vdwg.mxu0
      %vm1382 = vcmp.gt.f32.partialorder %v1145, 0.0
      %vm1383 = vcmp.gt.f32.partialorder %v1221, 0.0
      %vm1384 = vcmp.gt.f32.partialorder %v1297, 0.0
      %vm1385 = vcmp.gt.f32.partialorder %v1373, 0.0
      %vm1386 = vcmp.gt.f32.partialorder %v1147, 0.0
      %vm1387 = vcmp.gt.f32.partialorder %v1223, 0.0
      %vm1388 = vcmp.gt.f32.partialorder %v1299, 0.0
      %vm1389 = vcmp.gt.f32.partialorder %v1375, 0.0
      %vm1390 = vcmp.gt.f32.partialorder %v1150, 0.0
      %vm1391 = vcmp.gt.f32.partialorder %v1226, 0.0
      %vm1392 = vcmp.gt.f32.partialorder %v1302, 0.0
      %vm1393 = vcmp.gt.f32.partialorder %v1378, 0.0
      %vm1394 = vcmp.gt.f32.partialorder %v1152, 0.0
      %vm1395 = vcmp.gt.f32.partialorder %v1228, 0.0
      %vm1396 = vcmp.gt.f32.partialorder %v1304, 0.0
      %vm1397 = vcmp.gt.f32.partialorder %v1380, 0.0
      %v1398 = vmul.f32 %v1145, 0.1
      %v1399 = vmul.f32 %v1221, 0.1
      %v1400 = vmul.f32 %v1297, 0.1
      %v1401 = vmul.f32 %v1373, 0.1
      %v1402 = vmul.f32 %v1147, 0.1
      %v1403 = vmul.f32 %v1223, 0.1
      %v1404 = vmul.f32 %v1299, 0.1
      %v1405 = vmul.f32 %v1375, 0.1
      %v1406 = vmul.f32 %v1150, 0.1
      %v1407 = vmul.f32 %v1226, 0.1
      %v1408 = vmul.f32 %v1302, 0.1
      %v1409 = vmul.f32 %v1378, 0.1
      %v1410 = vmul.f32 %v1152, 0.1
      %v1411 = vmul.f32 %v1228, 0.1
      %v1412 = vmul.f32 %v1304, 0.1
      %v1413 = vmul.f32 %v1380, 0.1
      %v1414 = vsel %vm1382, %v1145, %v1398
      %v1415 = vsel %vm1383, %v1221, %v1399
      %v1416 = vsel %vm1384, %v1297, %v1400
      %v1417 = vsel %vm1385, %v1373, %v1401
      %v1418 = vsel %vm1386, %v1147, %v1402
      %v1419 = vsel %vm1387, %v1223, %v1403
      %v1420 = vsel %vm1388, %v1299, %v1404
      %v1421 = vsel %vm1389, %v1375, %v1405
      %v1422 = vsel %vm1390, %v1150, %v1406
      %v1423 = vsel %vm1391, %v1226, %v1407
      %v1424 = vsel %vm1392, %v1302, %v1408
      %v1425 = vsel %vm1393, %v1378, %v1409
      %v1426 = vsel %vm1394, %v1152, %v1410
      %v1427 = vsel %vm1395, %v1228, %v1411
      %v1428 = vsel %vm1396, %v1304, %v1412
      %v1429 = vsel %vm1397, %v1380, %v1413
      %v1430 = vpack.c.bf16 %v1415, %v1414
      %v1431 = vpack.c.bf16 %v1417, %v1416
      %v1432 = vpack.c.bf16 %v1419, %v1418
      %v1433 = vpack.c.bf16 %v1421, %v1420
      %v1434 = vpack.c.bf16 %v1423, %v1422
      %v1435 = vpack.c.bf16 %v1425, %v1424
      %v1436 = vpack.c.bf16 %v1427, %v1426
      %v1437 = vpack.c.bf16 %v1429, %v1428
      %1438 = vst [vmem:[%s250] sm:$0xff] %v1430
      %1439 = vst [vmem:[%s250 + $0x8] sm:$0xff] %v1431
      %1440 = vst [vmem:[%s250 + $0x10] sm:$0xff] %v1432
      %1441 = vst [vmem:[%s250 + $0x18] sm:$0xff] %v1433
      %1442 = vst [vmem:[%s250 + $0x20] sm:$0xff] %v1434
      %1443 = vst [vmem:[%s250 + $0x28] sm:$0xff] %v1435
      %1444 = vst [vmem:[%s250 + $0x30] sm:$0xff] %v1436
      %1445 = vst [vmem:[%s250 + $0x38] sm:$0xff] %v1437
      %s1446 = smul.u32 4, %s19
      %p1447 = scmp.lt.s32.totalorder %s18, 2
      %s1448 = scalar_select %p1447, %s18, 2
      %p1449 = scmp.lt.s32.totalorder %s1446, 3
      %s1450 = scalar_select %p1449, %s1446, 3
      %s1451 = smul.addr %s1450, 4
      %s1452 = smul.addr %s1448, 16
      %s1453 = sadd.s32 %s1451, %s1452
      %s1454 = smul.addr %s1453, 4
      %s1455 = scalar_lea.vmem %s3, %s1454
      // Predicated region
      $region33: #{model_forward.16} parent=31 // pred_check
        %p1456 = pneg %p126
      $region34: #{model_forward.16} parent=31 // pred_check_branch
        %1458 = sbr.rel (%p1456) target = $region36
      $region35: #{model_forward.16} parent=31 // pred_region
        %s1459 = smul.u32 4, %s19
      $region36: #{model_forward.16} parent=31 // pred_fallthru
        _
    $region32: #{model_forward.16} parent=5 // pred_fallthru
      _
    %p1460 = scmp.le.s32.totalorder 2, %s9
    // Predicated region
    $region37: #{model_forward.16} parent=5 // pred_check
      %p1461 = pneg %p1460
    $region38: #{model_forward.16} parent=5 // pred_check_branch
      %1463 = sbr.rel (%p1461) target = $region40
    $region39: #{model_forward.16} parent=5 // pred_region
      %s1464 = ssub.s32 %s9, 2
      // Predicated region
      $region41: #{model_forward.16} parent=39 // pred_check
        %p1465 = pneg %p132
      $region42: #{model_forward.16} parent=39 // pred_check_branch
        %1467 = sbr.rel (%p1465) target = $region44
      $region43: #{model_forward.16} parent=39 // pred_region
        %s1468 = smul.u32 4, %s21
        %p1469 = scmp.lt.s32.totalorder %s20, 2
        %s1470 = scalar_select %p1469, %s20, 2
        %p1471 = scmp.lt.s32.totalorder %s1468, 3
        %s1472 = scalar_select %p1471, %s1468, 3
        %s1473 = smul.addr %s1472, 4
        %s1474 = smul.addr %s1470, 16
        %s1475 = sadd.s32 %s1473, %s1474
        %s1476 = smul.addr %s1475, 4
        %s1477 = scalar_lea.vmem %s3, %s1476
      $region44: #{model_forward.16} parent=39 // pred_fallthru
        _
    $region40: #{model_forward.16} parent=5 // pred_fallthru
      _
  $region6: #{model_forward.16} parent=0 // loop_footer
    %s13 = sadd.s32 1, %s9
  $region7: #{model_forward.16} parent=0 // loop_footer_branch
    %8 = sbr.rel target = $region3
  $region8: #{model_forward.16} parent=0 // loop_exit
    _

// kernel: tile.273
$region0: #{tile.273}
  #allocation0 [shape = 's32[1]{0}', space=sflag, size = 0x4, scoped, tag = 'scoped memory for tile.273']
  %s0 = inlined_call_operand.vmem [shape: f32[64], index: 0, kind: input, shape index: {}]
  %s1 = inlined_call_operand.vmem [shape: f32[16,64], index: 1, kind: output, shape index: {}]
  // Predicated region
  $region2: #{tile.273} parent=0 // pred_check
    _
  $region3: #{tile.273} parent=0 // pred_check_branch
    %3 = sbr.rel (0) target = $region5
  $region4: #{tile.273} parent=0 // pred_region
    _
  $region5: #{tile.273} parent=0 // pred_fallthru
    _
  %v4 = vld [vmem:[%s0] ss:$0 sm:$0xff]
  %5 = vst [vmem:[%s1] sm:$0xff] %v4
  %s6 = scalar_lea.vmem %s1, 8
  %7 = vst [vmem:[%s6] sm:$0xff] %v4

// kernel: tile.282
$region0: #{tile.282}
  %s0 = inlined_call_operand.vmem [shape: f32[16,64], index: 0, kind: input, shape index: {}]
  %s1 = inlined_call_operand.vmem [shape: f32[1,1024], index: 1, kind: output, shape index: {}]
  $region1: #{tile.282} parent=0
    #allocation0 [shape = 'u8[32768]{0}', space=vmem, size = 0x8000, scoped, tag = 'scoped mem for output reshape']
    %v2 = vld [vmem:[%s0] ss:$2 sm:$0xff]
    %vm3 = vcmask 523264
    %4 = vst.msk [vmem:[#allocation0] ss:$8 sm:$0xf] %vm3, %v2
    %5 = vst.msk [vmem:[#allocation0] ss:$8 sm:$0xf0] %vm3, %v2
    %s6 = scalar_lea.vmem %s0, 1
    %v7 = vld [vmem:[%s6] ss:$2 sm:$0xff]
    %8 = vrot.lane.b32.xlu0 %v7, 64
    %v9 = vpop.permute.xlu0 %8
    %vm10 = vcmask 1048064
    %11 = vst.msk [vmem:[#allocation0] ss:$8 sm:$0xf] %vm10, %v9
    %12 = vst.msk [vmem:[#allocation0] ss:$8 sm:$0xf0] %vm10, %v9
    %s14 = ssub.s32 2, 1
    %v15 = vld [vmem:[#allocation0] sm:%s14]
    %s17 = ssub.s32 2, 1
    %18 = vst [vmem:[%s1] sm:%s17] %v15
    %s19 = scalar_lea.vmem [#allocation0], 8
    %v20 = vld [vmem:[%s19] sm:%s14]
    %s22 = ssub.s32 2, 1
    %s23 = scalar_lea.vmem %s1, 1
    %24 = vst [vmem:[%s23] sm:%s22] %v20
    %s25 = scalar_lea.vmem [#allocation0], 16
    %v26 = vld [vmem:[%s25] sm:%s14]
    %s28 = ssub.s32 2, 1
    %s29 = scalar_lea.vmem %s1, 2
    %30 = vst [vmem:[%s29] sm:%s28] %v26
    %s31 = scalar_lea.vmem [#allocation0], 24
    %v32 = vld [vmem:[%s31] sm:%s14]
    %s34 = ssub.s32 2, 1
    %s35 = scalar_lea.vmem %s1, 3
    %36 = vst [vmem:[%s35] sm:%s34] %v32
    %s37 = scalar_lea.vmem [#allocation0], 32
    %v38 = vld [vmem:[%s37] sm:%s14]
    %s40 = ssub.s32 2, 1
    %s41 = scalar_lea.vmem %s1, 4
    %42 = vst [vmem:[%s41] sm:%s40] %v38
    %s43 = scalar_lea.vmem [#allocation0], 40
    %v44 = vld [vmem:[%s43] sm:%s14]
    %s46 = ssub.s32 2, 1
    %s47 = scalar_lea.vmem %s1, 5
    %48 = vst [vmem:[%s47] sm:%s46] %v44
    %s49 = scalar_lea.vmem [#allocation0], 48
    %v50 = vld [vmem:[%s49] sm:%s14]
    %s52 = ssub.s32 2, 1
    %s53 = scalar_lea.vmem %s1, 6
    %54 = vst [vmem:[%s53] sm:%s52] %v50
    %s55 = scalar_lea.vmem [#allocation0], 56
    %v56 = vld [vmem:[%s55] sm:%s14]
    %s58 = ssub.s32 2, 1
    %s59 = scalar_lea.vmem %s1, 7
    %60 = vst [vmem:[%s59] sm:%s58] %v56

// kernel: model_forward.18
$region0: #{model_forward.18}
  #allocation0 [shape = 'u32[]', space=smem, size = 0x4, offset = 0x4, fixed_abs, tag = 'smem constant byte address 0x4 - core index']
  #allocation1 [shape = 'u32[72,128]{1,0:T(1,128)}', space=vmem, size = 0x9000, scoped, tag = 'internal scratch']
  %s0 = inlined_call_operand.vmem [shape: bf16[3,16,512], index: 0, kind: input, shape index: {}]
  %s1 = inlined_call_operand.vmem [shape: bf16[3,512,1024], index: 1, kind: input, shape index: {}]
  %s2 = inlined_call_operand.vmem [shape: f32[3,1,1024], index: 2, kind: input, shape index: {}]
  %s3 = inlined_call_operand.vmem [shape: bf16[3,16,1024], index: 3, kind: output, shape index: {}]
  %s4 = sld [smem:[#allocation0]]
  $region45: #{model_forward.18} parent=0
    _
  %s6 = ssub.s32 1, %s4
  %s7 = scalar_select 0, %s6, %s4
  loop: start=0, step=1, limit=5
  $region2: #{model_forward.18} parent=0 // loop_pre_header
    _
  $region3: #{model_forward.18} parent=0 // loop_header
    %s9 = sphi 0, %s13
    %p10 = scmp.ge.s32.totalorder %s9, 5
    %s16 = sphi 0, %s28
    %s17 = sphi 0, %s24
    %s18 = sphi 0, %s16
    %s19 = sphi 0, %s17
    %s20 = sphi 0, %s18
    %s21 = sphi 0, %s19
    %s33 = sphi 0, %s35
    %s36 = sphi 0, %s33
    %s37 = sphi 0, %s36
    %s53 = sphi 0, %s37
    %s59 = sphi 0, %s61
    %s62 = sphi 0, %s59
    %s63 = sphi 0, %s62
    %s79 = sphi 0, %s63
    %s85 = sphi 0, %s87
    %s88 = sphi 0, %s85
    %s89 = sphi 0, %s88
    %s105 = sphi 0, %s89
    %s113 = sphi 0, %s115
    %s116 = sphi 0, %s113
    %s117 = sphi 0, %s116
    %s133 = sphi 0, %s117
  $region4: #{model_forward.18} parent=0 // loop_header_branch
    %12 = sbr.rel (%p10) target = $region8
  $region5: #{model_forward.18} parent=0 // loop_body
    %s14 = ssub.s32 %s9, 1
    %s15 = ssub.s32 %s9, 2
    %s22 = sadd.s32 1, %s17
    %p23 = scmp.ge.s32.totalorder %s22, 1
    %s24 = scalar_select %p23, 0, %s22
    %s25 = sadd.s32 1, %s16
    %s26 = scalar_select %p23, %s25, %s16
    %p27 = scmp.ge.s32.totalorder %s26, 3
    %s28 = scalar_select %p27, 0, %s26
    %s29 = ssub.s32 %s16, %s28
    %s30 = ssub.s32 %s17, %s24
    %s31 = sor.u32 %s29, %s30
    %p32 = scmp.eq.s32.totalorder %s31, 0
    %s34 = sadd.s32 %s33, 1
    %s35 = scalar_select %p32, %s33, %s34
    %p38 = pneg %p32
    %p39 = scmp.eq.s32.totalorder %s9, 2
    %p40 = por %p38, %p39
    %p41 = scmp.ne.s32.totalorder %s33, %s36
    %p42 = scmp.eq.s32.totalorder %s9, 0
    %p43 = por %p41, %p42
    %p44 = scmp.ne.s32.totalorder %s33, %s36
    %p45 = scmp.eq.s32.totalorder %s14, 2
    %p46 = por %p44, %p45
    %p47 = scmp.ne.s32.totalorder %s36, %s37
    %p48 = scmp.eq.s32.totalorder %s14, 0
    %p49 = por %p47, %p48
    %p50 = scmp.ne.s32.totalorder %s36, %s37
    %p51 = scmp.eq.s32.totalorder %s15, 2
    %p52 = por %p50, %p51
    %p54 = scmp.ne.s32.totalorder %s37, %s53
    %p55 = scmp.eq.s32.totalorder %s15, 0
    %p56 = por %p54, %p55
    %s57 = ssub.s32 %s16, %s28
    %p58 = scmp.eq.s32.totalorder %s57, 0
    %s60 = sadd.s32 %s59, 1
    %s61 = scalar_select %p58, %s59, %s60
    %p64 = pneg %p58
    %p65 = scmp.eq.s32.totalorder %s9, 2
    %p66 = por %p64, %p65
    %p67 = scmp.ne.s32.totalorder %s59, %s62
    %p68 = scmp.eq.s32.totalorder %s9, 0
    %p69 = por %p67, %p68
    %p70 = scmp.ne.s32.totalorder %s59, %s62
    %p71 = scmp.eq.s32.totalorder %s14, 2
    %p72 = por %p70, %p71
    %p73 = scmp.ne.s32.totalorder %s62, %s63
    %p74 = scmp.eq.s32.totalorder %s14, 0
    %p75 = por %p73, %p74
    %p76 = scmp.ne.s32.totalorder %s62, %s63
    %p77 = scmp.eq.s32.totalorder %s15, 2
    %p78 = por %p76, %p77
    %p80 = scmp.ne.s32.totalorder %s63, %s79
    %p81 = scmp.eq.s32.totalorder %s15, 0
    %p82 = por %p80, %p81
    %s83 = ssub.s32 %s16, %s28
    %p84 = scmp.eq.s32.totalorder %s83, 0
    %s86 = sadd.s32 %s85, 1
    %s87 = scalar_select %p84, %s85, %s86
    %p90 = pneg %p84
    %p91 = scmp.eq.s32.totalorder %s9, 2
    %p92 = por %p90, %p91
    %p93 = scmp.ne.s32.totalorder %s85, %s88
    %p94 = scmp.eq.s32.totalorder %s9, 0
    %p95 = por %p93, %p94
    %p96 = scmp.ne.s32.totalorder %s85, %s88
    %p97 = scmp.eq.s32.totalorder %s14, 2
    %p98 = por %p96, %p97
    %p99 = scmp.ne.s32.totalorder %s88, %s89
    %p100 = scmp.eq.s32.totalorder %s14, 0
    %p101 = por %p99, %p100
    %p102 = scmp.ne.s32.totalorder %s88, %s89
    %p103 = scmp.eq.s32.totalorder %s15, 2
    %p104 = por %p102, %p103
    %p106 = scmp.ne.s32.totalorder %s89, %s105
    %p107 = scmp.eq.s32.totalorder %s15, 0
    %p108 = por %p106, %p107
    %s109 = ssub.s32 %s16, %s28
    %s110 = ssub.s32 %s17, %s24
    %s111 = sor.u32 %s109, %s110
    %p112 = scmp.eq.s32.totalorder %s111, 0
    %s114 = sadd.s32 %s113, 1
    %s115 = scalar_select %p112, %s113, %s114
    %p118 = pneg %p112
    %p119 = scmp.eq.s32.totalorder %s9, 2
    %p120 = por %p118, %p119
    %p121 = scmp.ne.s32.totalorder %s113, %s116
    %p122 = scmp.eq.s32.totalorder %s9, 0
    %p123 = por %p121, %p122
    %p124 = scmp.ne.s32.totalorder %s113, %s116
    %p125 = scmp.eq.s32.totalorder %s14, 2
    %p126 = por %p124, %p125
    %p127 = scmp.ne.s32.totalorder %s116, %s117
    %p128 = scmp.eq.s32.totalorder %s14, 0
    %p129 = por %p127, %p128
    %p130 = scmp.ne.s32.totalorder %s116, %s117
    %p131 = scmp.eq.s32.totalorder %s15, 2
    %p132 = por %p130, %p131
    %p134 = scmp.ne.s32.totalorder %s117, %s133
    %p135 = scmp.eq.s32.totalorder %s15, 0
    %p136 = por %p134, %p135
    %p137 = scmp.le.s32.totalorder 1, %s9
    %p138 = scmp.lt.s32.totalorder %s9, 4
    %p139 = pnand %p137, %p138
    %p140 = pneg %p139
    // Predicated region
    $region9: #{model_forward.18} parent=5 // pred_check
      _
    $region10: #{model_forward.18} parent=5 // pred_check_branch
      %142 = sbr.rel (%p139) target = $region12
    $region11: #{model_forward.18} parent=5 // pred_region
      %s143 = ssub.s32 %s9, 1
    $region12: #{model_forward.18} parent=5 // pred_fallthru
      _
    %p144 = scmp.lt.s32.totalorder %s9, 3
    // Predicated region
    $region13: #{model_forward.18} parent=5 // pred_check
      %p145 = pneg %p144
    $region14: #{model_forward.18} parent=5 // pred_check_branch
      %147 = sbr.rel (%p145) target = $region16
    $region15: #{model_forward.18} parent=5 // pred_region
      // Predicated region
      $region17: #{model_forward.18} parent=15 // pred_check
        %p148 = pneg %p43
      $region18: #{model_forward.18} parent=15 // pred_check_branch
        %150 = sbr.rel (%p148) target = $region20
      $region19: #{model_forward.18} parent=15 // pred_region
        %s151 = smul.u32 2, %s17
        %p152 = scmp.lt.s32.totalorder %s16, 2
        %s153 = scalar_select %p152, %s16, 2
        %p154 = scmp.lt.s32.totalorder %s151, 1
        %s155 = scalar_select %p154, %s151, 1
        %s156 = smul.addr %s155, 4
        %s157 = smul.addr %s153, 8
        %s158 = sadd.s32 %s156, %s157
        %s159 = smul.addr %s158, 4
        %s160 = scalar_lea.vmem %s0, %s159
        %s161 = smul.u32 2, %s17
      $region20: #{model_forward.18} parent=15 // pred_fallthru
        _
      // Predicated region
      $region21: #{model_forward.18} parent=15 // pred_check
        %p162 = pneg %p69
      $region22: #{model_forward.18} parent=15 // pred_check_branch
        %164 = sbr.rel (%p162) target = $region24
      $region23: #{model_forward.18} parent=15 // pred_region
        %p165 = scmp.lt.s32.totalorder %s16, 2
        %s166 = scalar_select %p165, %s16, 2
        %s167 = smul.addr %s166, 512
        %s168 = smul.addr %s167, 4
        %s169 = scalar_lea.vmem %s1, %s168
      $region24: #{model_forward.18} parent=15 // pred_fallthru
        _
      // Predicated region
      $region25: #{model_forward.18} parent=15 // pred_check
        %p170 = pneg %p95
      $region26: #{model_forward.18} parent=15 // pred_check_branch
        %172 = sbr.rel (%p170) target = $region28
      $region27: #{model_forward.18} parent=15 // pred_region
        %p173 = scmp.lt.s32.totalorder %s16, 2
        %s174 = scalar_select %p173, %s16, 2
        %s175 = smul.addr %s174, 8
        %s176 = scalar_lea.vmem %s2, %s175
      $region28: #{model_forward.18} parent=15 // pred_fallthru
        _
    $region16: #{model_forward.18} parent=5 // pred_fallthru
      _
    %p177 = scmp.le.s32.totalorder 1, %s9
    %p178 = scmp.lt.s32.totalorder %s9, 4
    %p179 = pnand %p177, %p178
    %p180 = pneg %p179
    // Predicated region
    $region29: #{model_forward.18} parent=5 // pred_check
      _
    $region30: #{model_forward.18} parent=5 // pred_check_branch
      %182 = sbr.rel (%p179) target = $region32
    $region31: #{model_forward.18} parent=5 // pred_region
      %s183 = ssub.s32 %s9, 1
      %s184 = smul.u32 2, %s19
      %p185 = scmp.lt.s32.totalorder %s18, 2
      %s186 = scalar_select %p185, %s18, 2
      %p187 = scmp.lt.s32.totalorder %s184, 1
      %s188 = scalar_select %p187, %s184, 1
      %s189 = smul.addr %s188, 4
      %s190 = smul.addr %s186, 8
      %s191 = sadd.s32 %s189, %s190
      %s192 = smul.addr %s191, 4
      %s193 = scalar_lea.vmem %s0, %s192
      %p194 = pneg %p49
      %p195 = pneg %p46
      %p196 = scmp.lt.s32.totalorder %s18, 2
      %s197 = scalar_select %p196, %s18, 2
      %s198 = smul.addr %s197, 512
      %s199 = smul.addr %s198, 4
      %s200 = scalar_lea.vmem %s1, %s199
      %p201 = pneg %p75
      %p202 = pneg %p72
      %p203 = scmp.lt.s32.totalorder %s18, 2
      %s204 = scalar_select %p203, %s18, 2
      %s205 = smul.addr %s204, 8
      %s206 = scalar_lea.vmem %s2, %s205
      %p207 = pneg %p101
      %p208 = pneg %p98
      %p209 = pneg %p129
      %p210 = pneg %p126
      %s211 = smul.u32 2, %s19
      %p212 = scmp.lt.s32.totalorder %s18, 2
      %s213 = scalar_select %p212, %s18, 2
      %p214 = scmp.lt.s32.totalorder %s211, 1
      %s215 = scalar_select %p214, %s211, 1
      %s216 = smul.addr %s215, 8
      %s217 = smul.addr %s213, 16
      %s218 = sadd.s32 %s216, %s217
      %s219 = smul.addr %s218, 4
      %s220 = scalar_lea.vmem %s3, %s219
      %s221 = smul.u32 2, %s19
      %p222 = scmp.lt.s32.totalorder %s18, 2
      %s223 = scalar_select %p222, %s18, 2
      %p224 = scmp.lt.s32.totalorder %s221, 1
      %s225 = scalar_select %p224, %s221, 1
      %s226 = smul.addr %s225, 4
      %s227 = smul.addr %s223, 8
      %s228 = sadd.s32 %s226, %s227
      %s229 = smul.addr %s228, 4
      %s230 = scalar_lea.vmem %s0, %s229
      %s231 = smul.u32 2, %s19
      %p232 = scmp.lt.s32.totalorder %s18, 2
      %s233 = scalar_select %p232, %s18, 2
      %s234 = smul.addr %s233, 512
      %s235 = smul.addr %s234, 4
      %s236 = scalar_lea.vmem %s1, %s235
      %p237 = scmp.lt.s32.totalorder %s18, 2
      %s238 = scalar_select %p237, %s18, 2
      %s239 = smul.addr %s238, 8
      %s240 = scalar_lea.vmem %s2, %s239
      %s241 = smul.u32 2, %s19
      %p242 = scmp.lt.s32.totalorder %s18, 2
      %s243 = scalar_select %p242, %s18, 2
      %p244 = scmp.lt.s32.totalorder %s241, 1
      %s245 = scalar_select %p244, %s241, 1
      %s246 = smul.addr %s245, 8
      %s247 = smul.addr %s243, 16
      %s248 = sadd.s32 %s246, %s247
      %s249 = smul.addr %s248, 4
      %s250 = scalar_lea.vmem %s3, %s249
      %s251 = smul.u32 2, %s19
      %v252 = vld [vmem:[%s230] sm:$0xff]
      %v253 = vld [vmem:[%s230 + $0x8] sm:$0xff]
      %v254 = vld [vmem:[%s230 + $0x10] sm:$0xff]
      %v255 = vld [vmem:[%s230 + $0x18] sm:$0xff]
      %v256 = vld [vmem:[%s236] sm:$0xff]
      %v257 = vld [vmem:[%s236 + $0x8] sm:$0xff]
      %v258 = vld [vmem:[%s236 + $0x10] sm:$0xff]
      %v259 = vld [vmem:[%s236 + $0x18] sm:$0xff]
      %v260 = vld [vmem:[%s236 + $0x20] sm:$0xff]
      %v261 = vld [vmem:[%s236 + $0x28] sm:$0xff]
      %v262 = vld [vmem:[%s236 + $0x30] sm:$0xff]
      %v263 = vld [vmem:[%s236 + $0x38] sm:$0xff]
      %v264 = vld [vmem:[%s236 + $0x40] sm:$0xff]
      %v265 = vld [vmem:[%s236 + $0x48] sm:$0xff]
      %v266 = vld [vmem:[%s236 + $0x50] sm:$0xff]
      %v267 = vld [vmem:[%s236 + $0x58] sm:$0xff]
      %v268 = vld [vmem:[%s236 + $0x60] sm:$0xff]
      %v269 = vld [vmem:[%s236 + $0x68] sm:$0xff]
      %v270 = vld [vmem:[%s236 + $0x70] sm:$0xff]
      %v271 = vld [vmem:[%s236 + $0x78] sm:$0xff]
      %v272 = vld [vmem:[%s236 + $0x80] sm:$0xff]
      %v273 = vld [vmem:[%s236 + $0x88] sm:$0xff]
      %v274 = vld [vmem:[%s236 + $0x90] sm:$0xff]
      %v275 = vld [vmem:[%s236 + $0x98] sm:$0xff]
      %v276 = vld [vmem:[%s236 + $0xa0] sm:$0xff]
      %v277 = vld [vmem:[%s236 + $0xa8] sm:$0xff]
      %v278 = vld [vmem:[%s236 + $0xb0] sm:$0xff]
      %v279 = vld [vmem:[%s236 + $0xb8] sm:$0xff]
      %v280 = vld [vmem:[%s236 + $0xc0] sm:$0xff]
      %v281 = vld [vmem:[%s236 + $0xc8] sm:$0xff]
      %v282 = vld [vmem:[%s236 + $0xd0] sm:$0xff]
      %v283 = vld [vmem:[%s236 + $0xd8] sm:$0xff]
      %v284 = vld [vmem:[%s236 + $0xe0] sm:$0xff]
      %v285 = vld [vmem:[%s236 + $0xe8] sm:$0xff]
      %v286 = vld [vmem:[%s236 + $0xf0] sm:$0xff]
      %v287 = vld [vmem:[%s236 + $0xf8] sm:$0xff]
      %v288 = vld [vmem:[%s236 + $0x100] sm:$0xff]
      %v289 = vld [vmem:[%s236 + $0x108] sm:$0xff]
      %v290 = vld [vmem:[%s236 + $0x110] sm:$0xff]
      %v291 = vld [vmem:[%s236 + $0x118] sm:$0xff]
      %v292 = vld [vmem:[%s236 + $0x120] sm:$0xff]
      %v293 = vld [vmem:[%s236 + $0x128] sm:$0xff]
      %v294 = vld [vmem:[%s236 + $0x130] sm:$0xff]
      %v295 = vld [vmem:[%s236 + $0x138] sm:$0xff]
      %v296 = vld [vmem:[%s236 + $0x140] sm:$0xff]
      %v297 = vld [vmem:[%s236 + $0x148] sm:$0xff]
      %v298 = vld [vmem:[%s236 + $0x150] sm:$0xff]
      %v299 = vld [vmem:[%s236 + $0x158] sm:$0xff]
      %v300 = vld [vmem:[%s236 + $0x160] sm:$0xff]
      %v301 = vld [vmem:[%s236 + $0x168] sm:$0xff]
      %v302 = vld [vmem:[%s236 + $0x170] sm:$0xff]
      %v303 = vld [vmem:[%s236 + $0x178] sm:$0xff]
      %v304 = vld [vmem:[%s236 + $0x180] sm:$0xff]
      %v305 = vld [vmem:[%s236 + $0x188] sm:$0xff]
      %v306 = vld [vmem:[%s236 + $0x190] sm:$0xff]
      %v307 = vld [vmem:[%s236 + $0x198] sm:$0xff]
      %v308 = vld [vmem:[%s236 + $0x1a0] sm:$0xff]
      %v309 = vld [vmem:[%s236 + $0x1a8] sm:$0xff]
      %v310 = vld [vmem:[%s236 + $0x1b0] sm:$0xff]
      %v311 = vld [vmem:[%s236 + $0x1b8] sm:$0xff]
      %v312 = vld [vmem:[%s236 + $0x1c0] sm:$0xff]
      %v313 = vld [vmem:[%s236 + $0x1c8] sm:$0xff]
      %v314 = vld [vmem:[%s236 + $0x1d0] sm:$0xff]
      %v315 = vld [vmem:[%s236 + $0x1d8] sm:$0xff]
      %v316 = vld [vmem:[%s236 + $0x1e0] sm:$0xff]
      %v317 = vld [vmem:[%s236 + $0x1e8] sm:$0xff]
      %v318 = vld [vmem:[%s236 + $0x1f0] sm:$0xff]
      %v319 = vld [vmem:[%s236 + $0x1f8] sm:$0xff]
      %v320 = vld [vmem:[%s236 + $0x200] sm:$0xff]
      %v321 = vld [vmem:[%s236 + $0x208] sm:$0xff]
      %v322 = vld [vmem:[%s236 + $0x210] sm:$0xff]
      %v323 = vld [vmem:[%s236 + $0x218] sm:$0xff]
      %v324 = vld [vmem:[%s236 + $0x220] sm:$0xff]
      %v325 = vld [vmem:[%s236 + $0x228] sm:$0xff]
      %v326 = vld [vmem:[%s236 + $0x230] sm:$0xff]
      %v327 = vld [vmem:[%s236 + $0x238] sm:$0xff]
      %v328 = vld [vmem:[%s236 + $0x240] sm:$0xff]
      %v329 = vld [vmem:[%s236 + $0x248] sm:$0xff]
      %v330 = vld [vmem:[%s236 + $0x250] sm:$0xff]
      %v331 = vld [vmem:[%s236 + $0x258] sm:$0xff]
      %v332 = vld [vmem:[%s236 + $0x260] sm:$0xff]
      %v333 = vld [vmem:[%s236 + $0x268] sm:$0xff]
      %v334 = vld [vmem:[%s236 + $0x270] sm:$0xff]
      %v335 = vld [vmem:[%s236 + $0x278] sm:$0xff]
      %v336 = vld [vmem:[%s236 + $0x280] sm:$0xff]
      %v337 = vld [vmem:[%s236 + $0x288] sm:$0xff]
      %v338 = vld [vmem:[%s236 + $0x290] sm:$0xff]
      %v339 = vld [vmem:[%s236 + $0x298] sm:$0xff]
      %v340 = vld [vmem:[%s236 + $0x2a0] sm:$0xff]
      %v341 = vld [vmem:[%s236 + $0x2a8] sm:$0xff]
      %v342 = vld [vmem:[%s236 + $0x2b0] sm:$0xff]
      %v343 = vld [vmem:[%s236 + $0x2b8] sm:$0xff]
      %v344 = vld [vmem:[%s236 + $0x2c0] sm:$0xff]
      %v345 = vld [vmem:[%s236 + $0x2c8] sm:$0xff]
      %v346 = vld [vmem:[%s236 + $0x2d0] sm:$0xff]
      %v347 = vld [vmem:[%s236 + $0x2d8] sm:$0xff]
      %v348 = vld [vmem:[%s236 + $0x2e0] sm:$0xff]
      %v349 = vld [vmem:[%s236 + $0x2e8] sm:$0xff]
      %v350 = vld [vmem:[%s236 + $0x2f0] sm:$0xff]
      %v351 = vld [vmem:[%s236 + $0x2f8] sm:$0xff]
      %v352 = vld [vmem:[%s236 + $0x300] sm:$0xff]
      %v353 = vld [vmem:[%s236 + $0x308] sm:$0xff]
      %v354 = vld [vmem:[%s236 + $0x310] sm:$0xff]
      %v355 = vld [vmem:[%s236 + $0x318] sm:$0xff]
      %v356 = vld [vmem:[%s236 + $0x320] sm:$0xff]
      %v357 = vld [vmem:[%s236 + $0x328] sm:$0xff]
      %v358 = vld [vmem:[%s236 + $0x330] sm:$0xff]
      %v359 = vld [vmem:[%s236 + $0x338] sm:$0xff]
      %v360 = vld [vmem:[%s236 + $0x340] sm:$0xff]
      %v361 = vld [vmem:[%s236 + $0x348] sm:$0xff]
      %v362 = vld [vmem:[%s236 + $0x350] sm:$0xff]
      %v363 = vld [vmem:[%s236 + $0x358] sm:$0xff]
      %v364 = vld [vmem:[%s236 + $0x360] sm:$0xff]
      %v365 = vld [vmem:[%s236 + $0x368] sm:$0xff]
      %v366 = vld [vmem:[%s236 + $0x370] sm:$0xff]
      %v367 = vld [vmem:[%s236 + $0x378] sm:$0xff]
      %v368 = vld [vmem:[%s236 + $0x380] sm:$0xff]
      %v369 = vld [vmem:[%s236 + $0x388] sm:$0xff]
      %v370 = vld [vmem:[%s236 + $0x390] sm:$0xff]
      %v371 = vld [vmem:[%s236 + $0x398] sm:$0xff]
      %v372 = vld [vmem:[%s236 + $0x3a0] sm:$0xff]
      %v373 = vld [vmem:[%s236 + $0x3a8] sm:$0xff]
      %v374 = vld [vmem:[%s236 + $0x3b0] sm:$0xff]
      %v375 = vld [vmem:[%s236 + $0x3b8] sm:$0xff]
      %v376 = vld [vmem:[%s236 + $0x3c0] sm:$0xff]
      %v377 = vld [vmem:[%s236 + $0x3c8] sm:$0xff]
      %v378 = vld [vmem:[%s236 + $0x3d0] sm:$0xff]
      %v379 = vld [vmem:[%s236 + $0x3d8] sm:$0xff]
      %v380 = vld [vmem:[%s236 + $0x3e0] sm:$0xff]
      %v381 = vld [vmem:[%s236 + $0x3e8] sm:$0xff]
      %v382 = vld [vmem:[%s236 + $0x3f0] sm:$0xff]
      %v383 = vld [vmem:[%s236 + $0x3f8] sm:$0xff]
      %v384 = vld [vmem:[%s236 + $0x400] sm:$0xff]
      %v385 = vld [vmem:[%s236 + $0x408] sm:$0xff]
      %v386 = vld [vmem:[%s236 + $0x410] sm:$0xff]
      %v387 = vld [vmem:[%s236 + $0x418] sm:$0xff]
      %v388 = vld [vmem:[%s236 + $0x420] sm:$0xff]
      %v389 = vld [vmem:[%s236 + $0x428] sm:$0xff]
      %v390 = vld [vmem:[%s236 + $0x430] sm:$0xff]
      %v391 = vld [vmem:[%s236 + $0x438] sm:$0xff]
      %v392 = vld [vmem:[%s236 + $0x440] sm:$0xff]
      %v393 = vld [vmem:[%s236 + $0x448] sm:$0xff]
      %v394 = vld [vmem:[%s236 + $0x450] sm:$0xff]
      %v395 = vld [vmem:[%s236 + $0x458] sm:$0xff]
      %v396 = vld [vmem:[%s236 + $0x460] sm:$0xff]
      %v397 = vld [vmem:[%s236 + $0x468] sm:$0xff]
      %v398 = vld [vmem:[%s236 + $0x470] sm:$0xff]
      %v399 = vld [vmem:[%s236 + $0x478] sm:$0xff]
      %v400 = vld [vmem:[%s236 + $0x480] sm:$0xff]
      %v401 = vld [vmem:[%s236 + $0x488] sm:$0xff]
      %v402 = vld [vmem:[%s236 + $0x490] sm:$0xff]
      %v403 = vld [vmem:[%s236 + $0x498] sm:$0xff]
      %v404 = vld [vmem:[%s236 + $0x4a0] sm:$0xff]
      %v405 = vld [vmem:[%s236 + $0x4a8] sm:$0xff]
      %v406 = vld [vmem:[%s236 + $0x4b0] sm:$0xff]
      %v407 = vld [vmem:[%s236 + $0x4b8] sm:$0xff]
      %v408 = vld [vmem:[%s236 + $0x4c0] sm:$0xff]
      %v409 = vld [vmem:[%s236 + $0x4c8] sm:$0xff]
      %v410 = vld [vmem:[%s236 + $0x4d0] sm:$0xff]
      %v411 = vld [vmem:[%s236 + $0x4d8] sm:$0xff]
      %v412 = vld [vmem:[%s236 + $0x4e0] sm:$0xff]
      %v413 = vld [vmem:[%s236 + $0x4e8] sm:$0xff]
      %v414 = vld [vmem:[%s236 + $0x4f0] sm:$0xff]
      %v415 = vld [vmem:[%s236 + $0x4f8] sm:$0xff]
      %v416 = vld [vmem:[%s236 + $0x500] sm:$0xff]
      %v417 = vld [vmem:[%s236 + $0x508] sm:$0xff]
      %v418 = vld [vmem:[%s236 + $0x510] sm:$0xff]
      %v419 = vld [vmem:[%s236 + $0x518] sm:$0xff]
      %v420 = vld [vmem:[%s236 + $0x520] sm:$0xff]
      %v421 = vld [vmem:[%s236 + $0x528] sm:$0xff]
      %v422 = vld [vmem:[%s236 + $0x530] sm:$0xff]
      %v423 = vld [vmem:[%s236 + $0x538] sm:$0xff]
      %v424 = vld [vmem:[%s236 + $0x540] sm:$0xff]
      %v425 = vld [vmem:[%s236 + $0x548] sm:$0xff]
      %v426 = vld [vmem:[%s236 + $0x550] sm:$0xff]
      %v427 = vld [vmem:[%s236 + $0x558] sm:$0xff]
      %v428 = vld [vmem:[%s236 + $0x560] sm:$0xff]
      %v429 = vld [vmem:[%s236 + $0x568] sm:$0xff]
      %v430 = vld [vmem:[%s236 + $0x570] sm:$0xff]
      %v431 = vld [vmem:[%s236 + $0x578] sm:$0xff]
      %v432 = vld [vmem:[%s236 + $0x580] sm:$0xff]
      %v433 = vld [vmem:[%s236 + $0x588] sm:$0xff]
      %v434 = vld [vmem:[%s236 + $0x590] sm:$0xff]
      %v435 = vld [vmem:[%s236 + $0x598] sm:$0xff]
      %v436 = vld [vmem:[%s236 + $0x5a0] sm:$0xff]
      %v437 = vld [vmem:[%s236 + $0x5a8] sm:$0xff]
      %v438 = vld [vmem:[%s236 + $0x5b0] sm:$0xff]
      %v439 = vld [vmem:[%s236 + $0x5b8] sm:$0xff]
      %v440 = vld [vmem:[%s236 + $0x5c0] sm:$0xff]
      %v441 = vld [vmem:[%s236 + $0x5c8] sm:$0xff]
      %v442 = vld [vmem:[%s236 + $0x5d0] sm:$0xff]
      %v443 = vld [vmem:[%s236 + $0x5d8] sm:$0xff]
      %v444 = vld [vmem:[%s236 + $0x5e0] sm:$0xff]
      %v445 = vld [vmem:[%s236 + $0x5e8] sm:$0xff]
      %v446 = vld [vmem:[%s236 + $0x5f0] sm:$0xff]
      %v447 = vld [vmem:[%s236 + $0x5f8] sm:$0xff]
      %v448 = vld [vmem:[%s236 + $0x600] sm:$0xff]
      %v449 = vld [vmem:[%s236 + $0x608] sm:$0xff]
      %v450 = vld [vmem:[%s236 + $0x610] sm:$0xff]
      %v451 = vld [vmem:[%s236 + $0x618] sm:$0xff]
      %v452 = vld [vmem:[%s236 + $0x620] sm:$0xff]
      %v453 = vld [vmem:[%s236 + $0x628] sm:$0xff]
      %v454 = vld [vmem:[%s236 + $0x630] sm:$0xff]
      %v455 = vld [vmem:[%s236 + $0x638] sm:$0xff]
      %v456 = vld [vmem:[%s236 + $0x640] sm:$0xff]
      %v457 = vld [vmem:[%s236 + $0x648] sm:$0xff]
      %v458 = vld [vmem:[%s236 + $0x650] sm:$0xff]
      %v459 = vld [vmem:[%s236 + $0x658] sm:$0xff]
      %v460 = vld [vmem:[%s236 + $0x660] sm:$0xff]
      %v461 = vld [vmem:[%s236 + $0x668] sm:$0xff]
      %v462 = vld [vmem:[%s236 + $0x670] sm:$0xff]
      %v463 = vld [vmem:[%s236 + $0x678] sm:$0xff]
      %v464 = vld [vmem:[%s236 + $0x680] sm:$0xff]
      %v465 = vld [vmem:[%s236 + $0x688] sm:$0xff]
      %v466 = vld [vmem:[%s236 + $0x690] sm:$0xff]
      %v467 = vld [vmem:[%s236 + $0x698] sm:$0xff]
      %v468 = vld [vmem:[%s236 + $0x6a0] sm:$0xff]
      %v469 = vld [vmem:[%s236 + $0x6a8] sm:$0xff]
      %v470 = vld [vmem:[%s236 + $0x6b0] sm:$0xff]
      %v471 = vld [vmem:[%s236 + $0x6b8] sm:$0xff]
      %v472 = vld [vmem:[%s236 + $0x6c0] sm:$0xff]
      %v473 = vld [vmem:[%s236 + $0x6c8] sm:$0xff]
      %v474 = vld [vmem:[%s236 + $0x6d0] sm:$0xff]
      %v475 = vld [vmem:[%s236 + $0x6d8] sm:$0xff]
      %v476 = vld [vmem:[%s236 + $0x6e0] sm:$0xff]
      %v477 = vld [vmem:[%s236 + $0x6e8] sm:$0xff]
      %v478 = vld [vmem:[%s236 + $0x6f0] sm:$0xff]
      %v479 = vld [vmem:[%s236 + $0x6f8] sm:$0xff]
      %v480 = vld [vmem:[%s236 + $0x700] sm:$0xff]
      %v481 = vld [vmem:[%s236 + $0x708] sm:$0xff]
      %v482 = vld [vmem:[%s236 + $0x710] sm:$0xff]
      %v483 = vld [vmem:[%s236 + $0x718] sm:$0xff]
      %v484 = vld [vmem:[%s236 + $0x720] sm:$0xff]
      %v485 = vld [vmem:[%s236 + $0x728] sm:$0xff]
      %v486 = vld [vmem:[%s236 + $0x730] sm:$0xff]
      %v487 = vld [vmem:[%s236 + $0x738] sm:$0xff]
      %v488 = vld [vmem:[%s236 + $0x740] sm:$0xff]
      %v489 = vld [vmem:[%s236 + $0x748] sm:$0xff]
      %v490 = vld [vmem:[%s236 + $0x750] sm:$0xff]
      %v491 = vld [vmem:[%s236 + $0x758] sm:$0xff]
      %v492 = vld [vmem:[%s236 + $0x760] sm:$0xff]
      %v493 = vld [vmem:[%s236 + $0x768] sm:$0xff]
      %v494 = vld [vmem:[%s236 + $0x770] sm:$0xff]
      %v495 = vld [vmem:[%s236 + $0x778] sm:$0xff]
      %v496 = vld [vmem:[%s236 + $0x780] sm:$0xff]
      %v497 = vld [vmem:[%s236 + $0x788] sm:$0xff]
      %v498 = vld [vmem:[%s236 + $0x790] sm:$0xff]
      %v499 = vld [vmem:[%s236 + $0x798] sm:$0xff]
      %v500 = vld [vmem:[%s236 + $0x7a0] sm:$0xff]
      %v501 = vld [vmem:[%s236 + $0x7a8] sm:$0xff]
      %v502 = vld [vmem:[%s236 + $0x7b0] sm:$0xff]
      %v503 = vld [vmem:[%s236 + $0x7b8] sm:$0xff]
      %v504 = vld [vmem:[%s236 + $0x7c0] sm:$0xff]
      %v505 = vld [vmem:[%s236 + $0x7c8] sm:$0xff]
      %v506 = vld [vmem:[%s236 + $0x7d0] sm:$0xff]
      %v507 = vld [vmem:[%s236 + $0x7d8] sm:$0xff]
      %v508 = vld [vmem:[%s236 + $0x7e0] sm:$0xff]
      %v509 = vld [vmem:[%s236 + $0x7e8] sm:$0xff]
      %v510 = vld [vmem:[%s236 + $0x7f0] sm:$0xff]
      %v511 = vld [vmem:[%s236 + $0x7f8] sm:$0xff]
      %v512 = vld [vmem:[%s240] sm:$0xff]
      %v514 = vperm.slane %v512, 0
      %v515 = vperm.slane %v512, 1
      %v516 = vperm.slane %v512, 2
      %v517 = vperm.slane %v512, 3
      %v518 = vperm.slane %v512, 4
      %v519 = vperm.slane %v512, 5
      %v520 = vperm.slane %v512, 6
      %v521 = vperm.slane %v512, 7
      %v534 = vunpack.c.l.b16 %v252
      %v535 = vunpack.c.h.b16 %v252
      %v536 = vunpack.c.l.b16 %v253
      %v537 = vunpack.c.h.b16 %v253
      %v538 = vunpack.c.l.b16 %v254
      %v539 = vunpack.c.h.b16 %v254
      %v540 = vunpack.c.l.b16 %v255
      %v541 = vunpack.c.h.b16 %v255
      %v542 = vpack.c.b16 %v538, %v534
      %v543 = vpack.c.b16 %v539, %v535
      %v544 = vpack.c.b16 %v540, %v536
      %v545 = vpack.c.b16 %v541, %v537
      %v806 = vunpack.c.l.b16 %v256
      %v807 = vunpack.c.h.b16 %v256
      %v808 = vunpack.c.l.b16 %v257
      %v809 = vunpack.c.h.b16 %v257
      %v810 = vunpack.c.l.b16 %v258
      %v811 = vunpack.c.h.b16 %v258
      %v812 = vunpack.c.l.b16 %v259
      %v813 = vunpack.c.h.b16 %v259
      %v814 = vunpack.c.l.b16 %v260
      %v815 = vunpack.c.h.b16 %v260
      %v816 = vunpack.c.l.b16 %v261
      %v817 = vunpack.c.h.b16 %v261
      %v818 = vunpack.c.l.b16 %v262
      %v819 = vunpack.c.h.b16 %v262
      %v820 = vunpack.c.l.b16 %v263
      %v821 = vunpack.c.h.b16 %v263
      %v822 = vunpack.c.l.b16 %v264
      %v823 = vunpack.c.h.b16 %v264
      %v824 = vunpack.c.l.b16 %v265
      %v825 = vunpack.c.h.b16 %v265
      %v826 = vunpack.c.l.b16 %v266
      %v827 = vunpack.c.h.b16 %v266
      %v828 = vunpack.c.l.b16 %v267
      %v829 = vunpack.c.h.b16 %v267
      %v830 = vunpack.c.l.b16 %v268
      %v831 = vunpack.c.h.b16 %v268
      %v832 = vunpack.c.l.b16 %v269
      %v833 = vunpack.c.h.b16 %v269
      %v834 = vunpack.c.l.b16 %v270
      %v835 = vunpack.c.h.b16 %v270
      %v836 = vunpack.c.l.b16 %v271
      %v837 = vunpack.c.h.b16 %v271
      %v838 = vunpack.c.l.b16 %v272
      %v839 = vunpack.c.h.b16 %v272
      %v840 = vunpack.c.l.b16 %v273
      %v841 = vunpack.c.h.b16 %v273
      %v842 = vunpack.c.l.b16 %v274
      %v843 = vunpack.c.h.b16 %v274
      %v844 = vunpack.c.l.b16 %v275
      %v845 = vunpack.c.h.b16 %v275
      %v846 = vunpack.c.l.b16 %v276
      %v847 = vunpack.c.h.b16 %v276
      %v848 = vunpack.c.l.b16 %v277
      %v849 = vunpack.c.h.b16 %v277
      %v850 = vunpack.c.l.b16 %v278
      %v851 = vunpack.c.h.b16 %v278
      %v852 = vunpack.c.l.b16 %v279
      %v853 = vunpack.c.h.b16 %v279
      %v854 = vunpack.c.l.b16 %v280
      %v855 = vunpack.c.h.b16 %v280
      %v856 = vunpack.c.l.b16 %v281
      %v857 = vunpack.c.h.b16 %v281
      %v858 = vunpack.c.l.b16 %v282
      %v859 = vunpack.c.h.b16 %v282
      %v860 = vunpack.c.l.b16 %v283
      %v861 = vunpack.c.h.b16 %v283
      %v862 = vunpack.c.l.b16 %v284
      %v863 = vunpack.c.h.b16 %v284
      %v864 = vunpack.c.l.b16 %v285
      %v865 = vunpack.c.h.b16 %v285
      %v866 = vunpack.c.l.b16 %v286
      %v867 = vunpack.c.h.b16 %v286
      %v868 = vunpack.c.l.b16 %v287
      %v869 = vunpack.c.h.b16 %v287
      %v870 = vunpack.c.l.b16 %v288
      %v871 = vunpack.c.h.b16 %v288
      %v872 = vunpack.c.l.b16 %v289
      %v873 = vunpack.c.h.b16 %v289
      %v874 = vunpack.c.l.b16 %v290
      %v875 = vunpack.c.h.b16 %v290
      %v876 = vunpack.c.l.b16 %v291
      %v877 = vunpack.c.h.b16 %v291
      %v878 = vunpack.c.l.b16 %v292
      %v879 = vunpack.c.h.b16 %v292
      %v880 = vunpack.c.l.b16 %v293
      %v881 = vunpack.c.h.b16 %v293
      %v882 = vunpack.c.l.b16 %v294
      %v883 = vunpack.c.h.b16 %v294
      %v884 = vunpack.c.l.b16 %v295
      %v885 = vunpack.c.h.b16 %v295
      %v886 = vunpack.c.l.b16 %v296
      %v887 = vunpack.c.h.b16 %v296
      %v888 = vunpack.c.l.b16 %v297
      %v889 = vunpack.c.h.b16 %v297
      %v890 = vunpack.c.l.b16 %v298
      %v891 = vunpack.c.h.b16 %v298
      %v892 = vunpack.c.l.b16 %v299
      %v893 = vunpack.c.h.b16 %v299
      %v894 = vunpack.c.l.b16 %v300
      %v895 = vunpack.c.h.b16 %v300
      %v896 = vunpack.c.l.b16 %v301
      %v897 = vunpack.c.h.b16 %v301
      %v898 = vunpack.c.l.b16 %v302
      %v899 = vunpack.c.h.b16 %v302
      %v900 = vunpack.c.l.b16 %v303
      %v901 = vunpack.c.h.b16 %v303
      %v902 = vunpack.c.l.b16 %v304
      %v903 = vunpack.c.h.b16 %v304
      %v904 = vunpack.c.l.b16 %v305
      %v905 = vunpack.c.h.b16 %v305
      %v906 = vunpack.c.l.b16 %v306
      %v907 = vunpack.c.h.b16 %v306
      %v908 = vunpack.c.l.b16 %v307
      %v909 = vunpack.c.h.b16 %v307
      %v910 = vunpack.c.l.b16 %v308
      %v911 = vunpack.c.h.b16 %v308
      %v912 = vunpack.c.l.b16 %v309
      %v913 = vunpack.c.h.b16 %v309
      %v914 = vunpack.c.l.b16 %v310
      %v915 = vunpack.c.h.b16 %v310
      %v916 = vunpack.c.l.b16 %v311
      %v917 = vunpack.c.h.b16 %v311
      %v918 = vunpack.c.l.b16 %v312
      %v919 = vunpack.c.h.b16 %v312
      %v920 = vunpack.c.l.b16 %v313
      %v921 = vunpack.c.h.b16 %v313
      %v922 = vunpack.c.l.b16 %v314
      %v923 = vunpack.c.h.b16 %v314
      %v924 = vunpack.c.l.b16 %v315
      %v925 = vunpack.c.h.b16 %v315
      %v926 = vunpack.c.l.b16 %v316
      %v927 = vunpack.c.h.b16 %v316
      %v928 = vunpack.c.l.b16 %v317
      %v929 = vunpack.c.h.b16 %v317
      %v930 = vunpack.c.l.b16 %v318
      %v931 = vunpack.c.h.b16 %v318
      %v932 = vunpack.c.l.b16 %v319
      %v933 = vunpack.c.h.b16 %v319
      %v934 = vunpack.c.l.b16 %v320
      %v935 = vunpack.c.h.b16 %v320
      %v936 = vunpack.c.l.b16 %v321
      %v937 = vunpack.c.h.b16 %v321
      %v938 = vunpack.c.l.b16 %v322
      %v939 = vunpack.c.h.b16 %v322
      %v940 = vunpack.c.l.b16 %v323
      %v941 = vunpack.c.h.b16 %v323
      %v942 = vunpack.c.l.b16 %v324
      %v943 = vunpack.c.h.b16 %v324
      %v944 = vunpack.c.l.b16 %v325
      %v945 = vunpack.c.h.b16 %v325
      %v946 = vunpack.c.l.b16 %v326
      %v947 = vunpack.c.h.b16 %v326
      %v948 = vunpack.c.l.b16 %v327
      %v949 = vunpack.c.h.b16 %v327
      %v950 = vunpack.c.l.b16 %v328
      %v951 = vunpack.c.h.b16 %v328
      %v952 = vunpack.c.l.b16 %v329
      %v953 = vunpack.c.h.b16 %v329
      %v954 = vunpack.c.l.b16 %v330
      %v955 = vunpack.c.h.b16 %v330
      %v956 = vunpack.c.l.b16 %v331
      %v957 = vunpack.c.h.b16 %v331
      %v958 = vunpack.c.l.b16 %v332
      %v959 = vunpack.c.h.b16 %v332
      %v960 = vunpack.c.l.b16 %v333
      %v961 = vunpack.c.h.b16 %v333
      %v962 = vunpack.c.l.b16 %v334
      %v963 = vunpack.c.h.b16 %v334
      %v964 = vunpack.c.l.b16 %v335
      %v965 = vunpack.c.h.b16 %v335
      %v966 = vunpack.c.l.b16 %v336
      %v967 = vunpack.c.h.b16 %v336
      %v968 = vunpack.c.l.b16 %v337
      %v969 = vunpack.c.h.b16 %v337
      %v970 = vunpack.c.l.b16 %v338
      %v971 = vunpack.c.h.b16 %v338
      %v972 = vunpack.c.l.b16 %v339
      %v973 = vunpack.c.h.b16 %v339
      %v974 = vunpack.c.l.b16 %v340
      %v975 = vunpack.c.h.b16 %v340
      %v976 = vunpack.c.l.b16 %v341
      %v977 = vunpack.c.h.b16 %v341
      %v978 = vunpack.c.l.b16 %v342
      %v979 = vunpack.c.h.b16 %v342
      %v980 = vunpack.c.l.b16 %v343
      %v981 = vunpack.c.h.b16 %v343
      %v982 = vunpack.c.l.b16 %v344
      %v983 = vunpack.c.h.b16 %v344
      %v984 = vunpack.c.l.b16 %v345
      %v985 = vunpack.c.h.b16 %v345
      %v986 = vunpack.c.l.b16 %v346
      %v987 = vunpack.c.h.b16 %v346
      %v988 = vunpack.c.l.b16 %v347
      %v989 = vunpack.c.h.b16 %v347
      %v990 = vunpack.c.l.b16 %v348
      %v991 = vunpack.c.h.b16 %v348
      %v992 = vunpack.c.l.b16 %v349
      %v993 = vunpack.c.h.b16 %v349
      %v994 = vunpack.c.l.b16 %v350
      %v995 = vunpack.c.h.b16 %v350
      %v996 = vunpack.c.l.b16 %v351
      %v997 = vunpack.c.h.b16 %v351
      %v998 = vunpack.c.l.b16 %v352
      %v999 = vunpack.c.h.b16 %v352
      %v1000 = vunpack.c.l.b16 %v353
      %v1001 = vunpack.c.h.b16 %v353
      %v1002 = vunpack.c.l.b16 %v354
      %v1003 = vunpack.c.h.b16 %v354
      %v1004 = vunpack.c.l.b16 %v355
      %v1005 = vunpack.c.h.b16 %v355
      %v1006 = vunpack.c.l.b16 %v356
      %v1007 = vunpack.c.h.b16 %v356
      %v1008 = vunpack.c.l.b16 %v357
      %v1009 = vunpack.c.h.b16 %v357
      %v1010 = vunpack.c.l.b16 %v358
      %v1011 = vunpack.c.h.b16 %v358
      %v1012 = vunpack.c.l.b16 %v359
      %v1013 = vunpack.c.h.b16 %v359
      %v1014 = vunpack.c.l.b16 %v360
      %v1015 = vunpack.c.h.b16 %v360
      %v1016 = vunpack.c.l.b16 %v361
      %v1017 = vunpack.c.h.b16 %v361
      %v1018 = vunpack.c.l.b16 %v362
      %v1019 = vunpack.c.h.b16 %v362
      %v1020 = vunpack.c.l.b16 %v363
      %v1021 = vunpack.c.h.b16 %v363
      %v1022 = vunpack.c.l.b16 %v364
      %v1023 = vunpack.c.h.b16 %v364
      %v1024 = vunpack.c.l.b16 %v365
      %v1025 = vunpack.c.h.b16 %v365
      %v1026 = vunpack.c.l.b16 %v366
      %v1027 = vunpack.c.h.b16 %v366
      %v1028 = vunpack.c.l.b16 %v367
      %v1029 = vunpack.c.h.b16 %v367
      %v1030 = vunpack.c.l.b16 %v368
      %v1031 = vunpack.c.h.b16 %v368
      %v1032 = vunpack.c.l.b16 %v369
      %v1033 = vunpack.c.h.b16 %v369
      %v1034 = vunpack.c.l.b16 %v370
      %v1035 = vunpack.c.h.b16 %v370
      %v1036 = vunpack.c.l.b16 %v371
      %v1037 = vunpack.c.h.b16 %v371
      %v1038 = vunpack.c.l.b16 %v372
      %v1039 = vunpack.c.h.b16 %v372
      %v1040 = vunpack.c.l.b16 %v373
      %v1041 = vunpack.c.h.b16 %v373
      %v1042 = vunpack.c.l.b16 %v374
      %v1043 = vunpack.c.h.b16 %v374
      %v1044 = vunpack.c.l.b16 %v375
      %v1045 = vunpack.c.h.b16 %v375
      %v1046 = vunpack.c.l.b16 %v376
      %v1047 = vunpack.c.h.b16 %v376
      %v1048 = vunpack.c.l.b16 %v377
      %v1049 = vunpack.c.h.b16 %v377
      %v1050 = vunpack.c.l.b16 %v378
      %v1051 = vunpack.c.h.b16 %v378
      %v1052 = vunpack.c.l.b16 %v379
      %v1053 = vunpack.c.h.b16 %v379
      %v1054 = vunpack.c.l.b16 %v380
      %v1055 = vunpack.c.h.b16 %v380
      %v1056 = vunpack.c.l.b16 %v381
      %v1057 = vunpack.c.h.b16 %v381
      %v1058 = vunpack.c.l.b16 %v382
      %v1059 = vunpack.c.h.b16 %v382
      %v1060 = vunpack.c.l.b16 %v383
      %v1061 = vunpack.c.h.b16 %v383
      %v1062 = vunpack.c.l.b16 %v384
      %v1063 = vunpack.c.h.b16 %v384
      %v1064 = vunpack.c.l.b16 %v385
      %v1065 = vunpack.c.h.b16 %v385
      %v1066 = vunpack.c.l.b16 %v386
      %v1067 = vunpack.c.h.b16 %v386
      %v1068 = vunpack.c.l.b16 %v387
      %v1069 = vunpack.c.h.b16 %v387
      %v1070 = vunpack.c.l.b16 %v388
      %v1071 = vunpack.c.h.b16 %v388
      %v1072 = vunpack.c.l.b16 %v389
      %v1073 = vunpack.c.h.b16 %v389
      %v1074 = vunpack.c.l.b16 %v390
      %v1075 = vunpack.c.h.b16 %v390
      %v1076 = vunpack.c.l.b16 %v391
      %v1077 = vunpack.c.h.b16 %v391
      %v1078 = vunpack.c.l.b16 %v392
      %v1079 = vunpack.c.h.b16 %v392
      %v1080 = vunpack.c.l.b16 %v393
      %v1081 = vunpack.c.h.b16 %v393
      %v1082 = vunpack.c.l.b16 %v394
      %v1083 = vunpack.c.h.b16 %v394
      %v1084 = vunpack.c.l.b16 %v395
      %v1085 = vunpack.c.h.b16 %v395
      %v1086 = vunpack.c.l.b16 %v396
      %v1087 = vunpack.c.h.b16 %v396
      %v1088 = vunpack.c.l.b16 %v397
      %v1089 = vunpack.c.h.b16 %v397
      %v1090 = vunpack.c.l.b16 %v398
      %v1091 = vunpack.c.h.b16 %v398
      %v1092 = vunpack.c.l.b16 %v399
      %v1093 = vunpack.c.h.b16 %v399
      %v1094 = vunpack.c.l.b16 %v400
      %v1095 = vunpack.c.h.b16 %v400
      %v1096 = vunpack.c.l.b16 %v401
      %v1097 = vunpack.c.h.b16 %v401
      %v1098 = vunpack.c.l.b16 %v402
      %v1099 = vunpack.c.h.b16 %v402
      %v1100 = vunpack.c.l.b16 %v403
      %v1101 = vunpack.c.h.b16 %v403
      %v1102 = vunpack.c.l.b16 %v404
      %v1103 = vunpack.c.h.b16 %v404
      %v1104 = vunpack.c.l.b16 %v405
      %v1105 = vunpack.c.h.b16 %v405
      %v1106 = vunpack.c.l.b16 %v406
      %v1107 = vunpack.c.h.b16 %v406
      %v1108 = vunpack.c.l.b16 %v407
      %v1109 = vunpack.c.h.b16 %v407
      %v1110 = vunpack.c.l.b16 %v408
      %v1111 = vunpack.c.h.b16 %v408
      %v1112 = vunpack.c.l.b16 %v409
      %v1113 = vunpack.c.h.b16 %v409
      %v1114 = vunpack.c.l.b16 %v410
      %v1115 = vunpack.c.h.b16 %v410
      %v1116 = vunpack.c.l.b16 %v411
      %v1117 = vunpack.c.h.b16 %v411
      %v1118 = vunpack.c.l.b16 %v412
      %v1119 = vunpack.c.h.b16 %v412
      %v1120 = vunpack.c.l.b16 %v413
      %v1121 = vunpack.c.h.b16 %v413
      %v1122 = vunpack.c.l.b16 %v414
      %v1123 = vunpack.c.h.b16 %v414
      %v1124 = vunpack.c.l.b16 %v415
      %v1125 = vunpack.c.h.b16 %v415
      %v1126 = vunpack.c.l.b16 %v416
      %v1127 = vunpack.c.h.b16 %v416
      %v1128 = vunpack.c.l.b16 %v417
      %v1129 = vunpack.c.h.b16 %v417
      %v1130 = vunpack.c.l.b16 %v418
      %v1131 = vunpack.c.h.b16 %v418
      %v1132 = vunpack.c.l.b16 %v419
      %v1133 = vunpack.c.h.b16 %v419
      %v1134 = vunpack.c.l.b16 %v420
      %v1135 = vunpack.c.h.b16 %v420
      %v1136 = vunpack.c.l.b16 %v421
      %v1137 = vunpack.c.h.b16 %v421
      %v1138 = vunpack.c.l.b16 %v422
      %v1139 = vunpack.c.h.b16 %v422
      %v1140 = vunpack.c.l.b16 %v423
      %v1141 = vunpack.c.h.b16 %v423
      %v1142 = vunpack.c.l.b16 %v424
      %v1143 = vunpack.c.h.b16 %v424
      %v1144 = vunpack.c.l.b16 %v425
      %v1145 = vunpack.c.h.b16 %v425
      %v1146 = vunpack.c.l.b16 %v426
      %v1147 = vunpack.c.h.b16 %v426
      %v1148 = vunpack.c.l.b16 %v427
      %v1149 = vunpack.c.h.b16 %v427
      %v1150 = vunpack.c.l.b16 %v428
      %v1151 = vunpack.c.h.b16 %v428
      %v1152 = vunpack.c.l.b16 %v429
      %v1153 = vunpack.c.h.b16 %v429
      %v1154 = vunpack.c.l.b16 %v430
      %v1155 = vunpack.c.h.b16 %v430
      %v1156 = vunpack.c.l.b16 %v431
      %v1157 = vunpack.c.h.b16 %v431
      %v1158 = vunpack.c.l.b16 %v432
      %v1159 = vunpack.c.h.b16 %v432
      %v1160 = vunpack.c.l.b16 %v433
      %v1161 = vunpack.c.h.b16 %v433
      %v1162 = vunpack.c.l.b16 %v434
      %v1163 = vunpack.c.h.b16 %v434
      %v1164 = vunpack.c.l.b16 %v435
      %v1165 = vunpack.c.h.b16 %v435
      %v1166 = vunpack.c.l.b16 %v436
      %v1167 = vunpack.c.h.b16 %v436
      %v1168 = vunpack.c.l.b16 %v437
      %v1169 = vunpack.c.h.b16 %v437
      %v1170 = vunpack.c.l.b16 %v438
      %v1171 = vunpack.c.h.b16 %v438
      %v1172 = vunpack.c.l.b16 %v439
      %v1173 = vunpack.c.h.b16 %v439
      %v1174 = vunpack.c.l.b16 %v440
      %v1175 = vunpack.c.h.b16 %v440
      %v1176 = vunpack.c.l.b16 %v441
      %v1177 = vunpack.c.h.b16 %v441
      %v1178 = vunpack.c.l.b16 %v442
      %v1179 = vunpack.c.h.b16 %v442
      %v1180 = vunpack.c.l.b16 %v443
      %v1181 = vunpack.c.h.b16 %v443
      %v1182 = vunpack.c.l.b16 %v444
      %v1183 = vunpack.c.h.b16 %v444
      %v1184 = vunpack.c.l.b16 %v445
      %v1185 = vunpack.c.h.b16 %v445
      %v1186 = vunpack.c.l.b16 %v446
      %v1187 = vunpack.c.h.b16 %v446
      %v1188 = vunpack.c.l.b16 %v447
      %v1189 = vunpack.c.h.b16 %v447
      %v1190 = vunpack.c.l.b16 %v448
      %v1191 = vunpack.c.h.b16 %v448
      %v1192 = vunpack.c.l.b16 %v449
      %v1193 = vunpack.c.h.b16 %v449
      %v1194 = vunpack.c.l.b16 %v450
      %v1195 = vunpack.c.h.b16 %v450
      %v1196 = vunpack.c.l.b16 %v451
      %v1197 = vunpack.c.h.b16 %v451
      %v1198 = vunpack.c.l.b16 %v452
      %v1199 = vunpack.c.h.b16 %v452
      %v1200 = vunpack.c.l.b16 %v453
      %v1201 = vunpack.c.h.b16 %v453
      %v1202 = vunpack.c.l.b16 %v454
      %v1203 = vunpack.c.h.b16 %v454
      %v1204 = vunpack.c.l.b16 %v455
      %v1205 = vunpack.c.h.b16 %v455
      %v1206 = vunpack.c.l.b16 %v456
      %v1207 = vunpack.c.h.b16 %v456
      %v1208 = vunpack.c.l.b16 %v457
      %v1209 = vunpack.c.h.b16 %v457
      %v1210 = vunpack.c.l.b16 %v458
      %v1211 = vunpack.c.h.b16 %v458
      %v1212 = vunpack.c.l.b16 %v459
      %v1213 = vunpack.c.h.b16 %v459
      %v1214 = vunpack.c.l.b16 %v460
      %v1215 = vunpack.c.h.b16 %v460
      %v1216 = vunpack.c.l.b16 %v461
      %v1217 = vunpack.c.h.b16 %v461
      %v1218 = vunpack.c.l.b16 %v462
      %v1219 = vunpack.c.h.b16 %v462
      %v1220 = vunpack.c.l.b16 %v463
      %v1221 = vunpack.c.h.b16 %v463
      %v1222 = vunpack.c.l.b16 %v464
      %v1223 = vunpack.c.h.b16 %v464
      %v1224 = vunpack.c.l.b16 %v465
      %v1225 = vunpack.c.h.b16 %v465
      %v1226 = vunpack.c.l.b16 %v466
      %v1227 = vunpack.c.h.b16 %v466
      %v1228 = vunpack.c.l.b16 %v467
      %v1229 = vunpack.c.h.b16 %v467
      %v1230 = vunpack.c.l.b16 %v468
      %v1231 = vunpack.c.h.b16 %v468
      %v1232 = vunpack.c.l.b16 %v469
      %v1233 = vunpack.c.h.b16 %v469
      %v1234 = vunpack.c.l.b16 %v470
      %v1235 = vunpack.c.h.b16 %v470
      %v1236 = vunpack.c.l.b16 %v471
      %v1237 = vunpack.c.h.b16 %v471
      %v1238 = vunpack.c.l.b16 %v472
      %v1239 = vunpack.c.h.b16 %v472
      %v1240 = vunpack.c.l.b16 %v473
      %v1241 = vunpack.c.h.b16 %v473
      %v1242 = vunpack.c.l.b16 %v474
      %v1243 = vunpack.c.h.b16 %v474
      %v1244 = vunpack.c.l.b16 %v475
      %v1245 = vunpack.c.h.b16 %v475
      %v1246 = vunpack.c.l.b16 %v476
      %v1247 = vunpack.c.h.b16 %v476
      %v1248 = vunpack.c.l.b16 %v477
      %v1249 = vunpack.c.h.b16 %v477
      %v1250 = vunpack.c.l.b16 %v478
      %v1251 = vunpack.c.h.b16 %v478
      %v1252 = vunpack.c.l.b16 %v479
      %v1253 = vunpack.c.h.b16 %v479
      %v1254 = vunpack.c.l.b16 %v480
      %v1255 = vunpack.c.h.b16 %v480
      %v1256 = vunpack.c.l.b16 %v481
      %v1257 = vunpack.c.h.b16 %v481
      %v1258 = vunpack.c.l.b16 %v482
      %v1259 = vunpack.c.h.b16 %v482
      %v1260 = vunpack.c.l.b16 %v483
      %v1261 = vunpack.c.h.b16 %v483
      %v1262 = vunpack.c.l.b16 %v484
      %v1263 = vunpack.c.h.b16 %v484
      %v1264 = vunpack.c.l.b16 %v485
      %v1265 = vunpack.c.h.b16 %v485
      %v1266 = vunpack.c.l.b16 %v486
      %v1267 = vunpack.c.h.b16 %v486
      %v1268 = vunpack.c.l.b16 %v487
      %v1269 = vunpack.c.h.b16 %v487
      %v1270 = vunpack.c.l.b16 %v488
      %v1271 = vunpack.c.h.b16 %v488
      %v1272 = vunpack.c.l.b16 %v489
      %v1273 = vunpack.c.h.b16 %v489
      %v1274 = vunpack.c.l.b16 %v490
      %v1275 = vunpack.c.h.b16 %v490
      %v1276 = vunpack.c.l.b16 %v491
      %v1277 = vunpack.c.h.b16 %v491
      %v1278 = vunpack.c.l.b16 %v492
      %v1279 = vunpack.c.h.b16 %v492
      %v1280 = vunpack.c.l.b16 %v493
      %v1281 = vunpack.c.h.b16 %v493
      %v1282 = vunpack.c.l.b16 %v494
      %v1283 = vunpack.c.h.b16 %v494
      %v1284 = vunpack.c.l.b16 %v495
      %v1285 = vunpack.c.h.b16 %v495
      %v1286 = vunpack.c.l.b16 %v496
      %v1287 = vunpack.c.h.b16 %v496
      %v1288 = vunpack.c.l.b16 %v497
      %v1289 = vunpack.c.h.b16 %v497
      %v1290 = vunpack.c.l.b16 %v498
      %v1291 = vunpack.c.h.b16 %v498
      %v1292 = vunpack.c.l.b16 %v499
      %v1293 = vunpack.c.h.b16 %v499
      %v1294 = vunpack.c.l.b16 %v500
      %v1295 = vunpack.c.h.b16 %v500
      %v1296 = vunpack.c.l.b16 %v501
      %v1297 = vunpack.c.h.b16 %v501
      %v1298 = vunpack.c.l.b16 %v502
      %v1299 = vunpack.c.h.b16 %v502
      %v1300 = vunpack.c.l.b16 %v503
      %v1301 = vunpack.c.h.b16 %v503
      %v1302 = vunpack.c.l.b16 %v504
      %v1303 = vunpack.c.h.b16 %v504
      %v1304 = vunpack.c.l.b16 %v505
      %v1305 = vunpack.c.h.b16 %v505
      %v1306 = vunpack.c.l.b16 %v506
      %v1307 = vunpack.c.h.b16 %v506
      %v1308 = vunpack.c.l.b16 %v507
      %v1309 = vunpack.c.h.b16 %v507
      %v1310 = vunpack.c.l.b16 %v508
      %v1311 = vunpack.c.h.b16 %v508
      %v1312 = vunpack.c.l.b16 %v509
      %v1313 = vunpack.c.h.b16 %v509
      %v1314 = vunpack.c.l.b16 %v510
      %v1315 = vunpack.c.h.b16 %v510
      %v1316 = vunpack.c.l.b16 %v511
      %v1317 = vunpack.c.h.b16 %v511
      %v1318 = vpack.c.b16 %v814, %v806
      %v1319 = vpack.c.b16 %v815, %v807
      %v1320 = vpack.c.b16 %v816, %v808
      %v1321 = vpack.c.b16 %v817, %v809
      %v1322 = vpack.c.b16 %v818, %v810
      %v1323 = vpack.c.b16 %v819, %v811
      %v1324 = vpack.c.b16 %v820, %v812
      %v1325 = vpack.c.b16 %v821, %v813
      %v1326 = vpack.c.b16 %v830, %v822
      %v1327 = vpack.c.b16 %v831, %v823
      %v1328 = vpack.c.b16 %v832, %v824
      %v1329 = vpack.c.b16 %v833, %v825
      %v1330 = vpack.c.b16 %v834, %v826
      %v1331 = vpack.c.b16 %v835, %v827
      %v1332 = vpack.c.b16 %v836, %v828
      %v1333 = vpack.c.b16 %v837, %v829
      %v1334 = vpack.c.b16 %v846, %v838
      %v1335 = vpack.c.b16 %v847, %v839
      %v1336 = vpack.c.b16 %v848, %v840
      %v1337 = vpack.c.b16 %v849, %v841
      %v1338 = vpack.c.b16 %v850, %v842
      %v1339 = vpack.c.b16 %v851, %v843
      %v1340 = vpack.c.b16 %v852, %v844
      %v1341 = vpack.c.b16 %v853, %v845
      %v1342 = vpack.c.b16 %v862, %v854
      %v1343 = vpack.c.b16 %v863, %v855
      %v1344 = vpack.c.b16 %v864, %v856
      %v1345 = vpack.c.b16 %v865, %v857
      %v1346 = vpack.c.b16 %v866, %v858
      %v1347 = vpack.c.b16 %v867, %v859
      %v1348 = vpack.c.b16 %v868, %v860
      %v1349 = vpack.c.b16 %v869, %v861
      %v1350 = vpack.c.b16 %v878, %v870
      %v1351 = vpack.c.b16 %v879, %v871
      %v1352 = vpack.c.b16 %v880, %v872
      %v1353 = vpack.c.b16 %v881, %v873
      %v1354 = vpack.c.b16 %v882, %v874
      %v1355 = vpack.c.b16 %v883, %v875
      %v1356 = vpack.c.b16 %v884, %v876
      %v1357 = vpack.c.b16 %v885, %v877
      %v1358 = vpack.c.b16 %v894, %v886
      %v1359 = vpack.c.b16 %v895, %v887
      %v1360 = vpack.c.b16 %v896, %v888
      %v1361 = vpack.c.b16 %v897, %v889
      %v1362 = vpack.c.b16 %v898, %v890
      %v1363 = vpack.c.b16 %v899, %v891
      %v1364 = vpack.c.b16 %v900, %v892
      %v1365 = vpack.c.b16 %v901, %v893
      %v1366 = vpack.c.b16 %v910, %v902
      %v1367 = vpack.c.b16 %v911, %v903
      %v1368 = vpack.c.b16 %v912, %v904
      %v1369 = vpack.c.b16 %v913, %v905
      %v1370 = vpack.c.b16 %v914, %v906
      %v1371 = vpack.c.b16 %v915, %v907
      %v1372 = vpack.c.b16 %v916, %v908
      %v1373 = vpack.c.b16 %v917, %v909
      %v1374 = vpack.c.b16 %v926, %v918
      %v1375 = vpack.c.b16 %v927, %v919
      %v1376 = vpack.c.b16 %v928, %v920
      %v1377 = vpack.c.b16 %v929, %v921
      %v1378 = vpack.c.b16 %v930, %v922
      %v1379 = vpack.c.b16 %v931, %v923
      %v1380 = vpack.c.b16 %v932, %v924
      %v1381 = vpack.c.b16 %v933, %v925
      %v1382 = vpack.c.b16 %v942, %v934
      %v1383 = vpack.c.b16 %v943, %v935
      %v1384 = vpack.c.b16 %v944, %v936
      %v1385 = vpack.c.b16 %v945, %v937
      %v1386 = vpack.c.b16 %v946, %v938
      %v1387 = vpack.c.b16 %v947, %v939
      %v1388 = vpack.c.b16 %v948, %v940
      %v1389 = vpack.c.b16 %v949, %v941
      %v1390 = vpack.c.b16 %v958, %v950
      %v1391 = vpack.c.b16 %v959, %v951
      %v1392 = vpack.c.b16 %v960, %v952
      %v1393 = vpack.c.b16 %v961, %v953
      %v1394 = vpack.c.b16 %v962, %v954
      %v1395 = vpack.c.b16 %v963, %v955
      %v1396 = vpack.c.b16 %v964, %v956
      %v1397 = vpack.c.b16 %v965, %v957
      %v1398 = vpack.c.b16 %v974, %v966
      %v1399 = vpack.c.b16 %v975, %v967
      %v1400 = vpack.c.b16 %v976, %v968
      %v1401 = vpack.c.b16 %v977, %v969
      %v1402 = vpack.c.b16 %v978, %v970
      %v1403 = vpack.c.b16 %v979, %v971
      %v1404 = vpack.c.b16 %v980, %v972
      %v1405 = vpack.c.b16 %v981, %v973
      %v1406 = vpack.c.b16 %v990, %v982
      %v1407 = vpack.c.b16 %v991, %v983
      %v1408 = vpack.c.b16 %v992, %v984
      %v1409 = vpack.c.b16 %v993, %v985
      %v1410 = vpack.c.b16 %v994, %v986
      %v1411 = vpack.c.b16 %v995, %v987
      %v1412 = vpack.c.b16 %v996, %v988
      %v1413 = vpack.c.b16 %v997, %v989
      %v1414 = vpack.c.b16 %v1006, %v998
      %v1415 = vpack.c.b16 %v1007, %v999
      %v1416 = vpack.c.b16 %v1008, %v1000
      %v1417 = vpack.c.b16 %v1009, %v1001
      %v1418 = vpack.c.b16 %v1010, %v1002
      %v1419 = vpack.c.b16 %v1011, %v1003
      %v1420 = vpack.c.b16 %v1012, %v1004
      %v1421 = vpack.c.b16 %v1013, %v1005
      %v1422 = vpack.c.b16 %v1022, %v1014
      %v1423 = vpack.c.b16 %v1023, %v1015
      %v1424 = vpack.c.b16 %v1024, %v1016
      %v1425 = vpack.c.b16 %v1025, %v1017
      %v1426 = vpack.c.b16 %v1026, %v1018
      %v1427 = vpack.c.b16 %v1027, %v1019
      %v1428 = vpack.c.b16 %v1028, %v1020
      %v1429 = vpack.c.b16 %v1029, %v1021
      %v1430 = vpack.c.b16 %v1038, %v1030
      %v1431 = vpack.c.b16 %v1039, %v1031
      %v1432 = vpack.c.b16 %v1040, %v1032
      %v1433 = vpack.c.b16 %v1041, %v1033
      %v1434 = vpack.c.b16 %v1042, %v1034
      %v1435 = vpack.c.b16 %v1043, %v1035
      %v1436 = vpack.c.b16 %v1044, %v1036
      %v1437 = vpack.c.b16 %v1045, %v1037
      %v1438 = vpack.c.b16 %v1054, %v1046
      %v1439 = vpack.c.b16 %v1055, %v1047
      %v1440 = vpack.c.b16 %v1056, %v1048
      %v1441 = vpack.c.b16 %v1057, %v1049
      %v1442 = vpack.c.b16 %v1058, %v1050
      %v1443 = vpack.c.b16 %v1059, %v1051
      %v1444 = vpack.c.b16 %v1060, %v1052
      %v1445 = vpack.c.b16 %v1061, %v1053
      %v1446 = vpack.c.b16 %v1070, %v1062
      %v1447 = vpack.c.b16 %v1071, %v1063
      %v1448 = vpack.c.b16 %v1072, %v1064
      %v1449 = vpack.c.b16 %v1073, %v1065
      %v1450 = vpack.c.b16 %v1074, %v1066
      %v1451 = vpack.c.b16 %v1075, %v1067
      %v1452 = vpack.c.b16 %v1076, %v1068
      %v1453 = vpack.c.b16 %v1077, %v1069
      %v1454 = vpack.c.b16 %v1086, %v1078
      %v1455 = vpack.c.b16 %v1087, %v1079
      %v1456 = vpack.c.b16 %v1088, %v1080
      %v1457 = vpack.c.b16 %v1089, %v1081
      %v1458 = vpack.c.b16 %v1090, %v1082
      %v1459 = vpack.c.b16 %v1091, %v1083
      %v1460 = vpack.c.b16 %v1092, %v1084
      %v1461 = vpack.c.b16 %v1093, %v1085
      %v1462 = vpack.c.b16 %v1102, %v1094
      %v1463 = vpack.c.b16 %v1103, %v1095
      %v1464 = vpack.c.b16 %v1104, %v1096
      %v1465 = vpack.c.b16 %v1105, %v1097
      %v1466 = vpack.c.b16 %v1106, %v1098
      %v1467 = vpack.c.b16 %v1107, %v1099
      %v1468 = vpack.c.b16 %v1108, %v1100
      %v1469 = vpack.c.b16 %v1109, %v1101
      %v1470 = vpack.c.b16 %v1118, %v1110
      %v1471 = vpack.c.b16 %v1119, %v1111
      %v1472 = vpack.c.b16 %v1120, %v1112
      %v1473 = vpack.c.b16 %v1121, %v1113
      %v1474 = vpack.c.b16 %v1122, %v1114
      %v1475 = vpack.c.b16 %v1123, %v1115
      %v1476 = vpack.c.b16 %v1124, %v1116
      %v1477 = vpack.c.b16 %v1125, %v1117
      %v1478 = vpack.c.b16 %v1134, %v1126
      %v1479 = vpack.c.b16 %v1135, %v1127
      %v1480 = vpack.c.b16 %v1136, %v1128
      %v1481 = vpack.c.b16 %v1137, %v1129
      %v1482 = vpack.c.b16 %v1138, %v1130
      %v1483 = vpack.c.b16 %v1139, %v1131
      %v1484 = vpack.c.b16 %v1140, %v1132
      %v1485 = vpack.c.b16 %v1141, %v1133
      %v1486 = vpack.c.b16 %v1150, %v1142
      %v1487 = vpack.c.b16 %v1151, %v1143
      %v1488 = vpack.c.b16 %v1152, %v1144
      %v1489 = vpack.c.b16 %v1153, %v1145
      %v1490 = vpack.c.b16 %v1154, %v1146
      %v1491 = vpack.c.b16 %v1155, %v1147
      %v1492 = vpack.c.b16 %v1156, %v1148
      %v1493 = vpack.c.b16 %v1157, %v1149
      %v1494 = vpack.c.b16 %v1166, %v1158
      %v1495 = vpack.c.b16 %v1167, %v1159
      %v1496 = vpack.c.b16 %v1168, %v1160
      %v1497 = vpack.c.b16 %v1169, %v1161
      %v1498 = vpack.c.b16 %v1170, %v1162
      %v1499 = vpack.c.b16 %v1171, %v1163
      %v1500 = vpack.c.b16 %v1172, %v1164
      %v1501 = vpack.c.b16 %v1173, %v1165
      %v1502 = vpack.c.b16 %v1182, %v1174
      %v1503 = vpack.c.b16 %v1183, %v1175
      %v1504 = vpack.c.b16 %v1184, %v1176
      %v1505 = vpack.c.b16 %v1185, %v1177
      %v1506 = vpack.c.b16 %v1186, %v1178
      %v1507 = vpack.c.b16 %v1187, %v1179
      %v1508 = vpack.c.b16 %v1188, %v1180
      %v1509 = vpack.c.b16 %v1189, %v1181
      %v1510 = vpack.c.b16 %v1198, %v1190
      %v1511 = vpack.c.b16 %v1199, %v1191
      %v1512 = vpack.c.b16 %v1200, %v1192
      %v1513 = vpack.c.b16 %v1201, %v1193
      %v1514 = vpack.c.b16 %v1202, %v1194
      %v1515 = vpack.c.b16 %v1203, %v1195
      %v1516 = vpack.c.b16 %v1204, %v1196
      %v1517 = vpack.c.b16 %v1205, %v1197
      %v1518 = vpack.c.b16 %v1214, %v1206
      %v1519 = vpack.c.b16 %v1215, %v1207
      %v1520 = vpack.c.b16 %v1216, %v1208
      %v1521 = vpack.c.b16 %v1217, %v1209
      %v1522 = vpack.c.b16 %v1218, %v1210
      %v1523 = vpack.c.b16 %v1219, %v1211
      %v1524 = vpack.c.b16 %v1220, %v1212
      %v1525 = vpack.c.b16 %v1221, %v1213
      %v1526 = vpack.c.b16 %v1230, %v1222
      %v1527 = vpack.c.b16 %v1231, %v1223
      %v1528 = vpack.c.b16 %v1232, %v1224
      %v1529 = vpack.c.b16 %v1233, %v1225
      %v1530 = vpack.c.b16 %v1234, %v1226
      %v1531 = vpack.c.b16 %v1235, %v1227
      %v1532 = vpack.c.b16 %v1236, %v1228
      %v1533 = vpack.c.b16 %v1237, %v1229
      %v1534 = vpack.c.b16 %v1246, %v1238
      %v1535 = vpack.c.b16 %v1247, %v1239
      %v1536 = vpack.c.b16 %v1248, %v1240
      %v1537 = vpack.c.b16 %v1249, %v1241
      %v1538 = vpack.c.b16 %v1250, %v1242
      %v1539 = vpack.c.b16 %v1251, %v1243
      %v1540 = vpack.c.b16 %v1252, %v1244
      %v1541 = vpack.c.b16 %v1253, %v1245
      %v1542 = vpack.c.b16 %v1262, %v1254
      %v1543 = vpack.c.b16 %v1263, %v1255
      %v1544 = vpack.c.b16 %v1264, %v1256
      %v1545 = vpack.c.b16 %v1265, %v1257
      %v1546 = vpack.c.b16 %v1266, %v1258
      %v1547 = vpack.c.b16 %v1267, %v1259
      %v1548 = vpack.c.b16 %v1268, %v1260
      %v1549 = vpack.c.b16 %v1269, %v1261
      %v1550 = vpack.c.b16 %v1278, %v1270
      %v1551 = vpack.c.b16 %v1279, %v1271
      %v1552 = vpack.c.b16 %v1280, %v1272
      %v1553 = vpack.c.b16 %v1281, %v1273
      %v1554 = vpack.c.b16 %v1282, %v1274
      %v1555 = vpack.c.b16 %v1283, %v1275
      %v1556 = vpack.c.b16 %v1284, %v1276
      %v1557 = vpack.c.b16 %v1285, %v1277
      %v1558 = vpack.c.b16 %v1294, %v1286
      %v1559 = vpack.c.b16 %v1295, %v1287
      %v1560 = vpack.c.b16 %v1296, %v1288
      %v1561 = vpack.c.b16 %v1297, %v1289
      %v1562 = vpack.c.b16 %v1298, %v1290
      %v1563 = vpack.c.b16 %v1299, %v1291
      %v1564 = vpack.c.b16 %v1300, %v1292
      %v1565 = vpack.c.b16 %v1301, %v1293
      %v1566 = vpack.c.b16 %v1310, %v1302
      %v1567 = vpack.c.b16 %v1311, %v1303
      %v1568 = vpack.c.b16 %v1312, %v1304
      %v1569 = vpack.c.b16 %v1313, %v1305
      %v1570 = vpack.c.b16 %v1314, %v1306
      %v1571 = vpack.c.b16 %v1315, %v1307
      %v1572 = vpack.c.b16 %v1316, %v1308
      %v1573 = vpack.c.b16 %v1317, %v1309
      %1830 = vmatpush.bf16.msra.mxu0 %v1374
      %1831 = vmatpush.bf16.msra.mxu0 %v1366
      %1832 = vmatpush.bf16.msra.mxu0 %v1358
      %1833 = vmatpush.bf16.msra.mxu0 %v1350
      %1834 = vmatpush.bf16.msra.mxu0 %v1342
      %1835 = vmatpush.bf16.msra.mxu0 %v1334
      %1836 = vmatpush.bf16.msra.mxu0 %v1326
      %1837 = vmatpush.bf16.msra.mxu0 %v1318
      %1838 = vmatmul.bf16.gmra.mxu0 %v542
      %v1839 = vpop.f32.mrf.mxu0
      %v1840 = vadd.f32 %v514, %v1839
      %v1841 = vpop.f32.mrf.mxu0
      %v1842 = vadd.f32 %v514, %v1841
      %1843 = vdwg.mxu0
      %1844 = vmatpush.bf16.msra.mxu0 %v1438
      %1845 = vmatpush.bf16.msra.mxu0 %v1430
      %1846 = vmatpush.bf16.msra.mxu0 %v1422
      %1847 = vmatpush.bf16.msra.mxu0 %v1414
      %1848 = vmatpush.bf16.msra.mxu0 %v1406
      %1849 = vmatpush.bf16.msra.mxu0 %v1398
      %1850 = vmatpush.bf16.msra.mxu0 %v1390
      %1851 = vmatpush.bf16.msra.mxu0 %v1382
      %1852 = vmatmul.bf16.gmra.mxu0 %v543
      %v1853 = vpop.f32.mrf.mxu0
      %v1854 = vadd.f32 %v1840, %v1853
      %v1855 = vpop.f32.mrf.mxu0
      %v1856 = vadd.f32 %v1842, %v1855
      %1857 = vdwg.mxu0
      %1858 = vmatpush.bf16.msra.mxu0 %v1502
      %1859 = vmatpush.bf16.msra.mxu0 %v1494
      %1860 = vmatpush.bf16.msra.mxu0 %v1486
      %1861 = vmatpush.bf16.msra.mxu0 %v1478
      %1862 = vmatpush.bf16.msra.mxu0 %v1470
      %1863 = vmatpush.bf16.msra.mxu0 %v1462
      %1864 = vmatpush.bf16.msra.mxu0 %v1454
      %1865 = vmatpush.bf16.msra.mxu0 %v1446
      %1866 = vmatmul.bf16.gmra.mxu0 %v544
      %v1867 = vpop.f32.mrf.mxu0
      %v1868 = vadd.f32 %v1854, %v1867
      %v1869 = vpop.f32.mrf.mxu0
      %v1870 = vadd.f32 %v1856, %v1869
      %1871 = vdwg.mxu0
      %1872 = vmatpush.bf16.msra.mxu0 %v1566
      %1873 = vmatpush.bf16.msra.mxu0 %v1558
      %1874 = vmatpush.bf16.msra.mxu0 %v1550
      %1875 = vmatpush.bf16.msra.mxu0 %v1542
      %1876 = vmatpush.bf16.msra.mxu0 %v1534
      %1877 = vmatpush.bf16.msra.mxu0 %v1526
      %1878 = vmatpush.bf16.msra.mxu0 %v1518
      %1879 = vmatpush.bf16.msra.mxu0 %v1510
      %1880 = vmatmul.bf16.gmra.mxu0 %v545
      %v1881 = vpop.f32.mrf.mxu0
      %v1882 = vadd.f32 %v1868, %v1881
      %v1883 = vpop.f32.mrf.mxu0
      %v1884 = vadd.f32 %v1870, %v1883
      %1885 = vdwg.mxu0
      %1886 = vmatpush.bf16.msra.mxu0 %v1375
      %1887 = vmatpush.bf16.msra.mxu0 %v1367
      %1888 = vmatpush.bf16.msra.mxu0 %v1359
      %1889 = vmatpush.bf16.msra.mxu0 %v1351
      %1890 = vmatpush.bf16.msra.mxu0 %v1343
      %1891 = vmatpush.bf16.msra.mxu0 %v1335
      %1892 = vmatpush.bf16.msra.mxu0 %v1327
      %1893 = vmatpush.bf16.msra.mxu0 %v1319
      %1894 = vmatmul.bf16.gmra.mxu0 %v542
      %v1895 = vpop.f32.mrf.mxu0
      %v1896 = vadd.f32 %v515, %v1895
      %v1897 = vpop.f32.mrf.mxu0
      %v1898 = vadd.f32 %v515, %v1897
      %1899 = vdwg.mxu0
      %1900 = vmatpush.bf16.msra.mxu0 %v1439
      %1901 = vmatpush.bf16.msra.mxu0 %v1431
      %1902 = vmatpush.bf16.msra.mxu0 %v1423
      %1903 = vmatpush.bf16.msra.mxu0 %v1415
      %1904 = vmatpush.bf16.msra.mxu0 %v1407
      %1905 = vmatpush.bf16.msra.mxu0 %v1399
      %1906 = vmatpush.bf16.msra.mxu0 %v1391
      %1907 = vmatpush.bf16.msra.mxu0 %v1383
      %1908 = vmatmul.bf16.gmra.mxu0 %v543
      %v1909 = vpop.f32.mrf.mxu0
      %v1910 = vadd.f32 %v1896, %v1909
      %v1911 = vpop.f32.mrf.mxu0
      %v1912 = vadd.f32 %v1898, %v1911
      %1913 = vdwg.mxu0
      %1914 = vmatpush.bf16.msra.mxu0 %v1503
      %1915 = vmatpush.bf16.msra.mxu0 %v1495
      %1916 = vmatpush.bf16.msra.mxu0 %v1487
      %1917 = vmatpush.bf16.msra.mxu0 %v1479
      %1918 = vmatpush.bf16.msra.mxu0 %v1471
      %1919 = vmatpush.bf16.msra.mxu0 %v1463
      %1920 = vmatpush.bf16.msra.mxu0 %v1455
      %1921 = vmatpush.bf16.msra.mxu0 %v1447
      %1922 = vmatmul.bf16.gmra.mxu0 %v544
      %v1923 = vpop.f32.mrf.mxu0
      %v1924 = vadd.f32 %v1910, %v1923
      %v1925 = vpop.f32.mrf.mxu0
      %v1926 = vadd.f32 %v1912, %v1925
      %1927 = vdwg.mxu0
      %1928 = vmatpush.bf16.msra.mxu0 %v1567
      %1929 = vmatpush.bf16.msra.mxu0 %v1559
      %1930 = vmatpush.bf16.msra.mxu0 %v1551
      %1931 = vmatpush.bf16.msra.mxu0 %v1543
      %1932 = vmatpush.bf16.msra.mxu0 %v1535
      %1933 = vmatpush.bf16.msra.mxu0 %v1527
      %1934 = vmatpush.bf16.msra.mxu0 %v1519
      %1935 = vmatpush.bf16.msra.mxu0 %v1511
      %1936 = vmatmul.bf16.gmra.mxu0 %v545
      %v1937 = vpop.f32.mrf.mxu0
      %v1938 = vadd.f32 %v1924, %v1937
      %v1939 = vpop.f32.mrf.mxu0
      %v1940 = vadd.f32 %v1926, %v1939
      %1941 = vdwg.mxu0
      %1942 = vmatpush.bf16.msra.mxu0 %v1376
      %1943 = vmatpush.bf16.msra.mxu0 %v1368
      %1944 = vmatpush.bf16.msra.mxu0 %v1360
      %1945 = vmatpush.bf16.msra.mxu0 %v1352
      %1946 = vmatpush.bf16.msra.mxu0 %v1344
      %1947 = vmatpush.bf16.msra.mxu0 %v1336
      %1948 = vmatpush.bf16.msra.mxu0 %v1328
      %1949 = vmatpush.bf16.msra.mxu0 %v1320
      %1950 = vmatmul.bf16.gmra.mxu0 %v542
      %v1951 = vpop.f32.mrf.mxu0
      %v1952 = vadd.f32 %v516, %v1951
      %v1953 = vpop.f32.mrf.mxu0
      %v1954 = vadd.f32 %v516, %v1953
      %1955 = vdwg.mxu0
      %1956 = vmatpush.bf16.msra.mxu0 %v1440
      %1957 = vmatpush.bf16.msra.mxu0 %v1432
      %1958 = vmatpush.bf16.msra.mxu0 %v1424
      %1959 = vmatpush.bf16.msra.mxu0 %v1416
      %1960 = vmatpush.bf16.msra.mxu0 %v1408
      %1961 = vmatpush.bf16.msra.mxu0 %v1400
      %1962 = vmatpush.bf16.msra.mxu0 %v1392
      %1963 = vmatpush.bf16.msra.mxu0 %v1384
      %1964 = vmatmul.bf16.gmra.mxu0 %v543
      %v1965 = vpop.f32.mrf.mxu0
      %v1966 = vadd.f32 %v1952, %v1965
      %v1967 = vpop.f32.mrf.mxu0
      %v1968 = vadd.f32 %v1954, %v1967
      %1969 = vdwg.mxu0
      %1970 = vmatpush.bf16.msra.mxu0 %v1504
      %1971 = vmatpush.bf16.msra.mxu0 %v1496
      %1972 = vmatpush.bf16.msra.mxu0 %v1488
      %1973 = vmatpush.bf16.msra.mxu0 %v1480
      %1974 = vmatpush.bf16.msra.mxu0 %v1472
      %1975 = vmatpush.bf16.msra.mxu0 %v1464
      %1976 = vmatpush.bf16.msra.mxu0 %v1456
      %1977 = vmatpush.bf16.msra.mxu0 %v1448
      %1978 = vmatmul.bf16.gmra.mxu0 %v544
      %v1979 = vpop.f32.mrf.mxu0
      %v1980 = vadd.f32 %v1966, %v1979
      %v1981 = vpop.f32.mrf.mxu0
      %v1982 = vadd.f32 %v1968, %v1981
      %1983 = vdwg.mxu0
      %1984 = vmatpush.bf16.msra.mxu0 %v1568
      %1985 = vmatpush.bf16.msra.mxu0 %v1560
      %1986 = vmatpush.bf16.msra.mxu0 %v1552
      %1987 = vmatpush.bf16.msra.mxu0 %v1544
      %1988 = vmatpush.bf16.msra.mxu0 %v1536
      %1989 = vmatpush.bf16.msra.mxu0 %v1528
      %1990 = vmatpush.bf16.msra.mxu0 %v1520
      %1991 = vmatpush.bf16.msra.mxu0 %v1512
      %1992 = vmatmul.bf16.gmra.mxu0 %v545
      %v1993 = vpop.f32.mrf.mxu0
      %v1994 = vadd.f32 %v1980, %v1993
      %v1995 = vpop.f32.mrf.mxu0
      %v1996 = vadd.f32 %v1982, %v1995
      %1997 = vdwg.mxu0
      %1998 = vmatpush.bf16.msra.mxu0 %v1377
      %1999 = vmatpush.bf16.msra.mxu0 %v1369
      %2000 = vmatpush.bf16.msra.mxu0 %v1361
      %2001 = vmatpush.bf16.msra.mxu0 %v1353
      %2002 = vmatpush.bf16.msra.mxu0 %v1345
      %2003 = vmatpush.bf16.msra.mxu0 %v1337
      %2004 = vmatpush.bf16.msra.mxu0 %v1329
      %2005 = vmatpush.bf16.msra.mxu0 %v1321
      %2006 = vmatmul.bf16.gmra.mxu0 %v542
      %v2007 = vpop.f32.mrf.mxu0
      %v2008 = vadd.f32 %v517, %v2007
      %v2009 = vpop.f32.mrf.mxu0
      %v2010 = vadd.f32 %v517, %v2009
      %2011 = vdwg.mxu0
      %2012 = vmatpush.bf16.msra.mxu0 %v1441
      %2013 = vmatpush.bf16.msra.mxu0 %v1433
      %2014 = vmatpush.bf16.msra.mxu0 %v1425
      %2015 = vmatpush.bf16.msra.mxu0 %v1417
      %2016 = vmatpush.bf16.msra.mxu0 %v1409
      %2017 = vmatpush.bf16.msra.mxu0 %v1401
      %2018 = vmatpush.bf16.msra.mxu0 %v1393
      %2019 = vmatpush.bf16.msra.mxu0 %v1385
      %2020 = vmatmul.bf16.gmra.mxu0 %v543
      %v2021 = vpop.f32.mrf.mxu0
      %v2022 = vadd.f32 %v2008, %v2021
      %v2023 = vpop.f32.mrf.mxu0
      %v2024 = vadd.f32 %v2010, %v2023
      %2025 = vdwg.mxu0
      %2026 = vmatpush.bf16.msra.mxu0 %v1505
      %2027 = vmatpush.bf16.msra.mxu0 %v1497
      %2028 = vmatpush.bf16.msra.mxu0 %v1489
      %2029 = vmatpush.bf16.msra.mxu0 %v1481
      %2030 = vmatpush.bf16.msra.mxu0 %v1473
      %2031 = vmatpush.bf16.msra.mxu0 %v1465
      %2032 = vmatpush.bf16.msra.mxu0 %v1457
      %2033 = vmatpush.bf16.msra.mxu0 %v1449
      %2034 = vmatmul.bf16.gmra.mxu0 %v544
      %v2035 = vpop.f32.mrf.mxu0
      %v2036 = vadd.f32 %v2022, %v2035
      %v2037 = vpop.f32.mrf.mxu0
      %v2038 = vadd.f32 %v2024, %v2037
      %2039 = vdwg.mxu0
      %2040 = vmatpush.bf16.msra.mxu0 %v1569
      %2041 = vmatpush.bf16.msra.mxu0 %v1561
      %2042 = vmatpush.bf16.msra.mxu0 %v1553
      %2043 = vmatpush.bf16.msra.mxu0 %v1545
      %2044 = vmatpush.bf16.msra.mxu0 %v1537
      %2045 = vmatpush.bf16.msra.mxu0 %v1529
      %2046 = vmatpush.bf16.msra.mxu0 %v1521
      %2047 = vmatpush.bf16.msra.mxu0 %v1513
      %2048 = vmatmul.bf16.gmra.mxu0 %v545
      %v2049 = vpop.f32.mrf.mxu0
      %v2050 = vadd.f32 %v2036, %v2049
      %v2051 = vpop.f32.mrf.mxu0
      %v2052 = vadd.f32 %v2038, %v2051
      %2053 = vdwg.mxu0
      %2054 = vmatpush.bf16.msra.mxu0 %v1378
      %2055 = vmatpush.bf16.msra.mxu0 %v1370
      %2056 = vmatpush.bf16.msra.mxu0 %v1362
      %2057 = vmatpush.bf16.msra.mxu0 %v1354
      %2058 = vmatpush.bf16.msra.mxu0 %v1346
      %2059 = vmatpush.bf16.msra.mxu0 %v1338
      %2060 = vmatpush.bf16.msra.mxu0 %v1330
      %2061 = vmatpush.bf16.msra.mxu0 %v1322
      %2062 = vmatmul.bf16.gmra.mxu0 %v542
      %v2063 = vpop.f32.mrf.mxu0
      %v2064 = vadd.f32 %v518, %v2063
      %v2065 = vpop.f32.mrf.mxu0
      %v2066 = vadd.f32 %v518, %v2065
      %2067 = vdwg.mxu0
      %2068 = vmatpush.bf16.msra.mxu0 %v1442
      %2069 = vmatpush.bf16.msra.mxu0 %v1434
      %2070 = vmatpush.bf16.msra.mxu0 %v1426
      %2071 = vmatpush.bf16.msra.mxu0 %v1418
      %2072 = vmatpush.bf16.msra.mxu0 %v1410
      %2073 = vmatpush.bf16.msra.mxu0 %v1402
      %2074 = vmatpush.bf16.msra.mxu0 %v1394
      %2075 = vmatpush.bf16.msra.mxu0 %v1386
      %2076 = vmatmul.bf16.gmra.mxu0 %v543
      %v2077 = vpop.f32.mrf.mxu0
      %v2078 = vadd.f32 %v2064, %v2077
      %v2079 = vpop.f32.mrf.mxu0
      %v2080 = vadd.f32 %v2066, %v2079
      %2081 = vdwg.mxu0
      %2082 = vmatpush.bf16.msra.mxu0 %v1506
      %2083 = vmatpush.bf16.msra.mxu0 %v1498
      %2084 = vmatpush.bf16.msra.mxu0 %v1490
      %2085 = vmatpush.bf16.msra.mxu0 %v1482
      %2086 = vmatpush.bf16.msra.mxu0 %v1474
      %2087 = vmatpush.bf16.msra.mxu0 %v1466
      %2088 = vmatpush.bf16.msra.mxu0 %v1458
      %2089 = vmatpush.bf16.msra.mxu0 %v1450
      %2090 = vmatmul.bf16.gmra.mxu0 %v544
      %v2091 = vpop.f32.mrf.mxu0
      %v2092 = vadd.f32 %v2078, %v2091
      %v2093 = vpop.f32.mrf.mxu0
      %v2094 = vadd.f32 %v2080, %v2093
      %2095 = vdwg.mxu0
      %2096 = vmatpush.bf16.msra.mxu0 %v1570
      %2097 = vmatpush.bf16.msra.mxu0 %v1562
      %2098 = vmatpush.bf16.msra.mxu0 %v1554
      %2099 = vmatpush.bf16.msra.mxu0 %v1546
      %2100 = vmatpush.bf16.msra.mxu0 %v1538
      %2101 = vmatpush.bf16.msra.mxu0 %v1530
      %2102 = vmatpush.bf16.msra.mxu0 %v1522
      %2103 = vmatpush.bf16.msra.mxu0 %v1514
      %2104 = vmatmul.bf16.gmra.mxu0 %v545
      %v2105 = vpop.f32.mrf.mxu0
      %v2106 = vadd.f32 %v2092, %v2105
      %v2107 = vpop.f32.mrf.mxu0
      %v2108 = vadd.f32 %v2094, %v2107
      %2109 = vdwg.mxu0
      %2110 = vmatpush.bf16.msra.mxu0 %v1379
      %2111 = vmatpush.bf16.msra.mxu0 %v1371
      %2112 = vmatpush.bf16.msra.mxu0 %v1363
      %2113 = vmatpush.bf16.msra.mxu0 %v1355
      %2114 = vmatpush.bf16.msra.mxu0 %v1347
      %2115 = vmatpush.bf16.msra.mxu0 %v1339
      %2116 = vmatpush.bf16.msra.mxu0 %v1331
      %2117 = vmatpush.bf16.msra.mxu0 %v1323
      %2118 = vmatmul.bf16.gmra.mxu0 %v542
      %v2119 = vpop.f32.mrf.mxu0
      %v2120 = vadd.f32 %v519, %v2119
      %v2121 = vpop.f32.mrf.mxu0
      %v2122 = vadd.f32 %v519, %v2121
      %2123 = vdwg.mxu0
      %2124 = vmatpush.bf16.msra.mxu0 %v1443
      %2125 = vmatpush.bf16.msra.mxu0 %v1435
      %2126 = vmatpush.bf16.msra.mxu0 %v1427
      %2127 = vmatpush.bf16.msra.mxu0 %v1419
      %2128 = vmatpush.bf16.msra.mxu0 %v1411
      %2129 = vmatpush.bf16.msra.mxu0 %v1403
      %2130 = vmatpush.bf16.msra.mxu0 %v1395
      %2131 = vmatpush.bf16.msra.mxu0 %v1387
      %2132 = vmatmul.bf16.gmra.mxu0 %v543
      %v2133 = vpop.f32.mrf.mxu0
      %v2134 = vadd.f32 %v2120, %v2133
      %v2135 = vpop.f32.mrf.mxu0
      %v2136 = vadd.f32 %v2122, %v2135
      %2137 = vdwg.mxu0
      %2138 = vmatpush.bf16.msra.mxu0 %v1507
      %2139 = vmatpush.bf16.msra.mxu0 %v1499
      %2140 = vmatpush.bf16.msra.mxu0 %v1491
      %2141 = vmatpush.bf16.msra.mxu0 %v1483
      %2142 = vmatpush.bf16.msra.mxu0 %v1475
      %2143 = vmatpush.bf16.msra.mxu0 %v1467
      %2144 = vmatpush.bf16.msra.mxu0 %v1459
      %2145 = vmatpush.bf16.msra.mxu0 %v1451
      %2146 = vmatmul.bf16.gmra.mxu0 %v544
      %v2147 = vpop.f32.mrf.mxu0
      %v2148 = vadd.f32 %v2134, %v2147
      %v2149 = vpop.f32.mrf.mxu0
      %v2150 = vadd.f32 %v2136, %v2149
      %2151 = vdwg.mxu0
      %2152 = vmatpush.bf16.msra.mxu0 %v1571
      %2153 = vmatpush.bf16.msra.mxu0 %v1563
      %2154 = vmatpush.bf16.msra.mxu0 %v1555
      %2155 = vmatpush.bf16.msra.mxu0 %v1547
      %2156 = vmatpush.bf16.msra.mxu0 %v1539
      %2157 = vmatpush.bf16.msra.mxu0 %v1531
      %2158 = vmatpush.bf16.msra.mxu0 %v1523
      %2159 = vmatpush.bf16.msra.mxu0 %v1515
      %2160 = vmatmul.bf16.gmra.mxu0 %v545
      %v2161 = vpop.f32.mrf.mxu0
      %v2162 = vadd.f32 %v2148, %v2161
      %v2163 = vpop.f32.mrf.mxu0
      %v2164 = vadd.f32 %v2150, %v2163
      %2165 = vdwg.mxu0
      %2166 = vmatpush.bf16.msra.mxu0 %v1380
      %2167 = vmatpush.bf16.msra.mxu0 %v1372
      %2168 = vmatpush.bf16.msra.mxu0 %v1364
      %2169 = vmatpush.bf16.msra.mxu0 %v1356
      %2170 = vmatpush.bf16.msra.mxu0 %v1348
      %2171 = vmatpush.bf16.msra.mxu0 %v1340
      %2172 = vmatpush.bf16.msra.mxu0 %v1332
      %2173 = vmatpush.bf16.msra.mxu0 %v1324
      %2174 = vmatmul.bf16.gmra.mxu0 %v542
      %v2175 = vpop.f32.mrf.mxu0
      %v2176 = vadd.f32 %v520, %v2175
      %v2177 = vpop.f32.mrf.mxu0
      %v2178 = vadd.f32 %v520, %v2177
      %2179 = vdwg.mxu0
      %2180 = vmatpush.bf16.msra.mxu0 %v1444
      %2181 = vmatpush.bf16.msra.mxu0 %v1436
      %2182 = vmatpush.bf16.msra.mxu0 %v1428
      %2183 = vmatpush.bf16.msra.mxu0 %v1420
      %2184 = vmatpush.bf16.msra.mxu0 %v1412
      %2185 = vmatpush.bf16.msra.mxu0 %v1404
      %2186 = vmatpush.bf16.msra.mxu0 %v1396
      %2187 = vmatpush.bf16.msra.mxu0 %v1388
      %2188 = vmatmul.bf16.gmra.mxu0 %v543
      %v2189 = vpop.f32.mrf.mxu0
      %v2190 = vadd.f32 %v2176, %v2189
      %v2191 = vpop.f32.mrf.mxu0
      %v2192 = vadd.f32 %v2178, %v2191
      %2193 = vdwg.mxu0
      %2194 = vmatpush.bf16.msra.mxu0 %v1508
      %2195 = vmatpush.bf16.msra.mxu0 %v1500
      %2196 = vmatpush.bf16.msra.mxu0 %v1492
      %2197 = vmatpush.bf16.msra.mxu0 %v1484
      %2198 = vmatpush.bf16.msra.mxu0 %v1476
      %2199 = vmatpush.bf16.msra.mxu0 %v1468
      %2200 = vmatpush.bf16.msra.mxu0 %v1460
      %2201 = vmatpush.bf16.msra.mxu0 %v1452
      %2202 = vmatmul.bf16.gmra.mxu0 %v544
      %v2203 = vpop.f32.mrf.mxu0
      %v2204 = vadd.f32 %v2190, %v2203
      %v2205 = vpop.f32.mrf.mxu0
      %v2206 = vadd.f32 %v2192, %v2205
      %2207 = vdwg.mxu0
      %2208 = vmatpush.bf16.msra.mxu0 %v1572
      %2209 = vmatpush.bf16.msra.mxu0 %v1564
      %2210 = vmatpush.bf16.msra.mxu0 %v1556
      %2211 = vmatpush.bf16.msra.mxu0 %v1548
      %2212 = vmatpush.bf16.msra.mxu0 %v1540
      %2213 = vmatpush.bf16.msra.mxu0 %v1532
      %2214 = vmatpush.bf16.msra.mxu0 %v1524
      %2215 = vmatpush.bf16.msra.mxu0 %v1516
      %2216 = vmatmul.bf16.gmra.mxu0 %v545
      %v2217 = vpop.f32.mrf.mxu0
      %v2218 = vadd.f32 %v2204, %v2217
      %v2219 = vpop.f32.mrf.mxu0
      %v2220 = vadd.f32 %v2206, %v2219
      %2221 = vdwg.mxu0
      %2222 = vmatpush.bf16.msra.mxu0 %v1381
      %2223 = vmatpush.bf16.msra.mxu0 %v1373
      %2224 = vmatpush.bf16.msra.mxu0 %v1365
      %2225 = vmatpush.bf16.msra.mxu0 %v1357
      %2226 = vmatpush.bf16.msra.mxu0 %v1349
      %2227 = vmatpush.bf16.msra.mxu0 %v1341
      %2228 = vmatpush.bf16.msra.mxu0 %v1333
      %2229 = vmatpush.bf16.msra.mxu0 %v1325
      %2230 = vmatmul.bf16.gmra.mxu0 %v542
      %v2231 = vpop.f32.mrf.mxu0
      %v2232 = vadd.f32 %v521, %v2231
      %v2233 = vpop.f32.mrf.mxu0
      %v2234 = vadd.f32 %v521, %v2233
      %2235 = vdwg.mxu0
      %2236 = vmatpush.bf16.msra.mxu0 %v1445
      %2237 = vmatpush.bf16.msra.mxu0 %v1437
      %2238 = vmatpush.bf16.msra.mxu0 %v1429
      %2239 = vmatpush.bf16.msra.mxu0 %v1421
      %2240 = vmatpush.bf16.msra.mxu0 %v1413
      %2241 = vmatpush.bf16.msra.mxu0 %v1405
      %2242 = vmatpush.bf16.msra.mxu0 %v1397
      %2243 = vmatpush.bf16.msra.mxu0 %v1389
      %2244 = vmatmul.bf16.gmra.mxu0 %v543
      %v2245 = vpop.f32.mrf.mxu0
      %v2246 = vadd.f32 %v2232, %v2245
      %v2247 = vpop.f32.mrf.mxu0
      %v2248 = vadd.f32 %v2234, %v2247
      %2249 = vdwg.mxu0
      %2250 = vmatpush.bf16.msra.mxu0 %v1509
      %2251 = vmatpush.bf16.msra.mxu0 %v1501
      %2252 = vmatpush.bf16.msra.mxu0 %v1493
      %2253 = vmatpush.bf16.msra.mxu0 %v1485
      %2254 = vmatpush.bf16.msra.mxu0 %v1477
      %2255 = vmatpush.bf16.msra.mxu0 %v1469
      %2256 = vmatpush.bf16.msra.mxu0 %v1461
      %2257 = vmatpush.bf16.msra.mxu0 %v1453
      %2258 = vmatmul.bf16.gmra.mxu0 %v544
      %v2259 = vpop.f32.mrf.mxu0
      %v2260 = vadd.f32 %v2246, %v2259
      %v2261 = vpop.f32.mrf.mxu0
      %v2262 = vadd.f32 %v2248, %v2261
      %2263 = vdwg.mxu0
      %2264 = vmatpush.bf16.msra.mxu0 %v1573
      %2265 = vmatpush.bf16.msra.mxu0 %v1565
      %2266 = vmatpush.bf16.msra.mxu0 %v1557
      %2267 = vmatpush.bf16.msra.mxu0 %v1549
      %2268 = vmatpush.bf16.msra.mxu0 %v1541
      %2269 = vmatpush.bf16.msra.mxu0 %v1533
      %2270 = vmatpush.bf16.msra.mxu0 %v1525
      %2271 = vmatpush.bf16.msra.mxu0 %v1517
      %2272 = vmatmul.bf16.gmra.mxu0 %v545
      %v2273 = vpop.f32.mrf.mxu0
      %v2274 = vadd.f32 %v2260, %v2273
      %v2275 = vpop.f32.mrf.mxu0
      %v2276 = vadd.f32 %v2262, %v2275
      %2277 = vdwg.mxu0
      %vm2278 = vcmp.gt.f32.partialorder %v1882, 0.0
      %vm2279 = vcmp.gt.f32.partialorder %v1938, 0.0
      %vm2280 = vcmp.gt.f32.partialorder %v1994, 0.0
      %vm2281 = vcmp.gt.f32.partialorder %v2050, 0.0
      %vm2282 = vcmp.gt.f32.partialorder %v2106, 0.0
      %vm2283 = vcmp.gt.f32.partialorder %v2162, 0.0
      %vm2284 = vcmp.gt.f32.partialorder %v2218, 0.0
      %vm2285 = vcmp.gt.f32.partialorder %v2274, 0.0
      %vm2286 = vcmp.gt.f32.partialorder %v1884, 0.0
      %vm2287 = vcmp.gt.f32.partialorder %v1940, 0.0
      %vm2288 = vcmp.gt.f32.partialorder %v1996, 0.0
      %vm2289 = vcmp.gt.f32.partialorder %v2052, 0.0
      %vm2290 = vcmp.gt.f32.partialorder %v2108, 0.0
      %vm2291 = vcmp.gt.f32.partialorder %v2164, 0.0
      %vm2292 = vcmp.gt.f32.partialorder %v2220, 0.0
      %vm2293 = vcmp.gt.f32.partialorder %v2276, 0.0
      %v2294 = vmul.f32 %v1882, 0.1
      %v2295 = vmul.f32 %v1938, 0.1
      %v2296 = vmul.f32 %v1994, 0.1
      %v2297 = vmul.f32 %v2050, 0.1
      %v2298 = vmul.f32 %v2106, 0.1
      %v2299 = vmul.f32 %v2162, 0.1
      %v2300 = vmul.f32 %v2218, 0.1
      %v2301 = vmul.f32 %v2274, 0.1
      %v2302 = vmul.f32 %v1884, 0.1
      %v2303 = vmul.f32 %v1940, 0.1
      %v2304 = vmul.f32 %v1996, 0.1
      %v2305 = vmul.f32 %v2052, 0.1
      %v2306 = vmul.f32 %v2108, 0.1
      %v2307 = vmul.f32 %v2164, 0.1
      %v2308 = vmul.f32 %v2220, 0.1
      %v2309 = vmul.f32 %v2276, 0.1
      %v2310 = vsel %vm2278, %v1882, %v2294
      %v2311 = vsel %vm2279, %v1938, %v2295
      %v2312 = vsel %vm2280, %v1994, %v2296
      %v2313 = vsel %vm2281, %v2050, %v2297
      %v2314 = vsel %vm2282, %v2106, %v2298
      %v2315 = vsel %vm2283, %v2162, %v2299
      %v2316 = vsel %vm2284, %v2218, %v2300
      %v2317 = vsel %vm2285, %v2274, %v2301
      %v2318 = vsel %vm2286, %v1884, %v2302
      %v2319 = vsel %vm2287, %v1940, %v2303
      %v2320 = vsel %vm2288, %v1996, %v2304
      %v2321 = vsel %vm2289, %v2052, %v2305
      %v2322 = vsel %vm2290, %v2108, %v2306
      %v2323 = vsel %vm2291, %v2164, %v2307
      %v2324 = vsel %vm2292, %v2220, %v2308
      %v2325 = vsel %vm2293, %v2276, %v2309
      %v2326 = vpack.c.bf16 %v2311, %v2310
      %v2327 = vpack.c.bf16 %v2313, %v2312
      %v2328 = vpack.c.bf16 %v2315, %v2314
      %v2329 = vpack.c.bf16 %v2317, %v2316
      %v2330 = vpack.c.bf16 %v2319, %v2318
      %v2331 = vpack.c.bf16 %v2321, %v2320
      %v2332 = vpack.c.bf16 %v2323, %v2322
      %v2333 = vpack.c.bf16 %v2325, %v2324
      %2334 = vst [vmem:[%s250] sm:$0xff] %v2326
      %2335 = vst [vmem:[%s250 + $0x8] sm:$0xff] %v2327
      %2336 = vst [vmem:[%s250 + $0x10] sm:$0xff] %v2328
      %2337 = vst [vmem:[%s250 + $0x18] sm:$0xff] %v2329
      %2338 = vst [vmem:[%s250 + $0x20] sm:$0xff] %v2330
      %2339 = vst [vmem:[%s250 + $0x28] sm:$0xff] %v2331
      %2340 = vst [vmem:[%s250 + $0x30] sm:$0xff] %v2332
      %2341 = vst [vmem:[%s250 + $0x38] sm:$0xff] %v2333
      %s2342 = smul.u32 2, %s19
      %p2343 = scmp.lt.s32.totalorder %s18, 2
      %s2344 = scalar_select %p2343, %s18, 2
      %p2345 = scmp.lt.s32.totalorder %s2342, 1
      %s2346 = scalar_select %p2345, %s2342, 1
      %s2347 = smul.addr %s2346, 8
      %s2348 = smul.addr %s2344, 16
      %s2349 = sadd.s32 %s2347, %s2348
      %s2350 = smul.addr %s2349, 4
      %s2351 = scalar_lea.vmem %s3, %s2350
      // Predicated region
      $region33: #{model_forward.18} parent=31 // pred_check
        %p2352 = pneg %p126
      $region34: #{model_forward.18} parent=31 // pred_check_branch
        %2354 = sbr.rel (%p2352) target = $region36
      $region35: #{model_forward.18} parent=31 // pred_region
        %s2355 = smul.u32 2, %s19
      $region36: #{model_forward.18} parent=31 // pred_fallthru
        _
    $region32: #{model_forward.18} parent=5 // pred_fallthru
      _
    %p2356 = scmp.le.s32.totalorder 2, %s9
    // Predicated region
    $region37: #{model_forward.18} parent=5 // pred_check
      %p2357 = pneg %p2356
    $region38: #{model_forward.18} parent=5 // pred_check_branch
      %2359 = sbr.rel (%p2357) target = $region40
    $region39: #{model_forward.18} parent=5 // pred_region
      %s2360 = ssub.s32 %s9, 2
      // Predicated region
      $region41: #{model_forward.18} parent=39 // pred_check
        %p2361 = pneg %p132
      $region42: #{model_forward.18} parent=39 // pred_check_branch
        %2363 = sbr.rel (%p2361) target = $region44
      $region43: #{model_forward.18} parent=39 // pred_region
        %s2364 = smul.u32 2, %s21
        %p2365 = scmp.lt.s32.totalorder %s20, 2
        %s2366 = scalar_select %p2365, %s20, 2
        %p2367 = scmp.lt.s32.totalorder %s2364, 1
        %s2368 = scalar_select %p2367, %s2364, 1
        %s2369 = smul.addr %s2368, 8
        %s2370 = smul.addr %s2366, 16
        %s2371 = sadd.s32 %s2369, %s2370
        %s2372 = smul.addr %s2371, 4
        %s2373 = scalar_lea.vmem %s3, %s2372
      $region44: #{model_forward.18} parent=39 // pred_fallthru
        _
    $region40: #{model_forward.18} parent=5 // pred_fallthru
      _
  $region6: #{model_forward.18} parent=0 // loop_footer
    %s13 = sadd.s32 1, %s9
  $region7: #{model_forward.18} parent=0 // loop_footer_branch
    %8 = sbr.rel target = $region3
  $region8: #{model_forward.18} parent=0 // loop_exit
    _

// kernel: model_forward.19
$region0: #{model_forward.19}
  #allocation0 [shape = 'u32[]', space=smem, size = 0x4, offset = 0x4, fixed_abs, tag = 'smem constant byte address 0x4 - core index']
  #allocation1 [shape = 'u32[72,128]{1,0:T(1,128)}', space=vmem, size = 0x9000, scoped, tag = 'internal scratch']
  %s0 = inlined_call_operand.vmem [shape: bf16[3,16,1024], index: 0, kind: input, shape index: {}]
  %s1 = inlined_call_operand.vmem [shape: bf16[3,1024,1024], index: 1, kind: input, shape index: {}]
  %s2 = inlined_call_operand.vmem [shape: f32[3,1,1024], index: 2, kind: input, shape index: {}]
  %s3 = inlined_call_operand.vmem [shape: bf16[3,16,1024], index: 3, kind: output, shape index: {}]
  %s4 = sld [smem:[#allocation0]]
  $region45: #{model_forward.19} parent=0
    _
  %s6 = ssub.s32 1, %s4
  %s7 = scalar_select 0, %s6, %s4
  loop: start=0, step=1, limit=5
  $region2: #{model_forward.19} parent=0 // loop_pre_header
    _
  $region3: #{model_forward.19} parent=0 // loop_header
    %s9 = sphi 0, %s13
    %p10 = scmp.ge.s32.totalorder %s9, 5
    %s16 = sphi 0, %s28
    %s17 = sphi 0, %s24
    %s18 = sphi 0, %s16
    %s19 = sphi 0, %s17
    %s20 = sphi 0, %s18
    %s21 = sphi 0, %s19
    %s33 = sphi 0, %s35
    %s36 = sphi 0, %s33
    %s37 = sphi 0, %s36
    %s53 = sphi 0, %s37
    %s59 = sphi 0, %s61
    %s62 = sphi 0, %s59
    %s63 = sphi 0, %s62
    %s79 = sphi 0, %s63
    %s85 = sphi 0, %s87
    %s88 = sphi 0, %s85
    %s89 = sphi 0, %s88
    %s105 = sphi 0, %s89
    %s113 = sphi 0, %s115
    %s116 = sphi 0, %s113
    %s117 = sphi 0, %s116
    %s133 = sphi 0, %s117
  $region4: #{model_forward.19} parent=0 // loop_header_branch
    %12 = sbr.rel (%p10) target = $region8
  $region5: #{model_forward.19} parent=0 // loop_body
    %s14 = ssub.s32 %s9, 1
    %s15 = ssub.s32 %s9, 2
    %s22 = sadd.s32 1, %s17
    %p23 = scmp.ge.s32.totalorder %s22, 1
    %s24 = scalar_select %p23, 0, %s22
    %s25 = sadd.s32 1, %s16
    %s26 = scalar_select %p23, %s25, %s16
    %p27 = scmp.ge.s32.totalorder %s26, 3
    %s28 = scalar_select %p27, 0, %s26
    %s29 = ssub.s32 %s16, %s28
    %s30 = ssub.s32 %s17, %s24
    %s31 = sor.u32 %s29, %s30
    %p32 = scmp.eq.s32.totalorder %s31, 0
    %s34 = sadd.s32 %s33, 1
    %s35 = scalar_select %p32, %s33, %s34
    %p38 = pneg %p32
    %p39 = scmp.eq.s32.totalorder %s9, 2
    %p40 = por %p38, %p39
    %p41 = scmp.ne.s32.totalorder %s33, %s36
    %p42 = scmp.eq.s32.totalorder %s9, 0
    %p43 = por %p41, %p42
    %p44 = scmp.ne.s32.totalorder %s33, %s36
    %p45 = scmp.eq.s32.totalorder %s14, 2
    %p46 = por %p44, %p45
    %p47 = scmp.ne.s32.totalorder %s36, %s37
    %p48 = scmp.eq.s32.totalorder %s14, 0
    %p49 = por %p47, %p48
    %p50 = scmp.ne.s32.totalorder %s36, %s37
    %p51 = scmp.eq.s32.totalorder %s15, 2
    %p52 = por %p50, %p51
    %p54 = scmp.ne.s32.totalorder %s37, %s53
    %p55 = scmp.eq.s32.totalorder %s15, 0
    %p56 = por %p54, %p55
    %s57 = ssub.s32 %s16, %s28
    %p58 = scmp.eq.s32.totalorder %s57, 0
    %s60 = sadd.s32 %s59, 1
    %s61 = scalar_select %p58, %s59, %s60
    %p64 = pneg %p58
    %p65 = scmp.eq.s32.totalorder %s9, 2
    %p66 = por %p64, %p65
    %p67 = scmp.ne.s32.totalorder %s59, %s62
    %p68 = scmp.eq.s32.totalorder %s9, 0
    %p69 = por %p67, %p68
    %p70 = scmp.ne.s32.totalorder %s59, %s62
    %p71 = scmp.eq.s32.totalorder %s14, 2
    %p72 = por %p70, %p71
    %p73 = scmp.ne.s32.totalorder %s62, %s63
    %p74 = scmp.eq.s32.totalorder %s14, 0
    %p75 = por %p73, %p74
    %p76 = scmp.ne.s32.totalorder %s62, %s63
    %p77 = scmp.eq.s32.totalorder %s15, 2
    %p78 = por %p76, %p77
    %p80 = scmp.ne.s32.totalorder %s63, %s79
    %p81 = scmp.eq.s32.totalorder %s15, 0
    %p82 = por %p80, %p81
    %s83 = ssub.s32 %s16, %s28
    %p84 = scmp.eq.s32.totalorder %s83, 0
    %s86 = sadd.s32 %s85, 1
    %s87 = scalar_select %p84, %s85, %s86
    %p90 = pneg %p84
    %p91 = scmp.eq.s32.totalorder %s9, 2
    %p92 = por %p90, %p91
    %p93 = scmp.ne.s32.totalorder %s85, %s88
    %p94 = scmp.eq.s32.totalorder %s9, 0
    %p95 = por %p93, %p94
    %p96 = scmp.ne.s32.totalorder %s85, %s88
    %p97 = scmp.eq.s32.totalorder %s14, 2
    %p98 = por %p96, %p97
    %p99 = scmp.ne.s32.totalorder %s88, %s89
    %p100 = scmp.eq.s32.totalorder %s14, 0
    %p101 = por %p99, %p100
    %p102 = scmp.ne.s32.totalorder %s88, %s89
    %p103 = scmp.eq.s32.totalorder %s15, 2
    %p104 = por %p102, %p103
    %p106 = scmp.ne.s32.totalorder %s89, %s105
    %p107 = scmp.eq.s32.totalorder %s15, 0
    %p108 = por %p106, %p107
    %s109 = ssub.s32 %s16, %s28
    %s110 = ssub.s32 %s17, %s24
    %s111 = sor.u32 %s109, %s110
    %p112 = scmp.eq.s32.totalorder %s111, 0
    %s114 = sadd.s32 %s113, 1
    %s115 = scalar_select %p112, %s113, %s114
    %p118 = pneg %p112
    %p119 = scmp.eq.s32.totalorder %s9, 2
    %p120 = por %p118, %p119
    %p121 = scmp.ne.s32.totalorder %s113, %s116
    %p122 = scmp.eq.s32.totalorder %s9, 0
    %p123 = por %p121, %p122
    %p124 = scmp.ne.s32.totalorder %s113, %s116
    %p125 = scmp.eq.s32.totalorder %s14, 2
    %p126 = por %p124, %p125
    %p127 = scmp.ne.s32.totalorder %s116, %s117
    %p128 = scmp.eq.s32.totalorder %s14, 0
    %p129 = por %p127, %p128
    %p130 = scmp.ne.s32.totalorder %s116, %s117
    %p131 = scmp.eq.s32.totalorder %s15, 2
    %p132 = por %p130, %p131
    %p134 = scmp.ne.s32.totalorder %s117, %s133
    %p135 = scmp.eq.s32.totalorder %s15, 0
    %p136 = por %p134, %p135
    %p137 = scmp.le.s32.totalorder 1, %s9
    %p138 = scmp.lt.s32.totalorder %s9, 4
    %p139 = pnand %p137, %p138
    %p140 = pneg %p139
    // Predicated region
    $region9: #{model_forward.19} parent=5 // pred_check
      _
    $region10: #{model_forward.19} parent=5 // pred_check_branch
      %142 = sbr.rel (%p139) target = $region12
    $region11: #{model_forward.19} parent=5 // pred_region
      %s143 = ssub.s32 %s9, 1
    $region12: #{model_forward.19} parent=5 // pred_fallthru
      _
    %p144 = scmp.lt.s32.totalorder %s9, 3
    // Predicated region
    $region13: #{model_forward.19} parent=5 // pred_check
      %p145 = pneg %p144
    $region14: #{model_forward.19} parent=5 // pred_check_branch
      %147 = sbr.rel (%p145) target = $region16
    $region15: #{model_forward.19} parent=5 // pred_region
      // Predicated region
      $region17: #{model_forward.19} parent=15 // pred_check
        %p148 = pneg %p43
      $region18: #{model_forward.19} parent=15 // pred_check_branch
        %150 = sbr.rel (%p148) target = $region20
      $region19: #{model_forward.19} parent=15 // pred_region
        %s151 = smul.u32 2, %s17
        %p152 = scmp.lt.s32.totalorder %s16, 2
        %s153 = scalar_select %p152, %s16, 2
        %p154 = scmp.lt.s32.totalorder %s151, 1
        %s155 = scalar_select %p154, %s151, 1
        %s156 = smul.addr %s155, 8
        %s157 = smul.addr %s153, 16
        %s158 = sadd.s32 %s156, %s157
        %s159 = smul.addr %s158, 4
        %s160 = scalar_lea.vmem %s0, %s159
        %s161 = smul.u32 2, %s17
      $region20: #{model_forward.19} parent=15 // pred_fallthru
        _
      // Predicated region
      $region21: #{model_forward.19} parent=15 // pred_check
        %p162 = pneg %p69
      $region22: #{model_forward.19} parent=15 // pred_check_branch
        %164 = sbr.rel (%p162) target = $region24
      $region23: #{model_forward.19} parent=15 // pred_region
        %p165 = scmp.lt.s32.totalorder %s16, 2
        %s166 = scalar_select %p165, %s16, 2
        %s167 = smul.addr %s166, 1024
        %s168 = smul.addr %s167, 4
        %s169 = scalar_lea.vmem %s1, %s168
      $region24: #{model_forward.19} parent=15 // pred_fallthru
        _
      // Predicated region
      $region25: #{model_forward.19} parent=15 // pred_check
        %p170 = pneg %p95
      $region26: #{model_forward.19} parent=15 // pred_check_branch
        %172 = sbr.rel (%p170) target = $region28
      $region27: #{model_forward.19} parent=15 // pred_region
        %p173 = scmp.lt.s32.totalorder %s16, 2
        %s174 = scalar_select %p173, %s16, 2
        %s175 = smul.addr %s174, 8
        %s176 = scalar_lea.vmem %s2, %s175
      $region28: #{model_forward.19} parent=15 // pred_fallthru
        _
    $region16: #{model_forward.19} parent=5 // pred_fallthru
      _
    %p177 = scmp.le.s32.totalorder 1, %s9
    %p178 = scmp.lt.s32.totalorder %s9, 4
    %p179 = pnand %p177, %p178
    %p180 = pneg %p179
    // Predicated region
    $region29: #{model_forward.19} parent=5 // pred_check
      _
    $region30: #{model_forward.19} parent=5 // pred_check_branch
      %182 = sbr.rel (%p179) target = $region32
    $region31: #{model_forward.19} parent=5 // pred_region
      %s183 = ssub.s32 %s9, 1
      %s184 = smul.u32 2, %s19
      %p185 = scmp.lt.s32.totalorder %s18, 2
      %s186 = scalar_select %p185, %s18, 2
      %p187 = scmp.lt.s32.totalorder %s184, 1
      %s188 = scalar_select %p187, %s184, 1
      %s189 = smul.addr %s188, 8
      %s190 = smul.addr %s186, 16
      %s191 = sadd.s32 %s189, %s190
      %s192 = smul.addr %s191, 4
      %s193 = scalar_lea.vmem %s0, %s192
      %p194 = pneg %p49
      %p195 = pneg %p46
      %p196 = scmp.lt.s32.totalorder %s18, 2
      %s197 = scalar_select %p196, %s18, 2
      %s198 = smul.addr %s197, 1024
      %s199 = smul.addr %s198, 4
      %s200 = scalar_lea.vmem %s1, %s199
      %p201 = pneg %p75
      %p202 = pneg %p72
      %p203 = scmp.lt.s32.totalorder %s18, 2
      %s204 = scalar_select %p203, %s18, 2
      %s205 = smul.addr %s204, 8
      %s206 = scalar_lea.vmem %s2, %s205
      %p207 = pneg %p101
      %p208 = pneg %p98
      %p209 = pneg %p129
      %p210 = pneg %p126
      %s211 = smul.u32 2, %s19
      %p212 = scmp.lt.s32.totalorder %s18, 2
      %s213 = scalar_select %p212, %s18, 2
      %p214 = scmp.lt.s32.totalorder %s211, 1
      %s215 = scalar_select %p214, %s211, 1
      %s216 = smul.addr %s215, 8
      %s217 = smul.addr %s213, 16
      %s218 = sadd.s32 %s216, %s217
      %s219 = smul.addr %s218, 4
      %s220 = scalar_lea.vmem %s3, %s219
      %s221 = smul.u32 2, %s19
      %p222 = scmp.lt.s32.totalorder %s18, 2
      %s223 = scalar_select %p222, %s18, 2
      %p224 = scmp.lt.s32.totalorder %s221, 1
      %s225 = scalar_select %p224, %s221, 1
      %s226 = smul.addr %s225, 8
      %s227 = smul.addr %s223, 16
      %s228 = sadd.s32 %s226, %s227
      %s229 = smul.addr %s228, 4
      %s230 = scalar_lea.vmem %s0, %s229
      %s231 = smul.u32 2, %s19
      %p232 = scmp.lt.s32.totalorder %s18, 2
      %s233 = scalar_select %p232, %s18, 2
      %s234 = smul.addr %s233, 1024
      %s235 = smul.addr %s234, 4
      %s236 = scalar_lea.vmem %s1, %s235
      %p237 = scmp.lt.s32.totalorder %s18, 2
      %s238 = scalar_select %p237, %s18, 2
      %s239 = smul.addr %s238, 8
      %s240 = scalar_lea.vmem %s2, %s239
      %s241 = smul.u32 2, %s19
      %p242 = scmp.lt.s32.totalorder %s18, 2
      %s243 = scalar_select %p242, %s18, 2
      %p244 = scmp.lt.s32.totalorder %s241, 1
      %s245 = scalar_select %p244, %s241, 1
      %s246 = smul.addr %s245, 8
      %s247 = smul.addr %s243, 16
      %s248 = sadd.s32 %s246, %s247
      %s249 = smul.addr %s248, 4
      %s250 = scalar_lea.vmem %s3, %s249
      %s251 = smul.u32 2, %s19
      %v252 = vld [vmem:[%s230] sm:$0xff]
      %v253 = vld [vmem:[%s230 + $0x8] sm:$0xff]
      %v254 = vld [vmem:[%s230 + $0x10] sm:$0xff]
      %v255 = vld [vmem:[%s230 + $0x18] sm:$0xff]
      %v256 = vld [vmem:[%s230 + $0x20] sm:$0xff]
      %v257 = vld [vmem:[%s230 + $0x28] sm:$0xff]
      %v258 = vld [vmem:[%s230 + $0x30] sm:$0xff]
      %v259 = vld [vmem:[%s230 + $0x38] sm:$0xff]
      %v260 = vld [vmem:[%s236] sm:$0xff]
      %v261 = vld [vmem:[%s236 + $0x8] sm:$0xff]
      %v262 = vld [vmem:[%s236 + $0x10] sm:$0xff]
      %v263 = vld [vmem:[%s236 + $0x18] sm:$0xff]
      %v264 = vld [vmem:[%s236 + $0x20] sm:$0xff]
      %v265 = vld [vmem:[%s236 + $0x28] sm:$0xff]
      %v266 = vld [vmem:[%s236 + $0x30] sm:$0xff]
      %v267 = vld [vmem:[%s236 + $0x38] sm:$0xff]
      %v268 = vld [vmem:[%s236 + $0x40] sm:$0xff]
      %v269 = vld [vmem:[%s236 + $0x48] sm:$0xff]
      %v270 = vld [vmem:[%s236 + $0x50] sm:$0xff]
      %v271 = vld [vmem:[%s236 + $0x58] sm:$0xff]
      %v272 = vld [vmem:[%s236 + $0x60] sm:$0xff]
      %v273 = vld [vmem:[%s236 + $0x68] sm:$0xff]
      %v274 = vld [vmem:[%s236 + $0x70] sm:$0xff]
      %v275 = vld [vmem:[%s236 + $0x78] sm:$0xff]
      %v276 = vld [vmem:[%s236 + $0x80] sm:$0xff]
      %v277 = vld [vmem:[%s236 + $0x88] sm:$0xff]
      %v278 = vld [vmem:[%s236 + $0x90] sm:$0xff]
      %v279 = vld [vmem:[%s236 + $0x98] sm:$0xff]
      %v280 = vld [vmem:[%s236 + $0xa0] sm:$0xff]
      %v281 = vld [vmem:[%s236 + $0xa8] sm:$0xff]
      %v282 = vld [vmem:[%s236 + $0xb0] sm:$0xff]
      %v283 = vld [vmem:[%s236 + $0xb8] sm:$0xff]
      %v284 = vld [vmem:[%s236 + $0xc0] sm:$0xff]
      %v285 = vld [vmem:[%s236 + $0xc8] sm:$0xff]
      %v286 = vld [vmem:[%s236 + $0xd0] sm:$0xff]
      %v287 = vld [vmem:[%s236 + $0xd8] sm:$0xff]
      %v288 = vld [vmem:[%s236 + $0xe0] sm:$0xff]
      %v289 = vld [vmem:[%s236 + $0xe8] sm:$0xff]
      %v290 = vld [vmem:[%s236 + $0xf0] sm:$0xff]
      %v291 = vld [vmem:[%s236 + $0xf8] sm:$0xff]
      %v292 = vld [vmem:[%s236 + $0x100] sm:$0xff]
      %v293 = vld [vmem:[%s236 + $0x108] sm:$0xff]
      %v294 = vld [vmem:[%s236 + $0x110] sm:$0xff]
      %v295 = vld [vmem:[%s236 + $0x118] sm:$0xff]
      %v296 = vld [vmem:[%s236 + $0x120] sm:$0xff]
      %v297 = vld [vmem:[%s236 + $0x128] sm:$0xff]
      %v298 = vld [vmem:[%s236 + $0x130] sm:$0xff]
      %v299 = vld [vmem:[%s236 + $0x138] sm:$0xff]
      %v300 = vld [vmem:[%s236 + $0x140] sm:$0xff]
      %v301 = vld [vmem:[%s236 + $0x148] sm:$0xff]
      %v302 = vld [vmem:[%s236 + $0x150] sm:$0xff]
      %v303 = vld [vmem:[%s236 + $0x158] sm:$0xff]
      %v304 = vld [vmem:[%s236 + $0x160] sm:$0xff]
      %v305 = vld [vmem:[%s236 + $0x168] sm:$0xff]
      %v306 = vld [vmem:[%s236 + $0x170] sm:$0xff]
      %v307 = vld [vmem:[%s236 + $0x178] sm:$0xff]
      %v308 = vld [vmem:[%s236 + $0x180] sm:$0xff]
      %v309 = vld [vmem:[%s236 + $0x188] sm:$0xff]
      %v310 = vld [vmem:[%s236 + $0x190] sm:$0xff]
      %v311 = vld [vmem:[%s236 + $0x198] sm:$0xff]
      %v312 = vld [vmem:[%s236 + $0x1a0] sm:$0xff]
      %v313 = vld [vmem:[%s236 + $0x1a8] sm:$0xff]
      %v314 = vld [vmem:[%s236 + $0x1b0] sm:$0xff]
      %v315 = vld [vmem:[%s236 + $0x1b8] sm:$0xff]
      %v316 = vld [vmem:[%s236 + $0x1c0] sm:$0xff]
      %v317 = vld [vmem:[%s236 + $0x1c8] sm:$0xff]
      %v318 = vld [vmem:[%s236 + $0x1d0] sm:$0xff]
      %v319 = vld [vmem:[%s236 + $0x1d8] sm:$0xff]
      %v320 = vld [vmem:[%s236 + $0x1e0] sm:$0xff]
      %v321 = vld [vmem:[%s236 + $0x1e8] sm:$0xff]
      %v322 = vld [vmem:[%s236 + $0x1f0] sm:$0xff]
      %v323 = vld [vmem:[%s236 + $0x1f8] sm:$0xff]
      %v324 = vld [vmem:[%s236 + $0x200] sm:$0xff]
      %v325 = vld [vmem:[%s236 + $0x208] sm:$0xff]
      %v326 = vld [vmem:[%s236 + $0x210] sm:$0xff]
      %v327 = vld [vmem:[%s236 + $0x218] sm:$0xff]
      %v328 = vld [vmem:[%s236 + $0x220] sm:$0xff]
      %v329 = vld [vmem:[%s236 + $0x228] sm:$0xff]
      %v330 = vld [vmem:[%s236 + $0x230] sm:$0xff]
      %v331 = vld [vmem:[%s236 + $0x238] sm:$0xff]
      %v332 = vld [vmem:[%s236 + $0x240] sm:$0xff]
      %v333 = vld [vmem:[%s236 + $0x248] sm:$0xff]
      %v334 = vld [vmem:[%s236 + $0x250] sm:$0xff]
      %v335 = vld [vmem:[%s236 + $0x258] sm:$0xff]
      %v336 = vld [vmem:[%s236 + $0x260] sm:$0xff]
      %v337 = vld [vmem:[%s236 + $0x268] sm:$0xff]
      %v338 = vld [vmem:[%s236 + $0x270] sm:$0xff]
      %v339 = vld [vmem:[%s236 + $0x278] sm:$0xff]
      %v340 = vld [vmem:[%s236 + $0x280] sm:$0xff]
      %v341 = vld [vmem:[%s236 + $0x288] sm:$0xff]
      %v342 = vld [vmem:[%s236 + $0x290] sm:$0xff]
      %v343 = vld [vmem:[%s236 + $0x298] sm:$0xff]
      %v344 = vld [vmem:[%s236 + $0x2a0] sm:$0xff]
      %v345 = vld [vmem:[%s236 + $0x2a8] sm:$0xff]
      %v346 = vld [vmem:[%s236 + $0x2b0] sm:$0xff]
      %v347 = vld [vmem:[%s236 + $0x2b8] sm:$0xff]
      %v348 = vld [vmem:[%s236 + $0x2c0] sm:$0xff]
      %v349 = vld [vmem:[%s236 + $0x2c8] sm:$0xff]
      %v350 = vld [vmem:[%s236 + $0x2d0] sm:$0xff]
      %v351 = vld [vmem:[%s236 + $0x2d8] sm:$0xff]
      %v352 = vld [vmem:[%s236 + $0x2e0] sm:$0xff]
      %v353 = vld [vmem:[%s236 + $0x2e8] sm:$0xff]
      %v354 = vld [vmem:[%s236 + $0x2f0] sm:$0xff]
      %v355 = vld [vmem:[%s236 + $0x2f8] sm:$0xff]
      %v356 = vld [vmem:[%s236 + $0x300] sm:$0xff]
      %v357 = vld [vmem:[%s236 + $0x308] sm:$0xff]
      %v358 = vld [vmem:[%s236 + $0x310] sm:$0xff]
      %v359 = vld [vmem:[%s236 + $0x318] sm:$0xff]
      %v360 = vld [vmem:[%s236 + $0x320] sm:$0xff]
      %v361 = vld [vmem:[%s236 + $0x328] sm:$0xff]
      %v362 = vld [vmem:[%s236 + $0x330] sm:$0xff]
      %v363 = vld [vmem:[%s236 + $0x338] sm:$0xff]
      %v364 = vld [vmem:[%s236 + $0x340] sm:$0xff]
      %v365 = vld [vmem:[%s236 + $0x348] sm:$0xff]
      %v366 = vld [vmem:[%s236 + $0x350] sm:$0xff]
      %v367 = vld [vmem:[%s236 + $0x358] sm:$0xff]
      %v368 = vld [vmem:[%s236 + $0x360] sm:$0xff]
      %v369 = vld [vmem:[%s236 + $0x368] sm:$0xff]
      %v370 = vld [vmem:[%s236 + $0x370] sm:$0xff]
      %v371 = vld [vmem:[%s236 + $0x378] sm:$0xff]
      %v372 = vld [vmem:[%s236 + $0x380] sm:$0xff]
      %v373 = vld [vmem:[%s236 + $0x388] sm:$0xff]
      %v374 = vld [vmem:[%s236 + $0x390] sm:$0xff]
      %v375 = vld [vmem:[%s236 + $0x398] sm:$0xff]
      %v376 = vld [vmem:[%s236 + $0x3a0] sm:$0xff]
      %v377 = vld [vmem:[%s236 + $0x3a8] sm:$0xff]
      %v378 = vld [vmem:[%s236 + $0x3b0] sm:$0xff]
      %v379 = vld [vmem:[%s236 + $0x3b8] sm:$0xff]
      %v380 = vld [vmem:[%s236 + $0x3c0] sm:$0xff]
      %v381 = vld [vmem:[%s236 + $0x3c8] sm:$0xff]
      %v382 = vld [vmem:[%s236 + $0x3d0] sm:$0xff]
      %v383 = vld [vmem:[%s236 + $0x3d8] sm:$0xff]
      %v384 = vld [vmem:[%s236 + $0x3e0] sm:$0xff]
      %v385 = vld [vmem:[%s236 + $0x3e8] sm:$0xff]
      %v386 = vld [vmem:[%s236 + $0x3f0] sm:$0xff]
      %v387 = vld [vmem:[%s236 + $0x3f8] sm:$0xff]
      %v388 = vld [vmem:[%s236 + $0x400] sm:$0xff]
      %v389 = vld [vmem:[%s236 + $0x408] sm:$0xff]
      %v390 = vld [vmem:[%s236 + $0x410] sm:$0xff]
      %v391 = vld [vmem:[%s236 + $0x418] sm:$0xff]
      %v392 = vld [vmem:[%s236 + $0x420] sm:$0xff]
      %v393 = vld [vmem:[%s236 + $0x428] sm:$0xff]
      %v394 = vld [vmem:[%s236 + $0x430] sm:$0xff]
      %v395 = vld [vmem:[%s236 + $0x438] sm:$0xff]
      %v396 = vld [vmem:[%s236 + $0x440] sm:$0xff]
      %v397 = vld [vmem:[%s236 + $0x448] sm:$0xff]
      %v398 = vld [vmem:[%s236 + $0x450] sm:$0xff]
      %v399 = vld [vmem:[%s236 + $0x458] sm:$0xff]
      %v400 = vld [vmem:[%s236 + $0x460] sm:$0xff]
      %v401 = vld [vmem:[%s236 + $0x468] sm:$0xff]
      %v402 = vld [vmem:[%s236 + $0x470] sm:$0xff]
      %v403 = vld [vmem:[%s236 + $0x478] sm:$0xff]
      %v404 = vld [vmem:[%s236 + $0x480] sm:$0xff]
      %v405 = vld [vmem:[%s236 + $0x488] sm:$0xff]
      %v406 = vld [vmem:[%s236 + $0x490] sm:$0xff]
      %v407 = vld [vmem:[%s236 + $0x498] sm:$0xff]
      %v408 = vld [vmem:[%s236 + $0x4a0] sm:$0xff]
      %v409 = vld [vmem:[%s236 + $0x4a8] sm:$0xff]
      %v410 = vld [vmem:[%s236 + $0x4b0] sm:$0xff]
      %v411 = vld [vmem:[%s236 + $0x4b8] sm:$0xff]
      %v412 = vld [vmem:[%s236 + $0x4c0] sm:$0xff]
      %v413 = vld [vmem:[%s236 + $0x4c8] sm:$0xff]
      %v414 = vld [vmem:[%s236 + $0x4d0] sm:$0xff]
      %v415 = vld [vmem:[%s236 + $0x4d8] sm:$0xff]
      %v416 = vld [vmem:[%s236 + $0x4e0] sm:$0xff]
      %v417 = vld [vmem:[%s236 + $0x4e8] sm:$0xff]
      %v418 = vld [vmem:[%s236 + $0x4f0] sm:$0xff]
      %v419 = vld [vmem:[%s236 + $0x4f8] sm:$0xff]
      %v420 = vld [vmem:[%s236 + $0x500] sm:$0xff]
      %v421 = vld [vmem:[%s236 + $0x508] sm:$0xff]
      %v422 = vld [vmem:[%s236 + $0x510] sm:$0xff]
      %v423 = vld [vmem:[%s236 + $0x518] sm:$0xff]
      %v424 = vld [vmem:[%s236 + $0x520] sm:$0xff]
      %v425 = vld [vmem:[%s236 + $0x528] sm:$0xff]
      %v426 = vld [vmem:[%s236 + $0x530] sm:$0xff]
      %v427 = vld [vmem:[%s236 + $0x538] sm:$0xff]
      %v428 = vld [vmem:[%s236 + $0x540] sm:$0xff]
      %v429 = vld [vmem:[%s236 + $0x548] sm:$0xff]
      %v430 = vld [vmem:[%s236 + $0x550] sm:$0xff]
      %v431 = vld [vmem:[%s236 + $0x558] sm:$0xff]
      %v432 = vld [vmem:[%s236 + $0x560] sm:$0xff]
      %v433 = vld [vmem:[%s236 + $0x568] sm:$0xff]
      %v434 = vld [vmem:[%s236 + $0x570] sm:$0xff]
      %v435 = vld [vmem:[%s236 + $0x578] sm:$0xff]
      %v436 = vld [vmem:[%s236 + $0x580] sm:$0xff]
      %v437 = vld [vmem:[%s236 + $0x588] sm:$0xff]
      %v438 = vld [vmem:[%s236 + $0x590] sm:$0xff]
      %v439 = vld [vmem:[%s236 + $0x598] sm:$0xff]
      %v440 = vld [vmem:[%s236 + $0x5a0] sm:$0xff]
      %v441 = vld [vmem:[%s236 + $0x5a8] sm:$0xff]
      %v442 = vld [vmem:[%s236 + $0x5b0] sm:$0xff]
      %v443 = vld [vmem:[%s236 + $0x5b8] sm:$0xff]
      %v444 = vld [vmem:[%s236 + $0x5c0] sm:$0xff]
      %v445 = vld [vmem:[%s236 + $0x5c8] sm:$0xff]
      %v446 = vld [vmem:[%s236 + $0x5d0] sm:$0xff]
      %v447 = vld [vmem:[%s236 + $0x5d8] sm:$0xff]
      %v448 = vld [vmem:[%s236 + $0x5e0] sm:$0xff]
      %v449 = vld [vmem:[%s236 + $0x5e8] sm:$0xff]
      %v450 = vld [vmem:[%s236 + $0x5f0] sm:$0xff]
      %v451 = vld [vmem:[%s236 + $0x5f8] sm:$0xff]
      %v452 = vld [vmem:[%s236 + $0x600] sm:$0xff]
      %v453 = vld [vmem:[%s236 + $0x608] sm:$0xff]
      %v454 = vld [vmem:[%s236 + $0x610] sm:$0xff]
      %v455 = vld [vmem:[%s236 + $0x618] sm:$0xff]
      %v456 = vld [vmem:[%s236 + $0x620] sm:$0xff]
      %v457 = vld [vmem:[%s236 + $0x628] sm:$0xff]
      %v458 = vld [vmem:[%s236 + $0x630] sm:$0xff]
      %v459 = vld [vmem:[%s236 + $0x638] sm:$0xff]
      %v460 = vld [vmem:[%s236 + $0x640] sm:$0xff]
      %v461 = vld [vmem:[%s236 + $0x648] sm:$0xff]
      %v462 = vld [vmem:[%s236 + $0x650] sm:$0xff]
      %v463 = vld [vmem:[%s236 + $0x658] sm:$0xff]
      %v464 = vld [vmem:[%s236 + $0x660] sm:$0xff]
      %v465 = vld [vmem:[%s236 + $0x668] sm:$0xff]
      %v466 = vld [vmem:[%s236 + $0x670] sm:$0xff]
      %v467 = vld [vmem:[%s236 + $0x678] sm:$0xff]
      %v468 = vld [vmem:[%s236 + $0x680] sm:$0xff]
      %v469 = vld [vmem:[%s236 + $0x688] sm:$0xff]
      %v470 = vld [vmem:[%s236 + $0x690] sm:$0xff]
      %v471 = vld [vmem:[%s236 + $0x698] sm:$0xff]
      %v472 = vld [vmem:[%s236 + $0x6a0] sm:$0xff]
      %v473 = vld [vmem:[%s236 + $0x6a8] sm:$0xff]
      %v474 = vld [vmem:[%s236 + $0x6b0] sm:$0xff]
      %v475 = vld [vmem:[%s236 + $0x6b8] sm:$0xff]
      %v476 = vld [vmem:[%s236 + $0x6c0] sm:$0xff]
      %v477 = vld [vmem:[%s236 + $0x6c8] sm:$0xff]
      %v478 = vld [vmem:[%s236 + $0x6d0] sm:$0xff]
      %v479 = vld [vmem:[%s236 + $0x6d8] sm:$0xff]
      %v480 = vld [vmem:[%s236 + $0x6e0] sm:$0xff]
      %v481 = vld [vmem:[%s236 + $0x6e8] sm:$0xff]
      %v482 = vld [vmem:[%s236 + $0x6f0] sm:$0xff]
      %v483 = vld [vmem:[%s236 + $0x6f8] sm:$0xff]
      %v484 = vld [vmem:[%s236 + $0x700] sm:$0xff]
      %v485 = vld [vmem:[%s236 + $0x708] sm:$0xff]
      %v486 = vld [vmem:[%s236 + $0x710] sm:$0xff]
      %v487 = vld [vmem:[%s236 + $0x718] sm:$0xff]
      %v488 = vld [vmem:[%s236 + $0x720] sm:$0xff]
      %v489 = vld [vmem:[%s236 + $0x728] sm:$0xff]
      %v490 = vld [vmem:[%s236 + $0x730] sm:$0xff]
      %v491 = vld [vmem:[%s236 + $0x738] sm:$0xff]
      %v492 = vld [vmem:[%s236 + $0x740] sm:$0xff]
      %v493 = vld [vmem:[%s236 + $0x748] sm:$0xff]
      %v494 = vld [vmem:[%s236 + $0x750] sm:$0xff]
      %v495 = vld [vmem:[%s236 + $0x758] sm:$0xff]
      %v496 = vld [vmem:[%s236 + $0x760] sm:$0xff]
      %v497 = vld [vmem:[%s236 + $0x768] sm:$0xff]
      %v498 = vld [vmem:[%s236 + $0x770] sm:$0xff]
      %v499 = vld [vmem:[%s236 + $0x778] sm:$0xff]
      %v500 = vld [vmem:[%s236 + $0x780] sm:$0xff]
      %v501 = vld [vmem:[%s236 + $0x788] sm:$0xff]
      %v502 = vld [vmem:[%s236 + $0x790] sm:$0xff]
      %v503 = vld [vmem:[%s236 + $0x798] sm:$0xff]
      %v504 = vld [vmem:[%s236 + $0x7a0] sm:$0xff]
      %v505 = vld [vmem:[%s236 + $0x7a8] sm:$0xff]
      %v506 = vld [vmem:[%s236 + $0x7b0] sm:$0xff]
      %v507 = vld [vmem:[%s236 + $0x7b8] sm:$0xff]
      %v508 = vld [vmem:[%s236 + $0x7c0] sm:$0xff]
      %v509 = vld [vmem:[%s236 + $0x7c8] sm:$0xff]
      %v510 = vld [vmem:[%s236 + $0x7d0] sm:$0xff]
      %v511 = vld [vmem:[%s236 + $0x7d8] sm:$0xff]
      %v512 = vld [vmem:[%s236 + $0x7e0] sm:$0xff]
      %v513 = vld [vmem:[%s236 + $0x7e8] sm:$0xff]
      %v514 = vld [vmem:[%s236 + $0x7f0] sm:$0xff]
      %v515 = vld [vmem:[%s236 + $0x7f8] sm:$0xff]
      %v516 = vld [vmem:[%s236 + $0x800] sm:$0xff]
      %v517 = vld [vmem:[%s236 + $0x808] sm:$0xff]
      %v518 = vld [vmem:[%s236 + $0x810] sm:$0xff]
      %v519 = vld [vmem:[%s236 + $0x818] sm:$0xff]
      %v520 = vld [vmem:[%s236 + $0x820] sm:$0xff]
      %v521 = vld [vmem:[%s236 + $0x828] sm:$0xff]
      %v522 = vld [vmem:[%s236 + $0x830] sm:$0xff]
      %v523 = vld [vmem:[%s236 + $0x838] sm:$0xff]
      %v524 = vld [vmem:[%s236 + $0x840] sm:$0xff]
      %v525 = vld [vmem:[%s236 + $0x848] sm:$0xff]
      %v526 = vld [vmem:[%s236 + $0x850] sm:$0xff]
      %v527 = vld [vmem:[%s236 + $0x858] sm:$0xff]
      %v528 = vld [vmem:[%s236 + $0x860] sm:$0xff]
      %v529 = vld [vmem:[%s236 + $0x868] sm:$0xff]
      %v530 = vld [vmem:[%s236 + $0x870] sm:$0xff]
      %v531 = vld [vmem:[%s236 + $0x878] sm:$0xff]
      %v532 = vld [vmem:[%s236 + $0x880] sm:$0xff]
      %v533 = vld [vmem:[%s236 + $0x888] sm:$0xff]
      %v534 = vld [vmem:[%s236 + $0x890] sm:$0xff]
      %v535 = vld [vmem:[%s236 + $0x898] sm:$0xff]
      %v536 = vld [vmem:[%s236 + $0x8a0] sm:$0xff]
      %v537 = vld [vmem:[%s236 + $0x8a8] sm:$0xff]
      %v538 = vld [vmem:[%s236 + $0x8b0] sm:$0xff]
      %v539 = vld [vmem:[%s236 + $0x8b8] sm:$0xff]
      %v540 = vld [vmem:[%s236 + $0x8c0] sm:$0xff]
      %v541 = vld [vmem:[%s236 + $0x8c8] sm:$0xff]
      %v542 = vld [vmem:[%s236 + $0x8d0] sm:$0xff]
      %v543 = vld [vmem:[%s236 + $0x8d8] sm:$0xff]
      %v544 = vld [vmem:[%s236 + $0x8e0] sm:$0xff]
      %v545 = vld [vmem:[%s236 + $0x8e8] sm:$0xff]
      %v546 = vld [vmem:[%s236 + $0x8f0] sm:$0xff]
      %v547 = vld [vmem:[%s236 + $0x8f8] sm:$0xff]
      %v548 = vld [vmem:[%s236 + $0x900] sm:$0xff]
      %v549 = vld [vmem:[%s236 + $0x908] sm:$0xff]
      %v550 = vld [vmem:[%s236 + $0x910] sm:$0xff]
      %v551 = vld [vmem:[%s236 + $0x918] sm:$0xff]
      %v552 = vld [vmem:[%s236 + $0x920] sm:$0xff]
      %v553 = vld [vmem:[%s236 + $0x928] sm:$0xff]
      %v554 = vld [vmem:[%s236 + $0x930] sm:$0xff]
      %v555 = vld [vmem:[%s236 + $0x938] sm:$0xff]
      %v556 = vld [vmem:[%s236 + $0x940] sm:$0xff]
      %v557 = vld [vmem:[%s236 + $0x948] sm:$0xff]
      %v558 = vld [vmem:[%s236 + $0x950] sm:$0xff]
      %v559 = vld [vmem:[%s236 + $0x958] sm:$0xff]
      %v560 = vld [vmem:[%s236 + $0x960] sm:$0xff]
      %v561 = vld [vmem:[%s236 + $0x968] sm:$0xff]
      %v562 = vld [vmem:[%s236 + $0x970] sm:$0xff]
      %v563 = vld [vmem:[%s236 + $0x978] sm:$0xff]
      %v564 = vld [vmem:[%s236 + $0x980] sm:$0xff]
      %v565 = vld [vmem:[%s236 + $0x988] sm:$0xff]
      %v566 = vld [vmem:[%s236 + $0x990] sm:$0xff]
      %v567 = vld [vmem:[%s236 + $0x998] sm:$0xff]
      %v568 = vld [vmem:[%s236 + $0x9a0] sm:$0xff]
      %v569 = vld [vmem:[%s236 + $0x9a8] sm:$0xff]
      %v570 = vld [vmem:[%s236 + $0x9b0] sm:$0xff]
      %v571 = vld [vmem:[%s236 + $0x9b8] sm:$0xff]
      %v572 = vld [vmem:[%s236 + $0x9c0] sm:$0xff]
      %v573 = vld [vmem:[%s236 + $0x9c8] sm:$0xff]
      %v574 = vld [vmem:[%s236 + $0x9d0] sm:$0xff]
      %v575 = vld [vmem:[%s236 + $0x9d8] sm:$0xff]
      %v576 = vld [vmem:[%s236 + $0x9e0] sm:$0xff]
      %v577 = vld [vmem:[%s236 + $0x9e8] sm:$0xff]
      %v578 = vld [vmem:[%s236 + $0x9f0] sm:$0xff]
      %v579 = vld [vmem:[%s236 + $0x9f8] sm:$0xff]
      %v580 = vld [vmem:[%s236 + $0xa00] sm:$0xff]
      %v581 = vld [vmem:[%s236 + $0xa08] sm:$0xff]
      %v582 = vld [vmem:[%s236 + $0xa10] sm:$0xff]
      %v583 = vld [vmem:[%s236 + $0xa18] sm:$0xff]
      %v584 = vld [vmem:[%s236 + $0xa20] sm:$0xff]
      %v585 = vld [vmem:[%s236 + $0xa28] sm:$0xff]
      %v586 = vld [vmem:[%s236 + $0xa30] sm:$0xff]
      %v587 = vld [vmem:[%s236 + $0xa38] sm:$0xff]
      %v588 = vld [vmem:[%s236 + $0xa40] sm:$0xff]
      %v589 = vld [vmem:[%s236 + $0xa48] sm:$0xff]
      %v590 = vld [vmem:[%s236 + $0xa50] sm:$0xff]
      %v591 = vld [vmem:[%s236 + $0xa58] sm:$0xff]
      %v592 = vld [vmem:[%s236 + $0xa60] sm:$0xff]
      %v593 = vld [vmem:[%s236 + $0xa68] sm:$0xff]
      %v594 = vld [vmem:[%s236 + $0xa70] sm:$0xff]
      %v595 = vld [vmem:[%s236 + $0xa78] sm:$0xff]
      %v596 = vld [vmem:[%s236 + $0xa80] sm:$0xff]
      %v597 = vld [vmem:[%s236 + $0xa88] sm:$0xff]
      %v598 = vld [vmem:[%s236 + $0xa90] sm:$0xff]
      %v599 = vld [vmem:[%s236 + $0xa98] sm:$0xff]
      %v600 = vld [vmem:[%s236 + $0xaa0] sm:$0xff]
      %v601 = vld [vmem:[%s236 + $0xaa8] sm:$0xff]
      %v602 = vld [vmem:[%s236 + $0xab0] sm:$0xff]
      %v603 = vld [vmem:[%s236 + $0xab8] sm:$0xff]
      %v604 = vld [vmem:[%s236 + $0xac0] sm:$0xff]
      %v605 = vld [vmem:[%s236 + $0xac8] sm:$0xff]
      %v606 = vld [vmem:[%s236 + $0xad0] sm:$0xff]
      %v607 = vld [vmem:[%s236 + $0xad8] sm:$0xff]
      %v608 = vld [vmem:[%s236 + $0xae0] sm:$0xff]
      %v609 = vld [vmem:[%s236 + $0xae8] sm:$0xff]
      %v610 = vld [vmem:[%s236 + $0xaf0] sm:$0xff]
      %v611 = vld [vmem:[%s236 + $0xaf8] sm:$0xff]
      %v612 = vld [vmem:[%s236 + $0xb00] sm:$0xff]
      %v613 = vld [vmem:[%s236 + $0xb08] sm:$0xff]
      %v614 = vld [vmem:[%s236 + $0xb10] sm:$0xff]
      %v615 = vld [vmem:[%s236 + $0xb18] sm:$0xff]
      %v616 = vld [vmem:[%s236 + $0xb20] sm:$0xff]
      %v617 = vld [vmem:[%s236 + $0xb28] sm:$0xff]
      %v618 = vld [vmem:[%s236 + $0xb30] sm:$0xff]
      %v619 = vld [vmem:[%s236 + $0xb38] sm:$0xff]
      %v620 = vld [vmem:[%s236 + $0xb40] sm:$0xff]
      %v621 = vld [vmem:[%s236 + $0xb48] sm:$0xff]
      %v622 = vld [vmem:[%s236 + $0xb50] sm:$0xff]
      %v623 = vld [vmem:[%s236 + $0xb58] sm:$0xff]
      %v624 = vld [vmem:[%s236 + $0xb60] sm:$0xff]
      %v625 = vld [vmem:[%s236 + $0xb68] sm:$0xff]
      %v626 = vld [vmem:[%s236 + $0xb70] sm:$0xff]
      %v627 = vld [vmem:[%s236 + $0xb78] sm:$0xff]
      %v628 = vld [vmem:[%s236 + $0xb80] sm:$0xff]
      %v629 = vld [vmem:[%s236 + $0xb88] sm:$0xff]
      %v630 = vld [vmem:[%s236 + $0xb90] sm:$0xff]
      %v631 = vld [vmem:[%s236 + $0xb98] sm:$0xff]
      %v632 = vld [vmem:[%s236 + $0xba0] sm:$0xff]
      %v633 = vld [vmem:[%s236 + $0xba8] sm:$0xff]
      %v634 = vld [vmem:[%s236 + $0xbb0] sm:$0xff]
      %v635 = vld [vmem:[%s236 + $0xbb8] sm:$0xff]
      %v636 = vld [vmem:[%s236 + $0xbc0] sm:$0xff]
      %v637 = vld [vmem:[%s236 + $0xbc8] sm:$0xff]
      %v638 = vld [vmem:[%s236 + $0xbd0] sm:$0xff]
      %v639 = vld [vmem:[%s236 + $0xbd8] sm:$0xff]
      %v640 = vld [vmem:[%s236 + $0xbe0] sm:$0xff]
      %v641 = vld [vmem:[%s236 + $0xbe8] sm:$0xff]
      %v642 = vld [vmem:[%s236 + $0xbf0] sm:$0xff]
      %v643 = vld [vmem:[%s236 + $0xbf8] sm:$0xff]
      %v644 = vld [vmem:[%s236 + $0xc00] sm:$0xff]
      %v645 = vld [vmem:[%s236 + $0xc08] sm:$0xff]
      %v646 = vld [vmem:[%s236 + $0xc10] sm:$0xff]
      %v647 = vld [vmem:[%s236 + $0xc18] sm:$0xff]
      %v648 = vld [vmem:[%s236 + $0xc20] sm:$0xff]
      %v649 = vld [vmem:[%s236 + $0xc28] sm:$0xff]
      %v650 = vld [vmem:[%s236 + $0xc30] sm:$0xff]
      %v651 = vld [vmem:[%s236 + $0xc38] sm:$0xff]
      %v652 = vld [vmem:[%s236 + $0xc40] sm:$0xff]
      %v653 = vld [vmem:[%s236 + $0xc48] sm:$0xff]
      %v654 = vld [vmem:[%s236 + $0xc50] sm:$0xff]
      %v655 = vld [vmem:[%s236 + $0xc58] sm:$0xff]
      %v656 = vld [vmem:[%s236 + $0xc60] sm:$0xff]
      %v657 = vld [vmem:[%s236 + $0xc68] sm:$0xff]
      %v658 = vld [vmem:[%s236 + $0xc70] sm:$0xff]
      %v659 = vld [vmem:[%s236 + $0xc78] sm:$0xff]
      %v660 = vld [vmem:[%s236 + $0xc80] sm:$0xff]
      %v661 = vld [vmem:[%s236 + $0xc88] sm:$0xff]
      %v662 = vld [vmem:[%s236 + $0xc90] sm:$0xff]
      %v663 = vld [vmem:[%s236 + $0xc98] sm:$0xff]
      %v664 = vld [vmem:[%s236 + $0xca0] sm:$0xff]
      %v665 = vld [vmem:[%s236 + $0xca8] sm:$0xff]
      %v666 = vld [vmem:[%s236 + $0xcb0] sm:$0xff]
      %v667 = vld [vmem:[%s236 + $0xcb8] sm:$0xff]
      %v668 = vld [vmem:[%s236 + $0xcc0] sm:$0xff]
      %v669 = vld [vmem:[%s236 + $0xcc8] sm:$0xff]
      %v670 = vld [vmem:[%s236 + $0xcd0] sm:$0xff]
      %v671 = vld [vmem:[%s236 + $0xcd8] sm:$0xff]
      %v672 = vld [vmem:[%s236 + $0xce0] sm:$0xff]
      %v673 = vld [vmem:[%s236 + $0xce8] sm:$0xff]
      %v674 = vld [vmem:[%s236 + $0xcf0] sm:$0xff]
      %v675 = vld [vmem:[%s236 + $0xcf8] sm:$0xff]
      %v676 = vld [vmem:[%s236 + $0xd00] sm:$0xff]
      %v677 = vld [vmem:[%s236 + $0xd08] sm:$0xff]
      %v678 = vld [vmem:[%s236 + $0xd10] sm:$0xff]
      %v679 = vld [vmem:[%s236 + $0xd18] sm:$0xff]
      %v680 = vld [vmem:[%s236 + $0xd20] sm:$0xff]
      %v681 = vld [vmem:[%s236 + $0xd28] sm:$0xff]
      %v682 = vld [vmem:[%s236 + $0xd30] sm:$0xff]
      %v683 = vld [vmem:[%s236 + $0xd38] sm:$0xff]
      %v684 = vld [vmem:[%s236 + $0xd40] sm:$0xff]
      %v685 = vld [vmem:[%s236 + $0xd48] sm:$0xff]
      %v686 = vld [vmem:[%s236 + $0xd50] sm:$0xff]
      %v687 = vld [vmem:[%s236 + $0xd58] sm:$0xff]
      %v688 = vld [vmem:[%s236 + $0xd60] sm:$0xff]
      %v689 = vld [vmem:[%s236 + $0xd68] sm:$0xff]
      %v690 = vld [vmem:[%s236 + $0xd70] sm:$0xff]
      %v691 = vld [vmem:[%s236 + $0xd78] sm:$0xff]
      %v692 = vld [vmem:[%s236 + $0xd80] sm:$0xff]
      %v693 = vld [vmem:[%s236 + $0xd88] sm:$0xff]
      %v694 = vld [vmem:[%s236 + $0xd90] sm:$0xff]
      %v695 = vld [vmem:[%s236 + $0xd98] sm:$0xff]
      %v696 = vld [vmem:[%s236 + $0xda0] sm:$0xff]
      %v697 = vld [vmem:[%s236 + $0xda8] sm:$0xff]
      %v698 = vld [vmem:[%s236 + $0xdb0] sm:$0xff]
      %v699 = vld [vmem:[%s236 + $0xdb8] sm:$0xff]
      %v700 = vld [vmem:[%s236 + $0xdc0] sm:$0xff]
      %v701 = vld [vmem:[%s236 + $0xdc8] sm:$0xff]
      %v702 = vld [vmem:[%s236 + $0xdd0] sm:$0xff]
      %v703 = vld [vmem:[%s236 + $0xdd8] sm:$0xff]
      %v704 = vld [vmem:[%s236 + $0xde0] sm:$0xff]
      %v705 = vld [vmem:[%s236 + $0xde8] sm:$0xff]
      %v706 = vld [vmem:[%s236 + $0xdf0] sm:$0xff]
      %v707 = vld [vmem:[%s236 + $0xdf8] sm:$0xff]
      %v708 = vld [vmem:[%s236 + $0xe00] sm:$0xff]
      %v709 = vld [vmem:[%s236 + $0xe08] sm:$0xff]
      %v710 = vld [vmem:[%s236 + $0xe10] sm:$0xff]
      %v711 = vld [vmem:[%s236 + $0xe18] sm:$0xff]
      %v712 = vld [vmem:[%s236 + $0xe20] sm:$0xff]
      %v713 = vld [vmem:[%s236 + $0xe28] sm:$0xff]
      %v714 = vld [vmem:[%s236 + $0xe30] sm:$0xff]
      %v715 = vld [vmem:[%s236 + $0xe38] sm:$0xff]
      %v716 = vld [vmem:[%s236 + $0xe40] sm:$0xff]
      %v717 = vld [vmem:[%s236 + $0xe48] sm:$0xff]
      %v718 = vld [vmem:[%s236 + $0xe50] sm:$0xff]
      %v719 = vld [vmem:[%s236 + $0xe58] sm:$0xff]
      %v720 = vld [vmem:[%s236 + $0xe60] sm:$0xff]
      %v721 = vld [vmem:[%s236 + $0xe68] sm:$0xff]
      %v722 = vld [vmem:[%s236 + $0xe70] sm:$0xff]
      %v723 = vld [vmem:[%s236 + $0xe78] sm:$0xff]
      %v724 = vld [vmem:[%s236 + $0xe80] sm:$0xff]
      %v725 = vld [vmem:[%s236 + $0xe88] sm:$0xff]
      %v726 = vld [vmem:[%s236 + $0xe90] sm:$0xff]
      %v727 = vld [vmem:[%s236 + $0xe98] sm:$0xff]
      %v728 = vld [vmem:[%s236 + $0xea0] sm:$0xff]
      %v729 = vld [vmem:[%s236 + $0xea8] sm:$0xff]
      %v730 = vld [vmem:[%s236 + $0xeb0] sm:$0xff]
      %v731 = vld [vmem:[%s236 + $0xeb8] sm:$0xff]
      %v732 = vld [vmem:[%s236 + $0xec0] sm:$0xff]
      %v733 = vld [vmem:[%s236 + $0xec8] sm:$0xff]
      %v734 = vld [vmem:[%s236 + $0xed0] sm:$0xff]
      %v735 = vld [vmem:[%s236 + $0xed8] sm:$0xff]
      %v736 = vld [vmem:[%s236 + $0xee0] sm:$0xff]
      %v737 = vld [vmem:[%s236 + $0xee8] sm:$0xff]
      %v738 = vld [vmem:[%s236 + $0xef0] sm:$0xff]
      %v739 = vld [vmem:[%s236 + $0xef8] sm:$0xff]
      %v740 = vld [vmem:[%s236 + $0xf00] sm:$0xff]
      %v741 = vld [vmem:[%s236 + $0xf08] sm:$0xff]
      %v742 = vld [vmem:[%s236 + $0xf10] sm:$0xff]
      %v743 = vld [vmem:[%s236 + $0xf18] sm:$0xff]
      %v744 = vld [vmem:[%s236 + $0xf20] sm:$0xff]
      %v745 = vld [vmem:[%s236 + $0xf28] sm:$0xff]
      %v746 = vld [vmem:[%s236 + $0xf30] sm:$0xff]
      %v747 = vld [vmem:[%s236 + $0xf38] sm:$0xff]
      %v748 = vld [vmem:[%s236 + $0xf40] sm:$0xff]
      %v749 = vld [vmem:[%s236 + $0xf48] sm:$0xff]
      %v750 = vld [vmem:[%s236 + $0xf50] sm:$0xff]
      %v751 = vld [vmem:[%s236 + $0xf58] sm:$0xff]
      %v752 = vld [vmem:[%s236 + $0xf60] sm:$0xff]
      %v753 = vld [vmem:[%s236 + $0xf68] sm:$0xff]
      %v754 = vld [vmem:[%s236 + $0xf70] sm:$0xff]
      %v755 = vld [vmem:[%s236 + $0xf78] sm:$0xff]
      %v756 = vld [vmem:[%s236 + $0xf80] sm:$0xff]
      %v757 = vld [vmem:[%s236 + $0xf88] sm:$0xff]
      %v758 = vld [vmem:[%s236 + $0xf90] sm:$0xff]
      %v759 = vld [vmem:[%s236 + $0xf98] sm:$0xff]
      %v760 = vld [vmem:[%s236 + $0xfa0] sm:$0xff]
      %v761 = vld [vmem:[%s236 + $0xfa8] sm:$0xff]
      %v762 = vld [vmem:[%s236 + $0xfb0] sm:$0xff]
      %v763 = vld [vmem:[%s236 + $0xfb8] sm:$0xff]
      %v764 = vld [vmem:[%s236 + $0xfc0] sm:$0xff]
      %v765 = vld [vmem:[%s236 + $0xfc8] sm:$0xff]
      %v766 = vld [vmem:[%s236 + $0xfd0] sm:$0xff]
      %v767 = vld [vmem:[%s236 + $0xfd8] sm:$0xff]
      %v768 = vld [vmem:[%s236 + $0xfe0] sm:$0xff]
      %v769 = vld [vmem:[%s236 + $0xfe8] sm:$0xff]
      %v770 = vld [vmem:[%s236 + $0xff0] sm:$0xff]
      %v771 = vld [vmem:[%s236 + $0xff8] sm:$0xff]
      %v772 = vld [vmem:[%s240] sm:$0xff]
      %v774 = vperm.slane %v772, 0
      %v775 = vperm.slane %v772, 1
      %v776 = vperm.slane %v772, 2
      %v777 = vperm.slane %v772, 3
      %v778 = vperm.slane %v772, 4
      %v779 = vperm.slane %v772, 5
      %v780 = vperm.slane %v772, 6
      %v781 = vperm.slane %v772, 7
      %v798 = vunpack.c.l.b16 %v252
      %v799 = vunpack.c.h.b16 %v252
      %v800 = vunpack.c.l.b16 %v253
      %v801 = vunpack.c.h.b16 %v253
      %v802 = vunpack.c.l.b16 %v254
      %v803 = vunpack.c.h.b16 %v254
      %v804 = vunpack.c.l.b16 %v255
      %v805 = vunpack.c.h.b16 %v255
      %v806 = vunpack.c.l.b16 %v256
      %v807 = vunpack.c.h.b16 %v256
      %v808 = vunpack.c.l.b16 %v257
      %v809 = vunpack.c.h.b16 %v257
      %v810 = vunpack.c.l.b16 %v258
      %v811 = vunpack.c.h.b16 %v258
      %v812 = vunpack.c.l.b16 %v259
      %v813 = vunpack.c.h.b16 %v259
      %v814 = vpack.c.b16 %v806, %v798
      %v815 = vpack.c.b16 %v807, %v799
      %v816 = vpack.c.b16 %v808, %v800
      %v817 = vpack.c.b16 %v809, %v801
      %v818 = vpack.c.b16 %v810, %v802
      %v819 = vpack.c.b16 %v811, %v803
      %v820 = vpack.c.b16 %v812, %v804
      %v821 = vpack.c.b16 %v813, %v805
      %v1342 = vunpack.c.l.b16 %v260
      %v1343 = vunpack.c.h.b16 %v260
      %v1344 = vunpack.c.l.b16 %v261
      %v1345 = vunpack.c.h.b16 %v261
      %v1346 = vunpack.c.l.b16 %v262
      %v1347 = vunpack.c.h.b16 %v262
      %v1348 = vunpack.c.l.b16 %v263
      %v1349 = vunpack.c.h.b16 %v263
      %v1350 = vunpack.c.l.b16 %v264
      %v1351 = vunpack.c.h.b16 %v264
      %v1352 = vunpack.c.l.b16 %v265
      %v1353 = vunpack.c.h.b16 %v265
      %v1354 = vunpack.c.l.b16 %v266
      %v1355 = vunpack.c.h.b16 %v266
      %v1356 = vunpack.c.l.b16 %v267
      %v1357 = vunpack.c.h.b16 %v267
      %v1358 = vunpack.c.l.b16 %v268
      %v1359 = vunpack.c.h.b16 %v268
      %v1360 = vunpack.c.l.b16 %v269
      %v1361 = vunpack.c.h.b16 %v269
      %v1362 = vunpack.c.l.b16 %v270
      %v1363 = vunpack.c.h.b16 %v270
      %v1364 = vunpack.c.l.b16 %v271
      %v1365 = vunpack.c.h.b16 %v271
      %v1366 = vunpack.c.l.b16 %v272
      %v1367 = vunpack.c.h.b16 %v272
      %v1368 = vunpack.c.l.b16 %v273
      %v1369 = vunpack.c.h.b16 %v273
      %v1370 = vunpack.c.l.b16 %v274
      %v1371 = vunpack.c.h.b16 %v274
      %v1372 = vunpack.c.l.b16 %v275
      %v1373 = vunpack.c.h.b16 %v275
      %v1374 = vunpack.c.l.b16 %v276
      %v1375 = vunpack.c.h.b16 %v276
      %v1376 = vunpack.c.l.b16 %v277
      %v1377 = vunpack.c.h.b16 %v277
      %v1378 = vunpack.c.l.b16 %v278
      %v1379 = vunpack.c.h.b16 %v278
      %v1380 = vunpack.c.l.b16 %v279
      %v1381 = vunpack.c.h.b16 %v279
      %v1382 = vunpack.c.l.b16 %v280
      %v1383 = vunpack.c.h.b16 %v280
      %v1384 = vunpack.c.l.b16 %v281
      %v1385 = vunpack.c.h.b16 %v281
      %v1386 = vunpack.c.l.b16 %v282
      %v1387 = vunpack.c.h.b16 %v282
      %v1388 = vunpack.c.l.b16 %v283
      %v1389 = vunpack.c.h.b16 %v283
      %v1390 = vunpack.c.l.b16 %v284
      %v1391 = vunpack.c.h.b16 %v284
      %v1392 = vunpack.c.l.b16 %v285
      %v1393 = vunpack.c.h.b16 %v285
      %v1394 = vunpack.c.l.b16 %v286
      %v1395 = vunpack.c.h.b16 %v286
      %v1396 = vunpack.c.l.b16 %v287
      %v1397 = vunpack.c.h.b16 %v287
      %v1398 = vunpack.c.l.b16 %v288
      %v1399 = vunpack.c.h.b16 %v288
      %v1400 = vunpack.c.l.b16 %v289
      %v1401 = vunpack.c.h.b16 %v289
      %v1402 = vunpack.c.l.b16 %v290
      %v1403 = vunpack.c.h.b16 %v290
      %v1404 = vunpack.c.l.b16 %v291
      %v1405 = vunpack.c.h.b16 %v291
      %v1406 = vunpack.c.l.b16 %v292
      %v1407 = vunpack.c.h.b16 %v292
      %v1408 = vunpack.c.l.b16 %v293
      %v1409 = vunpack.c.h.b16 %v293
      %v1410 = vunpack.c.l.b16 %v294
      %v1411 = vunpack.c.h.b16 %v294
      %v1412 = vunpack.c.l.b16 %v295
      %v1413 = vunpack.c.h.b16 %v295
      %v1414 = vunpack.c.l.b16 %v296
      %v1415 = vunpack.c.h.b16 %v296
      %v1416 = vunpack.c.l.b16 %v297
      %v1417 = vunpack.c.h.b16 %v297
      %v1418 = vunpack.c.l.b16 %v298
      %v1419 = vunpack.c.h.b16 %v298
      %v1420 = vunpack.c.l.b16 %v299
      %v1421 = vunpack.c.h.b16 %v299
      %v1422 = vunpack.c.l.b16 %v300
      %v1423 = vunpack.c.h.b16 %v300
      %v1424 = vunpack.c.l.b16 %v301
      %v1425 = vunpack.c.h.b16 %v301
      %v1426 = vunpack.c.l.b16 %v302
      %v1427 = vunpack.c.h.b16 %v302
      %v1428 = vunpack.c.l.b16 %v303
      %v1429 = vunpack.c.h.b16 %v303
      %v1430 = vunpack.c.l.b16 %v304
      %v1431 = vunpack.c.h.b16 %v304
      %v1432 = vunpack.c.l.b16 %v305
      %v1433 = vunpack.c.h.b16 %v305
      %v1434 = vunpack.c.l.b16 %v306
      %v1435 = vunpack.c.h.b16 %v306
      %v1436 = vunpack.c.l.b16 %v307
      %v1437 = vunpack.c.h.b16 %v307
      %v1438 = vunpack.c.l.b16 %v308
      %v1439 = vunpack.c.h.b16 %v308
      %v1440 = vunpack.c.l.b16 %v309
      %v1441 = vunpack.c.h.b16 %v309
      %v1442 = vunpack.c.l.b16 %v310
      %v1443 = vunpack.c.h.b16 %v310
      %v1444 = vunpack.c.l.b16 %v311
      %v1445 = vunpack.c.h.b16 %v311
      %v1446 = vunpack.c.l.b16 %v312
      %v1447 = vunpack.c.h.b16 %v312
      %v1448 = vunpack.c.l.b16 %v313
      %v1449 = vunpack.c.h.b16 %v313
      %v1450 = vunpack.c.l.b16 %v314
      %v1451 = vunpack.c.h.b16 %v314
      %v1452 = vunpack.c.l.b16 %v315
      %v1453 = vunpack.c.h.b16 %v315
      %v1454 = vunpack.c.l.b16 %v316
      %v1455 = vunpack.c.h.b16 %v316
      %v1456 = vunpack.c.l.b16 %v317
      %v1457 = vunpack.c.h.b16 %v317
      %v1458 = vunpack.c.l.b16 %v318
      %v1459 = vunpack.c.h.b16 %v318
      %v1460 = vunpack.c.l.b16 %v319
      %v1461 = vunpack.c.h.b16 %v319
      %v1462 = vunpack.c.l.b16 %v320
      %v1463 = vunpack.c.h.b16 %v320
      %v1464 = vunpack.c.l.b16 %v321
      %v1465 = vunpack.c.h.b16 %v321
      %v1466 = vunpack.c.l.b16 %v322
      %v1467 = vunpack.c.h.b16 %v322
      %v1468 = vunpack.c.l.b16 %v323
      %v1469 = vunpack.c.h.b16 %v323
      %v1470 = vunpack.c.l.b16 %v324
      %v1471 = vunpack.c.h.b16 %v324
      %v1472 = vunpack.c.l.b16 %v325
      %v1473 = vunpack.c.h.b16 %v325
      %v1474 = vunpack.c.l.b16 %v326
      %v1475 = vunpack.c.h.b16 %v326
      %v1476 = vunpack.c.l.b16 %v327
      %v1477 = vunpack.c.h.b16 %v327
      %v1478 = vunpack.c.l.b16 %v328
      %v1479 = vunpack.c.h.b16 %v328
      %v1480 = vunpack.c.l.b16 %v329
      %v1481 = vunpack.c.h.b16 %v329
      %v1482 = vunpack.c.l.b16 %v330
      %v1483 = vunpack.c.h.b16 %v330
      %v1484 = vunpack.c.l.b16 %v331
      %v1485 = vunpack.c.h.b16 %v331
      %v1486 = vunpack.c.l.b16 %v332
      %v1487 = vunpack.c.h.b16 %v332
      %v1488 = vunpack.c.l.b16 %v333
      %v1489 = vunpack.c.h.b16 %v333
      %v1490 = vunpack.c.l.b16 %v334
      %v1491 = vunpack.c.h.b16 %v334
      %v1492 = vunpack.c.l.b16 %v335
      %v1493 = vunpack.c.h.b16 %v335
      %v1494 = vunpack.c.l.b16 %v336
      %v1495 = vunpack.c.h.b16 %v336
      %v1496 = vunpack.c.l.b16 %v337
      %v1497 = vunpack.c.h.b16 %v337
      %v1498 = vunpack.c.l.b16 %v338
      %v1499 = vunpack.c.h.b16 %v338
      %v1500 = vunpack.c.l.b16 %v339
      %v1501 = vunpack.c.h.b16 %v339
      %v1502 = vunpack.c.l.b16 %v340
      %v1503 = vunpack.c.h.b16 %v340
      %v1504 = vunpack.c.l.b16 %v341
      %v1505 = vunpack.c.h.b16 %v341
      %v1506 = vunpack.c.l.b16 %v342
      %v1507 = vunpack.c.h.b16 %v342
      %v1508 = vunpack.c.l.b16 %v343
      %v1509 = vunpack.c.h.b16 %v343
      %v1510 = vunpack.c.l.b16 %v344
      %v1511 = vunpack.c.h.b16 %v344
      %v1512 = vunpack.c.l.b16 %v345
      %v1513 = vunpack.c.h.b16 %v345
      %v1514 = vunpack.c.l.b16 %v346
      %v1515 = vunpack.c.h.b16 %v346
      %v1516 = vunpack.c.l.b16 %v347
      %v1517 = vunpack.c.h.b16 %v347
      %v1518 = vunpack.c.l.b16 %v348
      %v1519 = vunpack.c.h.b16 %v348
      %v1520 = vunpack.c.l.b16 %v349
      %v1521 = vunpack.c.h.b16 %v349
      %v1522 = vunpack.c.l.b16 %v350
      %v1523 = vunpack.c.h.b16 %v350
      %v1524 = vunpack.c.l.b16 %v351
      %v1525 = vunpack.c.h.b16 %v351
      %v1526 = vunpack.c.l.b16 %v352
      %v1527 = vunpack.c.h.b16 %v352
      %v1528 = vunpack.c.l.b16 %v353
      %v1529 = vunpack.c.h.b16 %v353
      %v1530 = vunpack.c.l.b16 %v354
      %v1531 = vunpack.c.h.b16 %v354
      %v1532 = vunpack.c.l.b16 %v355
      %v1533 = vunpack.c.h.b16 %v355
      %v1534 = vunpack.c.l.b16 %v356
      %v1535 = vunpack.c.h.b16 %v356
      %v1536 = vunpack.c.l.b16 %v357
      %v1537 = vunpack.c.h.b16 %v357
      %v1538 = vunpack.c.l.b16 %v358
      %v1539 = vunpack.c.h.b16 %v358
      %v1540 = vunpack.c.l.b16 %v359
      %v1541 = vunpack.c.h.b16 %v359
      %v1542 = vunpack.c.l.b16 %v360
      %v1543 = vunpack.c.h.b16 %v360
      %v1544 = vunpack.c.l.b16 %v361
      %v1545 = vunpack.c.h.b16 %v361
      %v1546 = vunpack.c.l.b16 %v362
      %v1547 = vunpack.c.h.b16 %v362
      %v1548 = vunpack.c.l.b16 %v363
      %v1549 = vunpack.c.h.b16 %v363
      %v1550 = vunpack.c.l.b16 %v364
      %v1551 = vunpack.c.h.b16 %v364
      %v1552 = vunpack.c.l.b16 %v365
      %v1553 = vunpack.c.h.b16 %v365
      %v1554 = vunpack.c.l.b16 %v366
      %v1555 = vunpack.c.h.b16 %v366
      %v1556 = vunpack.c.l.b16 %v367
      %v1557 = vunpack.c.h.b16 %v367
      %v1558 = vunpack.c.l.b16 %v368
      %v1559 = vunpack.c.h.b16 %v368
      %v1560 = vunpack.c.l.b16 %v369
      %v1561 = vunpack.c.h.b16 %v369
      %v1562 = vunpack.c.l.b16 %v370
      %v1563 = vunpack.c.h.b16 %v370
      %v1564 = vunpack.c.l.b16 %v371
      %v1565 = vunpack.c.h.b16 %v371
      %v1566 = vunpack.c.l.b16 %v372
      %v1567 = vunpack.c.h.b16 %v372
      %v1568 = vunpack.c.l.b16 %v373
      %v1569 = vunpack.c.h.b16 %v373
      %v1570 = vunpack.c.l.b16 %v374
      %v1571 = vunpack.c.h.b16 %v374
      %v1572 = vunpack.c.l.b16 %v375
      %v1573 = vunpack.c.h.b16 %v375
      %v1574 = vunpack.c.l.b16 %v376
      %v1575 = vunpack.c.h.b16 %v376
      %v1576 = vunpack.c.l.b16 %v377
      %v1577 = vunpack.c.h.b16 %v377
      %v1578 = vunpack.c.l.b16 %v378
      %v1579 = vunpack.c.h.b16 %v378
      %v1580 = vunpack.c.l.b16 %v379
      %v1581 = vunpack.c.h.b16 %v379
      %v1582 = vunpack.c.l.b16 %v380
      %v1583 = vunpack.c.h.b16 %v380
      %v1584 = vunpack.c.l.b16 %v381
      %v1585 = vunpack.c.h.b16 %v381
      %v1586 = vunpack.c.l.b16 %v382
      %v1587 = vunpack.c.h.b16 %v382
      %v1588 = vunpack.c.l.b16 %v383
      %v1589 = vunpack.c.h.b16 %v383
      %v1590 = vunpack.c.l.b16 %v384
      %v1591 = vunpack.c.h.b16 %v384
      %v1592 = vunpack.c.l.b16 %v385
      %v1593 = vunpack.c.h.b16 %v385
      %v1594 = vunpack.c.l.b16 %v386
      %v1595 = vunpack.c.h.b16 %v386
      %v1596 = vunpack.c.l.b16 %v387
      %v1597 = vunpack.c.h.b16 %v387
      %v1598 = vunpack.c.l.b16 %v388
      %v1599 = vunpack.c.h.b16 %v388
      %v1600 = vunpack.c.l.b16 %v389
      %v1601 = vunpack.c.h.b16 %v389
      %v1602 = vunpack.c.l.b16 %v390
      %v1603 = vunpack.c.h.b16 %v390
      %v1604 = vunpack.c.l.b16 %v391
      %v1605 = vunpack.c.h.b16 %v391
      %v1606 = vunpack.c.l.b16 %v392
      %v1607 = vunpack.c.h.b16 %v392
      %v1608 = vunpack.c.l.b16 %v393
      %v1609 = vunpack.c.h.b16 %v393
      %v1610 = vunpack.c.l.b16 %v394
      %v1611 = vunpack.c.h.b16 %v394
      %v1612 = vunpack.c.l.b16 %v395
      %v1613 = vunpack.c.h.b16 %v395
      %v1614 = vunpack.c.l.b16 %v396
      %v1615 = vunpack.c.h.b16 %v396
      %v1616 = vunpack.c.l.b16 %v397
      %v1617 = vunpack.c.h.b16 %v397
      %v1618 = vunpack.c.l.b16 %v398
      %v1619 = vunpack.c.h.b16 %v398
      %v1620 = vunpack.c.l.b16 %v399
      %v1621 = vunpack.c.h.b16 %v399
      %v1622 = vunpack.c.l.b16 %v400
      %v1623 = vunpack.c.h.b16 %v400
      %v1624 = vunpack.c.l.b16 %v401
      %v1625 = vunpack.c.h.b16 %v401
      %v1626 = vunpack.c.l.b16 %v402
      %v1627 = vunpack.c.h.b16 %v402
      %v1628 = vunpack.c.l.b16 %v403
      %v1629 = vunpack.c.h.b16 %v403
      %v1630 = vunpack.c.l.b16 %v404
      %v1631 = vunpack.c.h.b16 %v404
      %v1632 = vunpack.c.l.b16 %v405
      %v1633 = vunpack.c.h.b16 %v405
      %v1634 = vunpack.c.l.b16 %v406
      %v1635 = vunpack.c.h.b16 %v406
      %v1636 = vunpack.c.l.b16 %v407
      %v1637 = vunpack.c.h.b16 %v407
      %v1638 = vunpack.c.l.b16 %v408
      %v1639 = vunpack.c.h.b16 %v408
      %v1640 = vunpack.c.l.b16 %v409
      %v1641 = vunpack.c.h.b16 %v409
      %v1642 = vunpack.c.l.b16 %v410
      %v1643 = vunpack.c.h.b16 %v410
      %v1644 = vunpack.c.l.b16 %v411
      %v1645 = vunpack.c.h.b16 %v411
      %v1646 = vunpack.c.l.b16 %v412
      %v1647 = vunpack.c.h.b16 %v412
      %v1648 = vunpack.c.l.b16 %v413
      %v1649 = vunpack.c.h.b16 %v413
      %v1650 = vunpack.c.l.b16 %v414
      %v1651 = vunpack.c.h.b16 %v414
      %v1652 = vunpack.c.l.b16 %v415
      %v1653 = vunpack.c.h.b16 %v415
      %v1654 = vunpack.c.l.b16 %v416
      %v1655 = vunpack.c.h.b16 %v416
      %v1656 = vunpack.c.l.b16 %v417
      %v1657 = vunpack.c.h.b16 %v417
      %v1658 = vunpack.c.l.b16 %v418
      %v1659 = vunpack.c.h.b16 %v418
      %v1660 = vunpack.c.l.b16 %v419
      %v1661 = vunpack.c.h.b16 %v419
      %v1662 = vunpack.c.l.b16 %v420
      %v1663 = vunpack.c.h.b16 %v420
      %v1664 = vunpack.c.l.b16 %v421
      %v1665 = vunpack.c.h.b16 %v421
      %v1666 = vunpack.c.l.b16 %v422
      %v1667 = vunpack.c.h.b16 %v422
      %v1668 = vunpack.c.l.b16 %v423
      %v1669 = vunpack.c.h.b16 %v423
      %v1670 = vunpack.c.l.b16 %v424
      %v1671 = vunpack.c.h.b16 %v424
      %v1672 = vunpack.c.l.b16 %v425
      %v1673 = vunpack.c.h.b16 %v425
      %v1674 = vunpack.c.l.b16 %v426
      %v1675 = vunpack.c.h.b16 %v426
      %v1676 = vunpack.c.l.b16 %v427
      %v1677 = vunpack.c.h.b16 %v427
      %v1678 = vunpack.c.l.b16 %v428
      %v1679 = vunpack.c.h.b16 %v428
      %v1680 = vunpack.c.l.b16 %v429
      %v1681 = vunpack.c.h.b16 %v429
      %v1682 = vunpack.c.l.b16 %v430
      %v1683 = vunpack.c.h.b16 %v430
      %v1684 = vunpack.c.l.b16 %v431
      %v1685 = vunpack.c.h.b16 %v431
      %v1686 = vunpack.c.l.b16 %v432
      %v1687 = vunpack.c.h.b16 %v432
      %v1688 = vunpack.c.l.b16 %v433
      %v1689 = vunpack.c.h.b16 %v433
      %v1690 = vunpack.c.l.b16 %v434
      %v1691 = vunpack.c.h.b16 %v434
      %v1692 = vunpack.c.l.b16 %v435
      %v1693 = vunpack.c.h.b16 %v435
      %v1694 = vunpack.c.l.b16 %v436
      %v1695 = vunpack.c.h.b16 %v436
      %v1696 = vunpack.c.l.b16 %v437
      %v1697 = vunpack.c.h.b16 %v437
      %v1698 = vunpack.c.l.b16 %v438
      %v1699 = vunpack.c.h.b16 %v438
      %v1700 = vunpack.c.l.b16 %v439
      %v1701 = vunpack.c.h.b16 %v439
      %v1702 = vunpack.c.l.b16 %v440
      %v1703 = vunpack.c.h.b16 %v440
      %v1704 = vunpack.c.l.b16 %v441
      %v1705 = vunpack.c.h.b16 %v441
      %v1706 = vunpack.c.l.b16 %v442
      %v1707 = vunpack.c.h.b16 %v442
      %v1708 = vunpack.c.l.b16 %v443
      %v1709 = vunpack.c.h.b16 %v443
      %v1710 = vunpack.c.l.b16 %v444
      %v1711 = vunpack.c.h.b16 %v444
      %v1712 = vunpack.c.l.b16 %v445
      %v1713 = vunpack.c.h.b16 %v445
      %v1714 = vunpack.c.l.b16 %v446
      %v1715 = vunpack.c.h.b16 %v446
      %v1716 = vunpack.c.l.b16 %v447
      %v1717 = vunpack.c.h.b16 %v447
      %v1718 = vunpack.c.l.b16 %v448
      %v1719 = vunpack.c.h.b16 %v448
      %v1720 = vunpack.c.l.b16 %v449
      %v1721 = vunpack.c.h.b16 %v449
      %v1722 = vunpack.c.l.b16 %v450
      %v1723 = vunpack.c.h.b16 %v450
      %v1724 = vunpack.c.l.b16 %v451
      %v1725 = vunpack.c.h.b16 %v451
      %v1726 = vunpack.c.l.b16 %v452
      %v1727 = vunpack.c.h.b16 %v452
      %v1728 = vunpack.c.l.b16 %v453
      %v1729 = vunpack.c.h.b16 %v453
      %v1730 = vunpack.c.l.b16 %v454
      %v1731 = vunpack.c.h.b16 %v454
      %v1732 = vunpack.c.l.b16 %v455
      %v1733 = vunpack.c.h.b16 %v455
      %v1734 = vunpack.c.l.b16 %v456
      %v1735 = vunpack.c.h.b16 %v456
      %v1736 = vunpack.c.l.b16 %v457
      %v1737 = vunpack.c.h.b16 %v457
      %v1738 = vunpack.c.l.b16 %v458
      %v1739 = vunpack.c.h.b16 %v458
      %v1740 = vunpack.c.l.b16 %v459
      %v1741 = vunpack.c.h.b16 %v459
      %v1742 = vunpack.c.l.b16 %v460
      %v1743 = vunpack.c.h.b16 %v460
      %v1744 = vunpack.c.l.b16 %v461
      %v1745 = vunpack.c.h.b16 %v461
      %v1746 = vunpack.c.l.b16 %v462
      %v1747 = vunpack.c.h.b16 %v462
      %v1748 = vunpack.c.l.b16 %v463
      %v1749 = vunpack.c.h.b16 %v463
      %v1750 = vunpack.c.l.b16 %v464
      %v1751 = vunpack.c.h.b16 %v464
      %v1752 = vunpack.c.l.b16 %v465
      %v1753 = vunpack.c.h.b16 %v465
      %v1754 = vunpack.c.l.b16 %v466
      %v1755 = vunpack.c.h.b16 %v466
      %v1756 = vunpack.c.l.b16 %v467
      %v1757 = vunpack.c.h.b16 %v467
      %v1758 = vunpack.c.l.b16 %v468
      %v1759 = vunpack.c.h.b16 %v468
      %v1760 = vunpack.c.l.b16 %v469
      %v1761 = vunpack.c.h.b16 %v469
      %v1762 = vunpack.c.l.b16 %v470
      %v1763 = vunpack.c.h.b16 %v470
      %v1764 = vunpack.c.l.b16 %v471
      %v1765 = vunpack.c.h.b16 %v471
      %v1766 = vunpack.c.l.b16 %v472
      %v1767 = vunpack.c.h.b16 %v472
      %v1768 = vunpack.c.l.b16 %v473
      %v1769 = vunpack.c.h.b16 %v473
      %v1770 = vunpack.c.l.b16 %v474
      %v1771 = vunpack.c.h.b16 %v474
      %v1772 = vunpack.c.l.b16 %v475
      %v1773 = vunpack.c.h.b16 %v475
      %v1774 = vunpack.c.l.b16 %v476
      %v1775 = vunpack.c.h.b16 %v476
      %v1776 = vunpack.c.l.b16 %v477
      %v1777 = vunpack.c.h.b16 %v477
      %v1778 = vunpack.c.l.b16 %v478
      %v1779 = vunpack.c.h.b16 %v478
      %v1780 = vunpack.c.l.b16 %v479
      %v1781 = vunpack.c.h.b16 %v479
      %v1782 = vunpack.c.l.b16 %v480
      %v1783 = vunpack.c.h.b16 %v480
      %v1784 = vunpack.c.l.b16 %v481
      %v1785 = vunpack.c.h.b16 %v481
      %v1786 = vunpack.c.l.b16 %v482
      %v1787 = vunpack.c.h.b16 %v482
      %v1788 = vunpack.c.l.b16 %v483
      %v1789 = vunpack.c.h.b16 %v483
      %v1790 = vunpack.c.l.b16 %v484
      %v1791 = vunpack.c.h.b16 %v484
      %v1792 = vunpack.c.l.b16 %v485
      %v1793 = vunpack.c.h.b16 %v485
      %v1794 = vunpack.c.l.b16 %v486
      %v1795 = vunpack.c.h.b16 %v486
      %v1796 = vunpack.c.l.b16 %v487
      %v1797 = vunpack.c.h.b16 %v487
      %v1798 = vunpack.c.l.b16 %v488
      %v1799 = vunpack.c.h.b16 %v488
      %v1800 = vunpack.c.l.b16 %v489
      %v1801 = vunpack.c.h.b16 %v489
      %v1802 = vunpack.c.l.b16 %v490
      %v1803 = vunpack.c.h.b16 %v490
      %v1804 = vunpack.c.l.b16 %v491
      %v1805 = vunpack.c.h.b16 %v491
      %v1806 = vunpack.c.l.b16 %v492
      %v1807 = vunpack.c.h.b16 %v492
      %v1808 = vunpack.c.l.b16 %v493
      %v1809 = vunpack.c.h.b16 %v493
      %v1810 = vunpack.c.l.b16 %v494
      %v1811 = vunpack.c.h.b16 %v494
      %v1812 = vunpack.c.l.b16 %v495
      %v1813 = vunpack.c.h.b16 %v495
      %v1814 = vunpack.c.l.b16 %v496
      %v1815 = vunpack.c.h.b16 %v496
      %v1816 = vunpack.c.l.b16 %v497
      %v1817 = vunpack.c.h.b16 %v497
      %v1818 = vunpack.c.l.b16 %v498
      %v1819 = vunpack.c.h.b16 %v498
      %v1820 = vunpack.c.l.b16 %v499
      %v1821 = vunpack.c.h.b16 %v499
      %v1822 = vunpack.c.l.b16 %v500
      %v1823 = vunpack.c.h.b16 %v500
      %v1824 = vunpack.c.l.b16 %v501
      %v1825 = vunpack.c.h.b16 %v501
      %v1826 = vunpack.c.l.b16 %v502
      %v1827 = vunpack.c.h.b16 %v502
      %v1828 = vunpack.c.l.b16 %v503
      %v1829 = vunpack.c.h.b16 %v503
      %v1830 = vunpack.c.l.b16 %v504
      %v1831 = vunpack.c.h.b16 %v504
      %v1832 = vunpack.c.l.b16 %v505
      %v1833 = vunpack.c.h.b16 %v505
      %v1834 = vunpack.c.l.b16 %v506
      %v1835 = vunpack.c.h.b16 %v506
      %v1836 = vunpack.c.l.b16 %v507
      %v1837 = vunpack.c.h.b16 %v507
      %v1838 = vunpack.c.l.b16 %v508
      %v1839 = vunpack.c.h.b16 %v508
      %v1840 = vunpack.c.l.b16 %v509
      %v1841 = vunpack.c.h.b16 %v509
      %v1842 = vunpack.c.l.b16 %v510
      %v1843 = vunpack.c.h.b16 %v510
      %v1844 = vunpack.c.l.b16 %v511
      %v1845 = vunpack.c.h.b16 %v511
      %v1846 = vunpack.c.l.b16 %v512
      %v1847 = vunpack.c.h.b16 %v512
      %v1848 = vunpack.c.l.b16 %v513
      %v1849 = vunpack.c.h.b16 %v513
      %v1850 = vunpack.c.l.b16 %v514
      %v1851 = vunpack.c.h.b16 %v514
      %v1852 = vunpack.c.l.b16 %v515
      %v1853 = vunpack.c.h.b16 %v515
      %v1854 = vunpack.c.l.b16 %v516
      %v1855 = vunpack.c.h.b16 %v516
      %v1856 = vunpack.c.l.b16 %v517
      %v1857 = vunpack.c.h.b16 %v517
      %v1858 = vunpack.c.l.b16 %v518
      %v1859 = vunpack.c.h.b16 %v518
      %v1860 = vunpack.c.l.b16 %v519
      %v1861 = vunpack.c.h.b16 %v519
      %v1862 = vunpack.c.l.b16 %v520
      %v1863 = vunpack.c.h.b16 %v520
      %v1864 = vunpack.c.l.b16 %v521
      %v1865 = vunpack.c.h.b16 %v521
      %v1866 = vunpack.c.l.b16 %v522
      %v1867 = vunpack.c.h.b16 %v522
      %v1868 = vunpack.c.l.b16 %v523
      %v1869 = vunpack.c.h.b16 %v523
      %v1870 = vunpack.c.l.b16 %v524
      %v1871 = vunpack.c.h.b16 %v524
      %v1872 = vunpack.c.l.b16 %v525
      %v1873 = vunpack.c.h.b16 %v525
      %v1874 = vunpack.c.l.b16 %v526
      %v1875 = vunpack.c.h.b16 %v526
      %v1876 = vunpack.c.l.b16 %v527
      %v1877 = vunpack.c.h.b16 %v527
      %v1878 = vunpack.c.l.b16 %v528
      %v1879 = vunpack.c.h.b16 %v528
      %v1880 = vunpack.c.l.b16 %v529
      %v1881 = vunpack.c.h.b16 %v529
      %v1882 = vunpack.c.l.b16 %v530
      %v1883 = vunpack.c.h.b16 %v530
      %v1884 = vunpack.c.l.b16 %v531
      %v1885 = vunpack.c.h.b16 %v531
      %v1886 = vunpack.c.l.b16 %v532
      %v1887 = vunpack.c.h.b16 %v532
      %v1888 = vunpack.c.l.b16 %v533
      %v1889 = vunpack.c.h.b16 %v533
      %v1890 = vunpack.c.l.b16 %v534
      %v1891 = vunpack.c.h.b16 %v534
      %v1892 = vunpack.c.l.b16 %v535
      %v1893 = vunpack.c.h.b16 %v535
      %v1894 = vunpack.c.l.b16 %v536
      %v1895 = vunpack.c.h.b16 %v536
      %v1896 = vunpack.c.l.b16 %v537
      %v1897 = vunpack.c.h.b16 %v537
      %v1898 = vunpack.c.l.b16 %v538
      %v1899 = vunpack.c.h.b16 %v538
      %v1900 = vunpack.c.l.b16 %v539
      %v1901 = vunpack.c.h.b16 %v539
      %v1902 = vunpack.c.l.b16 %v540
      %v1903 = vunpack.c.h.b16 %v540
      %v1904 = vunpack.c.l.b16 %v541
      %v1905 = vunpack.c.h.b16 %v541
      %v1906 = vunpack.c.l.b16 %v542
      %v1907 = vunpack.c.h.b16 %v542
      %v1908 = vunpack.c.l.b16 %v543
      %v1909 = vunpack.c.h.b16 %v543
      %v1910 = vunpack.c.l.b16 %v544
      %v1911 = vunpack.c.h.b16 %v544
      %v1912 = vunpack.c.l.b16 %v545
      %v1913 = vunpack.c.h.b16 %v545
      %v1914 = vunpack.c.l.b16 %v546
      %v1915 = vunpack.c.h.b16 %v546
      %v1916 = vunpack.c.l.b16 %v547
      %v1917 = vunpack.c.h.b16 %v547
      %v1918 = vunpack.c.l.b16 %v548
      %v1919 = vunpack.c.h.b16 %v548
      %v1920 = vunpack.c.l.b16 %v549
      %v1921 = vunpack.c.h.b16 %v549
      %v1922 = vunpack.c.l.b16 %v550
      %v1923 = vunpack.c.h.b16 %v550
      %v1924 = vunpack.c.l.b16 %v551
      %v1925 = vunpack.c.h.b16 %v551
      %v1926 = vunpack.c.l.b16 %v552
      %v1927 = vunpack.c.h.b16 %v552
      %v1928 = vunpack.c.l.b16 %v553
      %v1929 = vunpack.c.h.b16 %v553
      %v1930 = vunpack.c.l.b16 %v554
      %v1931 = vunpack.c.h.b16 %v554
      %v1932 = vunpack.c.l.b16 %v555
      %v1933 = vunpack.c.h.b16 %v555
      %v1934 = vunpack.c.l.b16 %v556
      %v1935 = vunpack.c.h.b16 %v556
      %v1936 = vunpack.c.l.b16 %v557
      %v1937 = vunpack.c.h.b16 %v557
      %v1938 = vunpack.c.l.b16 %v558
      %v1939 = vunpack.c.h.b16 %v558
      %v1940 = vunpack.c.l.b16 %v559
      %v1941 = vunpack.c.h.b16 %v559
      %v1942 = vunpack.c.l.b16 %v560
      %v1943 = vunpack.c.h.b16 %v560
      %v1944 = vunpack.c.l.b16 %v561
      %v1945 = vunpack.c.h.b16 %v561
      %v1946 = vunpack.c.l.b16 %v562
      %v1947 = vunpack.c.h.b16 %v562
      %v1948 = vunpack.c.l.b16 %v563
      %v1949 = vunpack.c.h.b16 %v563
      %v1950 = vunpack.c.l.b16 %v564
      %v1951 = vunpack.c.h.b16 %v564
      %v1952 = vunpack.c.l.b16 %v565
      %v1953 = vunpack.c.h.b16 %v565
      %v1954 = vunpack.c.l.b16 %v566
      %v1955 = vunpack.c.h.b16 %v566
      %v1956 = vunpack.c.l.b16 %v567
      %v1957 = vunpack.c.h.b16 %v567
      %v1958 = vunpack.c.l.b16 %v568
      %v1959 = vunpack.c.h.b16 %v568
      %v1960 = vunpack.c.l.b16 %v569
      %v1961 = vunpack.c.h.b16 %v569
      %v1962 = vunpack.c.l.b16 %v570
      %v1963 = vunpack.c.h.b16 %v570
      %v1964 = vunpack.c.l.b16 %v571
      %v1965 = vunpack.c.h.b16 %v571
      %v1966 = vunpack.c.l.b16 %v572
      %v1967 = vunpack.c.h.b16 %v572
      %v1968 = vunpack.c.l.b16 %v573
      %v1969 = vunpack.c.h.b16 %v573
      %v1970 = vunpack.c.l.b16 %v574
      %v1971 = vunpack.c.h.b16 %v574
      %v1972 = vunpack.c.l.b16 %v575
      %v1973 = vunpack.c.h.b16 %v575
      %v1974 = vunpack.c.l.b16 %v576
      %v1975 = vunpack.c.h.b16 %v576
      %v1976 = vunpack.c.l.b16 %v577
      %v1977 = vunpack.c.h.b16 %v577
      %v1978 = vunpack.c.l.b16 %v578
      %v1979 = vunpack.c.h.b16 %v578
      %v1980 = vunpack.c.l.b16 %v579
      %v1981 = vunpack.c.h.b16 %v579
      %v1982 = vunpack.c.l.b16 %v580
      %v1983 = vunpack.c.h.b16 %v580
      %v1984 = vunpack.c.l.b16 %v581
      %v1985 = vunpack.c.h.b16 %v581
      %v1986 = vunpack.c.l.b16 %v582
      %v1987 = vunpack.c.h.b16 %v582
      %v1988 = vunpack.c.l.b16 %v583
      %v1989 = vunpack.c.h.b16 %v583
      %v1990 = vunpack.c.l.b16 %v584
      %v1991 = vunpack.c.h.b16 %v584
      %v1992 = vunpack.c.l.b16 %v585
      %v1993 = vunpack.c.h.b16 %v585
      %v1994 = vunpack.c.l.b16 %v586
      %v1995 = vunpack.c.h.b16 %v586
      %v1996 = vunpack.c.l.b16 %v587
      %v1997 = vunpack.c.h.b16 %v587
      %v1998 = vunpack.c.l.b16 %v588
      %v1999 = vunpack.c.h.b16 %v588
      %v2000 = vunpack.c.l.b16 %v589
      %v2001 = vunpack.c.h.b16 %v589
      %v2002 = vunpack.c.l.b16 %v590
      %v2003 = vunpack.c.h.b16 %v590
      %v2004 = vunpack.c.l.b16 %v591
      %v2005 = vunpack.c.h.b16 %v591
      %v2006 = vunpack.c.l.b16 %v592
      %v2007 = vunpack.c.h.b16 %v592
      %v2008 = vunpack.c.l.b16 %v593
      %v2009 = vunpack.c.h.b16 %v593
      %v2010 = vunpack.c.l.b16 %v594
      %v2011 = vunpack.c.h.b16 %v594
      %v2012 = vunpack.c.l.b16 %v595
      %v2013 = vunpack.c.h.b16 %v595
      %v2014 = vunpack.c.l.b16 %v596
      %v2015 = vunpack.c.h.b16 %v596
      %v2016 = vunpack.c.l.b16 %v597
      %v2017 = vunpack.c.h.b16 %v597
      %v2018 = vunpack.c.l.b16 %v598
      %v2019 = vunpack.c.h.b16 %v598
      %v2020 = vunpack.c.l.b16 %v599
      %v2021 = vunpack.c.h.b16 %v599
      %v2022 = vunpack.c.l.b16 %v600
      %v2023 = vunpack.c.h.b16 %v600
      %v2024 = vunpack.c.l.b16 %v601
      %v2025 = vunpack.c.h.b16 %v601
      %v2026 = vunpack.c.l.b16 %v602
      %v2027 = vunpack.c.h.b16 %v602
      %v2028 = vunpack.c.l.b16 %v603
      %v2029 = vunpack.c.h.b16 %v603
      %v2030 = vunpack.c.l.b16 %v604
      %v2031 = vunpack.c.h.b16 %v604
      %v2032 = vunpack.c.l.b16 %v605
      %v2033 = vunpack.c.h.b16 %v605
      %v2034 = vunpack.c.l.b16 %v606
      %v2035 = vunpack.c.h.b16 %v606
      %v2036 = vunpack.c.l.b16 %v607
      %v2037 = vunpack.c.h.b16 %v607
      %v2038 = vunpack.c.l.b16 %v608
      %v2039 = vunpack.c.h.b16 %v608
      %v2040 = vunpack.c.l.b16 %v609
      %v2041 = vunpack.c.h.b16 %v609
      %v2042 = vunpack.c.l.b16 %v610
      %v2043 = vunpack.c.h.b16 %v610
      %v2044 = vunpack.c.l.b16 %v611
      %v2045 = vunpack.c.h.b16 %v611
      %v2046 = vunpack.c.l.b16 %v612
      %v2047 = vunpack.c.h.b16 %v612
      %v2048 = vunpack.c.l.b16 %v613
      %v2049 = vunpack.c.h.b16 %v613
      %v2050 = vunpack.c.l.b16 %v614
      %v2051 = vunpack.c.h.b16 %v614
      %v2052 = vunpack.c.l.b16 %v615
      %v2053 = vunpack.c.h.b16 %v615
      %v2054 = vunpack.c.l.b16 %v616
      %v2055 = vunpack.c.h.b16 %v616
      %v2056 = vunpack.c.l.b16 %v617
      %v2057 = vunpack.c.h.b16 %v617
      %v2058 = vunpack.c.l.b16 %v618
      %v2059 = vunpack.c.h.b16 %v618
      %v2060 = vunpack.c.l.b16 %v619
      %v2061 = vunpack.c.h.b16 %v619
      %v2062 = vunpack.c.l.b16 %v620
      %v2063 = vunpack.c.h.b16 %v620
      %v2064 = vunpack.c.l.b16 %v621
      %v2065 = vunpack.c.h.b16 %v621
      %v2066 = vunpack.c.l.b16 %v622
      %v2067 = vunpack.c.h.b16 %v622
      %v2068 = vunpack.c.l.b16 %v623
      %v2069 = vunpack.c.h.b16 %v623
      %v2070 = vunpack.c.l.b16 %v624
      %v2071 = vunpack.c.h.b16 %v624
      %v2072 = vunpack.c.l.b16 %v625
      %v2073 = vunpack.c.h.b16 %v625
      %v2074 = vunpack.c.l.b16 %v626
      %v2075 = vunpack.c.h.b16 %v626
      %v2076 = vunpack.c.l.b16 %v627
      %v2077 = vunpack.c.h.b16 %v627
      %v2078 = vunpack.c.l.b16 %v628
      %v2079 = vunpack.c.h.b16 %v628
      %v2080 = vunpack.c.l.b16 %v629
      %v2081 = vunpack.c.h.b16 %v629
      %v2082 = vunpack.c.l.b16 %v630
      %v2083 = vunpack.c.h.b16 %v630
      %v2084 = vunpack.c.l.b16 %v631
      %v2085 = vunpack.c.h.b16 %v631
      %v2086 = vunpack.c.l.b16 %v632
      %v2087 = vunpack.c.h.b16 %v632
      %v2088 = vunpack.c.l.b16 %v633
      %v2089 = vunpack.c.h.b16 %v633
      %v2090 = vunpack.c.l.b16 %v634
      %v2091 = vunpack.c.h.b16 %v634
      %v2092 = vunpack.c.l.b16 %v635
      %v2093 = vunpack.c.h.b16 %v635
      %v2094 = vunpack.c.l.b16 %v636
      %v2095 = vunpack.c.h.b16 %v636
      %v2096 = vunpack.c.l.b16 %v637
      %v2097 = vunpack.c.h.b16 %v637
      %v2098 = vunpack.c.l.b16 %v638
      %v2099 = vunpack.c.h.b16 %v638
      %v2100 = vunpack.c.l.b16 %v639
      %v2101 = vunpack.c.h.b16 %v639
      %v2102 = vunpack.c.l.b16 %v640
      %v2103 = vunpack.c.h.b16 %v640
      %v2104 = vunpack.c.l.b16 %v641
      %v2105 = vunpack.c.h.b16 %v641
      %v2106 = vunpack.c.l.b16 %v642
      %v2107 = vunpack.c.h.b16 %v642
      %v2108 = vunpack.c.l.b16 %v643
      %v2109 = vunpack.c.h.b16 %v643
      %v2110 = vunpack.c.l.b16 %v644
      %v2111 = vunpack.c.h.b16 %v644
      %v2112 = vunpack.c.l.b16 %v645
      %v2113 = vunpack.c.h.b16 %v645
      %v2114 = vunpack.c.l.b16 %v646
      %v2115 = vunpack.c.h.b16 %v646
      %v2116 = vunpack.c.l.b16 %v647
      %v2117 = vunpack.c.h.b16 %v647
      %v2118 = vunpack.c.l.b16 %v648
      %v2119 = vunpack.c.h.b16 %v648
      %v2120 = vunpack.c.l.b16 %v649
      %v2121 = vunpack.c.h.b16 %v649
      %v2122 = vunpack.c.l.b16 %v650
      %v2123 = vunpack.c.h.b16 %v650
      %v2124 = vunpack.c.l.b16 %v651
      %v2125 = vunpack.c.h.b16 %v651
      %v2126 = vunpack.c.l.b16 %v652
      %v2127 = vunpack.c.h.b16 %v652
      %v2128 = vunpack.c.l.b16 %v653
      %v2129 = vunpack.c.h.b16 %v653
      %v2130 = vunpack.c.l.b16 %v654
      %v2131 = vunpack.c.h.b16 %v654
      %v2132 = vunpack.c.l.b16 %v655
      %v2133 = vunpack.c.h.b16 %v655
      %v2134 = vunpack.c.l.b16 %v656
      %v2135 = vunpack.c.h.b16 %v656
      %v2136 = vunpack.c.l.b16 %v657
      %v2137 = vunpack.c.h.b16 %v657
      %v2138 = vunpack.c.l.b16 %v658
      %v2139 = vunpack.c.h.b16 %v658
      %v2140 = vunpack.c.l.b16 %v659
      %v2141 = vunpack.c.h.b16 %v659
      %v2142 = vunpack.c.l.b16 %v660
      %v2143 = vunpack.c.h.b16 %v660
      %v2144 = vunpack.c.l.b16 %v661
      %v2145 = vunpack.c.h.b16 %v661
      %v2146 = vunpack.c.l.b16 %v662
      %v2147 = vunpack.c.h.b16 %v662
      %v2148 = vunpack.c.l.b16 %v663
      %v2149 = vunpack.c.h.b16 %v663
      %v2150 = vunpack.c.l.b16 %v664
      %v2151 = vunpack.c.h.b16 %v664
      %v2152 = vunpack.c.l.b16 %v665
      %v2153 = vunpack.c.h.b16 %v665
      %v2154 = vunpack.c.l.b16 %v666
      %v2155 = vunpack.c.h.b16 %v666
      %v2156 = vunpack.c.l.b16 %v667
      %v2157 = vunpack.c.h.b16 %v667
      %v2158 = vunpack.c.l.b16 %v668
      %v2159 = vunpack.c.h.b16 %v668
      %v2160 = vunpack.c.l.b16 %v669
      %v2161 = vunpack.c.h.b16 %v669
      %v2162 = vunpack.c.l.b16 %v670
      %v2163 = vunpack.c.h.b16 %v670
      %v2164 = vunpack.c.l.b16 %v671
      %v2165 = vunpack.c.h.b16 %v671
      %v2166 = vunpack.c.l.b16 %v672
      %v2167 = vunpack.c.h.b16 %v672
      %v2168 = vunpack.c.l.b16 %v673
      %v2169 = vunpack.c.h.b16 %v673
      %v2170 = vunpack.c.l.b16 %v674
      %v2171 = vunpack.c.h.b16 %v674
      %v2172 = vunpack.c.l.b16 %v675
      %v2173 = vunpack.c.h.b16 %v675
      %v2174 = vunpack.c.l.b16 %v676
      %v2175 = vunpack.c.h.b16 %v676
      %v2176 = vunpack.c.l.b16 %v677
      %v2177 = vunpack.c.h.b16 %v677
      %v2178 = vunpack.c.l.b16 %v678
      %v2179 = vunpack.c.h.b16 %v678
      %v2180 = vunpack.c.l.b16 %v679
      %v2181 = vunpack.c.h.b16 %v679
      %v2182 = vunpack.c.l.b16 %v680
      %v2183 = vunpack.c.h.b16 %v680
      %v2184 = vunpack.c.l.b16 %v681
      %v2185 = vunpack.c.h.b16 %v681
      %v2186 = vunpack.c.l.b16 %v682
      %v2187 = vunpack.c.h.b16 %v682
      %v2188 = vunpack.c.l.b16 %v683
      %v2189 = vunpack.c.h.b16 %v683
      %v2190 = vunpack.c.l.b16 %v684
      %v2191 = vunpack.c.h.b16 %v684
      %v2192 = vunpack.c.l.b16 %v685
      %v2193 = vunpack.c.h.b16 %v685
      %v2194 = vunpack.c.l.b16 %v686
      %v2195 = vunpack.c.h.b16 %v686
      %v2196 = vunpack.c.l.b16 %v687
      %v2197 = vunpack.c.h.b16 %v687
      %v2198 = vunpack.c.l.b16 %v688
      %v2199 = vunpack.c.h.b16 %v688
      %v2200 = vunpack.c.l.b16 %v689
      %v2201 = vunpack.c.h.b16 %v689
      %v2202 = vunpack.c.l.b16 %v690
      %v2203 = vunpack.c.h.b16 %v690
      %v2204 = vunpack.c.l.b16 %v691
      %v2205 = vunpack.c.h.b16 %v691
      %v2206 = vunpack.c.l.b16 %v692
      %v2207 = vunpack.c.h.b16 %v692
      %v2208 = vunpack.c.l.b16 %v693
      %v2209 = vunpack.c.h.b16 %v693
      %v2210 = vunpack.c.l.b16 %v694
      %v2211 = vunpack.c.h.b16 %v694
      %v2212 = vunpack.c.l.b16 %v695
      %v2213 = vunpack.c.h.b16 %v695
      %v2214 = vunpack.c.l.b16 %v696
      %v2215 = vunpack.c.h.b16 %v696
      %v2216 = vunpack.c.l.b16 %v697
      %v2217 = vunpack.c.h.b16 %v697
      %v2218 = vunpack.c.l.b16 %v698
      %v2219 = vunpack.c.h.b16 %v698
      %v2220 = vunpack.c.l.b16 %v699
      %v2221 = vunpack.c.h.b16 %v699
      %v2222 = vunpack.c.l.b16 %v700
      %v2223 = vunpack.c.h.b16 %v700
      %v2224 = vunpack.c.l.b16 %v701
      %v2225 = vunpack.c.h.b16 %v701
      %v2226 = vunpack.c.l.b16 %v702
      %v2227 = vunpack.c.h.b16 %v702
      %v2228 = vunpack.c.l.b16 %v703
      %v2229 = vunpack.c.h.b16 %v703
      %v2230 = vunpack.c.l.b16 %v704
      %v2231 = vunpack.c.h.b16 %v704
      %v2232 = vunpack.c.l.b16 %v705
      %v2233 = vunpack.c.h.b16 %v705
      %v2234 = vunpack.c.l.b16 %v706
      %v2235 = vunpack.c.h.b16 %v706
      %v2236 = vunpack.c.l.b16 %v707
      %v2237 = vunpack.c.h.b16 %v707
      %v2238 = vunpack.c.l.b16 %v708
      %v2239 = vunpack.c.h.b16 %v708
      %v2240 = vunpack.c.l.b16 %v709
      %v2241 = vunpack.c.h.b16 %v709
      %v2242 = vunpack.c.l.b16 %v710
      %v2243 = vunpack.c.h.b16 %v710
      %v2244 = vunpack.c.l.b16 %v711
      %v2245 = vunpack.c.h.b16 %v711
      %v2246 = vunpack.c.l.b16 %v712
      %v2247 = vunpack.c.h.b16 %v712
      %v2248 = vunpack.c.l.b16 %v713
      %v2249 = vunpack.c.h.b16 %v713
      %v2250 = vunpack.c.l.b16 %v714
      %v2251 = vunpack.c.h.b16 %v714
      %v2252 = vunpack.c.l.b16 %v715
      %v2253 = vunpack.c.h.b16 %v715
      %v2254 = vunpack.c.l.b16 %v716
      %v2255 = vunpack.c.h.b16 %v716
      %v2256 = vunpack.c.l.b16 %v717
      %v2257 = vunpack.c.h.b16 %v717
      %v2258 = vunpack.c.l.b16 %v718
      %v2259 = vunpack.c.h.b16 %v718
      %v2260 = vunpack.c.l.b16 %v719
      %v2261 = vunpack.c.h.b16 %v719
      %v2262 = vunpack.c.l.b16 %v720
      %v2263 = vunpack.c.h.b16 %v720
      %v2264 = vunpack.c.l.b16 %v721
      %v2265 = vunpack.c.h.b16 %v721
      %v2266 = vunpack.c.l.b16 %v722
      %v2267 = vunpack.c.h.b16 %v722
      %v2268 = vunpack.c.l.b16 %v723
      %v2269 = vunpack.c.h.b16 %v723
      %v2270 = vunpack.c.l.b16 %v724
      %v2271 = vunpack.c.h.b16 %v724
      %v2272 = vunpack.c.l.b16 %v725
      %v2273 = vunpack.c.h.b16 %v725
      %v2274 = vunpack.c.l.b16 %v726
      %v2275 = vunpack.c.h.b16 %v726
      %v2276 = vunpack.c.l.b16 %v727
      %v2277 = vunpack.c.h.b16 %v727
      %v2278 = vunpack.c.l.b16 %v728
      %v2279 = vunpack.c.h.b16 %v728
      %v2280 = vunpack.c.l.b16 %v729
      %v2281 = vunpack.c.h.b16 %v729
      %v2282 = vunpack.c.l.b16 %v730
      %v2283 = vunpack.c.h.b16 %v730
      %v2284 = vunpack.c.l.b16 %v731
      %v2285 = vunpack.c.h.b16 %v731
      %v2286 = vunpack.c.l.b16 %v732
      %v2287 = vunpack.c.h.b16 %v732
      %v2288 = vunpack.c.l.b16 %v733
      %v2289 = vunpack.c.h.b16 %v733
      %v2290 = vunpack.c.l.b16 %v734
      %v2291 = vunpack.c.h.b16 %v734
      %v2292 = vunpack.c.l.b16 %v735
      %v2293 = vunpack.c.h.b16 %v735
      %v2294 = vunpack.c.l.b16 %v736
      %v2295 = vunpack.c.h.b16 %v736
      %v2296 = vunpack.c.l.b16 %v737
      %v2297 = vunpack.c.h.b16 %v737
      %v2298 = vunpack.c.l.b16 %v738
      %v2299 = vunpack.c.h.b16 %v738
      %v2300 = vunpack.c.l.b16 %v739
      %v2301 = vunpack.c.h.b16 %v739
      %v2302 = vunpack.c.l.b16 %v740
      %v2303 = vunpack.c.h.b16 %v740
      %v2304 = vunpack.c.l.b16 %v741
      %v2305 = vunpack.c.h.b16 %v741
      %v2306 = vunpack.c.l.b16 %v742
      %v2307 = vunpack.c.h.b16 %v742
      %v2308 = vunpack.c.l.b16 %v743
      %v2309 = vunpack.c.h.b16 %v743
      %v2310 = vunpack.c.l.b16 %v744
      %v2311 = vunpack.c.h.b16 %v744
      %v2312 = vunpack.c.l.b16 %v745
      %v2313 = vunpack.c.h.b16 %v745
      %v2314 = vunpack.c.l.b16 %v746
      %v2315 = vunpack.c.h.b16 %v746
      %v2316 = vunpack.c.l.b16 %v747
      %v2317 = vunpack.c.h.b16 %v747
      %v2318 = vunpack.c.l.b16 %v748
      %v2319 = vunpack.c.h.b16 %v748
      %v2320 = vunpack.c.l.b16 %v749
      %v2321 = vunpack.c.h.b16 %v749
      %v2322 = vunpack.c.l.b16 %v750
      %v2323 = vunpack.c.h.b16 %v750
      %v2324 = vunpack.c.l.b16 %v751
      %v2325 = vunpack.c.h.b16 %v751
      %v2326 = vunpack.c.l.b16 %v752
      %v2327 = vunpack.c.h.b16 %v752
      %v2328 = vunpack.c.l.b16 %v753
      %v2329 = vunpack.c.h.b16 %v753
      %v2330 = vunpack.c.l.b16 %v754
      %v2331 = vunpack.c.h.b16 %v754
      %v2332 = vunpack.c.l.b16 %v755
      %v2333 = vunpack.c.h.b16 %v755
      %v2334 = vunpack.c.l.b16 %v756
      %v2335 = vunpack.c.h.b16 %v756
      %v2336 = vunpack.c.l.b16 %v757
      %v2337 = vunpack.c.h.b16 %v757
      %v2338 = vunpack.c.l.b16 %v758
      %v2339 = vunpack.c.h.b16 %v758
      %v2340 = vunpack.c.l.b16 %v759
      %v2341 = vunpack.c.h.b16 %v759
      %v2342 = vunpack.c.l.b16 %v760
      %v2343 = vunpack.c.h.b16 %v760
      %v2344 = vunpack.c.l.b16 %v761
      %v2345 = vunpack.c.h.b16 %v761
      %v2346 = vunpack.c.l.b16 %v762
      %v2347 = vunpack.c.h.b16 %v762
      %v2348 = vunpack.c.l.b16 %v763
      %v2349 = vunpack.c.h.b16 %v763
      %v2350 = vunpack.c.l.b16 %v764
      %v2351 = vunpack.c.h.b16 %v764
      %v2352 = vunpack.c.l.b16 %v765
      %v2353 = vunpack.c.h.b16 %v765
      %v2354 = vunpack.c.l.b16 %v766
      %v2355 = vunpack.c.h.b16 %v766
      %v2356 = vunpack.c.l.b16 %v767
      %v2357 = vunpack.c.h.b16 %v767
      %v2358 = vunpack.c.l.b16 %v768
      %v2359 = vunpack.c.h.b16 %v768
      %v2360 = vunpack.c.l.b16 %v769
      %v2361 = vunpack.c.h.b16 %v769
      %v2362 = vunpack.c.l.b16 %v770
      %v2363 = vunpack.c.h.b16 %v770
      %v2364 = vunpack.c.l.b16 %v771
      %v2365 = vunpack.c.h.b16 %v771
      %v2366 = vpack.c.b16 %v1350, %v1342
      %v2367 = vpack.c.b16 %v1351, %v1343
      %v2368 = vpack.c.b16 %v1352, %v1344
      %v2369 = vpack.c.b16 %v1353, %v1345
      %v2370 = vpack.c.b16 %v1354, %v1346
      %v2371 = vpack.c.b16 %v1355, %v1347
      %v2372 = vpack.c.b16 %v1356, %v1348
      %v2373 = vpack.c.b16 %v1357, %v1349
      %v2374 = vpack.c.b16 %v1366, %v1358
      %v2375 = vpack.c.b16 %v1367, %v1359
      %v2376 = vpack.c.b16 %v1368, %v1360
      %v2377 = vpack.c.b16 %v1369, %v1361
      %v2378 = vpack.c.b16 %v1370, %v1362
      %v2379 = vpack.c.b16 %v1371, %v1363
      %v2380 = vpack.c.b16 %v1372, %v1364
      %v2381 = vpack.c.b16 %v1373, %v1365
      %v2382 = vpack.c.b16 %v1382, %v1374
      %v2383 = vpack.c.b16 %v1383, %v1375
      %v2384 = vpack.c.b16 %v1384, %v1376
      %v2385 = vpack.c.b16 %v1385, %v1377
      %v2386 = vpack.c.b16 %v1386, %v1378
      %v2387 = vpack.c.b16 %v1387, %v1379
      %v2388 = vpack.c.b16 %v1388, %v1380
      %v2389 = vpack.c.b16 %v1389, %v1381
      %v2390 = vpack.c.b16 %v1398, %v1390
      %v2391 = vpack.c.b16 %v1399, %v1391
      %v2392 = vpack.c.b16 %v1400, %v1392
      %v2393 = vpack.c.b16 %v1401, %v1393
      %v2394 = vpack.c.b16 %v1402, %v1394
      %v2395 = vpack.c.b16 %v1403, %v1395
      %v2396 = vpack.c.b16 %v1404, %v1396
      %v2397 = vpack.c.b16 %v1405, %v1397
      %v2398 = vpack.c.b16 %v1414, %v1406
      %v2399 = vpack.c.b16 %v1415, %v1407
      %v2400 = vpack.c.b16 %v1416, %v1408
      %v2401 = vpack.c.b16 %v1417, %v1409
      %v2402 = vpack.c.b16 %v1418, %v1410
      %v2403 = vpack.c.b16 %v1419, %v1411
      %v2404 = vpack.c.b16 %v1420, %v1412
      %v2405 = vpack.c.b16 %v1421, %v1413
      %v2406 = vpack.c.b16 %v1430, %v1422
      %v2407 = vpack.c.b16 %v1431, %v1423
      %v2408 = vpack.c.b16 %v1432, %v1424
      %v2409 = vpack.c.b16 %v1433, %v1425
      %v2410 = vpack.c.b16 %v1434, %v1426
      %v2411 = vpack.c.b16 %v1435, %v1427
      %v2412 = vpack.c.b16 %v1436, %v1428
      %v2413 = vpack.c.b16 %v1437, %v1429
      %v2414 = vpack.c.b16 %v1446, %v1438
      %v2415 = vpack.c.b16 %v1447, %v1439
      %v2416 = vpack.c.b16 %v1448, %v1440
      %v2417 = vpack.c.b16 %v1449, %v1441
      %v2418 = vpack.c.b16 %v1450, %v1442
      %v2419 = vpack.c.b16 %v1451, %v1443
      %v2420 = vpack.c.b16 %v1452, %v1444
      %v2421 = vpack.c.b16 %v1453, %v1445
      %v2422 = vpack.c.b16 %v1462, %v1454
      %v2423 = vpack.c.b16 %v1463, %v1455
      %v2424 = vpack.c.b16 %v1464, %v1456
      %v2425 = vpack.c.b16 %v1465, %v1457
      %v2426 = vpack.c.b16 %v1466, %v1458
      %v2427 = vpack.c.b16 %v1467, %v1459
      %v2428 = vpack.c.b16 %v1468, %v1460
      %v2429 = vpack.c.b16 %v1469, %v1461
      %v2430 = vpack.c.b16 %v1478, %v1470
      %v2431 = vpack.c.b16 %v1479, %v1471
      %v2432 = vpack.c.b16 %v1480, %v1472
      %v2433 = vpack.c.b16 %v1481, %v1473
      %v2434 = vpack.c.b16 %v1482, %v1474
      %v2435 = vpack.c.b16 %v1483, %v1475
      %v2436 = vpack.c.b16 %v1484, %v1476
      %v2437 = vpack.c.b16 %v1485, %v1477
      %v2438 = vpack.c.b16 %v1494, %v1486
      %v2439 = vpack.c.b16 %v1495, %v1487
      %v2440 = vpack.c.b16 %v1496, %v1488
      %v2441 = vpack.c.b16 %v1497, %v1489
      %v2442 = vpack.c.b16 %v1498, %v1490
      %v2443 = vpack.c.b16 %v1499, %v1491
      %v2444 = vpack.c.b16 %v1500, %v1492
      %v2445 = vpack.c.b16 %v1501, %v1493
      %v2446 = vpack.c.b16 %v1510, %v1502
      %v2447 = vpack.c.b16 %v1511, %v1503
      %v2448 = vpack.c.b16 %v1512, %v1504
      %v2449 = vpack.c.b16 %v1513, %v1505
      %v2450 = vpack.c.b16 %v1514, %v1506
      %v2451 = vpack.c.b16 %v1515, %v1507
      %v2452 = vpack.c.b16 %v1516, %v1508
      %v2453 = vpack.c.b16 %v1517, %v1509
      %v2454 = vpack.c.b16 %v1526, %v1518
      %v2455 = vpack.c.b16 %v1527, %v1519
      %v2456 = vpack.c.b16 %v1528, %v1520
      %v2457 = vpack.c.b16 %v1529, %v1521
      %v2458 = vpack.c.b16 %v1530, %v1522
      %v2459 = vpack.c.b16 %v1531, %v1523
      %v2460 = vpack.c.b16 %v1532, %v1524
      %v2461 = vpack.c.b16 %v1533, %v1525
      %v2462 = vpack.c.b16 %v1542, %v1534
      %v2463 = vpack.c.b16 %v1543, %v1535
      %v2464 = vpack.c.b16 %v1544, %v1536
      %v2465 = vpack.c.b16 %v1545, %v1537
      %v2466 = vpack.c.b16 %v1546, %v1538
      %v2467 = vpack.c.b16 %v1547, %v1539
      %v2468 = vpack.c.b16 %v1548, %v1540
      %v2469 = vpack.c.b16 %v1549, %v1541
      %v2470 = vpack.c.b16 %v1558, %v1550
      %v2471 = vpack.c.b16 %v1559, %v1551
      %v2472 = vpack.c.b16 %v1560, %v1552
      %v2473 = vpack.c.b16 %v1561, %v1553
      %v2474 = vpack.c.b16 %v1562, %v1554
      %v2475 = vpack.c.b16 %v1563, %v1555
      %v2476 = vpack.c.b16 %v1564, %v1556
      %v2477 = vpack.c.b16 %v1565, %v1557
      %v2478 = vpack.c.b16 %v1574, %v1566
      %v2479 = vpack.c.b16 %v1575, %v1567
      %v2480 = vpack.c.b16 %v1576, %v1568
      %v2481 = vpack.c.b16 %v1577, %v1569
      %v2482 = vpack.c.b16 %v1578, %v1570
      %v2483 = vpack.c.b16 %v1579, %v1571
      %v2484 = vpack.c.b16 %v1580, %v1572
      %v2485 = vpack.c.b16 %v1581, %v1573
      %v2486 = vpack.c.b16 %v1590, %v1582
      %v2487 = vpack.c.b16 %v1591, %v1583
      %v2488 = vpack.c.b16 %v1592, %v1584
      %v2489 = vpack.c.b16 %v1593, %v1585
      %v2490 = vpack.c.b16 %v1594, %v1586
      %v2491 = vpack.c.b16 %v1595, %v1587
      %v2492 = vpack.c.b16 %v1596, %v1588
      %v2493 = vpack.c.b16 %v1597, %v1589
      %v2494 = vpack.c.b16 %v1606, %v1598
      %v2495 = vpack.c.b16 %v1607, %v1599
      %v2496 = vpack.c.b16 %v1608, %v1600
      %v2497 = vpack.c.b16 %v1609, %v1601
      %v2498 = vpack.c.b16 %v1610, %v1602
      %v2499 = vpack.c.b16 %v1611, %v1603
      %v2500 = vpack.c.b16 %v1612, %v1604
      %v2501 = vpack.c.b16 %v1613, %v1605
      %v2502 = vpack.c.b16 %v1622, %v1614
      %v2503 = vpack.c.b16 %v1623, %v1615
      %v2504 = vpack.c.b16 %v1624, %v1616
      %v2505 = vpack.c.b16 %v1625, %v1617
      %v2506 = vpack.c.b16 %v1626, %v1618
      %v2507 = vpack.c.b16 %v1627, %v1619
      %v2508 = vpack.c.b16 %v1628, %v1620
      %v2509 = vpack.c.b16 %v1629, %v1621
      %v2510 = vpack.c.b16 %v1638, %v1630
      %v2511 = vpack.c.b16 %v1639, %v1631
      %v2512 = vpack.c.b16 %v1640, %v1632
      %v2513 = vpack.c.b16 %v1641, %v1633
      %v2514 = vpack.c.b16 %v1642, %v1634
      %v2515 = vpack.c.b16 %v1643, %v1635
      %v2516 = vpack.c.b16 %v1644, %v1636
      %v2517 = vpack.c.b16 %v1645, %v1637
      %v2518 = vpack.c.b16 %v1654, %v1646
      %v2519 = vpack.c.b16 %v1655, %v1647
      %v2520 = vpack.c.b16 %v1656, %v1648
      %v2521 = vpack.c.b16 %v1657, %v1649
      %v2522 = vpack.c.b16 %v1658, %v1650
      %v2523 = vpack.c.b16 %v1659, %v1651
      %v2524 = vpack.c.b16 %v1660, %v1652
      %v2525 = vpack.c.b16 %v1661, %v1653
      %v2526 = vpack.c.b16 %v1670, %v1662
      %v2527 = vpack.c.b16 %v1671, %v1663
      %v2528 = vpack.c.b16 %v1672, %v1664
      %v2529 = vpack.c.b16 %v1673, %v1665
      %v2530 = vpack.c.b16 %v1674, %v1666
      %v2531 = vpack.c.b16 %v1675, %v1667
      %v2532 = vpack.c.b16 %v1676, %v1668
      %v2533 = vpack.c.b16 %v1677, %v1669
      %v2534 = vpack.c.b16 %v1686, %v1678
      %v2535 = vpack.c.b16 %v1687, %v1679
      %v2536 = vpack.c.b16 %v1688, %v1680
      %v2537 = vpack.c.b16 %v1689, %v1681
      %v2538 = vpack.c.b16 %v1690, %v1682
      %v2539 = vpack.c.b16 %v1691, %v1683
      %v2540 = vpack.c.b16 %v1692, %v1684
      %v2541 = vpack.c.b16 %v1693, %v1685
      %v2542 = vpack.c.b16 %v1702, %v1694
      %v2543 = vpack.c.b16 %v1703, %v1695
      %v2544 = vpack.c.b16 %v1704, %v1696
      %v2545 = vpack.c.b16 %v1705, %v1697
      %v2546 = vpack.c.b16 %v1706, %v1698
      %v2547 = vpack.c.b16 %v1707, %v1699
      %v2548 = vpack.c.b16 %v1708, %v1700
      %v2549 = vpack.c.b16 %v1709, %v1701
      %v2550 = vpack.c.b16 %v1718, %v1710
      %v2551 = vpack.c.b16 %v1719, %v1711
      %v2552 = vpack.c.b16 %v1720, %v1712
      %v2553 = vpack.c.b16 %v1721, %v1713
      %v2554 = vpack.c.b16 %v1722, %v1714
      %v2555 = vpack.c.b16 %v1723, %v1715
      %v2556 = vpack.c.b16 %v1724, %v1716
      %v2557 = vpack.c.b16 %v1725, %v1717
      %v2558 = vpack.c.b16 %v1734, %v1726
      %v2559 = vpack.c.b16 %v1735, %v1727
      %v2560 = vpack.c.b16 %v1736, %v1728
      %v2561 = vpack.c.b16 %v1737, %v1729
      %v2562 = vpack.c.b16 %v1738, %v1730
      %v2563 = vpack.c.b16 %v1739, %v1731
      %v2564 = vpack.c.b16 %v1740, %v1732
      %v2565 = vpack.c.b16 %v1741, %v1733
      %v2566 = vpack.c.b16 %v1750, %v1742
      %v2567 = vpack.c.b16 %v1751, %v1743
      %v2568 = vpack.c.b16 %v1752, %v1744
      %v2569 = vpack.c.b16 %v1753, %v1745
      %v2570 = vpack.c.b16 %v1754, %v1746
      %v2571 = vpack.c.b16 %v1755, %v1747
      %v2572 = vpack.c.b16 %v1756, %v1748
      %v2573 = vpack.c.b16 %v1757, %v1749
      %v2574 = vpack.c.b16 %v1766, %v1758
      %v2575 = vpack.c.b16 %v1767, %v1759
      %v2576 = vpack.c.b16 %v1768, %v1760
      %v2577 = vpack.c.b16 %v1769, %v1761
      %v2578 = vpack.c.b16 %v1770, %v1762
      %v2579 = vpack.c.b16 %v1771, %v1763
      %v2580 = vpack.c.b16 %v1772, %v1764
      %v2581 = vpack.c.b16 %v1773, %v1765
      %v2582 = vpack.c.b16 %v1782, %v1774
      %v2583 = vpack.c.b16 %v1783, %v1775
      %v2584 = vpack.c.b16 %v1784, %v1776
      %v2585 = vpack.c.b16 %v1785, %v1777
      %v2586 = vpack.c.b16 %v1786, %v1778
      %v2587 = vpack.c.b16 %v1787, %v1779
      %v2588 = vpack.c.b16 %v1788, %v1780
      %v2589 = vpack.c.b16 %v1789, %v1781
      %v2590 = vpack.c.b16 %v1798, %v1790
      %v2591 = vpack.c.b16 %v1799, %v1791
      %v2592 = vpack.c.b16 %v1800, %v1792
      %v2593 = vpack.c.b16 %v1801, %v1793
      %v2594 = vpack.c.b16 %v1802, %v1794
      %v2595 = vpack.c.b16 %v1803, %v1795
      %v2596 = vpack.c.b16 %v1804, %v1796
      %v2597 = vpack.c.b16 %v1805, %v1797
      %v2598 = vpack.c.b16 %v1814, %v1806
      %v2599 = vpack.c.b16 %v1815, %v1807
      %v2600 = vpack.c.b16 %v1816, %v1808
      %v2601 = vpack.c.b16 %v1817, %v1809
      %v2602 = vpack.c.b16 %v1818, %v1810
      %v2603 = vpack.c.b16 %v1819, %v1811
      %v2604 = vpack.c.b16 %v1820, %v1812
      %v2605 = vpack.c.b16 %v1821, %v1813
      %v2606 = vpack.c.b16 %v1830, %v1822
      %v2607 = vpack.c.b16 %v1831, %v1823
      %v2608 = vpack.c.b16 %v1832, %v1824
      %v2609 = vpack.c.b16 %v1833, %v1825
      %v2610 = vpack.c.b16 %v1834, %v1826
      %v2611 = vpack.c.b16 %v1835, %v1827
      %v2612 = vpack.c.b16 %v1836, %v1828
      %v2613 = vpack.c.b16 %v1837, %v1829
      %v2614 = vpack.c.b16 %v1846, %v1838
      %v2615 = vpack.c.b16 %v1847, %v1839
      %v2616 = vpack.c.b16 %v1848, %v1840
      %v2617 = vpack.c.b16 %v1849, %v1841
      %v2618 = vpack.c.b16 %v1850, %v1842
      %v2619 = vpack.c.b16 %v1851, %v1843
      %v2620 = vpack.c.b16 %v1852, %v1844
      %v2621 = vpack.c.b16 %v1853, %v1845
      %v2622 = vpack.c.b16 %v1862, %v1854
      %v2623 = vpack.c.b16 %v1863, %v1855
      %v2624 = vpack.c.b16 %v1864, %v1856
      %v2625 = vpack.c.b16 %v1865, %v1857
      %v2626 = vpack.c.b16 %v1866, %v1858
      %v2627 = vpack.c.b16 %v1867, %v1859
      %v2628 = vpack.c.b16 %v1868, %v1860
      %v2629 = vpack.c.b16 %v1869, %v1861
      %v2630 = vpack.c.b16 %v1878, %v1870
      %v2631 = vpack.c.b16 %v1879, %v1871
      %v2632 = vpack.c.b16 %v1880, %v1872
      %v2633 = vpack.c.b16 %v1881, %v1873
      %v2634 = vpack.c.b16 %v1882, %v1874
      %v2635 = vpack.c.b16 %v1883, %v1875
      %v2636 = vpack.c.b16 %v1884, %v1876
      %v2637 = vpack.c.b16 %v1885, %v1877
      %v2638 = vpack.c.b16 %v1894, %v1886
      %v2639 = vpack.c.b16 %v1895, %v1887
      %v2640 = vpack.c.b16 %v1896, %v1888
      %v2641 = vpack.c.b16 %v1897, %v1889
      %v2642 = vpack.c.b16 %v1898, %v1890
      %v2643 = vpack.c.b16 %v1899, %v1891
      %v2644 = vpack.c.b16 %v1900, %v1892
      %v2645 = vpack.c.b16 %v1901, %v1893
      %v2646 = vpack.c.b16 %v1910, %v1902
      %v2647 = vpack.c.b16 %v1911, %v1903
      %v2648 = vpack.c.b16 %v1912, %v1904
      %v2649 = vpack.c.b16 %v1913, %v1905
      %v2650 = vpack.c.b16 %v1914, %v1906
      %v2651 = vpack.c.b16 %v1915, %v1907
      %v2652 = vpack.c.b16 %v1916, %v1908
      %v2653 = vpack.c.b16 %v1917, %v1909
      %v2654 = vpack.c.b16 %v1926, %v1918
      %v2655 = vpack.c.b16 %v1927, %v1919
      %v2656 = vpack.c.b16 %v1928, %v1920
      %v2657 = vpack.c.b16 %v1929, %v1921
      %v2658 = vpack.c.b16 %v1930, %v1922
      %v2659 = vpack.c.b16 %v1931, %v1923
      %v2660 = vpack.c.b16 %v1932, %v1924
      %v2661 = vpack.c.b16 %v1933, %v1925
      %v2662 = vpack.c.b16 %v1942, %v1934
      %v2663 = vpack.c.b16 %v1943, %v1935
      %v2664 = vpack.c.b16 %v1944, %v1936
      %v2665 = vpack.c.b16 %v1945, %v1937
      %v2666 = vpack.c.b16 %v1946, %v1938
      %v2667 = vpack.c.b16 %v1947, %v1939
      %v2668 = vpack.c.b16 %v1948, %v1940
      %v2669 = vpack.c.b16 %v1949, %v1941
      %v2670 = vpack.c.b16 %v1958, %v1950
      %v2671 = vpack.c.b16 %v1959, %v1951
      %v2672 = vpack.c.b16 %v1960, %v1952
      %v2673 = vpack.c.b16 %v1961, %v1953
      %v2674 = vpack.c.b16 %v1962, %v1954
      %v2675 = vpack.c.b16 %v1963, %v1955
      %v2676 = vpack.c.b16 %v1964, %v1956
      %v2677 = vpack.c.b16 %v1965, %v1957
      %v2678 = vpack.c.b16 %v1974, %v1966
      %v2679 = vpack.c.b16 %v1975, %v1967
      %v2680 = vpack.c.b16 %v1976, %v1968
      %v2681 = vpack.c.b16 %v1977, %v1969
      %v2682 = vpack.c.b16 %v1978, %v1970
      %v2683 = vpack.c.b16 %v1979, %v1971
      %v2684 = vpack.c.b16 %v1980, %v1972
      %v2685 = vpack.c.b16 %v1981, %v1973
      %v2686 = vpack.c.b16 %v1990, %v1982
      %v2687 = vpack.c.b16 %v1991, %v1983
      %v2688 = vpack.c.b16 %v1992, %v1984
      %v2689 = vpack.c.b16 %v1993, %v1985
      %v2690 = vpack.c.b16 %v1994, %v1986
      %v2691 = vpack.c.b16 %v1995, %v1987
      %v2692 = vpack.c.b16 %v1996, %v1988
      %v2693 = vpack.c.b16 %v1997, %v1989
      %v2694 = vpack.c.b16 %v2006, %v1998
      %v2695 = vpack.c.b16 %v2007, %v1999
      %v2696 = vpack.c.b16 %v2008, %v2000
      %v2697 = vpack.c.b16 %v2009, %v2001
      %v2698 = vpack.c.b16 %v2010, %v2002
      %v2699 = vpack.c.b16 %v2011, %v2003
      %v2700 = vpack.c.b16 %v2012, %v2004
      %v2701 = vpack.c.b16 %v2013, %v2005
      %v2702 = vpack.c.b16 %v2022, %v2014
      %v2703 = vpack.c.b16 %v2023, %v2015
      %v2704 = vpack.c.b16 %v2024, %v2016
      %v2705 = vpack.c.b16 %v2025, %v2017
      %v2706 = vpack.c.b16 %v2026, %v2018
      %v2707 = vpack.c.b16 %v2027, %v2019
      %v2708 = vpack.c.b16 %v2028, %v2020
      %v2709 = vpack.c.b16 %v2029, %v2021
      %v2710 = vpack.c.b16 %v2038, %v2030
      %v2711 = vpack.c.b16 %v2039, %v2031
      %v2712 = vpack.c.b16 %v2040, %v2032
      %v2713 = vpack.c.b16 %v2041, %v2033
      %v2714 = vpack.c.b16 %v2042, %v2034
      %v2715 = vpack.c.b16 %v2043, %v2035
      %v2716 = vpack.c.b16 %v2044, %v2036
      %v2717 = vpack.c.b16 %v2045, %v2037
      %v2718 = vpack.c.b16 %v2054, %v2046
      %v2719 = vpack.c.b16 %v2055, %v2047
      %v2720 = vpack.c.b16 %v2056, %v2048
      %v2721 = vpack.c.b16 %v2057, %v2049
      %v2722 = vpack.c.b16 %v2058, %v2050
      %v2723 = vpack.c.b16 %v2059, %v2051
      %v2724 = vpack.c.b16 %v2060, %v2052
      %v2725 = vpack.c.b16 %v2061, %v2053
      %v2726 = vpack.c.b16 %v2070, %v2062
      %v2727 = vpack.c.b16 %v2071, %v2063
      %v2728 = vpack.c.b16 %v2072, %v2064
      %v2729 = vpack.c.b16 %v2073, %v2065
      %v2730 = vpack.c.b16 %v2074, %v2066
      %v2731 = vpack.c.b16 %v2075, %v2067
      %v2732 = vpack.c.b16 %v2076, %v2068
      %v2733 = vpack.c.b16 %v2077, %v2069
      %v2734 = vpack.c.b16 %v2086, %v2078
      %v2735 = vpack.c.b16 %v2087, %v2079
      %v2736 = vpack.c.b16 %v2088, %v2080
      %v2737 = vpack.c.b16 %v2089, %v2081
      %v2738 = vpack.c.b16 %v2090, %v2082
      %v2739 = vpack.c.b16 %v2091, %v2083
      %v2740 = vpack.c.b16 %v2092, %v2084
      %v2741 = vpack.c.b16 %v2093, %v2085
      %v2742 = vpack.c.b16 %v2102, %v2094
      %v2743 = vpack.c.b16 %v2103, %v2095
      %v2744 = vpack.c.b16 %v2104, %v2096
      %v2745 = vpack.c.b16 %v2105, %v2097
      %v2746 = vpack.c.b16 %v2106, %v2098
      %v2747 = vpack.c.b16 %v2107, %v2099
      %v2748 = vpack.c.b16 %v2108, %v2100
      %v2749 = vpack.c.b16 %v2109, %v2101
      %v2750 = vpack.c.b16 %v2118, %v2110
      %v2751 = vpack.c.b16 %v2119, %v2111
      %v2752 = vpack.c.b16 %v2120, %v2112
      %v2753 = vpack.c.b16 %v2121, %v2113
      %v2754 = vpack.c.b16 %v2122, %v2114
      %v2755 = vpack.c.b16 %v2123, %v2115
      %v2756 = vpack.c.b16 %v2124, %v2116
      %v2757 = vpack.c.b16 %v2125, %v2117
      %v2758 = vpack.c.b16 %v2134, %v2126
      %v2759 = vpack.c.b16 %v2135, %v2127
      %v2760 = vpack.c.b16 %v2136, %v2128
      %v2761 = vpack.c.b16 %v2137, %v2129
      %v2762 = vpack.c.b16 %v2138, %v2130
      %v2763 = vpack.c.b16 %v2139, %v2131
      %v2764 = vpack.c.b16 %v2140, %v2132
      %v2765 = vpack.c.b16 %v2141, %v2133
      %v2766 = vpack.c.b16 %v2150, %v2142
      %v2767 = vpack.c.b16 %v2151, %v2143
      %v2768 = vpack.c.b16 %v2152, %v2144
      %v2769 = vpack.c.b16 %v2153, %v2145
      %v2770 = vpack.c.b16 %v2154, %v2146
      %v2771 = vpack.c.b16 %v2155, %v2147
      %v2772 = vpack.c.b16 %v2156, %v2148
      %v2773 = vpack.c.b16 %v2157, %v2149
      %v2774 = vpack.c.b16 %v2166, %v2158
      %v2775 = vpack.c.b16 %v2167, %v2159
      %v2776 = vpack.c.b16 %v2168, %v2160
      %v2777 = vpack.c.b16 %v2169, %v2161
      %v2778 = vpack.c.b16 %v2170, %v2162
      %v2779 = vpack.c.b16 %v2171, %v2163
      %v2780 = vpack.c.b16 %v2172, %v2164
      %v2781 = vpack.c.b16 %v2173, %v2165
      %v2782 = vpack.c.b16 %v2182, %v2174
      %v2783 = vpack.c.b16 %v2183, %v2175
      %v2784 = vpack.c.b16 %v2184, %v2176
      %v2785 = vpack.c.b16 %v2185, %v2177
      %v2786 = vpack.c.b16 %v2186, %v2178
      %v2787 = vpack.c.b16 %v2187, %v2179
      %v2788 = vpack.c.b16 %v2188, %v2180
      %v2789 = vpack.c.b16 %v2189, %v2181
      %v2790 = vpack.c.b16 %v2198, %v2190
      %v2791 = vpack.c.b16 %v2199, %v2191
      %v2792 = vpack.c.b16 %v2200, %v2192
      %v2793 = vpack.c.b16 %v2201, %v2193
      %v2794 = vpack.c.b16 %v2202, %v2194
      %v2795 = vpack.c.b16 %v2203, %v2195
      %v2796 = vpack.c.b16 %v2204, %v2196
      %v2797 = vpack.c.b16 %v2205, %v2197
      %v2798 = vpack.c.b16 %v2214, %v2206
      %v2799 = vpack.c.b16 %v2215, %v2207
      %v2800 = vpack.c.b16 %v2216, %v2208
      %v2801 = vpack.c.b16 %v2217, %v2209
      %v2802 = vpack.c.b16 %v2218, %v2210
      %v2803 = vpack.c.b16 %v2219, %v2211
      %v2804 = vpack.c.b16 %v2220, %v2212
      %v2805 = vpack.c.b16 %v2221, %v2213
      %v2806 = vpack.c.b16 %v2230, %v2222
      %v2807 = vpack.c.b16 %v2231, %v2223
      %v2808 = vpack.c.b16 %v2232, %v2224
      %v2809 = vpack.c.b16 %v2233, %v2225
      %v2810 = vpack.c.b16 %v2234, %v2226
      %v2811 = vpack.c.b16 %v2235, %v2227
      %v2812 = vpack.c.b16 %v2236, %v2228
      %v2813 = vpack.c.b16 %v2237, %v2229
      %v2814 = vpack.c.b16 %v2246, %v2238
      %v2815 = vpack.c.b16 %v2247, %v2239
      %v2816 = vpack.c.b16 %v2248, %v2240
      %v2817 = vpack.c.b16 %v2249, %v2241
      %v2818 = vpack.c.b16 %v2250, %v2242
      %v2819 = vpack.c.b16 %v2251, %v2243
      %v2820 = vpack.c.b16 %v2252, %v2244
      %v2821 = vpack.c.b16 %v2253, %v2245
      %v2822 = vpack.c.b16 %v2262, %v2254
      %v2823 = vpack.c.b16 %v2263, %v2255
      %v2824 = vpack.c.b16 %v2264, %v2256
      %v2825 = vpack.c.b16 %v2265, %v2257
      %v2826 = vpack.c.b16 %v2266, %v2258
      %v2827 = vpack.c.b16 %v2267, %v2259
      %v2828 = vpack.c.b16 %v2268, %v2260
      %v2829 = vpack.c.b16 %v2269, %v2261
      %v2830 = vpack.c.b16 %v2278, %v2270
      %v2831 = vpack.c.b16 %v2279, %v2271
      %v2832 = vpack.c.b16 %v2280, %v2272
      %v2833 = vpack.c.b16 %v2281, %v2273
      %v2834 = vpack.c.b16 %v2282, %v2274
      %v2835 = vpack.c.b16 %v2283, %v2275
      %v2836 = vpack.c.b16 %v2284, %v2276
      %v2837 = vpack.c.b16 %v2285, %v2277
      %v2838 = vpack.c.b16 %v2294, %v2286
      %v2839 = vpack.c.b16 %v2295, %v2287
      %v2840 = vpack.c.b16 %v2296, %v2288
      %v2841 = vpack.c.b16 %v2297, %v2289
      %v2842 = vpack.c.b16 %v2298, %v2290
      %v2843 = vpack.c.b16 %v2299, %v2291
      %v2844 = vpack.c.b16 %v2300, %v2292
      %v2845 = vpack.c.b16 %v2301, %v2293
      %v2846 = vpack.c.b16 %v2310, %v2302
      %v2847 = vpack.c.b16 %v2311, %v2303
      %v2848 = vpack.c.b16 %v2312, %v2304
      %v2849 = vpack.c.b16 %v2313, %v2305
      %v2850 = vpack.c.b16 %v2314, %v2306
      %v2851 = vpack.c.b16 %v2315, %v2307
      %v2852 = vpack.c.b16 %v2316, %v2308
      %v2853 = vpack.c.b16 %v2317, %v2309
      %v2854 = vpack.c.b16 %v2326, %v2318
      %v2855 = vpack.c.b16 %v2327, %v2319
      %v2856 = vpack.c.b16 %v2328, %v2320
      %v2857 = vpack.c.b16 %v2329, %v2321
      %v2858 = vpack.c.b16 %v2330, %v2322
      %v2859 = vpack.c.b16 %v2331, %v2323
      %v2860 = vpack.c.b16 %v2332, %v2324
      %v2861 = vpack.c.b16 %v2333, %v2325
      %v2862 = vpack.c.b16 %v2342, %v2334
      %v2863 = vpack.c.b16 %v2343, %v2335
      %v2864 = vpack.c.b16 %v2344, %v2336
      %v2865 = vpack.c.b16 %v2345, %v2337
      %v2866 = vpack.c.b16 %v2346, %v2338
      %v2867 = vpack.c.b16 %v2347, %v2339
      %v2868 = vpack.c.b16 %v2348, %v2340
      %v2869 = vpack.c.b16 %v2349, %v2341
      %v2870 = vpack.c.b16 %v2358, %v2350
      %v2871 = vpack.c.b16 %v2359, %v2351
      %v2872 = vpack.c.b16 %v2360, %v2352
      %v2873 = vpack.c.b16 %v2361, %v2353
      %v2874 = vpack.c.b16 %v2362, %v2354
      %v2875 = vpack.c.b16 %v2363, %v2355
      %v2876 = vpack.c.b16 %v2364, %v2356
      %v2877 = vpack.c.b16 %v2365, %v2357
      %3390 = vmatpush.bf16.msra.mxu0 %v2422
      %3391 = vmatpush.bf16.msra.mxu0 %v2414
      %3392 = vmatpush.bf16.msra.mxu0 %v2406
      %3393 = vmatpush.bf16.msra.mxu0 %v2398
      %3394 = vmatpush.bf16.msra.mxu0 %v2390
      %3395 = vmatpush.bf16.msra.mxu0 %v2382
      %3396 = vmatpush.bf16.msra.mxu0 %v2374
      %3397 = vmatpush.bf16.msra.mxu0 %v2366
      %3398 = vmatmul.bf16.gmra.mxu0 %v814
      %v3399 = vpop.f32.mrf.mxu0
      %v3400 = vadd.f32 %v774, %v3399
      %v3401 = vpop.f32.mrf.mxu0
      %v3402 = vadd.f32 %v774, %v3401
      %3403 = vdwg.mxu0
      %3404 = vmatpush.bf16.msra.mxu0 %v2486
      %3405 = vmatpush.bf16.msra.mxu0 %v2478
      %3406 = vmatpush.bf16.msra.mxu0 %v2470
      %3407 = vmatpush.bf16.msra.mxu0 %v2462
      %3408 = vmatpush.bf16.msra.mxu0 %v2454
      %3409 = vmatpush.bf16.msra.mxu0 %v2446
      %3410 = vmatpush.bf16.msra.mxu0 %v2438
      %3411 = vmatpush.bf16.msra.mxu0 %v2430
      %3412 = vmatmul.bf16.gmra.mxu0 %v815
      %v3413 = vpop.f32.mrf.mxu0
      %v3414 = vadd.f32 %v3400, %v3413
      %v3415 = vpop.f32.mrf.mxu0
      %v3416 = vadd.f32 %v3402, %v3415
      %3417 = vdwg.mxu0
      %3418 = vmatpush.bf16.msra.mxu0 %v2550
      %3419 = vmatpush.bf16.msra.mxu0 %v2542
      %3420 = vmatpush.bf16.msra.mxu0 %v2534
      %3421 = vmatpush.bf16.msra.mxu0 %v2526
      %3422 = vmatpush.bf16.msra.mxu0 %v2518
      %3423 = vmatpush.bf16.msra.mxu0 %v2510
      %3424 = vmatpush.bf16.msra.mxu0 %v2502
      %3425 = vmatpush.bf16.msra.mxu0 %v2494
      %3426 = vmatmul.bf16.gmra.mxu0 %v816
      %v3427 = vpop.f32.mrf.mxu0
      %v3428 = vadd.f32 %v3414, %v3427
      %v3429 = vpop.f32.mrf.mxu0
      %v3430 = vadd.f32 %v3416, %v3429
      %3431 = vdwg.mxu0
      %3432 = vmatpush.bf16.msra.mxu0 %v2614
      %3433 = vmatpush.bf16.msra.mxu0 %v2606
      %3434 = vmatpush.bf16.msra.mxu0 %v2598
      %3435 = vmatpush.bf16.msra.mxu0 %v2590
      %3436 = vmatpush.bf16.msra.mxu0 %v2582
      %3437 = vmatpush.bf16.msra.mxu0 %v2574
      %3438 = vmatpush.bf16.msra.mxu0 %v2566
      %3439 = vmatpush.bf16.msra.mxu0 %v2558
      %3440 = vmatmul.bf16.gmra.mxu0 %v817
      %v3441 = vpop.f32.mrf.mxu0
      %v3442 = vadd.f32 %v3428, %v3441
      %v3443 = vpop.f32.mrf.mxu0
      %v3444 = vadd.f32 %v3430, %v3443
      %3445 = vdwg.mxu0
      %3446 = vmatpush.bf16.msra.mxu0 %v2678
      %3447 = vmatpush.bf16.msra.mxu0 %v2670
      %3448 = vmatpush.bf16.msra.mxu0 %v2662
      %3449 = vmatpush.bf16.msra.mxu0 %v2654
      %3450 = vmatpush.bf16.msra.mxu0 %v2646
      %3451 = vmatpush.bf16.msra.mxu0 %v2638
      %3452 = vmatpush.bf16.msra.mxu0 %v2630
      %3453 = vmatpush.bf16.msra.mxu0 %v2622
      %3454 = vmatmul.bf16.gmra.mxu0 %v818
      %v3455 = vpop.f32.mrf.mxu0
      %v3456 = vadd.f32 %v3442, %v3455
      %v3457 = vpop.f32.mrf.mxu0
      %v3458 = vadd.f32 %v3444, %v3457
      %3459 = vdwg.mxu0
      %3460 = vmatpush.bf16.msra.mxu0 %v2742
      %3461 = vmatpush.bf16.msra.mxu0 %v2734
      %3462 = vmatpush.bf16.msra.mxu0 %v2726
      %3463 = vmatpush.bf16.msra.mxu0 %v2718
      %3464 = vmatpush.bf16.msra.mxu0 %v2710
      %3465 = vmatpush.bf16.msra.mxu0 %v2702
      %3466 = vmatpush.bf16.msra.mxu0 %v2694
      %3467 = vmatpush.bf16.msra.mxu0 %v2686
      %3468 = vmatmul.bf16.gmra.mxu0 %v819
      %v3469 = vpop.f32.mrf.mxu0
      %v3470 = vadd.f32 %v3456, %v3469
      %v3471 = vpop.f32.mrf.mxu0
      %v3472 = vadd.f32 %v3458, %v3471
      %3473 = vdwg.mxu0
      %3474 = vmatpush.bf16.msra.mxu0 %v2806
      %3475 = vmatpush.bf16.msra.mxu0 %v2798
      %3476 = vmatpush.bf16.msra.mxu0 %v2790
      %3477 = vmatpush.bf16.msra.mxu0 %v2782
      %3478 = vmatpush.bf16.msra.mxu0 %v2774
      %3479 = vmatpush.bf16.msra.mxu0 %v2766
      %3480 = vmatpush.bf16.msra.mxu0 %v2758
      %3481 = vmatpush.bf16.msra.mxu0 %v2750
      %3482 = vmatmul.bf16.gmra.mxu0 %v820
      %v3483 = vpop.f32.mrf.mxu0
      %v3484 = vadd.f32 %v3470, %v3483
      %v3485 = vpop.f32.mrf.mxu0
      %v3486 = vadd.f32 %v3472, %v3485
      %3487 = vdwg.mxu0
      %3488 = vmatpush.bf16.msra.mxu0 %v2870
      %3489 = vmatpush.bf16.msra.mxu0 %v2862
      %3490 = vmatpush.bf16.msra.mxu0 %v2854
      %3491 = vmatpush.bf16.msra.mxu0 %v2846
      %3492 = vmatpush.bf16.msra.mxu0 %v2838
      %3493 = vmatpush.bf16.msra.mxu0 %v2830
      %3494 = vmatpush.bf16.msra.mxu0 %v2822
      %3495 = vmatpush.bf16.msra.mxu0 %v2814
      %3496 = vmatmul.bf16.gmra.mxu0 %v821
      %v3497 = vpop.f32.mrf.mxu0
      %v3498 = vadd.f32 %v3484, %v3497
      %v3499 = vpop.f32.mrf.mxu0
      %v3500 = vadd.f32 %v3486, %v3499
      %3501 = vdwg.mxu0
      %3502 = vmatpush.bf16.msra.mxu0 %v2423
      %3503 = vmatpush.bf16.msra.mxu0 %v2415
      %3504 = vmatpush.bf16.msra.mxu0 %v2407
      %3505 = vmatpush.bf16.msra.mxu0 %v2399
      %3506 = vmatpush.bf16.msra.mxu0 %v2391
      %3507 = vmatpush.bf16.msra.mxu0 %v2383
      %3508 = vmatpush.bf16.msra.mxu0 %v2375
      %3509 = vmatpush.bf16.msra.mxu0 %v2367
      %3510 = vmatmul.bf16.gmra.mxu0 %v814
      %v3511 = vpop.f32.mrf.mxu0
      %v3512 = vadd.f32 %v775, %v3511
      %v3513 = vpop.f32.mrf.mxu0
      %v3514 = vadd.f32 %v775, %v3513
      %3515 = vdwg.mxu0
      %3516 = vmatpush.bf16.msra.mxu0 %v2487
      %3517 = vmatpush.bf16.msra.mxu0 %v2479
      %3518 = vmatpush.bf16.msra.mxu0 %v2471
      %3519 = vmatpush.bf16.msra.mxu0 %v2463
      %3520 = vmatpush.bf16.msra.mxu0 %v2455
      %3521 = vmatpush.bf16.msra.mxu0 %v2447
      %3522 = vmatpush.bf16.msra.mxu0 %v2439
      %3523 = vmatpush.bf16.msra.mxu0 %v2431
      %3524 = vmatmul.bf16.gmra.mxu0 %v815
      %v3525 = vpop.f32.mrf.mxu0
      %v3526 = vadd.f32 %v3512, %v3525
      %v3527 = vpop.f32.mrf.mxu0
      %v3528 = vadd.f32 %v3514, %v3527
      %3529 = vdwg.mxu0
      %3530 = vmatpush.bf16.msra.mxu0 %v2551
      %3531 = vmatpush.bf16.msra.mxu0 %v2543
      %3532 = vmatpush.bf16.msra.mxu0 %v2535
      %3533 = vmatpush.bf16.msra.mxu0 %v2527
      %3534 = vmatpush.bf16.msra.mxu0 %v2519
      %3535 = vmatpush.bf16.msra.mxu0 %v2511
      %3536 = vmatpush.bf16.msra.mxu0 %v2503
      %3537 = vmatpush.bf16.msra.mxu0 %v2495
      %3538 = vmatmul.bf16.gmra.mxu0 %v816
      %v3539 = vpop.f32.mrf.mxu0
      %v3540 = vadd.f32 %v3526, %v3539
      %v3541 = vpop.f32.mrf.mxu0
      %v3542 = vadd.f32 %v3528, %v3541
      %3543 = vdwg.mxu0
      %3544 = vmatpush.bf16.msra.mxu0 %v2615
      %3545 = vmatpush.bf16.msra.mxu0 %v2607
      %3546 = vmatpush.bf16.msra.mxu0 %v2599
      %3547 = vmatpush.bf16.msra.mxu0 %v2591
      %3548 = vmatpush.bf16.msra.mxu0 %v2583
      %3549 = vmatpush.bf16.msra.mxu0 %v2575
      %3550 = vmatpush.bf16.msra.mxu0 %v2567
      %3551 = vmatpush.bf16.msra.mxu0 %v2559
      %3552 = vmatmul.bf16.gmra.mxu0 %v817
      %v3553 = vpop.f32.mrf.mxu0
      %v3554 = vadd.f32 %v3540, %v3553
      %v3555 = vpop.f32.mrf.mxu0
      %v3556 = vadd.f32 %v3542, %v3555
      %3557 = vdwg.mxu0
      %3558 = vmatpush.bf16.msra.mxu0 %v2679
      %3559 = vmatpush.bf16.msra.mxu0 %v2671
      %3560 = vmatpush.bf16.msra.mxu0 %v2663
      %3561 = vmatpush.bf16.msra.mxu0 %v2655
      %3562 = vmatpush.bf16.msra.mxu0 %v2647
      %3563 = vmatpush.bf16.msra.mxu0 %v2639
      %3564 = vmatpush.bf16.msra.mxu0 %v2631
      %3565 = vmatpush.bf16.msra.mxu0 %v2623
      %3566 = vmatmul.bf16.gmra.mxu0 %v818
      %v3567 = vpop.f32.mrf.mxu0
      %v3568 = vadd.f32 %v3554, %v3567
      %v3569 = vpop.f32.mrf.mxu0
      %v3570 = vadd.f32 %v3556, %v3569
      %3571 = vdwg.mxu0
      %3572 = vmatpush.bf16.msra.mxu0 %v2743
      %3573 = vmatpush.bf16.msra.mxu0 %v2735
      %3574 = vmatpush.bf16.msra.mxu0 %v2727
      %3575 = vmatpush.bf16.msra.mxu0 %v2719
      %3576 = vmatpush.bf16.msra.mxu0 %v2711
      %3577 = vmatpush.bf16.msra.mxu0 %v2703
      %3578 = vmatpush.bf16.msra.mxu0 %v2695
      %3579 = vmatpush.bf16.msra.mxu0 %v2687
      %3580 = vmatmul.bf16.gmra.mxu0 %v819
      %v3581 = vpop.f32.mrf.mxu0
      %v3582 = vadd.f32 %v3568, %v3581
      %v3583 = vpop.f32.mrf.mxu0
      %v3584 = vadd.f32 %v3570, %v3583
      %3585 = vdwg.mxu0
      %3586 = vmatpush.bf16.msra.mxu0 %v2807
      %3587 = vmatpush.bf16.msra.mxu0 %v2799
      %3588 = vmatpush.bf16.msra.mxu0 %v2791
      %3589 = vmatpush.bf16.msra.mxu0 %v2783
      %3590 = vmatpush.bf16.msra.mxu0 %v2775
      %3591 = vmatpush.bf16.msra.mxu0 %v2767
      %3592 = vmatpush.bf16.msra.mxu0 %v2759
      %3593 = vmatpush.bf16.msra.mxu0 %v2751
      %3594 = vmatmul.bf16.gmra.mxu0 %v820
      %v3595 = vpop.f32.mrf.mxu0
      %v3596 = vadd.f32 %v3582, %v3595
      %v3597 = vpop.f32.mrf.mxu0
      %v3598 = vadd.f32 %v3584, %v3597
      %3599 = vdwg.mxu0
      %3600 = vmatpush.bf16.msra.mxu0 %v2871
      %3601 = vmatpush.bf16.msra.mxu0 %v2863
      %3602 = vmatpush.bf16.msra.mxu0 %v2855
      %3603 = vmatpush.bf16.msra.mxu0 %v2847
      %3604 = vmatpush.bf16.msra.mxu0 %v2839
      %3605 = vmatpush.bf16.msra.mxu0 %v2831
      %3606 = vmatpush.bf16.msra.mxu0 %v2823
      %3607 = vmatpush.bf16.msra.mxu0 %v2815
      %3608 = vmatmul.bf16.gmra.mxu0 %v821
      %v3609 = vpop.f32.mrf.mxu0
      %v3610 = vadd.f32 %v3596, %v3609
      %v3611 = vpop.f32.mrf.mxu0
      %v3612 = vadd.f32 %v3598, %v3611
      %3613 = vdwg.mxu0
      %3614 = vmatpush.bf16.msra.mxu0 %v2424
      %3615 = vmatpush.bf16.msra.mxu0 %v2416
      %3616 = vmatpush.bf16.msra.mxu0 %v2408
      %3617 = vmatpush.bf16.msra.mxu0 %v2400
      %3618 = vmatpush.bf16.msra.mxu0 %v2392
      %3619 = vmatpush.bf16.msra.mxu0 %v2384
      %3620 = vmatpush.bf16.msra.mxu0 %v2376
      %3621 = vmatpush.bf16.msra.mxu0 %v2368
      %3622 = vmatmul.bf16.gmra.mxu0 %v814
      %v3623 = vpop.f32.mrf.mxu0
      %v3624 = vadd.f32 %v776, %v3623
      %v3625 = vpop.f32.mrf.mxu0
      %v3626 = vadd.f32 %v776, %v3625
      %3627 = vdwg.mxu0
      %3628 = vmatpush.bf16.msra.mxu0 %v2488
      %3629 = vmatpush.bf16.msra.mxu0 %v2480
      %3630 = vmatpush.bf16.msra.mxu0 %v2472
      %3631 = vmatpush.bf16.msra.mxu0 %v2464
      %3632 = vmatpush.bf16.msra.mxu0 %v2456
      %3633 = vmatpush.bf16.msra.mxu0 %v2448
      %3634 = vmatpush.bf16.msra.mxu0 %v2440
      %3635 = vmatpush.bf16.msra.mxu0 %v2432
      %3636 = vmatmul.bf16.gmra.mxu0 %v815
      %v3637 = vpop.f32.mrf.mxu0
      %v3638 = vadd.f32 %v3624, %v3637
      %v3639 = vpop.f32.mrf.mxu0
      %v3640 = vadd.f32 %v3626, %v3639
      %3641 = vdwg.mxu0
      %3642 = vmatpush.bf16.msra.mxu0 %v2552
      %3643 = vmatpush.bf16.msra.mxu0 %v2544
      %3644 = vmatpush.bf16.msra.mxu0 %v2536
      %3645 = vmatpush.bf16.msra.mxu0 %v2528
      %3646 = vmatpush.bf16.msra.mxu0 %v2520
      %3647 = vmatpush.bf16.msra.mxu0 %v2512
      %3648 = vmatpush.bf16.msra.mxu0 %v2504
      %3649 = vmatpush.bf16.msra.mxu0 %v2496
      %3650 = vmatmul.bf16.gmra.mxu0 %v816
      %v3651 = vpop.f32.mrf.mxu0
      %v3652 = vadd.f32 %v3638, %v3651
      %v3653 = vpop.f32.mrf.mxu0
      %v3654 = vadd.f32 %v3640, %v3653
      %3655 = vdwg.mxu0
      %3656 = vmatpush.bf16.msra.mxu0 %v2616
      %3657 = vmatpush.bf16.msra.mxu0 %v2608
      %3658 = vmatpush.bf16.msra.mxu0 %v2600
      %3659 = vmatpush.bf16.msra.mxu0 %v2592
      %3660 = vmatpush.bf16.msra.mxu0 %v2584
      %3661 = vmatpush.bf16.msra.mxu0 %v2576
      %3662 = vmatpush.bf16.msra.mxu0 %v2568
      %3663 = vmatpush.bf16.msra.mxu0 %v2560
      %3664 = vmatmul.bf16.gmra.mxu0 %v817
      %v3665 = vpop.f32.mrf.mxu0
      %v3666 = vadd.f32 %v3652, %v3665
      %v3667 = vpop.f32.mrf.mxu0
      %v3668 = vadd.f32 %v3654, %v3667
      %3669 = vdwg.mxu0
      %3670 = vmatpush.bf16.msra.mxu0 %v2680
      %3671 = vmatpush.bf16.msra.mxu0 %v2672
      %3672 = vmatpush.bf16.msra.mxu0 %v2664
      %3673 = vmatpush.bf16.msra.mxu0 %v2656
      %3674 = vmatpush.bf16.msra.mxu0 %v2648
      %3675 = vmatpush.bf16.msra.mxu0 %v2640
      %3676 = vmatpush.bf16.msra.mxu0 %v2632
      %3677 = vmatpush.bf16.msra.mxu0 %v2624
      %3678 = vmatmul.bf16.gmra.mxu0 %v818
      %v3679 = vpop.f32.mrf.mxu0
      %v3680 = vadd.f32 %v3666, %v3679
      %v3681 = vpop.f32.mrf.mxu0
      %v3682 = vadd.f32 %v3668, %v3681
      %3683 = vdwg.mxu0
      %3684 = vmatpush.bf16.msra.mxu0 %v2744
      %3685 = vmatpush.bf16.msra.mxu0 %v2736
      %3686 = vmatpush.bf16.msra.mxu0 %v2728
      %3687 = vmatpush.bf16.msra.mxu0 %v2720
      %3688 = vmatpush.bf16.msra.mxu0 %v2712
      %3689 = vmatpush.bf16.msra.mxu0 %v2704
      %3690 = vmatpush.bf16.msra.mxu0 %v2696
      %3691 = vmatpush.bf16.msra.mxu0 %v2688
      %3692 = vmatmul.bf16.gmra.mxu0 %v819
      %v3693 = vpop.f32.mrf.mxu0
      %v3694 = vadd.f32 %v3680, %v3693
      %v3695 = vpop.f32.mrf.mxu0
      %v3696 = vadd.f32 %v3682, %v3695
      %3697 = vdwg.mxu0
      %3698 = vmatpush.bf16.msra.mxu0 %v2808
      %3699 = vmatpush.bf16.msra.mxu0 %v2800
      %3700 = vmatpush.bf16.msra.mxu0 %v2792
      %3701 = vmatpush.bf16.msra.mxu0 %v2784
      %3702 = vmatpush.bf16.msra.mxu0 %v2776
      %3703 = vmatpush.bf16.msra.mxu0 %v2768
      %3704 = vmatpush.bf16.msra.mxu0 %v2760
      %3705 = vmatpush.bf16.msra.mxu0 %v2752
      %3706 = vmatmul.bf16.gmra.mxu0 %v820
      %v3707 = vpop.f32.mrf.mxu0
      %v3708 = vadd.f32 %v3694, %v3707
      %v3709 = vpop.f32.mrf.mxu0
      %v3710 = vadd.f32 %v3696, %v3709
      %3711 = vdwg.mxu0
      %3712 = vmatpush.bf16.msra.mxu0 %v2872
      %3713 = vmatpush.bf16.msra.mxu0 %v2864
      %3714 = vmatpush.bf16.msra.mxu0 %v2856
      %3715 = vmatpush.bf16.msra.mxu0 %v2848
      %3716 = vmatpush.bf16.msra.mxu0 %v2840
      %3717 = vmatpush.bf16.msra.mxu0 %v2832
      %3718 = vmatpush.bf16.msra.mxu0 %v2824
      %3719 = vmatpush.bf16.msra.mxu0 %v2816
      %3720 = vmatmul.bf16.gmra.mxu0 %v821
      %v3721 = vpop.f32.mrf.mxu0
      %v3722 = vadd.f32 %v3708, %v3721
      %v3723 = vpop.f32.mrf.mxu0
      %v3724 = vadd.f32 %v3710, %v3723
      %3725 = vdwg.mxu0
      %3726 = vmatpush.bf16.msra.mxu0 %v2425
      %3727 = vmatpush.bf16.msra.mxu0 %v2417
      %3728 = vmatpush.bf16.msra.mxu0 %v2409
      %3729 = vmatpush.bf16.msra.mxu0 %v2401
      %3730 = vmatpush.bf16.msra.mxu0 %v2393
      %3731 = vmatpush.bf16.msra.mxu0 %v2385
      %3732 = vmatpush.bf16.msra.mxu0 %v2377
      %3733 = vmatpush.bf16.msra.mxu0 %v2369
      %3734 = vmatmul.bf16.gmra.mxu0 %v814
      %v3735 = vpop.f32.mrf.mxu0
      %v3736 = vadd.f32 %v777, %v3735
      %v3737 = vpop.f32.mrf.mxu0
      %v3738 = vadd.f32 %v777, %v3737
      %3739 = vdwg.mxu0
      %3740 = vmatpush.bf16.msra.mxu0 %v2489
      %3741 = vmatpush.bf16.msra.mxu0 %v2481
      %3742 = vmatpush.bf16.msra.mxu0 %v2473
      %3743 = vmatpush.bf16.msra.mxu0 %v2465
      %3744 = vmatpush.bf16.msra.mxu0 %v2457
      %3745 = vmatpush.bf16.msra.mxu0 %v2449
      %3746 = vmatpush.bf16.msra.mxu0 %v2441
      %3747 = vmatpush.bf16.msra.mxu0 %v2433
      %3748 = vmatmul.bf16.gmra.mxu0 %v815
      %v3749 = vpop.f32.mrf.mxu0
      %v3750 = vadd.f32 %v3736, %v3749
      %v3751 = vpop.f32.mrf.mxu0
      %v3752 = vadd.f32 %v3738, %v3751
      %3753 = vdwg.mxu0
      %3754 = vmatpush.bf16.msra.mxu0 %v2553
      %3755 = vmatpush.bf16.msra.mxu0 %v2545
      %3756 = vmatpush.bf16.msra.mxu0 %v2537
      %3757 = vmatpush.bf16.msra.mxu0 %v2529
      %3758 = vmatpush.bf16.msra.mxu0 %v2521
      %3759 = vmatpush.bf16.msra.mxu0 %v2513
      %3760 = vmatpush.bf16.msra.mxu0 %v2505
      %3761 = vmatpush.bf16.msra.mxu0 %v2497
      %3762 = vmatmul.bf16.gmra.mxu0 %v816
      %v3763 = vpop.f32.mrf.mxu0
      %v3764 = vadd.f32 %v3750, %v3763
      %v3765 = vpop.f32.mrf.mxu0
      %v3766 = vadd.f32 %v3752, %v3765
      %3767 = vdwg.mxu0
      %3768 = vmatpush.bf16.msra.mxu0 %v2617
      %3769 = vmatpush.bf16.msra.mxu0 %v2609
      %3770 = vmatpush.bf16.msra.mxu0 %v2601
      %3771 = vmatpush.bf16.msra.mxu0 %v2593
      %3772 = vmatpush.bf16.msra.mxu0 %v2585
      %3773 = vmatpush.bf16.msra.mxu0 %v2577
      %3774 = vmatpush.bf16.msra.mxu0 %v2569
      %3775 = vmatpush.bf16.msra.mxu0 %v2561
      %3776 = vmatmul.bf16.gmra.mxu0 %v817
      %v3777 = vpop.f32.mrf.mxu0
      %v3778 = vadd.f32 %v3764, %v3777
      %v3779 = vpop.f32.mrf.mxu0
      %v3780 = vadd.f32 %v3766, %v3779
      %3781 = vdwg.mxu0
      %3782 = vmatpush.bf16.msra.mxu0 %v2681
      %3783 = vmatpush.bf16.msra.mxu0 %v2673
      %3784 = vmatpush.bf16.msra.mxu0 %v2665
      %3785 = vmatpush.bf16.msra.mxu0 %v2657
      %3786 = vmatpush.bf16.msra.mxu0 %v2649
      %3787 = vmatpush.bf16.msra.mxu0 %v2641
      %3788 = vmatpush.bf16.msra.mxu0 %v2633
      %3789 = vmatpush.bf16.msra.mxu0 %v2625
      %3790 = vmatmul.bf16.gmra.mxu0 %v818
      %v3791 = vpop.f32.mrf.mxu0
      %v3792 = vadd.f32 %v3778, %v3791
      %v3793 = vpop.f32.mrf.mxu0
      %v3794 = vadd.f32 %v3780, %v3793
      %3795 = vdwg.mxu0
      %3796 = vmatpush.bf16.msra.mxu0 %v2745
      %3797 = vmatpush.bf16.msra.mxu0 %v2737
      %3798 = vmatpush.bf16.msra.mxu0 %v2729
      %3799 = vmatpush.bf16.msra.mxu0 %v2721
      %3800 = vmatpush.bf16.msra.mxu0 %v2713
      %3801 = vmatpush.bf16.msra.mxu0 %v2705
      %3802 = vmatpush.bf16.msra.mxu0 %v2697
      %3803 = vmatpush.bf16.msra.mxu0 %v2689
      %3804 = vmatmul.bf16.gmra.mxu0 %v819
      %v3805 = vpop.f32.mrf.mxu0
      %v3806 = vadd.f32 %v3792, %v3805
      %v3807 = vpop.f32.mrf.mxu0
      %v3808 = vadd.f32 %v3794, %v3807
      %3809 = vdwg.mxu0
      %3810 = vmatpush.bf16.msra.mxu0 %v2809
      %3811 = vmatpush.bf16.msra.mxu0 %v2801
      %3812 = vmatpush.bf16.msra.mxu0 %v2793
      %3813 = vmatpush.bf16.msra.mxu0 %v2785
      %3814 = vmatpush.bf16.msra.mxu0 %v2777
      %3815 = vmatpush.bf16.msra.mxu0 %v2769
      %3816 = vmatpush.bf16.msra.mxu0 %v2761
      %3817 = vmatpush.bf16.msra.mxu0 %v2753
      %3818 = vmatmul.bf16.gmra.mxu0 %v820
      %v3819 = vpop.f32.mrf.mxu0
      %v3820 = vadd.f32 %v3806, %v3819
      %v3821 = vpop.f32.mrf.mxu0
      %v3822 = vadd.f32 %v3808, %v3821
      %3823 = vdwg.mxu0
      %3824 = vmatpush.bf16.msra.mxu0 %v2873
      %3825 = vmatpush.bf16.msra.mxu0 %v2865
      %3826 = vmatpush.bf16.msra.mxu0 %v2857
      %3827 = vmatpush.bf16.msra.mxu0 %v2849
      %3828 = vmatpush.bf16.msra.mxu0 %v2841
      %3829 = vmatpush.bf16.msra.mxu0 %v2833
      %3830 = vmatpush.bf16.msra.mxu0 %v2825
      %3831 = vmatpush.bf16.msra.mxu0 %v2817
      %3832 = vmatmul.bf16.gmra.mxu0 %v821
      %v3833 = vpop.f32.mrf.mxu0
      %v3834 = vadd.f32 %v3820, %v3833
      %v3835 = vpop.f32.mrf.mxu0
      %v3836 = vadd.f32 %v3822, %v3835
      %3837 = vdwg.mxu0
      %3838 = vmatpush.bf16.msra.mxu0 %v2426
      %3839 = vmatpush.bf16.msra.mxu0 %v2418
      %3840 = vmatpush.bf16.msra.mxu0 %v2410
      %3841 = vmatpush.bf16.msra.mxu0 %v2402
      %3842 = vmatpush.bf16.msra.mxu0 %v2394
      %3843 = vmatpush.bf16.msra.mxu0 %v2386
      %3844 = vmatpush.bf16.msra.mxu0 %v2378
      %3845 = vmatpush.bf16.msra.mxu0 %v2370
      %3846 = vmatmul.bf16.gmra.mxu0 %v814
      %v3847 = vpop.f32.mrf.mxu0
      %v3848 = vadd.f32 %v778, %v3847
      %v3849 = vpop.f32.mrf.mxu0
      %v3850 = vadd.f32 %v778, %v3849
      %3851 = vdwg.mxu0
      %3852 = vmatpush.bf16.msra.mxu0 %v2490
      %3853 = vmatpush.bf16.msra.mxu0 %v2482
      %3854 = vmatpush.bf16.msra.mxu0 %v2474
      %3855 = vmatpush.bf16.msra.mxu0 %v2466
      %3856 = vmatpush.bf16.msra.mxu0 %v2458
      %3857 = vmatpush.bf16.msra.mxu0 %v2450
      %3858 = vmatpush.bf16.msra.mxu0 %v2442
      %3859 = vmatpush.bf16.msra.mxu0 %v2434
      %3860 = vmatmul.bf16.gmra.mxu0 %v815
      %v3861 = vpop.f32.mrf.mxu0
      %v3862 = vadd.f32 %v3848, %v3861
      %v3863 = vpop.f32.mrf.mxu0
      %v3864 = vadd.f32 %v3850, %v3863
      %3865 = vdwg.mxu0
      %3866 = vmatpush.bf16.msra.mxu0 %v2554
      %3867 = vmatpush.bf16.msra.mxu0 %v2546
      %3868 = vmatpush.bf16.msra.mxu0 %v2538
      %3869 = vmatpush.bf16.msra.mxu0 %v2530
      %3870 = vmatpush.bf16.msra.mxu0 %v2522
      %3871 = vmatpush.bf16.msra.mxu0 %v2514
      %3872 = vmatpush.bf16.msra.mxu0 %v2506
      %3873 = vmatpush.bf16.msra.mxu0 %v2498
      %3874 = vmatmul.bf16.gmra.mxu0 %v816
      %v3875 = vpop.f32.mrf.mxu0
      %v3876 = vadd.f32 %v3862, %v3875
      %v3877 = vpop.f32.mrf.mxu0
      %v3878 = vadd.f32 %v3864, %v3877
      %3879 = vdwg.mxu0
      %3880 = vmatpush.bf16.msra.mxu0 %v2618
      %3881 = vmatpush.bf16.msra.mxu0 %v2610
      %3882 = vmatpush.bf16.msra.mxu0 %v2602
      %3883 = vmatpush.bf16.msra.mxu0 %v2594
      %3884 = vmatpush.bf16.msra.mxu0 %v2586
      %3885 = vmatpush.bf16.msra.mxu0 %v2578
      %3886 = vmatpush.bf16.msra.mxu0 %v2570
      %3887 = vmatpush.bf16.msra.mxu0 %v2562
      %3888 = vmatmul.bf16.gmra.mxu0 %v817
      %v3889 = vpop.f32.mrf.mxu0
      %v3890 = vadd.f32 %v3876, %v3889
      %v3891 = vpop.f32.mrf.mxu0
      %v3892 = vadd.f32 %v3878, %v3891
      %3893 = vdwg.mxu0
      %3894 = vmatpush.bf16.msra.mxu0 %v2682
      %3895 = vmatpush.bf16.msra.mxu0 %v2674
      %3896 = vmatpush.bf16.msra.mxu0 %v2666
      %3897 = vmatpush.bf16.msra.mxu0 %v2658
      %3898 = vmatpush.bf16.msra.mxu0 %v2650
      %3899 = vmatpush.bf16.msra.mxu0 %v2642
      %3900 = vmatpush.bf16.msra.mxu0 %v2634
      %3901 = vmatpush.bf16.msra.mxu0 %v2626
      %3902 = vmatmul.bf16.gmra.mxu0 %v818
      %v3903 = vpop.f32.mrf.mxu0
      %v3904 = vadd.f32 %v3890, %v3903
      %v3905 = vpop.f32.mrf.mxu0
      %v3906 = vadd.f32 %v3892, %v3905
      %3907 = vdwg.mxu0
      %3908 = vmatpush.bf16.msra.mxu0 %v2746
      %3909 = vmatpush.bf16.msra.mxu0 %v2738
      %3910 = vmatpush.bf16.msra.mxu0 %v2730
      %3911 = vmatpush.bf16.msra.mxu0 %v2722
      %3912 = vmatpush.bf16.msra.mxu0 %v2714
      %3913 = vmatpush.bf16.msra.mxu0 %v2706
      %3914 = vmatpush.bf16.msra.mxu0 %v2698
      %3915 = vmatpush.bf16.msra.mxu0 %v2690
      %3916 = vmatmul.bf16.gmra.mxu0 %v819
      %v3917 = vpop.f32.mrf.mxu0
      %v3918 = vadd.f32 %v3904, %v3917
      %v3919 = vpop.f32.mrf.mxu0
      %v3920 = vadd.f32 %v3906, %v3919
      %3921 = vdwg.mxu0
      %3922 = vmatpush.bf16.msra.mxu0 %v2810
      %3923 = vmatpush.bf16.msra.mxu0 %v2802
      %3924 = vmatpush.bf16.msra.mxu0 %v2794
      %3925 = vmatpush.bf16.msra.mxu0 %v2786
      %3926 = vmatpush.bf16.msra.mxu0 %v2778
      %3927 = vmatpush.bf16.msra.mxu0 %v2770
      %3928 = vmatpush.bf16.msra.mxu0 %v2762
      %3929 = vmatpush.bf16.msra.mxu0 %v2754
      %3930 = vmatmul.bf16.gmra.mxu0 %v820
      %v3931 = vpop.f32.mrf.mxu0
      %v3932 = vadd.f32 %v3918, %v3931
      %v3933 = vpop.f32.mrf.mxu0
      %v3934 = vadd.f32 %v3920, %v3933
      %3935 = vdwg.mxu0
      %3936 = vmatpush.bf16.msra.mxu0 %v2874
      %3937 = vmatpush.bf16.msra.mxu0 %v2866
      %3938 = vmatpush.bf16.msra.mxu0 %v2858
      %3939 = vmatpush.bf16.msra.mxu0 %v2850
      %3940 = vmatpush.bf16.msra.mxu0 %v2842
      %3941 = vmatpush.bf16.msra.mxu0 %v2834
      %3942 = vmatpush.bf16.msra.mxu0 %v2826
      %3943 = vmatpush.bf16.msra.mxu0 %v2818
      %3944 = vmatmul.bf16.gmra.mxu0 %v821
      %v3945 = vpop.f32.mrf.mxu0
      %v3946 = vadd.f32 %v3932, %v3945
      %v3947 = vpop.f32.mrf.mxu0
      %v3948 = vadd.f32 %v3934, %v3947
      %3949 = vdwg.mxu0
      %3950 = vmatpush.bf16.msra.mxu0 %v2427
      %3951 = vmatpush.bf16.msra.mxu0 %v2419
      %3952 = vmatpush.bf16.msra.mxu0 %v2411
      %3953 = vmatpush.bf16.msra.mxu0 %v2403
      %3954 = vmatpush.bf16.msra.mxu0 %v2395
      %3955 = vmatpush.bf16.msra.mxu0 %v2387
      %3956 = vmatpush.bf16.msra.mxu0 %v2379
      %3957 = vmatpush.bf16.msra.mxu0 %v2371
      %3958 = vmatmul.bf16.gmra.mxu0 %v814
      %v3959 = vpop.f32.mrf.mxu0
      %v3960 = vadd.f32 %v779, %v3959
      %v3961 = vpop.f32.mrf.mxu0
      %v3962 = vadd.f32 %v779, %v3961
      %3963 = vdwg.mxu0
      %3964 = vmatpush.bf16.msra.mxu0 %v2491
      %3965 = vmatpush.bf16.msra.mxu0 %v2483
      %3966 = vmatpush.bf16.msra.mxu0 %v2475
      %3967 = vmatpush.bf16.msra.mxu0 %v2467
      %3968 = vmatpush.bf16.msra.mxu0 %v2459
      %3969 = vmatpush.bf16.msra.mxu0 %v2451
      %3970 = vmatpush.bf16.msra.mxu0 %v2443
      %3971 = vmatpush.bf16.msra.mxu0 %v2435
      %3972 = vmatmul.bf16.gmra.mxu0 %v815
      %v3973 = vpop.f32.mrf.mxu0
      %v3974 = vadd.f32 %v3960, %v3973
      %v3975 = vpop.f32.mrf.mxu0
      %v3976 = vadd.f32 %v3962, %v3975
      %3977 = vdwg.mxu0
      %3978 = vmatpush.bf16.msra.mxu0 %v2555
      %3979 = vmatpush.bf16.msra.mxu0 %v2547
      %3980 = vmatpush.bf16.msra.mxu0 %v2539
      %3981 = vmatpush.bf16.msra.mxu0 %v2531
      %3982 = vmatpush.bf16.msra.mxu0 %v2523
      %3983 = vmatpush.bf16.msra.mxu0 %v2515
      %3984 = vmatpush.bf16.msra.mxu0 %v2507
      %3985 = vmatpush.bf16.msra.mxu0 %v2499
      %3986 = vmatmul.bf16.gmra.mxu0 %v816
      %v3987 = vpop.f32.mrf.mxu0
      %v3988 = vadd.f32 %v3974, %v3987
      %v3989 = vpop.f32.mrf.mxu0
      %v3990 = vadd.f32 %v3976, %v3989
      %3991 = vdwg.mxu0
      %3992 = vmatpush.bf16.msra.mxu0 %v2619
      %3993 = vmatpush.bf16.msra.mxu0 %v2611
      %3994 = vmatpush.bf16.msra.mxu0 %v2603
      %3995 = vmatpush.bf16.msra.mxu0 %v2595
      %3996 = vmatpush.bf16.msra.mxu0 %v2587
      %3997 = vmatpush.bf16.msra.mxu0 %v2579
      %3998 = vmatpush.bf16.msra.mxu0 %v2571
      %3999 = vmatpush.bf16.msra.mxu0 %v2563
      %4000 = vmatmul.bf16.gmra.mxu0 %v817
      %v4001 = vpop.f32.mrf.mxu0
      %v4002 = vadd.f32 %v3988, %v4001
      %v4003 = vpop.f32.mrf.mxu0
      %v4004 = vadd.f32 %v3990, %v4003
      %4005 = vdwg.mxu0
      %4006 = vmatpush.bf16.msra.mxu0 %v2683
      %4007 = vmatpush.bf16.msra.mxu0 %v2675
      %4008 = vmatpush.bf16.msra.mxu0 %v2667
      %4009 = vmatpush.bf16.msra.mxu0 %v2659
      %4010 = vmatpush.bf16.msra.mxu0 %v2651
      %4011 = vmatpush.bf16.msra.mxu0 %v2643
      %4012 = vmatpush.bf16.msra.mxu0 %v2635
      %4013 = vmatpush.bf16.msra.mxu0 %v2627
      %4014 = vmatmul.bf16.gmra.mxu0 %v818
      %v4015 = vpop.f32.mrf.mxu0
      %v4016 = vadd.f32 %v4002, %v4015
      %v4017 = vpop.f32.mrf.mxu0
      %v4018 = vadd.f32 %v4004, %v4017
      %4019 = vdwg.mxu0
      %4020 = vmatpush.bf16.msra.mxu0 %v2747
      %4021 = vmatpush.bf16.msra.mxu0 %v2739
      %4022 = vmatpush.bf16.msra.mxu0 %v2731
      %4023 = vmatpush.bf16.msra.mxu0 %v2723
      %4024 = vmatpush.bf16.msra.mxu0 %v2715
      %4025 = vmatpush.bf16.msra.mxu0 %v2707
      %4026 = vmatpush.bf16.msra.mxu0 %v2699
      %4027 = vmatpush.bf16.msra.mxu0 %v2691
      %4028 = vmatmul.bf16.gmra.mxu0 %v819
      %v4029 = vpop.f32.mrf.mxu0
      %v4030 = vadd.f32 %v4016, %v4029
      %v4031 = vpop.f32.mrf.mxu0
      %v4032 = vadd.f32 %v4018, %v4031
      %4033 = vdwg.mxu0
      %4034 = vmatpush.bf16.msra.mxu0 %v2811
      %4035 = vmatpush.bf16.msra.mxu0 %v2803
      %4036 = vmatpush.bf16.msra.mxu0 %v2795
      %4037 = vmatpush.bf16.msra.mxu0 %v2787
      %4038 = vmatpush.bf16.msra.mxu0 %v2779
      %4039 = vmatpush.bf16.msra.mxu0 %v2771
      %4040 = vmatpush.bf16.msra.mxu0 %v2763
      %4041 = vmatpush.bf16.msra.mxu0 %v2755
      %4042 = vmatmul.bf16.gmra.mxu0 %v820
      %v4043 = vpop.f32.mrf.mxu0
      %v4044 = vadd.f32 %v4030, %v4043
      %v4045 = vpop.f32.mrf.mxu0
      %v4046 = vadd.f32 %v4032, %v4045
      %4047 = vdwg.mxu0
      %4048 = vmatpush.bf16.msra.mxu0 %v2875
      %4049 = vmatpush.bf16.msra.mxu0 %v2867
      %4050 = vmatpush.bf16.msra.mxu0 %v2859
      %4051 = vmatpush.bf16.msra.mxu0 %v2851
      %4052 = vmatpush.bf16.msra.mxu0 %v2843
      %4053 = vmatpush.bf16.msra.mxu0 %v2835
      %4054 = vmatpush.bf16.msra.mxu0 %v2827
      %4055 = vmatpush.bf16.msra.mxu0 %v2819
      %4056 = vmatmul.bf16.gmra.mxu0 %v821
      %v4057 = vpop.f32.mrf.mxu0
      %v4058 = vadd.f32 %v4044, %v4057
      %v4059 = vpop.f32.mrf.mxu0
      %v4060 = vadd.f32 %v4046, %v4059
      %4061 = vdwg.mxu0
      %4062 = vmatpush.bf16.msra.mxu0 %v2428
      %4063 = vmatpush.bf16.msra.mxu0 %v2420
      %4064 = vmatpush.bf16.msra.mxu0 %v2412
      %4065 = vmatpush.bf16.msra.mxu0 %v2404
      %4066 = vmatpush.bf16.msra.mxu0 %v2396
      %4067 = vmatpush.bf16.msra.mxu0 %v2388
      %4068 = vmatpush.bf16.msra.mxu0 %v2380
      %4069 = vmatpush.bf16.msra.mxu0 %v2372
      %4070 = vmatmul.bf16.gmra.mxu0 %v814
      %v4071 = vpop.f32.mrf.mxu0
      %v4072 = vadd.f32 %v780, %v4071
      %v4073 = vpop.f32.mrf.mxu0
      %v4074 = vadd.f32 %v780, %v4073
      %4075 = vdwg.mxu0
      %4076 = vmatpush.bf16.msra.mxu0 %v2492
      %4077 = vmatpush.bf16.msra.mxu0 %v2484
      %4078 = vmatpush.bf16.msra.mxu0 %v2476
      %4079 = vmatpush.bf16.msra.mxu0 %v2468
      %4080 = vmatpush.bf16.msra.mxu0 %v2460
      %4081 = vmatpush.bf16.msra.mxu0 %v2452
      %4082 = vmatpush.bf16.msra.mxu0 %v2444
      %4083 = vmatpush.bf16.msra.mxu0 %v2436
      %4084 = vmatmul.bf16.gmra.mxu0 %v815
      %v4085 = vpop.f32.mrf.mxu0
      %v4086 = vadd.f32 %v4072, %v4085
      %v4087 = vpop.f32.mrf.mxu0
      %v4088 = vadd.f32 %v4074, %v4087
      %4089 = vdwg.mxu0
      %4090 = vmatpush.bf16.msra.mxu0 %v2556
      %4091 = vmatpush.bf16.msra.mxu0 %v2548
      %4092 = vmatpush.bf16.msra.mxu0 %v2540
      %4093 = vmatpush.bf16.msra.mxu0 %v2532
      %4094 = vmatpush.bf16.msra.mxu0 %v2524
      %4095 = vmatpush.bf16.msra.mxu0 %v2516
      %4096 = vmatpush.bf16.msra.mxu0 %v2508
      %4097 = vmatpush.bf16.msra.mxu0 %v2500
      %4098 = vmatmul.bf16.gmra.mxu0 %v816
      %v4099 = vpop.f32.mrf.mxu0
      %v4100 = vadd.f32 %v4086, %v4099
      %v4101 = vpop.f32.mrf.mxu0
      %v4102 = vadd.f32 %v4088, %v4101
      %4103 = vdwg.mxu0
      %4104 = vmatpush.bf16.msra.mxu0 %v2620
      %4105 = vmatpush.bf16.msra.mxu0 %v2612
      %4106 = vmatpush.bf16.msra.mxu0 %v2604
      %4107 = vmatpush.bf16.msra.mxu0 %v2596
      %4108 = vmatpush.bf16.msra.mxu0 %v2588
      %4109 = vmatpush.bf16.msra.mxu0 %v2580
      %4110 = vmatpush.bf16.msra.mxu0 %v2572
      %4111 = vmatpush.bf16.msra.mxu0 %v2564
      %4112 = vmatmul.bf16.gmra.mxu0 %v817
      %v4113 = vpop.f32.mrf.mxu0
      %v4114 = vadd.f32 %v4100, %v4113
      %v4115 = vpop.f32.mrf.mxu0
      %v4116 = vadd.f32 %v4102, %v4115
      %4117 = vdwg.mxu0
      %4118 = vmatpush.bf16.msra.mxu0 %v2684
      %4119 = vmatpush.bf16.msra.mxu0 %v2676
      %4120 = vmatpush.bf16.msra.mxu0 %v2668
      %4121 = vmatpush.bf16.msra.mxu0 %v2660
      %4122 = vmatpush.bf16.msra.mxu0 %v2652
      %4123 = vmatpush.bf16.msra.mxu0 %v2644
      %4124 = vmatpush.bf16.msra.mxu0 %v2636
      %4125 = vmatpush.bf16.msra.mxu0 %v2628
      %4126 = vmatmul.bf16.gmra.mxu0 %v818
      %v4127 = vpop.f32.mrf.mxu0
      %v4128 = vadd.f32 %v4114, %v4127
      %v4129 = vpop.f32.mrf.mxu0
      %v4130 = vadd.f32 %v4116, %v4129
      %4131 = vdwg.mxu0
      %4132 = vmatpush.bf16.msra.mxu0 %v2748
      %4133 = vmatpush.bf16.msra.mxu0 %v2740
      %4134 = vmatpush.bf16.msra.mxu0 %v2732
      %4135 = vmatpush.bf16.msra.mxu0 %v2724
      %4136 = vmatpush.bf16.msra.mxu0 %v2716
      %4137 = vmatpush.bf16.msra.mxu0 %v2708
      %4138 = vmatpush.bf16.msra.mxu0 %v2700
      %4139 = vmatpush.bf16.msra.mxu0 %v2692
      %4140 = vmatmul.bf16.gmra.mxu0 %v819
      %v4141 = vpop.f32.mrf.mxu0
      %v4142 = vadd.f32 %v4128, %v4141
      %v4143 = vpop.f32.mrf.mxu0
      %v4144 = vadd.f32 %v4130, %v4143
      %4145 = vdwg.mxu0
      %4146 = vmatpush.bf16.msra.mxu0 %v2812
      %4147 = vmatpush.bf16.msra.mxu0 %v2804
      %4148 = vmatpush.bf16.msra.mxu0 %v2796
      %4149 = vmatpush.bf16.msra.mxu0 %v2788
      %4150 = vmatpush.bf16.msra.mxu0 %v2780
      %4151 = vmatpush.bf16.msra.mxu0 %v2772
      %4152 = vmatpush.bf16.msra.mxu0 %v2764
      %4153 = vmatpush.bf16.msra.mxu0 %v2756
      %4154 = vmatmul.bf16.gmra.mxu0 %v820
      %v4155 = vpop.f32.mrf.mxu0
      %v4156 = vadd.f32 %v4142, %v4155
      %v4157 = vpop.f32.mrf.mxu0
      %v4158 = vadd.f32 %v4144, %v4157
      %4159 = vdwg.mxu0
      %4160 = vmatpush.bf16.msra.mxu0 %v2876
      %4161 = vmatpush.bf16.msra.mxu0 %v2868
      %4162 = vmatpush.bf16.msra.mxu0 %v2860
      %4163 = vmatpush.bf16.msra.mxu0 %v2852
      %4164 = vmatpush.bf16.msra.mxu0 %v2844
      %4165 = vmatpush.bf16.msra.mxu0 %v2836
      %4166 = vmatpush.bf16.msra.mxu0 %v2828
      %4167 = vmatpush.bf16.msra.mxu0 %v2820
      %4168 = vmatmul.bf16.gmra.mxu0 %v821
      %v4169 = vpop.f32.mrf.mxu0
      %v4170 = vadd.f32 %v4156, %v4169
      %v4171 = vpop.f32.mrf.mxu0
      %v4172 = vadd.f32 %v4158, %v4171
      %4173 = vdwg.mxu0
      %4174 = vmatpush.bf16.msra.mxu0 %v2429
      %4175 = vmatpush.bf16.msra.mxu0 %v2421
      %4176 = vmatpush.bf16.msra.mxu0 %v2413
      %4177 = vmatpush.bf16.msra.mxu0 %v2405
      %4178 = vmatpush.bf16.msra.mxu0 %v2397
      %4179 = vmatpush.bf16.msra.mxu0 %v2389
      %4180 = vmatpush.bf16.msra.mxu0 %v2381
      %4181 = vmatpush.bf16.msra.mxu0 %v2373
      %4182 = vmatmul.bf16.gmra.mxu0 %v814
      %v4183 = vpop.f32.mrf.mxu0
      %v4184 = vadd.f32 %v781, %v4183
      %v4185 = vpop.f32.mrf.mxu0
      %v4186 = vadd.f32 %v781, %v4185
      %4187 = vdwg.mxu0
      %4188 = vmatpush.bf16.msra.mxu0 %v2493
      %4189 = vmatpush.bf16.msra.mxu0 %v2485
      %4190 = vmatpush.bf16.msra.mxu0 %v2477
      %4191 = vmatpush.bf16.msra.mxu0 %v2469
      %4192 = vmatpush.bf16.msra.mxu0 %v2461
      %4193 = vmatpush.bf16.msra.mxu0 %v2453
      %4194 = vmatpush.bf16.msra.mxu0 %v2445
      %4195 = vmatpush.bf16.msra.mxu0 %v2437
      %4196 = vmatmul.bf16.gmra.mxu0 %v815
      %v4197 = vpop.f32.mrf.mxu0
      %v4198 = vadd.f32 %v4184, %v4197
      %v4199 = vpop.f32.mrf.mxu0
      %v4200 = vadd.f32 %v4186, %v4199
      %4201 = vdwg.mxu0
      %4202 = vmatpush.bf16.msra.mxu0 %v2557
      %4203 = vmatpush.bf16.msra.mxu0 %v2549
      %4204 = vmatpush.bf16.msra.mxu0 %v2541
      %4205 = vmatpush.bf16.msra.mxu0 %v2533
      %4206 = vmatpush.bf16.msra.mxu0 %v2525
      %4207 = vmatpush.bf16.msra.mxu0 %v2517
      %4208 = vmatpush.bf16.msra.mxu0 %v2509
      %4209 = vmatpush.bf16.msra.mxu0 %v2501
      %4210 = vmatmul.bf16.gmra.mxu0 %v816
      %v4211 = vpop.f32.mrf.mxu0
      %v4212 = vadd.f32 %v4198, %v4211
      %v4213 = vpop.f32.mrf.mxu0
      %v4214 = vadd.f32 %v4200, %v4213
      %4215 = vdwg.mxu0
      %4216 = vmatpush.bf16.msra.mxu0 %v2621
      %4217 = vmatpush.bf16.msra.mxu0 %v2613
      %4218 = vmatpush.bf16.msra.mxu0 %v2605
      %4219 = vmatpush.bf16.msra.mxu0 %v2597
      %4220 = vmatpush.bf16.msra.mxu0 %v2589
      %4221 = vmatpush.bf16.msra.mxu0 %v2581
      %4222 = vmatpush.bf16.msra.mxu0 %v2573
      %4223 = vmatpush.bf16.msra.mxu0 %v2565
      %4224 = vmatmul.bf16.gmra.mxu0 %v817
      %v4225 = vpop.f32.mrf.mxu0
      %v4226 = vadd.f32 %v4212, %v4225
      %v4227 = vpop.f32.mrf.mxu0
      %v4228 = vadd.f32 %v4214, %v4227
      %4229 = vdwg.mxu0
      %4230 = vmatpush.bf16.msra.mxu0 %v2685
      %4231 = vmatpush.bf16.msra.mxu0 %v2677
      %4232 = vmatpush.bf16.msra.mxu0 %v2669
      %4233 = vmatpush.bf16.msra.mxu0 %v2661
      %4234 = vmatpush.bf16.msra.mxu0 %v2653
      %4235 = vmatpush.bf16.msra.mxu0 %v2645
      %4236 = vmatpush.bf16.msra.mxu0 %v2637
      %4237 = vmatpush.bf16.msra.mxu0 %v2629
      %4238 = vmatmul.bf16.gmra.mxu0 %v818
      %v4239 = vpop.f32.mrf.mxu0
      %v4240 = vadd.f32 %v4226, %v4239
      %v4241 = vpop.f32.mrf.mxu0
      %v4242 = vadd.f32 %v4228, %v4241
      %4243 = vdwg.mxu0
      %4244 = vmatpush.bf16.msra.mxu0 %v2749
      %4245 = vmatpush.bf16.msra.mxu0 %v2741
      %4246 = vmatpush.bf16.msra.mxu0 %v2733
      %4247 = vmatpush.bf16.msra.mxu0 %v2725
      %4248 = vmatpush.bf16.msra.mxu0 %v2717
      %4249 = vmatpush.bf16.msra.mxu0 %v2709
      %4250 = vmatpush.bf16.msra.mxu0 %v2701
      %4251 = vmatpush.bf16.msra.mxu0 %v2693
      %4252 = vmatmul.bf16.gmra.mxu0 %v819
      %v4253 = vpop.f32.mrf.mxu0
      %v4254 = vadd.f32 %v4240, %v4253
      %v4255 = vpop.f32.mrf.mxu0
      %v4256 = vadd.f32 %v4242, %v4255
      %4257 = vdwg.mxu0
      %4258 = vmatpush.bf16.msra.mxu0 %v2813
      %4259 = vmatpush.bf16.msra.mxu0 %v2805
      %4260 = vmatpush.bf16.msra.mxu0 %v2797
      %4261 = vmatpush.bf16.msra.mxu0 %v2789
      %4262 = vmatpush.bf16.msra.mxu0 %v2781
      %4263 = vmatpush.bf16.msra.mxu0 %v2773
      %4264 = vmatpush.bf16.msra.mxu0 %v2765
      %4265 = vmatpush.bf16.msra.mxu0 %v2757
      %4266 = vmatmul.bf16.gmra.mxu0 %v820
      %v4267 = vpop.f32.mrf.mxu0
      %v4268 = vadd.f32 %v4254, %v4267
      %v4269 = vpop.f32.mrf.mxu0
      %v4270 = vadd.f32 %v4256, %v4269
      %4271 = vdwg.mxu0
      %4272 = vmatpush.bf16.msra.mxu0 %v2877
      %4273 = vmatpush.bf16.msra.mxu0 %v2869
      %4274 = vmatpush.bf16.msra.mxu0 %v2861
      %4275 = vmatpush.bf16.msra.mxu0 %v2853
      %4276 = vmatpush.bf16.msra.mxu0 %v2845
      %4277 = vmatpush.bf16.msra.mxu0 %v2837
      %4278 = vmatpush.bf16.msra.mxu0 %v2829
      %4279 = vmatpush.bf16.msra.mxu0 %v2821
      %4280 = vmatmul.bf16.gmra.mxu0 %v821
      %v4281 = vpop.f32.mrf.mxu0
      %v4282 = vadd.f32 %v4268, %v4281
      %v4283 = vpop.f32.mrf.mxu0
      %v4284 = vadd.f32 %v4270, %v4283
      %4285 = vdwg.mxu0
      %vm4286 = vcmp.gt.f32.partialorder %v3498, 0.0
      %vm4287 = vcmp.gt.f32.partialorder %v3610, 0.0
      %vm4288 = vcmp.gt.f32.partialorder %v3722, 0.0
      %vm4289 = vcmp.gt.f32.partialorder %v3834, 0.0
      %vm4290 = vcmp.gt.f32.partialorder %v3946, 0.0
      %vm4291 = vcmp.gt.f32.partialorder %v4058, 0.0
      %vm4292 = vcmp.gt.f32.partialorder %v4170, 0.0
      %vm4293 = vcmp.gt.f32.partialorder %v4282, 0.0
      %vm4294 = vcmp.gt.f32.partialorder %v3500, 0.0
      %vm4295 = vcmp.gt.f32.partialorder %v3612, 0.0
      %vm4296 = vcmp.gt.f32.partialorder %v3724, 0.0
      %vm4297 = vcmp.gt.f32.partialorder %v3836, 0.0
      %vm4298 = vcmp.gt.f32.partialorder %v3948, 0.0
      %vm4299 = vcmp.gt.f32.partialorder %v4060, 0.0
      %vm4300 = vcmp.gt.f32.partialorder %v4172, 0.0
      %vm4301 = vcmp.gt.f32.partialorder %v4284, 0.0
      %v4302 = vmul.f32 %v3498, 0.1
      %v4303 = vmul.f32 %v3610, 0.1
      %v4304 = vmul.f32 %v3722, 0.1
      %v4305 = vmul.f32 %v3834, 0.1
      %v4306 = vmul.f32 %v3946, 0.1
      %v4307 = vmul.f32 %v4058, 0.1
      %v4308 = vmul.f32 %v4170, 0.1
      %v4309 = vmul.f32 %v4282, 0.1
      %v4310 = vmul.f32 %v3500, 0.1
      %v4311 = vmul.f32 %v3612, 0.1
      %v4312 = vmul.f32 %v3724, 0.1
      %v4313 = vmul.f32 %v3836, 0.1
      %v4314 = vmul.f32 %v3948, 0.1
      %v4315 = vmul.f32 %v4060, 0.1
      %v4316 = vmul.f32 %v4172, 0.1
      %v4317 = vmul.f32 %v4284, 0.1
      %v4318 = vsel %vm4286, %v3498, %v4302
      %v4319 = vsel %vm4287, %v3610, %v4303
      %v4320 = vsel %vm4288, %v3722, %v4304
      %v4321 = vsel %vm4289, %v3834, %v4305
      %v4322 = vsel %vm4290, %v3946, %v4306
      %v4323 = vsel %vm4291, %v4058, %v4307
      %v4324 = vsel %vm4292, %v4170, %v4308
      %v4325 = vsel %vm4293, %v4282, %v4309
      %v4326 = vsel %vm4294, %v3500, %v4310
      %v4327 = vsel %vm4295, %v3612, %v4311
      %v4328 = vsel %vm4296, %v3724, %v4312
      %v4329 = vsel %vm4297, %v3836, %v4313
      %v4330 = vsel %vm4298, %v3948, %v4314
      %v4331 = vsel %vm4299, %v4060, %v4315
      %v4332 = vsel %vm4300, %v4172, %v4316
      %v4333 = vsel %vm4301, %v4284, %v4317
      %v4334 = vpack.c.bf16 %v4319, %v4318
      %v4335 = vpack.c.bf16 %v4321, %v4320
      %v4336 = vpack.c.bf16 %v4323, %v4322
      %v4337 = vpack.c.bf16 %v4325, %v4324
      %v4338 = vpack.c.bf16 %v4327, %v4326
      %v4339 = vpack.c.bf16 %v4329, %v4328
      %v4340 = vpack.c.bf16 %v4331, %v4330
      %v4341 = vpack.c.bf16 %v4333, %v4332
      %4342 = vst [vmem:[%s250] sm:$0xff] %v4334
      %4343 = vst [vmem:[%s250 + $0x8] sm:$0xff] %v4335
      %4344 = vst [vmem:[%s250 + $0x10] sm:$0xff] %v4336
      %4345 = vst [vmem:[%s250 + $0x18] sm:$0xff] %v4337
      %4346 = vst [vmem:[%s250 + $0x20] sm:$0xff] %v4338
      %4347 = vst [vmem:[%s250 + $0x28] sm:$0xff] %v4339
      %4348 = vst [vmem:[%s250 + $0x30] sm:$0xff] %v4340
      %4349 = vst [vmem:[%s250 + $0x38] sm:$0xff] %v4341
      %s4350 = smul.u32 2, %s19
      %p4351 = scmp.lt.s32.totalorder %s18, 2
      %s4352 = scalar_select %p4351, %s18, 2
      %p4353 = scmp.lt.s32.totalorder %s4350, 1
      %s4354 = scalar_select %p4353, %s4350, 1
      %s4355 = smul.addr %s4354, 8
      %s4356 = smul.addr %s4352, 16
      %s4357 = sadd.s32 %s4355, %s4356
      %s4358 = smul.addr %s4357, 4
      %s4359 = scalar_lea.vmem %s3, %s4358
      // Predicated region
      $region33: #{model_forward.19} parent=31 // pred_check
        %p4360 = pneg %p126
      $region34: #{model_forward.19} parent=31 // pred_check_branch
        %4362 = sbr.rel (%p4360) target = $region36
      $region35: #{model_forward.19} parent=31 // pred_region
        %s4363 = smul.u32 2, %s19
      $region36: #{model_forward.19} parent=31 // pred_fallthru
        _
    $region32: #{model_forward.19} parent=5 // pred_fallthru
      _
    %p4364 = scmp.le.s32.totalorder 2, %s9
    // Predicated region
    $region37: #{model_forward.19} parent=5 // pred_check
      %p4365 = pneg %p4364
    $region38: #{model_forward.19} parent=5 // pred_check_branch
      %4367 = sbr.rel (%p4365) target = $region40
    $region39: #{model_forward.19} parent=5 // pred_region
      %s4368 = ssub.s32 %s9, 2
      // Predicated region
      $region41: #{model_forward.19} parent=39 // pred_check
        %p4369 = pneg %p132
      $region42: #{model_forward.19} parent=39 // pred_check_branch
        %4371 = sbr.rel (%p4369) target = $region44
      $region43: #{model_forward.19} parent=39 // pred_region
        %s4372 = smul.u32 2, %s21
        %p4373 = scmp.lt.s32.totalorder %s20, 2
        %s4374 = scalar_select %p4373, %s20, 2
        %p4375 = scmp.lt.s32.totalorder %s4372, 1
        %s4376 = scalar_select %p4375, %s4372, 1
        %s4377 = smul.addr %s4376, 8
        %s4378 = smul.addr %s4374, 16
        %s4379 = sadd.s32 %s4377, %s4378
        %s4380 = smul.addr %s4379, 4
        %s4381 = scalar_lea.vmem %s3, %s4380
      $region44: #{model_forward.19} parent=39 // pred_fallthru
        _
    $region40: #{model_forward.19} parent=5 // pred_fallthru
      _
  $region6: #{model_forward.19} parent=0 // loop_footer
    %s13 = sadd.s32 1, %s9
  $region7: #{model_forward.19} parent=0 // loop_footer_branch
    %8 = sbr.rel target = $region3
  $region8: #{model_forward.19} parent=0 // loop_exit
    _

// kernel: model_forward.21
$region0: #{model_forward.21}
  #allocation0 [shape = 'u32[]', space=smem, size = 0x4, offset = 0x4, fixed_abs, tag = 'smem constant byte address 0x4 - core index']
  #allocation1 [shape = 'u32[72,128]{1,0:T(1,128)}', space=vmem, size = 0x9000, scoped, tag = 'internal scratch']
  %s0 = inlined_call_operand.vmem [shape: bf16[3,16,1024], index: 0, kind: input, shape index: {}]
  %s1 = inlined_call_operand.vmem [shape: f32[3,1024,10], index: 1, kind: input, shape index: {}]
  %s2 = inlined_call_operand.vmem [shape: f32[3,1,10], index: 2, kind: input, shape index: {}]
  %s3 = inlined_call_operand.vmem [shape: f32[3,2,10], index: 3, kind: output, shape index: {}]
  %s4 = sld [smem:[#allocation0]]
  $region45: #{model_forward.21} parent=0
    _
  %s6 = ssub.s32 1, %s4
  %s7 = scalar_select 0, %s6, %s4
  loop: start=0, step=1, limit=8
  $region2: #{model_forward.21} parent=0 // loop_pre_header
    _
  $region3: #{model_forward.21} parent=0 // loop_header
    %s9 = sphi 0, %s13
    %p10 = scmp.ge.s32.totalorder %s9, 8
    %s16 = sphi 0, %s28
    %s17 = sphi 0, %s24
    %s18 = sphi 0, %s16
    %s19 = sphi 0, %s17
    %s20 = sphi 0, %s18
    %s21 = sphi 0, %s19
    %s33 = sphi 0, %s35
    %s36 = sphi 0, %s33
    %s37 = sphi 0, %s36
    %s53 = sphi 0, %s37
    %s59 = sphi 0, %s61
    %s62 = sphi 0, %s59
    %s63 = sphi 0, %s62
    %s79 = sphi 0, %s63
    %s85 = sphi 0, %s87
    %s88 = sphi 0, %s85
    %s89 = sphi 0, %s88
    %s105 = sphi 0, %s89
    %s111 = sphi 0, %s113
    %s114 = sphi 0, %s111
    %s115 = sphi 0, %s114
    %s131 = sphi 0, %s115
  $region4: #{model_forward.21} parent=0 // loop_header_branch
    %12 = sbr.rel (%p10) target = $region8
  $region5: #{model_forward.21} parent=0 // loop_body
    %s14 = ssub.s32 %s9, 1
    %s15 = ssub.s32 %s9, 2
    %s22 = sadd.s32 1, %s17
    %p23 = scmp.ge.s32.totalorder %s22, 2
    %s24 = scalar_select %p23, 0, %s22
    %s25 = sadd.s32 1, %s16
    %s26 = scalar_select %p23, %s25, %s16
    %p27 = scmp.ge.s32.totalorder %s26, 3
    %s28 = scalar_select %p27, 0, %s26
    %s29 = ssub.s32 %s16, %s28
    %s30 = ssub.s32 %s17, %s24
    %s31 = sor.u32 %s29, %s30
    %p32 = scmp.eq.s32.totalorder %s31, 0
    %s34 = sadd.s32 %s33, 1
    %s35 = scalar_select %p32, %s33, %s34
    %p38 = pneg %p32
    %p39 = scmp.eq.s32.totalorder %s9, 5
    %p40 = por %p38, %p39
    %p41 = scmp.ne.s32.totalorder %s33, %s36
    %p42 = scmp.eq.s32.totalorder %s9, 0
    %p43 = por %p41, %p42
    %p44 = scmp.ne.s32.totalorder %s33, %s36
    %p45 = scmp.eq.s32.totalorder %s14, 5
    %p46 = por %p44, %p45
    %p47 = scmp.ne.s32.totalorder %s36, %s37
    %p48 = scmp.eq.s32.totalorder %s14, 0
    %p49 = por %p47, %p48
    %p50 = scmp.ne.s32.totalorder %s36, %s37
    %p51 = scmp.eq.s32.totalorder %s15, 5
    %p52 = por %p50, %p51
    %p54 = scmp.ne.s32.totalorder %s37, %s53
    %p55 = scmp.eq.s32.totalorder %s15, 0
    %p56 = por %p54, %p55
    %s57 = ssub.s32 %s16, %s28
    %p58 = scmp.eq.s32.totalorder %s57, 0
    %s60 = sadd.s32 %s59, 1
    %s61 = scalar_select %p58, %s59, %s60
    %p64 = pneg %p58
    %p65 = scmp.eq.s32.totalorder %s9, 5
    %p66 = por %p64, %p65
    %p67 = scmp.ne.s32.totalorder %s59, %s62
    %p68 = scmp.eq.s32.totalorder %s9, 0
    %p69 = por %p67, %p68
    %p70 = scmp.ne.s32.totalorder %s59, %s62
    %p71 = scmp.eq.s32.totalorder %s14, 5
    %p72 = por %p70, %p71
    %p73 = scmp.ne.s32.totalorder %s62, %s63
    %p74 = scmp.eq.s32.totalorder %s14, 0
    %p75 = por %p73, %p74
    %p76 = scmp.ne.s32.totalorder %s62, %s63
    %p77 = scmp.eq.s32.totalorder %s15, 5
    %p78 = por %p76, %p77
    %p80 = scmp.ne.s32.totalorder %s63, %s79
    %p81 = scmp.eq.s32.totalorder %s15, 0
    %p82 = por %p80, %p81
    %s83 = ssub.s32 %s16, %s28
    %p84 = scmp.eq.s32.totalorder %s83, 0
    %s86 = sadd.s32 %s85, 1
    %s87 = scalar_select %p84, %s85, %s86
    %p90 = pneg %p84
    %p91 = scmp.eq.s32.totalorder %s9, 5
    %p92 = por %p90, %p91
    %p93 = scmp.ne.s32.totalorder %s85, %s88
    %p94 = scmp.eq.s32.totalorder %s9, 0
    %p95 = por %p93, %p94
    %p96 = scmp.ne.s32.totalorder %s85, %s88
    %p97 = scmp.eq.s32.totalorder %s14, 5
    %p98 = por %p96, %p97
    %p99 = scmp.ne.s32.totalorder %s88, %s89
    %p100 = scmp.eq.s32.totalorder %s14, 0
    %p101 = por %p99, %p100
    %p102 = scmp.ne.s32.totalorder %s88, %s89
    %p103 = scmp.eq.s32.totalorder %s15, 5
    %p104 = por %p102, %p103
    %p106 = scmp.ne.s32.totalorder %s89, %s105
    %p107 = scmp.eq.s32.totalorder %s15, 0
    %p108 = por %p106, %p107
    %s109 = ssub.s32 %s16, %s28
    %p110 = scmp.eq.s32.totalorder %s109, 0
    %s112 = sadd.s32 %s111, 1
    %s113 = scalar_select %p110, %s111, %s112
    %p116 = pneg %p110
    %p117 = scmp.eq.s32.totalorder %s9, 5
    %p118 = por %p116, %p117
    %p119 = scmp.ne.s32.totalorder %s111, %s114
    %p120 = scmp.eq.s32.totalorder %s9, 0
    %p121 = por %p119, %p120
    %p122 = scmp.ne.s32.totalorder %s111, %s114
    %p123 = scmp.eq.s32.totalorder %s14, 5
    %p124 = por %p122, %p123
    %p125 = scmp.ne.s32.totalorder %s114, %s115
    %p126 = scmp.eq.s32.totalorder %s14, 0
    %p127 = por %p125, %p126
    %p128 = scmp.ne.s32.totalorder %s114, %s115
    %p129 = scmp.eq.s32.totalorder %s15, 5
    %p130 = por %p128, %p129
    %p132 = scmp.ne.s32.totalorder %s115, %s131
    %p133 = scmp.eq.s32.totalorder %s15, 0
    %p134 = por %p132, %p133
    %p135 = scmp.le.s32.totalorder 1, %s9
    %p136 = scmp.lt.s32.totalorder %s9, 7
    %p137 = pnand %p135, %p136
    %p138 = pneg %p137
    // Predicated region
    $region9: #{model_forward.21} parent=5 // pred_check
      _
    $region10: #{model_forward.21} parent=5 // pred_check_branch
      %140 = sbr.rel (%p137) target = $region12
    $region11: #{model_forward.21} parent=5 // pred_region
      %s141 = ssub.s32 %s9, 1
    $region12: #{model_forward.21} parent=5 // pred_fallthru
      _
    %p142 = scmp.lt.s32.totalorder %s9, 6
    // Predicated region
    $region13: #{model_forward.21} parent=5 // pred_check
      %p143 = pneg %p142
    $region14: #{model_forward.21} parent=5 // pred_check_branch
      %145 = sbr.rel (%p143) target = $region16
    $region15: #{model_forward.21} parent=5 // pred_region
      // Predicated region
      $region17: #{model_forward.21} parent=15 // pred_check
        %p146 = pneg %p43
      $region18: #{model_forward.21} parent=15 // pred_check_branch
        %148 = sbr.rel (%p146) target = $region20
      $region19: #{model_forward.21} parent=15 // pred_region
        %p149 = scmp.lt.s32.totalorder %s16, 2
        %s150 = scalar_select %p149, %s16, 2
        %p151 = scmp.lt.s32.totalorder %s17, 1
        %s152 = scalar_select %p151, %s17, 1
        %s153 = smul.addr %s152, 8
        %s154 = smul.addr %s150, 16
        %s155 = sadd.s32 %s153, %s154
        %s156 = smul.addr %s155, 4
        %s157 = scalar_lea.vmem %s0, %s156
      $region20: #{model_forward.21} parent=15 // pred_fallthru
        _
      // Predicated region
      $region21: #{model_forward.21} parent=15 // pred_check
        %p158 = pneg %p69
      $region22: #{model_forward.21} parent=15 // pred_check_branch
        %160 = sbr.rel (%p158) target = $region24
      $region23: #{model_forward.21} parent=15 // pred_region
        %p161 = scmp.lt.s32.totalorder %s16, 2
        %s162 = scalar_select %p161, %s16, 2
        %s163 = smul.addr %s162, 128
        %s164 = smul.addr %s163, 8
        %s165 = scalar_lea.vmem %s1, %s164
      $region24: #{model_forward.21} parent=15 // pred_fallthru
        _
      // Predicated region
      $region25: #{model_forward.21} parent=15 // pred_check
        %p166 = pneg %p95
      $region26: #{model_forward.21} parent=15 // pred_check_branch
        %168 = sbr.rel (%p166) target = $region28
      $region27: #{model_forward.21} parent=15 // pred_region
        %p169 = scmp.lt.s32.totalorder %s16, 2
        %s170 = scalar_select %p169, %s16, 2
        %s171 = scalar_lea.vmem %s2, %s170
      $region28: #{model_forward.21} parent=15 // pred_fallthru
        _
    $region16: #{model_forward.21} parent=5 // pred_fallthru
      _
    %p172 = scmp.le.s32.totalorder 1, %s9
    %p173 = scmp.lt.s32.totalorder %s9, 7
    %p174 = pnand %p172, %p173
    %p175 = pneg %p174
    // Predicated region
    $region29: #{model_forward.21} parent=5 // pred_check
      _
    $region30: #{model_forward.21} parent=5 // pred_check_branch
      %177 = sbr.rel (%p174) target = $region32
    $region31: #{model_forward.21} parent=5 // pred_region
      %s178 = ssub.s32 %s9, 1
      %p179 = scmp.lt.s32.totalorder %s18, 2
      %s180 = scalar_select %p179, %s18, 2
      %p181 = scmp.lt.s32.totalorder %s19, 1
      %s182 = scalar_select %p181, %s19, 1
      %s183 = smul.addr %s182, 8
      %s184 = smul.addr %s180, 16
      %s185 = sadd.s32 %s183, %s184
      %s186 = smul.addr %s185, 4
      %s187 = scalar_lea.vmem %s0, %s186
      %p188 = pneg %p49
      %p189 = pneg %p46
      %p190 = scmp.lt.s32.totalorder %s18, 2
      %s191 = scalar_select %p190, %s18, 2
      %s192 = smul.addr %s191, 128
      %s193 = smul.addr %s192, 8
      %s194 = scalar_lea.vmem %s1, %s193
      %p195 = pneg %p75
      %p196 = pneg %p72
      %p197 = scmp.lt.s32.totalorder %s18, 2
      %s198 = scalar_select %p197, %s18, 2
      %s199 = scalar_lea.vmem %s2, %s198
      %p200 = pneg %p101
      %p201 = pneg %p98
      %p202 = pneg %p127
      %p203 = pneg %p124
      %p204 = scmp.lt.s32.totalorder %s18, 2
      %s205 = scalar_select %p204, %s18, 2
      %s206 = smul.addr %s205, 2
      %s207 = scalar_lea.vmem %s3, %s206
      %p208 = scmp.lt.s32.totalorder %s18, 2
      %s209 = scalar_select %p208, %s18, 2
      %p210 = scmp.lt.s32.totalorder %s19, 1
      %s211 = scalar_select %p210, %s19, 1
      %s212 = smul.addr %s211, 8
      %s213 = smul.addr %s209, 16
      %s214 = sadd.s32 %s212, %s213
      %s215 = smul.addr %s214, 4
      %s216 = scalar_lea.vmem %s0, %s215
      %p217 = scmp.lt.s32.totalorder %s18, 2
      %s218 = scalar_select %p217, %s18, 2
      %s219 = smul.addr %s218, 128
      %s220 = smul.addr %s219, 8
      %s221 = scalar_lea.vmem %s1, %s220
      %p222 = scmp.lt.s32.totalorder %s18, 2
      %s223 = scalar_select %p222, %s18, 2
      %s224 = scalar_lea.vmem %s2, %s223
      %p225 = scmp.lt.s32.totalorder %s18, 2
      %s226 = scalar_select %p225, %s18, 2
      %s227 = smul.addr %s226, 2
      %s228 = scalar_lea.vmem %s3, %s227
      %v229 = vld [vmem:[%s216] sm:$0xff]
      %v230 = vld [vmem:[%s216 + $0x8] sm:$0xff]
      %v231 = vld [vmem:[%s216 + $0x10] sm:$0xff]
      %v232 = vld [vmem:[%s216 + $0x18] sm:$0xff]
      %v233 = vunpack.c.l.bf16 %v229
      %v234 = vunpack.c.h.bf16 %v229
      %v235 = vunpack.c.l.bf16 %v230
      %v236 = vunpack.c.h.bf16 %v230
      %v237 = vunpack.c.l.bf16 %v231
      %v238 = vunpack.c.h.bf16 %v231
      %v239 = vunpack.c.l.bf16 %v232
      %v240 = vunpack.c.h.bf16 %v232
      %v241 = vrot.slane %v233, 4
      %v242 = vadd.f32 %v233, %v241
      %v243 = vrot.slane %v242, 2
      %v244 = vadd.f32 %v242, %v243
      %v245 = vrot.slane %v244, 1
      %v246 = vadd.f32 %v244, %v245
      %v247 = vrot.slane %v234, 4
      %v248 = vadd.f32 %v234, %v247
      %v249 = vrot.slane %v248, 2
      %v250 = vadd.f32 %v248, %v249
      %v251 = vrot.slane %v250, 1
      %v252 = vadd.f32 %v250, %v251
      %v253 = vrot.slane %v235, 4
      %v254 = vadd.f32 %v235, %v253
      %v255 = vrot.slane %v254, 2
      %v256 = vadd.f32 %v254, %v255
      %v257 = vrot.slane %v256, 1
      %v258 = vadd.f32 %v256, %v257
      %v259 = vrot.slane %v236, 4
      %v260 = vadd.f32 %v236, %v259
      %v261 = vrot.slane %v260, 2
      %v262 = vadd.f32 %v260, %v261
      %v263 = vrot.slane %v262, 1
      %v264 = vadd.f32 %v262, %v263
      %v265 = vrot.slane %v237, 4
      %v266 = vadd.f32 %v237, %v265
      %v267 = vrot.slane %v266, 2
      %v268 = vadd.f32 %v266, %v267
      %v269 = vrot.slane %v268, 1
      %v270 = vadd.f32 %v268, %v269
      %v271 = vrot.slane %v238, 4
      %v272 = vadd.f32 %v238, %v271
      %v273 = vrot.slane %v272, 2
      %v274 = vadd.f32 %v272, %v273
      %v275 = vrot.slane %v274, 1
      %v276 = vadd.f32 %v274, %v275
      %v277 = vrot.slane %v239, 4
      %v278 = vadd.f32 %v239, %v277
      %v279 = vrot.slane %v278, 2
      %v280 = vadd.f32 %v278, %v279
      %v281 = vrot.slane %v280, 1
      %v282 = vadd.f32 %v280, %v281
      %v283 = vrot.slane %v240, 4
      %v284 = vadd.f32 %v240, %v283
      %v285 = vrot.slane %v284, 2
      %v286 = vadd.f32 %v284, %v285
      %v287 = vrot.slane %v286, 1
      %v288 = vadd.f32 %v286, %v287
      %v289 = vrcp.pop 8.0
      %v290 = vmul.f32 8.0, %v289
      %v291 = vsub.f32 1.0, %v290
      %v292 = vmul.f32 %v289, %v291
      %v293 = vadd.f32 %v289, %v292
      %vm294 = vweird.f32 %v289
      %v295 = vsel %vm294, %v289, %v293
      %v296 = vmul.f32 %v246, %v295
      %v297 = vmul.f32 %v252, %v295
      %v298 = vmul.f32 %v258, %v295
      %v299 = vmul.f32 %v264, %v295
      %v300 = vmul.f32 %v270, %v295
      %v301 = vmul.f32 %v276, %v295
      %v302 = vmul.f32 %v282, %v295
      %v303 = vmul.f32 %v288, %v295
      %v304 = vld [vmem:[%s221] sm:$0xff]
      %v305 = vld [vmem:[%s221 + $0x8] sm:$0xff]
      %v306 = vld [vmem:[%s221 + $0x10] sm:$0xff]
      %v307 = vld [vmem:[%s221 + $0x18] sm:$0xff]
      %v308 = vld [vmem:[%s221 + $0x20] sm:$0xff]
      %v309 = vld [vmem:[%s221 + $0x28] sm:$0xff]
      %v310 = vld [vmem:[%s221 + $0x30] sm:$0xff]
      %v311 = vld [vmem:[%s221 + $0x38] sm:$0xff]
      %v312 = vld [vmem:[%s221 + $0x40] sm:$0xff]
      %v313 = vld [vmem:[%s221 + $0x48] sm:$0xff]
      %v314 = vld [vmem:[%s221 + $0x50] sm:$0xff]
      %v315 = vld [vmem:[%s221 + $0x58] sm:$0xff]
      %v316 = vld [vmem:[%s221 + $0x60] sm:$0xff]
      %v317 = vld [vmem:[%s221 + $0x68] sm:$0xff]
      %v318 = vld [vmem:[%s221 + $0x70] sm:$0xff]
      %v319 = vld [vmem:[%s221 + $0x78] sm:$0xff]
      %v320 = vld [vmem:[%s221 + $0x80] sm:$0xff]
      %v321 = vld [vmem:[%s221 + $0x88] sm:$0xff]
      %v322 = vld [vmem:[%s221 + $0x90] sm:$0xff]
      %v323 = vld [vmem:[%s221 + $0x98] sm:$0xff]
      %v324 = vld [vmem:[%s221 + $0xa0] sm:$0xff]
      %v325 = vld [vmem:[%s221 + $0xa8] sm:$0xff]
      %v326 = vld [vmem:[%s221 + $0xb0] sm:$0xff]
      %v327 = vld [vmem:[%s221 + $0xb8] sm:$0xff]
      %v328 = vld [vmem:[%s221 + $0xc0] sm:$0xff]
      %v329 = vld [vmem:[%s221 + $0xc8] sm:$0xff]
      %v330 = vld [vmem:[%s221 + $0xd0] sm:$0xff]
      %v331 = vld [vmem:[%s221 + $0xd8] sm:$0xff]
      %v332 = vld [vmem:[%s221 + $0xe0] sm:$0xff]
      %v333 = vld [vmem:[%s221 + $0xe8] sm:$0xff]
      %v334 = vld [vmem:[%s221 + $0xf0] sm:$0xff]
      %v335 = vld [vmem:[%s221 + $0xf8] sm:$0xff]
      %v336 = vld [vmem:[%s221 + $0x100] sm:$0xff]
      %v337 = vld [vmem:[%s221 + $0x108] sm:$0xff]
      %v338 = vld [vmem:[%s221 + $0x110] sm:$0xff]
      %v339 = vld [vmem:[%s221 + $0x118] sm:$0xff]
      %v340 = vld [vmem:[%s221 + $0x120] sm:$0xff]
      %v341 = vld [vmem:[%s221 + $0x128] sm:$0xff]
      %v342 = vld [vmem:[%s221 + $0x130] sm:$0xff]
      %v343 = vld [vmem:[%s221 + $0x138] sm:$0xff]
      %v344 = vld [vmem:[%s221 + $0x140] sm:$0xff]
      %v345 = vld [vmem:[%s221 + $0x148] sm:$0xff]
      %v346 = vld [vmem:[%s221 + $0x150] sm:$0xff]
      %v347 = vld [vmem:[%s221 + $0x158] sm:$0xff]
      %v348 = vld [vmem:[%s221 + $0x160] sm:$0xff]
      %v349 = vld [vmem:[%s221 + $0x168] sm:$0xff]
      %v350 = vld [vmem:[%s221 + $0x170] sm:$0xff]
      %v351 = vld [vmem:[%s221 + $0x178] sm:$0xff]
      %v352 = vld [vmem:[%s221 + $0x180] sm:$0xff]
      %v353 = vld [vmem:[%s221 + $0x188] sm:$0xff]
      %v354 = vld [vmem:[%s221 + $0x190] sm:$0xff]
      %v355 = vld [vmem:[%s221 + $0x198] sm:$0xff]
      %v356 = vld [vmem:[%s221 + $0x1a0] sm:$0xff]
      %v357 = vld [vmem:[%s221 + $0x1a8] sm:$0xff]
      %v358 = vld [vmem:[%s221 + $0x1b0] sm:$0xff]
      %v359 = vld [vmem:[%s221 + $0x1b8] sm:$0xff]
      %v360 = vld [vmem:[%s221 + $0x1c0] sm:$0xff]
      %v361 = vld [vmem:[%s221 + $0x1c8] sm:$0xff]
      %v362 = vld [vmem:[%s221 + $0x1d0] sm:$0xff]
      %v363 = vld [vmem:[%s221 + $0x1d8] sm:$0xff]
      %v364 = vld [vmem:[%s221 + $0x1e0] sm:$0xff]
      %v365 = vld [vmem:[%s221 + $0x1e8] sm:$0xff]
      %v366 = vld [vmem:[%s221 + $0x1f0] sm:$0xff]
      %v367 = vld [vmem:[%s221 + $0x1f8] sm:$0xff]
      %v368 = vld [vmem:[%s221 + $0x200] sm:$0xff]
      %v369 = vld [vmem:[%s221 + $0x208] sm:$0xff]
      %v370 = vld [vmem:[%s221 + $0x210] sm:$0xff]
      %v371 = vld [vmem:[%s221 + $0x218] sm:$0xff]
      %v372 = vld [vmem:[%s221 + $0x220] sm:$0xff]
      %v373 = vld [vmem:[%s221 + $0x228] sm:$0xff]
      %v374 = vld [vmem:[%s221 + $0x230] sm:$0xff]
      %v375 = vld [vmem:[%s221 + $0x238] sm:$0xff]
      %v376 = vld [vmem:[%s221 + $0x240] sm:$0xff]
      %v377 = vld [vmem:[%s221 + $0x248] sm:$0xff]
      %v378 = vld [vmem:[%s221 + $0x250] sm:$0xff]
      %v379 = vld [vmem:[%s221 + $0x258] sm:$0xff]
      %v380 = vld [vmem:[%s221 + $0x260] sm:$0xff]
      %v381 = vld [vmem:[%s221 + $0x268] sm:$0xff]
      %v382 = vld [vmem:[%s221 + $0x270] sm:$0xff]
      %v383 = vld [vmem:[%s221 + $0x278] sm:$0xff]
      %v384 = vld [vmem:[%s221 + $0x280] sm:$0xff]
      %v385 = vld [vmem:[%s221 + $0x288] sm:$0xff]
      %v386 = vld [vmem:[%s221 + $0x290] sm:$0xff]
      %v387 = vld [vmem:[%s221 + $0x298] sm:$0xff]
      %v388 = vld [vmem:[%s221 + $0x2a0] sm:$0xff]
      %v389 = vld [vmem:[%s221 + $0x2a8] sm:$0xff]
      %v390 = vld [vmem:[%s221 + $0x2b0] sm:$0xff]
      %v391 = vld [vmem:[%s221 + $0x2b8] sm:$0xff]
      %v392 = vld [vmem:[%s221 + $0x2c0] sm:$0xff]
      %v393 = vld [vmem:[%s221 + $0x2c8] sm:$0xff]
      %v394 = vld [vmem:[%s221 + $0x2d0] sm:$0xff]
      %v395 = vld [vmem:[%s221 + $0x2d8] sm:$0xff]
      %v396 = vld [vmem:[%s221 + $0x2e0] sm:$0xff]
      %v397 = vld [vmem:[%s221 + $0x2e8] sm:$0xff]
      %v398 = vld [vmem:[%s221 + $0x2f0] sm:$0xff]
      %v399 = vld [vmem:[%s221 + $0x2f8] sm:$0xff]
      %v400 = vld [vmem:[%s221 + $0x300] sm:$0xff]
      %v401 = vld [vmem:[%s221 + $0x308] sm:$0xff]
      %v402 = vld [vmem:[%s221 + $0x310] sm:$0xff]
      %v403 = vld [vmem:[%s221 + $0x318] sm:$0xff]
      %v404 = vld [vmem:[%s221 + $0x320] sm:$0xff]
      %v405 = vld [vmem:[%s221 + $0x328] sm:$0xff]
      %v406 = vld [vmem:[%s221 + $0x330] sm:$0xff]
      %v407 = vld [vmem:[%s221 + $0x338] sm:$0xff]
      %v408 = vld [vmem:[%s221 + $0x340] sm:$0xff]
      %v409 = vld [vmem:[%s221 + $0x348] sm:$0xff]
      %v410 = vld [vmem:[%s221 + $0x350] sm:$0xff]
      %v411 = vld [vmem:[%s221 + $0x358] sm:$0xff]
      %v412 = vld [vmem:[%s221 + $0x360] sm:$0xff]
      %v413 = vld [vmem:[%s221 + $0x368] sm:$0xff]
      %v414 = vld [vmem:[%s221 + $0x370] sm:$0xff]
      %v415 = vld [vmem:[%s221 + $0x378] sm:$0xff]
      %v416 = vld [vmem:[%s221 + $0x380] sm:$0xff]
      %v417 = vld [vmem:[%s221 + $0x388] sm:$0xff]
      %v418 = vld [vmem:[%s221 + $0x390] sm:$0xff]
      %v419 = vld [vmem:[%s221 + $0x398] sm:$0xff]
      %v420 = vld [vmem:[%s221 + $0x3a0] sm:$0xff]
      %v421 = vld [vmem:[%s221 + $0x3a8] sm:$0xff]
      %v422 = vld [vmem:[%s221 + $0x3b0] sm:$0xff]
      %v423 = vld [vmem:[%s221 + $0x3b8] sm:$0xff]
      %v424 = vld [vmem:[%s221 + $0x3c0] sm:$0xff]
      %v425 = vld [vmem:[%s221 + $0x3c8] sm:$0xff]
      %v426 = vld [vmem:[%s221 + $0x3d0] sm:$0xff]
      %v427 = vld [vmem:[%s221 + $0x3d8] sm:$0xff]
      %v428 = vld [vmem:[%s221 + $0x3e0] sm:$0xff]
      %v429 = vld [vmem:[%s221 + $0x3e8] sm:$0xff]
      %v430 = vld [vmem:[%s221 + $0x3f0] sm:$0xff]
      %v431 = vld [vmem:[%s221 + $0x3f8] sm:$0xff]
      %v432 = vld [vmem:[%s224] sm:$0x1]
      %433 = vmatpush.msra.mxu0 %v319
      %434 = vmatpush.msra.mxu0 %v318
      %435 = vmatpush.msra.mxu0 %v317
      %436 = vmatpush.msra.mxu0 %v316
      %437 = vmatpush.msra.mxu0 %v315
      %438 = vmatpush.msra.mxu0 %v314
      %439 = vmatpush.msra.mxu0 %v313
      %440 = vmatpush.msra.mxu0 %v312
      %441 = vmatpush.msra.mxu0 %v311
      %442 = vmatpush.msra.mxu0 %v310
      %443 = vmatpush.msra.mxu0 %v309
      %444 = vmatpush.msra.mxu0 %v308
      %445 = vmatpush.msra.mxu0 %v307
      %446 = vmatpush.msra.mxu0 %v306
      %447 = vmatpush.msra.mxu0 %v305
      %448 = vmatpush.msra.mxu0 %v304
      %449 = vmatmul.f32.gmra.mxu0 %v296
      %v450 = vpop.f32.mrf.mxu0
      %v451 = vadd.f32 %v432, %v450
      %452 = vdwg.mxu0
      %453 = vmatpush.msra.mxu0 %v335
      %454 = vmatpush.msra.mxu0 %v334
      %455 = vmatpush.msra.mxu0 %v333
      %456 = vmatpush.msra.mxu0 %v332
      %457 = vmatpush.msra.mxu0 %v331
      %458 = vmatpush.msra.mxu0 %v330
      %459 = vmatpush.msra.mxu0 %v329
      %460 = vmatpush.msra.mxu0 %v328
      %461 = vmatpush.msra.mxu0 %v327
      %462 = vmatpush.msra.mxu0 %v326
      %463 = vmatpush.msra.mxu0 %v325
      %464 = vmatpush.msra.mxu0 %v324
      %465 = vmatpush.msra.mxu0 %v323
      %466 = vmatpush.msra.mxu0 %v322
      %467 = vmatpush.msra.mxu0 %v321
      %468 = vmatpush.msra.mxu0 %v320
      %469 = vmatmul.f32.gmra.mxu0 %v297
      %v470 = vpop.f32.mrf.mxu0
      %v471 = vadd.f32 %v451, %v470
      %472 = vdwg.mxu0
      %473 = vmatpush.msra.mxu0 %v351
      %474 = vmatpush.msra.mxu0 %v350
      %475 = vmatpush.msra.mxu0 %v349
      %476 = vmatpush.msra.mxu0 %v348
      %477 = vmatpush.msra.mxu0 %v347
      %478 = vmatpush.msra.mxu0 %v346
      %479 = vmatpush.msra.mxu0 %v345
      %480 = vmatpush.msra.mxu0 %v344
      %481 = vmatpush.msra.mxu0 %v343
      %482 = vmatpush.msra.mxu0 %v342
      %483 = vmatpush.msra.mxu0 %v341
      %484 = vmatpush.msra.mxu0 %v340
      %485 = vmatpush.msra.mxu0 %v339
      %486 = vmatpush.msra.mxu0 %v338
      %487 = vmatpush.msra.mxu0 %v337
      %488 = vmatpush.msra.mxu0 %v336
      %489 = vmatmul.f32.gmra.mxu0 %v298
      %v490 = vpop.f32.mrf.mxu0
      %v491 = vadd.f32 %v471, %v490
      %492 = vdwg.mxu0
      %493 = vmatpush.msra.mxu0 %v367
      %494 = vmatpush.msra.mxu0 %v366
      %495 = vmatpush.msra.mxu0 %v365
      %496 = vmatpush.msra.mxu0 %v364
      %497 = vmatpush.msra.mxu0 %v363
      %498 = vmatpush.msra.mxu0 %v362
      %499 = vmatpush.msra.mxu0 %v361
      %500 = vmatpush.msra.mxu0 %v360
      %501 = vmatpush.msra.mxu0 %v359
      %502 = vmatpush.msra.mxu0 %v358
      %503 = vmatpush.msra.mxu0 %v357
      %504 = vmatpush.msra.mxu0 %v356
      %505 = vmatpush.msra.mxu0 %v355
      %506 = vmatpush.msra.mxu0 %v354
      %507 = vmatpush.msra.mxu0 %v353
      %508 = vmatpush.msra.mxu0 %v352
      %509 = vmatmul.f32.gmra.mxu0 %v299
      %v510 = vpop.f32.mrf.mxu0
      %v511 = vadd.f32 %v491, %v510
      %512 = vdwg.mxu0
      %513 = vmatpush.msra.mxu0 %v383
      %514 = vmatpush.msra.mxu0 %v382
      %515 = vmatpush.msra.mxu0 %v381
      %516 = vmatpush.msra.mxu0 %v380
      %517 = vmatpush.msra.mxu0 %v379
      %518 = vmatpush.msra.mxu0 %v378
      %519 = vmatpush.msra.mxu0 %v377
      %520 = vmatpush.msra.mxu0 %v376
      %521 = vmatpush.msra.mxu0 %v375
      %522 = vmatpush.msra.mxu0 %v374
      %523 = vmatpush.msra.mxu0 %v373
      %524 = vmatpush.msra.mxu0 %v372
      %525 = vmatpush.msra.mxu0 %v371
      %526 = vmatpush.msra.mxu0 %v370
      %527 = vmatpush.msra.mxu0 %v369
      %528 = vmatpush.msra.mxu0 %v368
      %529 = vmatmul.f32.gmra.mxu0 %v300
      %v530 = vpop.f32.mrf.mxu0
      %v531 = vadd.f32 %v511, %v530
      %532 = vdwg.mxu0
      %533 = vmatpush.msra.mxu0 %v399
      %534 = vmatpush.msra.mxu0 %v398
      %535 = vmatpush.msra.mxu0 %v397
      %536 = vmatpush.msra.mxu0 %v396
      %537 = vmatpush.msra.mxu0 %v395
      %538 = vmatpush.msra.mxu0 %v394
      %539 = vmatpush.msra.mxu0 %v393
      %540 = vmatpush.msra.mxu0 %v392
      %541 = vmatpush.msra.mxu0 %v391
      %542 = vmatpush.msra.mxu0 %v390
      %543 = vmatpush.msra.mxu0 %v389
      %544 = vmatpush.msra.mxu0 %v388
      %545 = vmatpush.msra.mxu0 %v387
      %546 = vmatpush.msra.mxu0 %v386
      %547 = vmatpush.msra.mxu0 %v385
      %548 = vmatpush.msra.mxu0 %v384
      %549 = vmatmul.f32.gmra.mxu0 %v301
      %v550 = vpop.f32.mrf.mxu0
      %v551 = vadd.f32 %v531, %v550
      %552 = vdwg.mxu0
      %553 = vmatpush.msra.mxu0 %v415
      %554 = vmatpush.msra.mxu0 %v414
      %555 = vmatpush.msra.mxu0 %v413
      %556 = vmatpush.msra.mxu0 %v412
      %557 = vmatpush.msra.mxu0 %v411
      %558 = vmatpush.msra.mxu0 %v410
      %559 = vmatpush.msra.mxu0 %v409
      %560 = vmatpush.msra.mxu0 %v408
      %561 = vmatpush.msra.mxu0 %v407
      %562 = vmatpush.msra.mxu0 %v406
      %563 = vmatpush.msra.mxu0 %v405
      %564 = vmatpush.msra.mxu0 %v404
      %565 = vmatpush.msra.mxu0 %v403
      %566 = vmatpush.msra.mxu0 %v402
      %567 = vmatpush.msra.mxu0 %v401
      %568 = vmatpush.msra.mxu0 %v400
      %569 = vmatmul.f32.gmra.mxu0 %v302
      %v570 = vpop.f32.mrf.mxu0
      %v571 = vadd.f32 %v551, %v570
      %572 = vdwg.mxu0
      %573 = vmatpush.msra.mxu0 %v431
      %574 = vmatpush.msra.mxu0 %v430
      %575 = vmatpush.msra.mxu0 %v429
      %576 = vmatpush.msra.mxu0 %v428
      %577 = vmatpush.msra.mxu0 %v427
      %578 = vmatpush.msra.mxu0 %v426
      %579 = vmatpush.msra.mxu0 %v425
      %580 = vmatpush.msra.mxu0 %v424
      %581 = vmatpush.msra.mxu0 %v423
      %582 = vmatpush.msra.mxu0 %v422
      %583 = vmatpush.msra.mxu0 %v421
      %584 = vmatpush.msra.mxu0 %v420
      %585 = vmatpush.msra.mxu0 %v419
      %586 = vmatpush.msra.mxu0 %v418
      %587 = vmatpush.msra.mxu0 %v417
      %588 = vmatpush.msra.mxu0 %v416
      %589 = vmatmul.f32.gmra.mxu0 %v303
      %v590 = vpop.f32.mrf.mxu0
      %v591 = vadd.f32 %v571, %v590
      %592 = vdwg.mxu0
      %s593 = scalar_lea.vmem %s228, %s19
      %vm594 = vcmask 73728
      %595 = vst.msk [vmem:[%s593] sm:$0x1] %vm594, %v591
      %p596 = scmp.lt.s32.totalorder %s18, 2
      %s597 = scalar_select %p596, %s18, 2
      %s598 = smul.addr %s597, 2
      %s599 = scalar_lea.vmem %s3, %s598
      // Predicated region
      $region33: #{model_forward.21} parent=31 // pred_check
        %p600 = pneg %p124
      $region34: #{model_forward.21} parent=31 // pred_check_branch
        %602 = sbr.rel (%p600) target = $region36
      $region35: #{model_forward.21} parent=31 // pred_region
        _
      $region36: #{model_forward.21} parent=31 // pred_fallthru
        _
    $region32: #{model_forward.21} parent=5 // pred_fallthru
      _
    %p603 = scmp.le.s32.totalorder 2, %s9
    // Predicated region
    $region37: #{model_forward.21} parent=5 // pred_check
      %p604 = pneg %p603
    $region38: #{model_forward.21} parent=5 // pred_check_branch
      %606 = sbr.rel (%p604) target = $region40
    $region39: #{model_forward.21} parent=5 // pred_region
      %s607 = ssub.s32 %s9, 2
      // Predicated region
      $region41: #{model_forward.21} parent=39 // pred_check
        %p608 = pneg %p130
      $region42: #{model_forward.21} parent=39 // pred_check_branch
        %610 = sbr.rel (%p608) target = $region44
      $region43: #{model_forward.21} parent=39 // pred_region
        %p611 = scmp.lt.s32.totalorder %s20, 2
        %s612 = scalar_select %p611, %s20, 2
        %s613 = smul.addr %s612, 2
        %s614 = scalar_lea.vmem %s3, %s613
      $region44: #{model_forward.21} parent=39 // pred_fallthru
        _
    $region40: #{model_forward.21} parent=5 // pred_fallthru
      _
  $region6: #{model_forward.21} parent=0 // loop_footer
    %s13 = sadd.s32 1, %s9
  $region7: #{model_forward.21} parent=0 // loop_footer_branch
    %8 = sbr.rel target = $region3
  $region8: #{model_forward.21} parent=0 // loop_exit
    _

</llo_original>
